<compile_context>
chip_gen: v6e
topology: v6e:2x2x1
jax: 0.10.0
libtpu: 0.0.40
codegen_flags: <defaults>
</compile_context>

<pallas_src>
import jax
import jax.numpy as jnp
from jax.experimental import pallas as pl
from jax.experimental.pallas import tpu as pltpu


def _leaky(z):
    # LeakyReLU(0.1): max(z, 0.1*z) — one VPU max, no select / extra broadcast.
    return jnp.maximum(z, 0.1 * z)


# ------------------------------ fused kernel --------------------------------

def yolox_level_kernel(x_ref, w_stem_ref, b_stem_ref, w0_ref, b0_ref,
                       wc1_ref, bc1_ref, wr1_ref, br1_ref,
                       w_pred_ref, b_pred_ref, o_ref,
                       pad_a, pad_cls, pad_reg):
    """One whole YOLOX head level for one batch item.

    x_ref          : (1, H, W, Cin)             NHWC input tile
    w_stem_ref     : (Cin, hid)        bf16     1x1 stem weight (BN scale folded)
    b_stem_ref     : (1, hid)          f32      folded BN shift
    w0_ref         : (9*hid, 2*hid)    bf16     fused cls||reg first 3x3 conv
    b0_ref         : (1, 2*hid)        f32
    wc1_ref/wr1_ref: (9*hid, hid)      bf16     second 3x3 conv of each branch
    bc1_ref/br1_ref: (1, hid)          f32
    w_pred_ref     : (2*hid, 5+nc)     bf16     [reg_feat|cls_feat] -> [reg,obj,cls]
    b_pred_ref     : (1, 5+nc)         f32
    o_ref          : (1, H, W, 5+nc)
    pad_a/pad_cls/pad_reg : (H+2, W+2, hid) f32 VMEM zero-halo scratch
    """
    _, H, W, n_out = o_ref.shape
    cin = x_ref.shape[3]
    hid = w_stem_ref.shape[1]

    def im2col(pad_ref):
        cols = []
        for kh in range(3):
            for kw in range(3):
                cols.append(pad_ref[kh:kh + H, kw:kw + W, :].reshape(H * W, hid))
        # (H*W, 9*hid): one K=9*hid MXU matmul instead of nine K=hid ones.
        return jnp.concatenate(cols, axis=-1).astype(jnp.bfloat16)

    # ---- stem 1x1 conv (BN scale pre-folded) + shift + LeakyReLU ----
    x2 = x_ref[0].reshape(H * W, cin).astype(jnp.bfloat16)
    y = jnp.dot(x2, w_stem_ref[...], preferred_element_type=jnp.float32)
    y = _leaky(y + b_stem_ref[...])

    pad_a[...] = jnp.zeros_like(pad_a)
    pad_a[1:H + 1, 1:W + 1, :] = y.reshape(H, W, hid)

    # ---- first 3x3 of cls & reg branches, fused along Cout (shared input) ----
    p0 = im2col(pad_a)
    y0 = jnp.dot(p0, w0_ref[...], preferred_element_type=jnp.float32)
    y0 = _leaky(y0 + b0_ref[...]).reshape(H, W, 2 * hid)

    pad_cls[...] = jnp.zeros_like(pad_cls)
    pad_reg[...] = jnp.zeros_like(pad_reg)
    pad_cls[1:H + 1, 1:W + 1, :] = y0[:, :, :hid]
    pad_reg[1:H + 1, 1:W + 1, :] = y0[:, :, hid:]

    # ---- second 3x3 of each branch ----
    cls_feat = _leaky(jnp.dot(im2col(pad_cls), wc1_ref[...],
                              preferred_element_type=jnp.float32) + bc1_ref[...])
    reg_feat = _leaky(jnp.dot(im2col(pad_reg), wr1_ref[...],
                              preferred_element_type=jnp.float32) + br1_ref[...])

    # ---- fused reg/obj/cls 1x1 predictions: one matmul, one lane-dense store ----
    feat = jnp.concatenate([reg_feat, cls_feat], axis=-1).astype(jnp.bfloat16)
    out = jnp.dot(feat, w_pred_ref[...],
                  preferred_element_type=jnp.float32) + b_pred_ref[...]
    o_ref[0] = out.reshape(H, W, n_out).astype(o_ref.dtype)


# ------------------------------ wrapper --------------------------------------

@jax.jit
def _run_level(x_nchw, p):
    N, cin, H, W = x_nchw.shape
    hid = p['w_stem'].shape[1]
    n_out = p['w_pred'].shape[1]

    # Single NCHW->NHWC transpose of the raw input; everything else is fused.
    # TODO(synk): fold this transpose into the stem matmul (contract C directly
    # from the NCHW view) to remove the last XLA pass over HBM.
    x = jnp.transpose(x_nchw, (0, 2, 3, 1))

    # TODO(synk): at production sizes (hidden=256, 80x80) strip-tile H with a
    # 3-row halo so v7x's 64 MiB VMEM and both TensorCores are fully used.
    return pl.pallas_call(
        yolox_level_kernel,
        out_shape=jax.ShapeDtypeStruct((N, H, W, n_out), jnp.float32),
        grid=(N,),
        in_specs=[
            pl.BlockSpec((1, H, W, cin), lambda n: (n, 0, 0, 0)),
            pl.BlockSpec(p['w_stem'].shape, lambda n: (0, 0)),
            pl.BlockSpec(p['b_stem'].shape, lambda n: (0, 0)),
            pl.BlockSpec(p['w0'].shape, lambda n: (0, 0)),
            pl.BlockSpec(p['b0'].shape, lambda n: (0, 0)),
            pl.BlockSpec(p['wc1'].shape, lambda n: (0, 0)),
            pl.BlockSpec(p['bc1'].shape, lambda n: (0, 0)),
            pl.BlockSpec(p['wr1'].shape, lambda n: (0, 0)),
            pl.BlockSpec(p['br1'].shape, lambda n: (0, 0)),
            pl.BlockSpec(p['w_pred'].shape, lambda n: (0, 0)),
            pl.BlockSpec(p['b_pred'].shape, lambda n: (0, 0)),
        ],
        out_specs=pl.BlockSpec((1, H, W, n_out), lambda n: (n, 0, 0, 0)),
        scratch_shapes=[
            pltpu.VMEM((H + 2, W + 2, hid), jnp.float32),
            pltpu.VMEM((H + 2, W + 2, hid), jnp.float32),
            pltpu.VMEM((H + 2, W + 2, hid), jnp.float32),
        ],
        compiler_params=pltpu.CompilerParams(dimension_semantics=("parallel",)),
    )(x, p['w_stem'], p['b_stem'], p['w0'], p['b0'],
      p['wc1'], p['bc1'], p['wr1'], p['br1'], p['w_pred'], p['b_pred'])


def yolox_head_forward(prep_params, inputs):
    """inputs: list of NCHW arrays -> list of NHWC (N, H, W, 4+1+num_classes)."""
    if not isinstance(inputs, (list, tuple)):
        inputs = [inputs]
    return [_run_level(x, p) for p, x in zip(prep_params, inputs)]


# --------------------------- parameter handling ------------------------------

def init_head_params(key, in_channels, hidden, num_classes):
    """Deterministic synthetic parameters mirroring YOLOXHead.__init__ shapes."""
    def nxt():
        nonlocal key
        key, sub = jax.random.split(key)
        return sub

    def w(shape, scale=0.1):
        return jax.random.normal(nxt(), shape, jnp.float32) * scale

    def bn(c):
        return dict(
            gamma=jax.random.uniform(nxt(), (c,), jnp.float32, 0.5, 1.5),
            beta=jax.random.normal(nxt(), (c,), jnp.float32) * 0.1,
            mean=jax.random.normal(nxt(), (c,), jnp.float32) * 0.1,
            var=jax.random.uniform(nxt(), (c,), jnp.float32, 0.5, 1.5),
        )

    params = []
    for c_in in in_channels:
        params.append(dict(
            stem_w=w((c_in, hidden)), stem_bn=bn(hidden),
            cls_w=[w((3, 3, hidden, hidden)) for _ in range(2)],
            cls_bn=[bn(hidden) for _ in range(2)],
            reg_w=[w((3, 3, hidden, hidden)) for _ in range(2)],
            reg_bn=[bn(hidden) for _ in range(2)],
            reg_pred_w=w((hidden, 4)), reg_pred_b=w((4,)),
            obj_pred_w=w((hidden, 1)), obj_pred_b=w((1,)),
            cls_pred_w=w((hidden, num_classes)), cls_pred_b=w((num_classes,)),
        ))
    return params


def _bn_fold(bn, eps=1e-3):
    # BaseConv uses nn.BatchNorm2d(eps=0.001); eval-mode (running-stat) fold.
    scale = bn['gamma'] * jax.lax.rsqrt(bn['var'] + eps)
    shift = bn['beta'] - bn['mean'] * scale
    return scale, shift


def prepare_level_params(p, num_classes):
    """Fold BN scale into weights, fuse branches/preds, cast MXU operands to bf16."""
    hid = p['stem_w'].shape[1]
    n_out = 5 + num_classes

    s, b = _bn_fold(p['stem_bn'])
    w_stem = (p['stem_w'] * s[None, :]).astype(jnp.bfloat16)
    b_stem = b.reshape(1, hid)

    # First 3x3 of cls & reg share their input -> fuse along Cout.
    sc0, bc0 = _bn_fold(p['cls_bn'][0])
    sr0, br0 = _bn_fold(p['reg_bn'][0])
    w0 = jnp.concatenate([p['cls_w'][0] * sc0, p['reg_w'][0] * sr0],
                         axis=-1).reshape(9 * hid, 2 * hid).astype(jnp.bfloat16)
    b0 = jnp.concatenate([bc0, br0]).reshape(1, 2 * hid)

    sc1, bc1 = _bn_fold(p['cls_bn'][1])
    sr1, br1 = _bn_fold(p['reg_bn'][1])
    wc1 = (p['cls_w'][1] * sc1).reshape(9 * hid, hid).astype(jnp.bfloat16)
    wr1 = (p['reg_w'][1] * sr1).reshape(9 * hid, hid).astype(jnp.bfloat16)

    # Fused prediction block weight: [reg_feat | cls_feat] -> [reg(4), obj(1), cls(nc)].
    w_ro = jnp.concatenate([p['reg_pred_w'], p['obj_pred_w']], axis=1)  # (hid, 5)
    w_pred = jnp.zeros((2 * hid, n_out), jnp.float32)
    w_pred = w_pred.at[:hid, :5].set(w_ro)
    w_pred = w_pred.at[hid:, 5:].set(p['cls_pred_w'])
    w_pred = w_pred.astype(jnp.bfloat16)
    b_pred = jnp.concatenate([p['reg_pred_b'], p['obj_pred_b'],
                              p['cls_pred_b']]).reshape(1, n_out)

    return dict(w_stem=w_stem, b_stem=b_stem, w0=w0, b0=b0,
                wc1=wc1, bc1=bc1.reshape(1, hid),
                wr1=wr1, br1=br1.reshape(1, hid),
                w_pred=w_pred, b_pred=b_pred)


# ------------------------- pure-JAX reference (check) ------------------------

def yolox_head_forward_ref(prep_params, inputs):
    """Pure-JAX (lax.conv) reference using the same folded/bf16 parameters."""
    if not isinstance(inputs, (list, tuple)):
        inputs = [inputs]

    def conv(x, w_hwio, pad):
        return jax.lax.conv_general_dilated(
            x.astype(jnp.bfloat16), w_hwio, (1, 1), pad,
            dimension_numbers=('NHWC', 'HWIO', 'NHWC'),
            preferred_element_type=jnp.float32)

    outs = []
    for p, x_nchw in zip(prep_params, inputs):
        cin, hid = p['w_stem'].shape
        n_out = p['w_pred'].shape[1]
        x = jnp.transpose(x_nchw, (0, 2, 3, 1))
        x = _leaky(conv(x, p['w_stem'].reshape(1, 1, cin, hid), 'VALID')
                   + p['b_stem'])
        y0 = _leaky(conv(x, p['w0'].reshape(3, 3, hid, 2 * hid), 'SAME')
                    + p['b0'])
        cls_feat = _leaky(conv(y0[..., :hid], p['wc1'].reshape(3, 3, hid, hid),
                               'SAME') + p['bc1'])
        reg_feat = _leaky(conv(y0[..., hid:], p['wr1'].reshape(3, 3, hid, hid),
                               'SAME') + p['br1'])
        feat = jnp.concatenate([reg_feat, cls_feat], axis=-1)
        out = conv(feat, p['w_pred'].reshape(1, 1, 2 * hid, n_out), 'VALID') \
            + p['b_pred']
        outs.append(out)
    return outs


# --------------------------------- main ---------------------------------------

if __name__ == "__main__":
    # YOLOXHead(num_classes=3, in_channels=[32], width=0.125) -> hidden = 32.
    num_classes = 3
    in_channels = [32]
    hidden = int(256 * 0.125)          # 32
    N, H, W = 2, 16, 16

    key = jax.random.PRNGKey(0)
    k_params, k_x = jax.random.split(key)
    raw_params = init_head_params(k_params, in_channels, hidden, num_classes)
    prep_params = [prepare_level_params(p, num_classes) for p in raw_params]

    x = jax.random.normal(k_x, (N, in_channels[0], H, W), jnp.float32)  # NCHW

    outs = yolox_head_forward(prep_params, [x])
    outs = [jax.block_until_ready(o) for o in outs]

    refs = yolox_head_forward_ref(prep_params, [x])
    for o, r in zip(outs, refs):
        assert o.shape == (N, H, W, 4 + 1 + num_classes), o.shape
        err = float(jnp.max(jnp.abs(o - r)))
        assert jnp.allclose(o, r, atol=2e-3, rtol=2e-3), err

    print("KERNEL_OK")
</pallas_src>

<mosaic_0001>
module attributes {stable_mosaic.version = 11 : i64} {
  func.func @yolox_level_kernel(%arg0: i32, %arg1: memref<1x16x16x32xf32, #tpu.memory_space<vmem>>, %arg2: memref<32x32xbf16, #tpu.memory_space<vmem>>, %arg3: memref<1x32xf32, #tpu.memory_space<vmem>>, %arg4: memref<288x64xbf16, #tpu.memory_space<vmem>>, %arg5: memref<1x64xf32, #tpu.memory_space<vmem>>, %arg6: memref<288x32xbf16, #tpu.memory_space<vmem>>, %arg7: memref<1x32xf32, #tpu.memory_space<vmem>>, %arg8: memref<288x32xbf16, #tpu.memory_space<vmem>>, %arg9: memref<1x32xf32, #tpu.memory_space<vmem>>, %arg10: memref<64x8xbf16, #tpu.memory_space<vmem>>, %arg11: memref<1x8xf32, #tpu.memory_space<vmem>>, %arg12: memref<1x16x16x8xf32, #tpu.memory_space<vmem>>, %arg13: memref<18x18x32xf32, #tpu.memory_space<vmem>>, %arg14: memref<18x18x32xf32, #tpu.memory_space<vmem>>, %arg15: memref<18x18x32xf32, #tpu.memory_space<vmem>>) attributes {dimension_semantics = [#tpu.dimension_semantics<parallel>], iteration_bounds = array<i64: 2>, scalar_prefetch = 0 : i64, scratch_operands = 3 : i64, tpu.core_type = #tpu.core_type<tc>, window_params = [{transform_indices = @transform_0, window_bounds = array<i64: 1, 16, 16, 32>}, {pipeline_mode = #tpu.pipeline_mode<synchronous>, transform_indices = @transform_1, window_bounds = array<i64: 32, 32>}, {pipeline_mode = #tpu.pipeline_mode<synchronous>, transform_indices = @transform_2, window_bounds = array<i64: 1, 32>}, {pipeline_mode = #tpu.pipeline_mode<synchronous>, transform_indices = @transform_3, window_bounds = array<i64: 288, 64>}, {pipeline_mode = #tpu.pipeline_mode<synchronous>, transform_indices = @transform_4, window_bounds = array<i64: 1, 64>}, {pipeline_mode = #tpu.pipeline_mode<synchronous>, transform_indices = @transform_5, window_bounds = array<i64: 288, 32>}, {pipeline_mode = #tpu.pipeline_mode<synchronous>, transform_indices = @transform_6, window_bounds = array<i64: 1, 32>}, {pipeline_mode = #tpu.pipeline_mode<synchronous>, transform_indices = @transform_7, window_bounds = array<i64: 288, 32>}, {pipeline_mode = #tpu.pipeline_mode<synchronous>, transform_indices = @transform_8, window_bounds = array<i64: 1, 32>}, {pipeline_mode = #tpu.pipeline_mode<synchronous>, transform_indices = @transform_9, window_bounds = array<i64: 64, 8>}, {pipeline_mode = #tpu.pipeline_mode<synchronous>, transform_indices = @transform_10, window_bounds = array<i64: 1, 8>}, {transform_indices = @transform_11, window_bounds = array<i64: 1, 16, 16, 8>}]} {
    %c0 = arith.constant 0 : index
    %c0_0 = arith.constant 0 : index
    %c0_1 = arith.constant 0 : index
    %c0_2 = arith.constant 0 : index
    %0 = vector.load %arg1[%c0, %c0_0, %c0_1, %c0_2] : memref<1x16x16x32xf32, #tpu.memory_space<vmem>>, vector<1x16x16x32xf32>
    %1 = vector.shape_cast %0 : vector<1x16x16x32xf32> to vector<16x16x32xf32>
    %2 = vector.shape_cast %1 : vector<16x16x32xf32> to vector<256x32xf32>
    %3 = arith.truncf %2 : vector<256x32xf32> to vector<256x32xbf16>
    %c0_3 = arith.constant 0 : index
    %c0_4 = arith.constant 0 : index
    %4 = vector.load %arg2[%c0_3, %c0_4] : memref<32x32xbf16, #tpu.memory_space<vmem>>, vector<32x32xbf16>
    %cst = arith.constant dense<0.000000e+00> : vector<256x32xf32>
    %5 = tpu.matmul %3, %4, %cst {dimension_numbers = #tpu.dot_dimension_numbers<[1], [0], [0], [1], [0, 0, 1, 1], [], []>} : vector<256x32xbf16>, vector<32x32xbf16>, vector<256x32xf32> -> vector<256x32xf32>
    %c0_5 = arith.constant 0 : index
    %c0_6 = arith.constant 0 : index
    %6 = vector.load %arg3[%c0_5, %c0_6] : memref<1x32xf32, #tpu.memory_space<vmem>>, vector<1x32xf32>
    %7 = vector.broadcast %6 : vector<1x32xf32> to vector<256x32xf32>
    %8 = arith.addf %5, %7 : vector<256x32xf32>
    %cst_7 = arith.constant 1.000000e-01 : f32
    %9 = vector.broadcast %cst_7 : f32 to vector<256x32xf32>
    %10 = arith.mulf %9, %8 : vector<256x32xf32>
    %11 = arith.maximumf %8, %10 : vector<256x32xf32>
    %cst_8 = arith.constant 0.000000e+00 : f32
    %12 = vector.broadcast %cst_8 : f32 to vector<18x18x32xf32>
    %c0_9 = arith.constant 0 : index
    %c0_10 = arith.constant 0 : index
    %c0_11 = arith.constant 0 : index
    %13 = vector.load %arg13[%c0_9, %c0_10, %c0_11] : memref<18x18x32xf32, #tpu.memory_space<vmem>>, vector<18x18x32xf32>
    tpu.vector_store %arg13[%c0_9, %c0_10, %c0_11], %12 {strides = array<i32>} : memref<18x18x32xf32, #tpu.memory_space<vmem>>, vector<18x18x32xf32>,
    %14 = vector.shape_cast %11 : vector<256x32xf32> to vector<16x16x32xf32>
    %c1 = arith.constant 1 : index
    %c1_12 = arith.constant 1 : index
    %c0_13 = arith.constant 0 : index
    %15 = vector.load %arg13[%c1, %c1_12, %c0_13] : memref<18x18x32xf32, #tpu.memory_space<vmem>>, vector<16x16x32xf32>
    tpu.vector_store %arg13[%c1, %c1_12, %c0_13], %14 {strides = array<i32>} : memref<18x18x32xf32, #tpu.memory_space<vmem>>, vector<16x16x32xf32>,
    %c0_14 = arith.constant 0 : index
    %c0_15 = arith.constant 0 : index
    %c0_16 = arith.constant 0 : index
    %16 = vector.load %arg13[%c0_14, %c0_15, %c0_16] : memref<18x18x32xf32, #tpu.memory_space<vmem>>, vector<16x16x32xf32>
    %17 = vector.shape_cast %16 : vector<16x16x32xf32> to vector<256x32xf32>
    %c0_17 = arith.constant 0 : index
    %c1_18 = arith.constant 1 : index
    %c0_19 = arith.constant 0 : index
    %18 = vector.load %arg13[%c0_17, %c1_18, %c0_19] : memref<18x18x32xf32, #tpu.memory_space<vmem>>, vector<16x16x32xf32>
    %19 = vector.shape_cast %18 : vector<16x16x32xf32> to vector<256x32xf32>
    %c0_20 = arith.constant 0 : index
    %c2 = arith.constant 2 : index
    %c0_21 = arith.constant 0 : index
    %20 = vector.load %arg13[%c0_20, %c2, %c0_21] : memref<18x18x32xf32, #tpu.memory_space<vmem>>, vector<16x16x32xf32>
    %21 = vector.shape_cast %20 : vector<16x16x32xf32> to vector<256x32xf32>
    %c1_22 = arith.constant 1 : index
    %c0_23 = arith.constant 0 : index
    %c0_24 = arith.constant 0 : index
    %22 = vector.load %arg13[%c1_22, %c0_23, %c0_24] : memref<18x18x32xf32, #tpu.memory_space<vmem>>, vector<16x16x32xf32>
    %23 = vector.shape_cast %22 : vector<16x16x32xf32> to vector<256x32xf32>
    %c1_25 = arith.constant 1 : index
    %c1_26 = arith.constant 1 : index
    %c0_27 = arith.constant 0 : index
    %24 = vector.load %arg13[%c1_25, %c1_26, %c0_27] : memref<18x18x32xf32, #tpu.memory_space<vmem>>, vector<16x16x32xf32>
    %25 = vector.shape_cast %24 : vector<16x16x32xf32> to vector<256x32xf32>
    %c1_28 = arith.constant 1 : index
    %c2_29 = arith.constant 2 : index
    %c0_30 = arith.constant 0 : index
    %26 = vector.load %arg13[%c1_28, %c2_29, %c0_30] : memref<18x18x32xf32, #tpu.memory_space<vmem>>, vector<16x16x32xf32>
    %27 = vector.shape_cast %26 : vector<16x16x32xf32> to vector<256x32xf32>
    %c2_31 = arith.constant 2 : index
    %c0_32 = arith.constant 0 : index
    %c0_33 = arith.constant 0 : index
    %28 = vector.load %arg13[%c2_31, %c0_32, %c0_33] : memref<18x18x32xf32, #tpu.memory_space<vmem>>, vector<16x16x32xf32>
    %29 = vector.shape_cast %28 : vector<16x16x32xf32> to vector<256x32xf32>
    %c2_34 = arith.constant 2 : index
    %c1_35 = arith.constant 1 : index
    %c0_36 = arith.constant 0 : index
    %30 = vector.load %arg13[%c2_34, %c1_35, %c0_36] : memref<18x18x32xf32, #tpu.memory_space<vmem>>, vector<16x16x32xf32>
    %31 = vector.shape_cast %30 : vector<16x16x32xf32> to vector<256x32xf32>
    %c2_37 = arith.constant 2 : index
    %c2_38 = arith.constant 2 : index
    %c0_39 = arith.constant 0 : index
    %32 = vector.load %arg13[%c2_37, %c2_38, %c0_39] : memref<18x18x32xf32, #tpu.memory_space<vmem>>, vector<16x16x32xf32>
    %33 = vector.shape_cast %32 : vector<16x16x32xf32> to vector<256x32xf32>
    %34 = tpu.concatenate %17, %19, %21, %23, %25, %27, %29, %31, %33 in 1 : vector<256x32xf32>, vector<256x32xf32>, vector<256x32xf32>, vector<256x32xf32>, vector<256x32xf32>, vector<256x32xf32>, vector<256x32xf32>, vector<256x32xf32>, vector<256x32xf32> -> vector<256x288xf32>
    %35 = arith.truncf %34 : vector<256x288xf32> to vector<256x288xbf16>
    %c0_40 = arith.constant 0 : index
    %c0_41 = arith.constant 0 : index
    %36 = vector.load %arg4[%c0_40, %c0_41] : memref<288x64xbf16, #tpu.memory_space<vmem>>, vector<288x64xbf16>
    %cst_42 = arith.constant dense<0.000000e+00> : vector<256x64xf32>
    %37 = tpu.matmul %35, %36, %cst_42 {dimension_numbers = #tpu.dot_dimension_numbers<[1], [0], [0], [1], [0, 0, 1, 1], [], []>} : vector<256x288xbf16>, vector<288x64xbf16>, vector<256x64xf32> -> vector<256x64xf32>
    %c0_43 = arith.constant 0 : index
    %c0_44 = arith.constant 0 : index
    %38 = vector.load %arg5[%c0_43, %c0_44] : memref<1x64xf32, #tpu.memory_space<vmem>>, vector<1x64xf32>
    %39 = vector.broadcast %38 : vector<1x64xf32> to vector<256x64xf32>
    %40 = arith.addf %37, %39 : vector<256x64xf32>
    %cst_45 = arith.constant 1.000000e-01 : f32
    %41 = vector.broadcast %cst_45 : f32 to vector<256x64xf32>
    %42 = arith.mulf %41, %40 : vector<256x64xf32>
    %43 = arith.maximumf %40, %42 : vector<256x64xf32>
    %44 = vector.shape_cast %43 : vector<256x64xf32> to vector<16x16x64xf32>
    %cst_46 = arith.constant 0.000000e+00 : f32
    %45 = vector.broadcast %cst_46 : f32 to vector<18x18x32xf32>
    %c0_47 = arith.constant 0 : index
    %c0_48 = arith.constant 0 : index
    %c0_49 = arith.constant 0 : index
    %46 = vector.load %arg14[%c0_47, %c0_48, %c0_49] : memref<18x18x32xf32, #tpu.memory_space<vmem>>, vector<18x18x32xf32>
    tpu.vector_store %arg14[%c0_47, %c0_48, %c0_49], %45 {strides = array<i32>} : memref<18x18x32xf32, #tpu.memory_space<vmem>>, vector<18x18x32xf32>,
    %cst_50 = arith.constant 0.000000e+00 : f32
    %47 = vector.broadcast %cst_50 : f32 to vector<18x18x32xf32>
    %c0_51 = arith.constant 0 : index
    %c0_52 = arith.constant 0 : index
    %c0_53 = arith.constant 0 : index
    %48 = vector.load %arg15[%c0_51, %c0_52, %c0_53] : memref<18x18x32xf32, #tpu.memory_space<vmem>>, vector<18x18x32xf32>
    tpu.vector_store %arg15[%c0_51, %c0_52, %c0_53], %47 {strides = array<i32>} : memref<18x18x32xf32, #tpu.memory_space<vmem>>, vector<18x18x32xf32>,
    %49 = vector.extract_strided_slice %44 {offsets = [0, 0, 0], sizes = [16, 16, 32], strides = [1, 1, 1]} : vector<16x16x64xf32> to vector<16x16x32xf32>
    %c1_54 = arith.constant 1 : index
    %c1_55 = arith.constant 1 : index
    %c0_56 = arith.constant 0 : index
    %50 = vector.load %arg14[%c1_54, %c1_55, %c0_56] : memref<18x18x32xf32, #tpu.memory_space<vmem>>, vector<16x16x32xf32>
    tpu.vector_store %arg14[%c1_54, %c1_55, %c0_56], %49 {strides = array<i32>} : memref<18x18x32xf32, #tpu.memory_space<vmem>>, vector<16x16x32xf32>,
    %51 = vector.extract_strided_slice %44 {offsets = [0, 0, 32], sizes = [16, 16, 32], strides = [1, 1, 1]} : vector<16x16x64xf32> to vector<16x16x32xf32>
    %c1_57 = arith.constant 1 : index
    %c1_58 = arith.constant 1 : index
    %c0_59 = arith.constant 0 : index
    %52 = vector.load %arg15[%c1_57, %c1_58, %c0_59] : memref<18x18x32xf32, #tpu.memory_space<vmem>>, vector<16x16x32xf32>
    tpu.vector_store %arg15[%c1_57, %c1_58, %c0_59], %51 {strides = array<i32>} : memref<18x18x32xf32, #tpu.memory_space<vmem>>, vector<16x16x32xf32>,
    %c0_60 = arith.constant 0 : index
    %c0_61 = arith.constant 0 : index
    %c0_62 = arith.constant 0 : index
    %53 = vector.load %arg14[%c0_60, %c0_61, %c0_62] : memref<18x18x32xf32, #tpu.memory_space<vmem>>, vector<16x16x32xf32>
    %54 = vector.shape_cast %53 : vector<16x16x32xf32> to vector<256x32xf32>
    %c0_63 = arith.constant 0 : index
    %c1_64 = arith.constant 1 : index
    %c0_65 = arith.constant 0 : index
    %55 = vector.load %arg14[%c0_63, %c1_64, %c0_65] : memref<18x18x32xf32, #tpu.memory_space<vmem>>, vector<16x16x32xf32>
    %56 = vector.shape_cast %55 : vector<16x16x32xf32> to vector<256x32xf32>
    %c0_66 = arith.constant 0 : index
    %c2_67 = arith.constant 2 : index
    %c0_68 = arith.constant 0 : index
    %57 = vector.load %arg14[%c0_66, %c2_67, %c0_68] : memref<18x18x32xf32, #tpu.memory_space<vmem>>, vector<16x16x32xf32>
    %58 = vector.shape_cast %57 : vector<16x16x32xf32> to vector<256x32xf32>
    %c1_69 = arith.constant 1 : index
    %c0_70 = arith.constant 0 : index
    %c0_71 = arith.constant 0 : index
    %59 = vector.load %arg14[%c1_69, %c0_70, %c0_71] : memref<18x18x32xf32, #tpu.memory_space<vmem>>, vector<16x16x32xf32>
    %60 = vector.shape_cast %59 : vector<16x16x32xf32> to vector<256x32xf32>
    %c1_72 = arith.constant 1 : index
    %c1_73 = arith.constant 1 : index
    %c0_74 = arith.constant 0 : index
    %61 = vector.load %arg14[%c1_72, %c1_73, %c0_74] : memref<18x18x32xf32, #tpu.memory_space<vmem>>, vector<16x16x32xf32>
    %62 = vector.shape_cast %61 : vector<16x16x32xf32> to vector<256x32xf32>
    %c1_75 = arith.constant 1 : index
    %c2_76 = arith.constant 2 : index
    %c0_77 = arith.constant 0 : index
    %63 = vector.load %arg14[%c1_75, %c2_76, %c0_77] : memref<18x18x32xf32, #tpu.memory_space<vmem>>, vector<16x16x32xf32>
    %64 = vector.shape_cast %63 : vector<16x16x32xf32> to vector<256x32xf32>
    %c2_78 = arith.constant 2 : index
    %c0_79 = arith.constant 0 : index
    %c0_80 = arith.constant 0 : index
    %65 = vector.load %arg14[%c2_78, %c0_79, %c0_80] : memref<18x18x32xf32, #tpu.memory_space<vmem>>, vector<16x16x32xf32>
    %66 = vector.shape_cast %65 : vector<16x16x32xf32> to vector<256x32xf32>
    %c2_81 = arith.constant 2 : index
    %c1_82 = arith.constant 1 : index
    %c0_83 = arith.constant 0 : index
    %67 = vector.load %arg14[%c2_81, %c1_82, %c0_83] : memref<18x18x32xf32, #tpu.memory_space<vmem>>, vector<16x16x32xf32>
    %68 = vector.shape_cast %67 : vector<16x16x32xf32> to vector<256x32xf32>
    %c2_84 = arith.constant 2 : index
    %c2_85 = arith.constant 2 : index
    %c0_86 = arith.constant 0 : index
    %69 = vector.load %arg14[%c2_84, %c2_85, %c0_86] : memref<18x18x32xf32, #tpu.memory_space<vmem>>, vector<16x16x32xf32>
    %70 = vector.shape_cast %69 : vector<16x16x32xf32> to vector<256x32xf32>
    %71 = tpu.concatenate %54, %56, %58, %60, %62, %64, %66, %68, %70 in 1 : vector<256x32xf32>, vector<256x32xf32>, vector<256x32xf32>, vector<256x32xf32>, vector<256x32xf32>, vector<256x32xf32>, vector<256x32xf32>, vector<256x32xf32>, vector<256x32xf32> -> vector<256x288xf32>
    %72 = arith.truncf %71 : vector<256x288xf32> to vector<256x288xbf16>
    %c0_87 = arith.constant 0 : index
    %c0_88 = arith.constant 0 : index
    %73 = vector.load %arg6[%c0_87, %c0_88] : memref<288x32xbf16, #tpu.memory_space<vmem>>, vector<288x32xbf16>
    %cst_89 = arith.constant dense<0.000000e+00> : vector<256x32xf32>
    %74 = tpu.matmul %72, %73, %cst_89 {dimension_numbers = #tpu.dot_dimension_numbers<[1], [0], [0], [1], [0, 0, 1, 1], [], []>} : vector<256x288xbf16>, vector<288x32xbf16>, vector<256x32xf32> -> vector<256x32xf32>
    %c0_90 = arith.constant 0 : index
    %c0_91 = arith.constant 0 : index
    %75 = vector.load %arg7[%c0_90, %c0_91] : memref<1x32xf32, #tpu.memory_space<vmem>>, vector<1x32xf32>
    %76 = vector.broadcast %75 : vector<1x32xf32> to vector<256x32xf32>
    %77 = arith.addf %74, %76 : vector<256x32xf32>
    %cst_92 = arith.constant 1.000000e-01 : f32
    %78 = vector.broadcast %cst_92 : f32 to vector<256x32xf32>
    %79 = arith.mulf %78, %77 : vector<256x32xf32>
    %80 = arith.maximumf %77, %79 : vector<256x32xf32>
    %c0_93 = arith.constant 0 : index
    %c0_94 = arith.constant 0 : index
    %c0_95 = arith.constant 0 : index
    %81 = vector.load %arg15[%c0_93, %c0_94, %c0_95] : memref<18x18x32xf32, #tpu.memory_space<vmem>>, vector<16x16x32xf32>
    %82 = vector.shape_cast %81 : vector<16x16x32xf32> to vector<256x32xf32>
    %c0_96 = arith.constant 0 : index
    %c1_97 = arith.constant 1 : index
    %c0_98 = arith.constant 0 : index
    %83 = vector.load %arg15[%c0_96, %c1_97, %c0_98] : memref<18x18x32xf32, #tpu.memory_space<vmem>>, vector<16x16x32xf32>
    %84 = vector.shape_cast %83 : vector<16x16x32xf32> to vector<256x32xf32>
    %c0_99 = arith.constant 0 : index
    %c2_100 = arith.constant 2 : index
    %c0_101 = arith.constant 0 : index
    %85 = vector.load %arg15[%c0_99, %c2_100, %c0_101] : memref<18x18x32xf32, #tpu.memory_space<vmem>>, vector<16x16x32xf32>
    %86 = vector.shape_cast %85 : vector<16x16x32xf32> to vector<256x32xf32>
    %c1_102 = arith.constant 1 : index
    %c0_103 = arith.constant 0 : index
    %c0_104 = arith.constant 0 : index
    %87 = vector.load %arg15[%c1_102, %c0_103, %c0_104] : memref<18x18x32xf32, #tpu.memory_space<vmem>>, vector<16x16x32xf32>
    %88 = vector.shape_cast %87 : vector<16x16x32xf32> to vector<256x32xf32>
    %c1_105 = arith.constant 1 : index
    %c1_106 = arith.constant 1 : index
    %c0_107 = arith.constant 0 : index
    %89 = vector.load %arg15[%c1_105, %c1_106, %c0_107] : memref<18x18x32xf32, #tpu.memory_space<vmem>>, vector<16x16x32xf32>
    %90 = vector.shape_cast %89 : vector<16x16x32xf32> to vector<256x32xf32>
    %c1_108 = arith.constant 1 : index
    %c2_109 = arith.constant 2 : index
    %c0_110 = arith.constant 0 : index
    %91 = vector.load %arg15[%c1_108, %c2_109, %c0_110] : memref<18x18x32xf32, #tpu.memory_space<vmem>>, vector<16x16x32xf32>
    %92 = vector.shape_cast %91 : vector<16x16x32xf32> to vector<256x32xf32>
    %c2_111 = arith.constant 2 : index
    %c0_112 = arith.constant 0 : index
    %c0_113 = arith.constant 0 : index
    %93 = vector.load %arg15[%c2_111, %c0_112, %c0_113] : memref<18x18x32xf32, #tpu.memory_space<vmem>>, vector<16x16x32xf32>
    %94 = vector.shape_cast %93 : vector<16x16x32xf32> to vector<256x32xf32>
    %c2_114 = arith.constant 2 : index
    %c1_115 = arith.constant 1 : index
    %c0_116 = arith.constant 0 : index
    %95 = vector.load %arg15[%c2_114, %c1_115, %c0_116] : memref<18x18x32xf32, #tpu.memory_space<vmem>>, vector<16x16x32xf32>
    %96 = vector.shape_cast %95 : vector<16x16x32xf32> to vector<256x32xf32>
    %c2_117 = arith.constant 2 : index
    %c2_118 = arith.constant 2 : index
    %c0_119 = arith.constant 0 : index
    %97 = vector.load %arg15[%c2_117, %c2_118, %c0_119] : memref<18x18x32xf32, #tpu.memory_space<vmem>>, vector<16x16x32xf32>
    %98 = vector.shape_cast %97 : vector<16x16x32xf32> to vector<256x32xf32>
    %99 = tpu.concatenate %82, %84, %86, %88, %90, %92, %94, %96, %98 in 1 : vector<256x32xf32>, vector<256x32xf32>, vector<256x32xf32>, vector<256x32xf32>, vector<256x32xf32>, vector<256x32xf32>, vector<256x32xf32>, vector<256x32xf32>, vector<256x32xf32> -> vector<256x288xf32>
    %100 = arith.truncf %99 : vector<256x288xf32> to vector<256x288xbf16>
    %c0_120 = arith.constant 0 : index
    %c0_121 = arith.constant 0 : index
    %101 = vector.load %arg8[%c0_120, %c0_121] : memref<288x32xbf16, #tpu.memory_space<vmem>>, vector<288x32xbf16>
    %cst_122 = arith.constant dense<0.000000e+00> : vector<256x32xf32>
    %102 = tpu.matmul %100, %101, %cst_122 {dimension_numbers = #tpu.dot_dimension_numbers<[1], [0], [0], [1], [0, 0, 1, 1], [], []>} : vector<256x288xbf16>, vector<288x32xbf16>, vector<256x32xf32> -> vector<256x32xf32>
    %c0_123 = arith.constant 0 : index
    %c0_124 = arith.constant 0 : index
    %103 = vector.load %arg9[%c0_123, %c0_124] : memref<1x32xf32, #tpu.memory_space<vmem>>, vector<1x32xf32>
    %104 = vector.broadcast %103 : vector<1x32xf32> to vector<256x32xf32>
    %105 = arith.addf %102, %104 : vector<256x32xf32>
    %cst_125 = arith.constant 1.000000e-01 : f32
    %106 = vector.broadcast %cst_125 : f32 to vector<256x32xf32>
    %107 = arith.mulf %106, %105 : vector<256x32xf32>
    %108 = arith.maximumf %105, %107 : vector<256x32xf32>
    %109 = tpu.concatenate %108, %80 in 1 : vector<256x32xf32>, vector<256x32xf32> -> vector<256x64xf32>
    %110 = arith.truncf %109 : vector<256x64xf32> to vector<256x64xbf16>
    %c0_126 = arith.constant 0 : index
    %c0_127 = arith.constant 0 : index
    %111 = vector.load %arg10[%c0_126, %c0_127] : memref<64x8xbf16, #tpu.memory_space<vmem>>, vector<64x8xbf16>
    %cst_128 = arith.constant dense<0.000000e+00> : vector<256x8xf32>
    %112 = tpu.matmul %110, %111, %cst_128 {dimension_numbers = #tpu.dot_dimension_numbers<[1], [0], [0], [1], [0, 0, 1, 1], [], []>} : vector<256x64xbf16>, vector<64x8xbf16>, vector<256x8xf32> -> vector<256x8xf32>
    %c0_129 = arith.constant 0 : index
    %c0_130 = arith.constant 0 : index
    %113 = vector.load %arg11[%c0_129, %c0_130] : memref<1x8xf32, #tpu.memory_space<vmem>>, vector<1x8xf32>
    %114 = vector.broadcast %113 : vector<1x8xf32> to vector<256x8xf32>
    %115 = arith.addf %112, %114 : vector<256x8xf32>
    %116 = vector.shape_cast %115 : vector<256x8xf32> to vector<16x16x8xf32>
    %c0_131 = arith.constant 0 : index
    %c0_132 = arith.constant 0 : index
    %c0_133 = arith.constant 0 : index
    %c0_134 = arith.constant 0 : index
    %117 = vector.load %arg12[%c0_131, %c0_132, %c0_133, %c0_134] : memref<1x16x16x8xf32, #tpu.memory_space<vmem>>, vector<1x16x16x8xf32>
    %118 = vector.shape_cast %117 : vector<1x16x16x8xf32> to vector<16x16x8xf32>
    %119 = vector.shape_cast %116 : vector<16x16x8xf32> to vector<1x16x16x8xf32>
    tpu.vector_store %arg12[%c0_131, %c0_132, %c0_133, %c0_134], %119 {strides = array<i32>} : memref<1x16x16x8xf32, #tpu.memory_space<vmem>>, vector<1x16x16x8xf32>,
    return
  }
  func.func @transform_0(%arg0: i32) -> (i32, i32, i32, i32) {
    %c0_i32 = arith.constant 0 : i32
    %c0_i32_0 = arith.constant 0 : i32
    %c0_i32_1 = arith.constant 0 : i32
    %c0_i32_2 = arith.constant 0 : i32
    return %arg0, %c0_i32, %c0_i32_0, %c0_i32_1 : i32, i32, i32, i32
  }
  func.func @transform_1(%arg0: i32) -> (i32, i32) {
    %c0_i32 = arith.constant 0 : i32
    %c0_i32_0 = arith.constant 0 : i32
    %c0_i32_1 = arith.constant 0 : i32
    return %c0_i32, %c0_i32_0 : i32, i32
  }
  func.func @transform_2(%arg0: i32) -> (i32, i32) {
    %c0_i32 = arith.constant 0 : i32
    %c0_i32_0 = arith.constant 0 : i32
    %c0_i32_1 = arith.constant 0 : i32
    return %c0_i32, %c0_i32_0 : i32, i32
  }
  func.func @transform_3(%arg0: i32) -> (i32, i32) {
    %c0_i32 = arith.constant 0 : i32
    %c0_i32_0 = arith.constant 0 : i32
    %c0_i32_1 = arith.constant 0 : i32
    return %c0_i32, %c0_i32_0 : i32, i32
  }
  func.func @transform_4(%arg0: i32) -> (i32, i32) {
    %c0_i32 = arith.constant 0 : i32
    %c0_i32_0 = arith.constant 0 : i32
    %c0_i32_1 = arith.constant 0 : i32
    return %c0_i32, %c0_i32_0 : i32, i32
  }
  func.func @transform_5(%arg0: i32) -> (i32, i32) {
    %c0_i32 = arith.constant 0 : i32
    %c0_i32_0 = arith.constant 0 : i32
    %c0_i32_1 = arith.constant 0 : i32
    return %c0_i32, %c0_i32_0 : i32, i32
  }
  func.func @transform_6(%arg0: i32) -> (i32, i32) {
    %c0_i32 = arith.constant 0 : i32
    %c0_i32_0 = arith.constant 0 : i32
    %c0_i32_1 = arith.constant 0 : i32
    return %c0_i32, %c0_i32_0 : i32, i32
  }
  func.func @transform_7(%arg0: i32) -> (i32, i32) {
    %c0_i32 = arith.constant 0 : i32
    %c0_i32_0 = arith.constant 0 : i32
    %c0_i32_1 = arith.constant 0 : i32
    return %c0_i32, %c0_i32_0 : i32, i32
  }
  func.func @transform_8(%arg0: i32) -> (i32, i32) {
    %c0_i32 = arith.constant 0 : i32
    %c0_i32_0 = arith.constant 0 : i32
    %c0_i32_1 = arith.constant 0 : i32
    return %c0_i32, %c0_i32_0 : i32, i32
  }
  func.func @transform_9(%arg0: i32) -> (i32, i32) {
    %c0_i32 = arith.constant 0 : i32
    %c0_i32_0 = arith.constant 0 : i32
    %c0_i32_1 = arith.constant 0 : i32
    return %c0_i32, %c0_i32_0 : i32, i32
  }
  func.func @transform_10(%arg0: i32) -> (i32, i32) {
    %c0_i32 = arith.constant 0 : i32
    %c0_i32_0 = arith.constant 0 : i32
    %c0_i32_1 = arith.constant 0 : i32
    return %c0_i32, %c0_i32_0 : i32, i32
  }
  func.func @transform_11(%arg0: i32) -> (i32, i32, i32, i32) {
    %c0_i32 = arith.constant 0 : i32
    %c0_i32_0 = arith.constant 0 : i32
    %c0_i32_1 = arith.constant 0 : i32
    %c0_i32_2 = arith.constant 0 : i32
    return %arg0, %c0_i32, %c0_i32_0, %c0_i32_1 : i32, i32, i32, i32
  }
}

</mosaic_0001>

<llo_original>
// kernel: _run_level.1
$region0: #{_run_level.1}
  #allocation0 [shape = 'u32[]', space=smem, size = 0x4, offset = 0x4, fixed_abs, tag = 'smem constant byte address 0x4 - core index']
  #allocation1 [shape = 'u32[144,128]{1,0:T(1,128)}', space=vmem, size = 0x12000, scoped, tag = 'internal scratch']
  #allocation2 [shape = 'f32[18,18,32]{2,1,0:T(8,128)}', space=vmem, size = 0x36000, scoped, tag = 'scratch operand']
  #allocation3 [shape = 'f32[18,18,32]{2,1,0:T(8,128)}', space=vmem, size = 0x36000, scoped, tag = 'scratch operand']
  #allocation4 [shape = 'f32[18,18,32]{2,1,0:T(8,128)}', space=vmem, size = 0x36000, scoped, tag = 'scratch operand']
  %s0 = inlined_call_operand.vmem [shape: f32[2,16,16,32], index: 0, kind: input, shape index: {}]
  %s1 = inlined_call_operand.vmem [shape: bf16[32,32], index: 1, kind: input, shape index: {}]
  %s2 = inlined_call_operand.vmem [shape: f32[1,32], index: 2, kind: input, shape index: {}]
  %s3 = inlined_call_operand.vmem [shape: bf16[288,64], index: 3, kind: input, shape index: {}]
  %s4 = inlined_call_operand.vmem [shape: f32[1,64], index: 4, kind: input, shape index: {}]
  %s5 = inlined_call_operand.vmem [shape: bf16[288,32], index: 5, kind: input, shape index: {}]
  %s6 = inlined_call_operand.vmem [shape: f32[1,32], index: 6, kind: input, shape index: {}]
  %s7 = inlined_call_operand.vmem [shape: bf16[288,32], index: 7, kind: input, shape index: {}]
  %s8 = inlined_call_operand.vmem [shape: f32[1,32], index: 8, kind: input, shape index: {}]
  %s9 = inlined_call_operand.vmem [shape: bf16[64,8], index: 9, kind: input, shape index: {}]
  %s10 = inlined_call_operand.vmem [shape: f32[1,8], index: 10, kind: input, shape index: {}]
  %s11 = inlined_call_operand.vmem [shape: f32[2,16,16,8], index: 11, kind: output, shape index: {}]
  %s12 = sld [smem:[#allocation0]]
  $region77: #{_run_level.1} parent=0
    _
  %s14 = ssub.s32 1, %s12
  %s15 = scalar_select 0, %s14, %s12
  loop: start=0, step=1, limit=4
  $region2: #{_run_level.1} parent=0 // loop_pre_header
    _
  $region3: #{_run_level.1} parent=0 // loop_header
    %s17 = sphi 0, %s21
    %p18 = scmp.ge.s32.totalorder %s17, 4
    %s27 = sphi 0, %s29
    %s30 = sphi 0, %s27
    %s31 = sphi 0, %s30
    %s47 = sphi 0, %s31
    %s51 = sphi 0, %s51
    %s53 = sphi 0, %s51
    %s54 = sphi 0, %s53
    %s68 = sphi 0, %s54
    %s72 = sphi 0, %s72
    %s74 = sphi 0, %s72
    %s75 = sphi 0, %s74
    %s89 = sphi 0, %s75
    %s93 = sphi 0, %s93
    %s95 = sphi 0, %s93
    %s96 = sphi 0, %s95
    %s110 = sphi 0, %s96
    %s114 = sphi 0, %s114
    %s116 = sphi 0, %s114
    %s117 = sphi 0, %s116
    %s131 = sphi 0, %s117
    %s135 = sphi 0, %s135
    %s137 = sphi 0, %s135
    %s138 = sphi 0, %s137
    %s152 = sphi 0, %s138
    %s156 = sphi 0, %s156
    %s158 = sphi 0, %s156
    %s159 = sphi 0, %s158
    %s173 = sphi 0, %s159
    %s177 = sphi 0, %s177
    %s179 = sphi 0, %s177
    %s180 = sphi 0, %s179
    %s194 = sphi 0, %s180
    %s198 = sphi 0, %s198
    %s200 = sphi 0, %s198
    %s201 = sphi 0, %s200
    %s215 = sphi 0, %s201
    %s219 = sphi 0, %s219
    %s221 = sphi 0, %s219
    %s222 = sphi 0, %s221
    %s236 = sphi 0, %s222
    %s240 = sphi 0, %s240
    %s242 = sphi 0, %s240
    %s243 = sphi 0, %s242
    %s257 = sphi 0, %s243
    %s263 = sphi 0, %s265
    %s266 = sphi 0, %s263
    %s267 = sphi 0, %s266
    %s283 = sphi 0, %s267
  $region4: #{_run_level.1} parent=0 // loop_header_branch
    %20 = sbr.rel (%p18) target = $region8
  $region5: #{_run_level.1} parent=0 // loop_body
    %s22 = ssub.s32 %s17, 1
    %s23 = ssub.s32 %s17, 2
    %s24 = sadd.s32 %s17, 1
    %s25 = ssub.s32 %s17, %s24
    %p26 = scmp.eq.s32.totalorder %s25, 0
    %s28 = sadd.s32 %s27, 1
    %s29 = scalar_select %p26, %s27, %s28
    %p32 = pneg %p26
    %p33 = scmp.eq.s32.totalorder %s17, 1
    %p34 = por %p32, %p33
    %p35 = scmp.ne.s32.totalorder %s27, %s30
    %p36 = scmp.eq.s32.totalorder %s17, 0
    %p37 = por %p35, %p36
    %p38 = scmp.ne.s32.totalorder %s27, %s30
    %p39 = scmp.eq.s32.totalorder %s22, 1
    %p40 = por %p38, %p39
    %p41 = scmp.ne.s32.totalorder %s30, %s31
    %p42 = scmp.eq.s32.totalorder %s22, 0
    %p43 = por %p41, %p42
    %p44 = scmp.ne.s32.totalorder %s30, %s31
    %p45 = scmp.eq.s32.totalorder %s23, 1
    %p46 = por %p44, %p45
    %p48 = scmp.ne.s32.totalorder %s31, %s47
    %p49 = scmp.eq.s32.totalorder %s23, 0
    %p50 = por %p48, %p49
    %s52 = sadd.s32 %s51, 1
    %p55 = scmp.eq.s32.totalorder %s17, 1
    %p56 = scmp.ne.s32.totalorder %s51, %s53
    %p57 = scmp.eq.s32.totalorder %s17, 0
    %p58 = por %p56, %p57
    %p59 = scmp.ne.s32.totalorder %s51, %s53
    %p60 = scmp.eq.s32.totalorder %s22, 1
    %p61 = por %p59, %p60
    %p62 = scmp.ne.s32.totalorder %s53, %s54
    %p63 = scmp.eq.s32.totalorder %s22, 0
    %p64 = por %p62, %p63
    %p65 = scmp.ne.s32.totalorder %s53, %s54
    %p66 = scmp.eq.s32.totalorder %s23, 1
    %p67 = por %p65, %p66
    %p69 = scmp.ne.s32.totalorder %s54, %s68
    %p70 = scmp.eq.s32.totalorder %s23, 0
    %p71 = por %p69, %p70
    %s73 = sadd.s32 %s72, 1
    %p76 = scmp.eq.s32.totalorder %s17, 1
    %p77 = scmp.ne.s32.totalorder %s72, %s74
    %p78 = scmp.eq.s32.totalorder %s17, 0
    %p79 = por %p77, %p78
    %p80 = scmp.ne.s32.totalorder %s72, %s74
    %p81 = scmp.eq.s32.totalorder %s22, 1
    %p82 = por %p80, %p81
    %p83 = scmp.ne.s32.totalorder %s74, %s75
    %p84 = scmp.eq.s32.totalorder %s22, 0
    %p85 = por %p83, %p84
    %p86 = scmp.ne.s32.totalorder %s74, %s75
    %p87 = scmp.eq.s32.totalorder %s23, 1
    %p88 = por %p86, %p87
    %p90 = scmp.ne.s32.totalorder %s75, %s89
    %p91 = scmp.eq.s32.totalorder %s23, 0
    %p92 = por %p90, %p91
    %s94 = sadd.s32 %s93, 1
    %p97 = scmp.eq.s32.totalorder %s17, 1
    %p98 = scmp.ne.s32.totalorder %s93, %s95
    %p99 = scmp.eq.s32.totalorder %s17, 0
    %p100 = por %p98, %p99
    %p101 = scmp.ne.s32.totalorder %s93, %s95
    %p102 = scmp.eq.s32.totalorder %s22, 1
    %p103 = por %p101, %p102
    %p104 = scmp.ne.s32.totalorder %s95, %s96
    %p105 = scmp.eq.s32.totalorder %s22, 0
    %p106 = por %p104, %p105
    %p107 = scmp.ne.s32.totalorder %s95, %s96
    %p108 = scmp.eq.s32.totalorder %s23, 1
    %p109 = por %p107, %p108
    %p111 = scmp.ne.s32.totalorder %s96, %s110
    %p112 = scmp.eq.s32.totalorder %s23, 0
    %p113 = por %p111, %p112
    %s115 = sadd.s32 %s114, 1
    %p118 = scmp.eq.s32.totalorder %s17, 1
    %p119 = scmp.ne.s32.totalorder %s114, %s116
    %p120 = scmp.eq.s32.totalorder %s17, 0
    %p121 = por %p119, %p120
    %p122 = scmp.ne.s32.totalorder %s114, %s116
    %p123 = scmp.eq.s32.totalorder %s22, 1
    %p124 = por %p122, %p123
    %p125 = scmp.ne.s32.totalorder %s116, %s117
    %p126 = scmp.eq.s32.totalorder %s22, 0
    %p127 = por %p125, %p126
    %p128 = scmp.ne.s32.totalorder %s116, %s117
    %p129 = scmp.eq.s32.totalorder %s23, 1
    %p130 = por %p128, %p129
    %p132 = scmp.ne.s32.totalorder %s117, %s131
    %p133 = scmp.eq.s32.totalorder %s23, 0
    %p134 = por %p132, %p133
    %s136 = sadd.s32 %s135, 1
    %p139 = scmp.eq.s32.totalorder %s17, 1
    %p140 = scmp.ne.s32.totalorder %s135, %s137
    %p141 = scmp.eq.s32.totalorder %s17, 0
    %p142 = por %p140, %p141
    %p143 = scmp.ne.s32.totalorder %s135, %s137
    %p144 = scmp.eq.s32.totalorder %s22, 1
    %p145 = por %p143, %p144
    %p146 = scmp.ne.s32.totalorder %s137, %s138
    %p147 = scmp.eq.s32.totalorder %s22, 0
    %p148 = por %p146, %p147
    %p149 = scmp.ne.s32.totalorder %s137, %s138
    %p150 = scmp.eq.s32.totalorder %s23, 1
    %p151 = por %p149, %p150
    %p153 = scmp.ne.s32.totalorder %s138, %s152
    %p154 = scmp.eq.s32.totalorder %s23, 0
    %p155 = por %p153, %p154
    %s157 = sadd.s32 %s156, 1
    %p160 = scmp.eq.s32.totalorder %s17, 1
    %p161 = scmp.ne.s32.totalorder %s156, %s158
    %p162 = scmp.eq.s32.totalorder %s17, 0
    %p163 = por %p161, %p162
    %p164 = scmp.ne.s32.totalorder %s156, %s158
    %p165 = scmp.eq.s32.totalorder %s22, 1
    %p166 = por %p164, %p165
    %p167 = scmp.ne.s32.totalorder %s158, %s159
    %p168 = scmp.eq.s32.totalorder %s22, 0
    %p169 = por %p167, %p168
    %p170 = scmp.ne.s32.totalorder %s158, %s159
    %p171 = scmp.eq.s32.totalorder %s23, 1
    %p172 = por %p170, %p171
    %p174 = scmp.ne.s32.totalorder %s159, %s173
    %p175 = scmp.eq.s32.totalorder %s23, 0
    %p176 = por %p174, %p175
    %s178 = sadd.s32 %s177, 1
    %p181 = scmp.eq.s32.totalorder %s17, 1
    %p182 = scmp.ne.s32.totalorder %s177, %s179
    %p183 = scmp.eq.s32.totalorder %s17, 0
    %p184 = por %p182, %p183
    %p185 = scmp.ne.s32.totalorder %s177, %s179
    %p186 = scmp.eq.s32.totalorder %s22, 1
    %p187 = por %p185, %p186
    %p188 = scmp.ne.s32.totalorder %s179, %s180
    %p189 = scmp.eq.s32.totalorder %s22, 0
    %p190 = por %p188, %p189
    %p191 = scmp.ne.s32.totalorder %s179, %s180
    %p192 = scmp.eq.s32.totalorder %s23, 1
    %p193 = por %p191, %p192
    %p195 = scmp.ne.s32.totalorder %s180, %s194
    %p196 = scmp.eq.s32.totalorder %s23, 0
    %p197 = por %p195, %p196
    %s199 = sadd.s32 %s198, 1
    %p202 = scmp.eq.s32.totalorder %s17, 1
    %p203 = scmp.ne.s32.totalorder %s198, %s200
    %p204 = scmp.eq.s32.totalorder %s17, 0
    %p205 = por %p203, %p204
    %p206 = scmp.ne.s32.totalorder %s198, %s200
    %p207 = scmp.eq.s32.totalorder %s22, 1
    %p208 = por %p206, %p207
    %p209 = scmp.ne.s32.totalorder %s200, %s201
    %p210 = scmp.eq.s32.totalorder %s22, 0
    %p211 = por %p209, %p210
    %p212 = scmp.ne.s32.totalorder %s200, %s201
    %p213 = scmp.eq.s32.totalorder %s23, 1
    %p214 = por %p212, %p213
    %p216 = scmp.ne.s32.totalorder %s201, %s215
    %p217 = scmp.eq.s32.totalorder %s23, 0
    %p218 = por %p216, %p217
    %s220 = sadd.s32 %s219, 1
    %p223 = scmp.eq.s32.totalorder %s17, 1
    %p224 = scmp.ne.s32.totalorder %s219, %s221
    %p225 = scmp.eq.s32.totalorder %s17, 0
    %p226 = por %p224, %p225
    %p227 = scmp.ne.s32.totalorder %s219, %s221
    %p228 = scmp.eq.s32.totalorder %s22, 1
    %p229 = por %p227, %p228
    %p230 = scmp.ne.s32.totalorder %s221, %s222
    %p231 = scmp.eq.s32.totalorder %s22, 0
    %p232 = por %p230, %p231
    %p233 = scmp.ne.s32.totalorder %s221, %s222
    %p234 = scmp.eq.s32.totalorder %s23, 1
    %p235 = por %p233, %p234
    %p237 = scmp.ne.s32.totalorder %s222, %s236
    %p238 = scmp.eq.s32.totalorder %s23, 0
    %p239 = por %p237, %p238
    %s241 = sadd.s32 %s240, 1
    %p244 = scmp.eq.s32.totalorder %s17, 1
    %p245 = scmp.ne.s32.totalorder %s240, %s242
    %p246 = scmp.eq.s32.totalorder %s17, 0
    %p247 = por %p245, %p246
    %p248 = scmp.ne.s32.totalorder %s240, %s242
    %p249 = scmp.eq.s32.totalorder %s22, 1
    %p250 = por %p248, %p249
    %p251 = scmp.ne.s32.totalorder %s242, %s243
    %p252 = scmp.eq.s32.totalorder %s22, 0
    %p253 = por %p251, %p252
    %p254 = scmp.ne.s32.totalorder %s242, %s243
    %p255 = scmp.eq.s32.totalorder %s23, 1
    %p256 = por %p254, %p255
    %p258 = scmp.ne.s32.totalorder %s243, %s257
    %p259 = scmp.eq.s32.totalorder %s23, 0
    %p260 = por %p258, %p259
    %s261 = ssub.s32 %s17, %s24
    %p262 = scmp.eq.s32.totalorder %s261, 0
    %s264 = sadd.s32 %s263, 1
    %s265 = scalar_select %p262, %s263, %s264
    %p268 = pneg %p262
    %p269 = scmp.eq.s32.totalorder %s17, 1
    %p270 = por %p268, %p269
    %p271 = scmp.ne.s32.totalorder %s263, %s266
    %p272 = scmp.eq.s32.totalorder %s17, 0
    %p273 = por %p271, %p272
    %p274 = scmp.ne.s32.totalorder %s263, %s266
    %p275 = scmp.eq.s32.totalorder %s22, 1
    %p276 = por %p274, %p275
    %p277 = scmp.ne.s32.totalorder %s266, %s267
    %p278 = scmp.eq.s32.totalorder %s22, 0
    %p279 = por %p277, %p278
    %p280 = scmp.ne.s32.totalorder %s266, %s267
    %p281 = scmp.eq.s32.totalorder %s23, 1
    %p282 = por %p280, %p281
    %p284 = scmp.ne.s32.totalorder %s267, %s283
    %p285 = scmp.eq.s32.totalorder %s23, 0
    %p286 = por %p284, %p285
    %p287 = scmp.le.s32.totalorder 1, %s17
    %p288 = scmp.lt.s32.totalorder %s17, 3
    %p289 = pnand %p287, %p288
    %p290 = pneg %p289
    // Predicated region
    $region9: #{_run_level.1} parent=5 // pred_check
      _
    $region10: #{_run_level.1} parent=5 // pred_check_branch
      %292 = sbr.rel (%p289) target = $region12
    $region11: #{_run_level.1} parent=5 // pred_region
      %s293 = ssub.s32 %s17, 1
      // Predicated region
      $region13: #{_run_level.1} parent=11 // pred_check
        %p294 = pneg %p64
      $region14: #{_run_level.1} parent=11 // pred_check_branch
        %296 = sbr.rel (%p294) target = $region16
      $region15: #{_run_level.1} parent=11 // pred_region
        _
      $region16: #{_run_level.1} parent=11 // pred_fallthru
        _
      // Predicated region
      $region17: #{_run_level.1} parent=11 // pred_check
        %p297 = pneg %p85
      $region18: #{_run_level.1} parent=11 // pred_check_branch
        %299 = sbr.rel (%p297) target = $region20
      $region19: #{_run_level.1} parent=11 // pred_region
        _
      $region20: #{_run_level.1} parent=11 // pred_fallthru
        _
      // Predicated region
      $region21: #{_run_level.1} parent=11 // pred_check
        %p300 = pneg %p106
      $region22: #{_run_level.1} parent=11 // pred_check_branch
        %302 = sbr.rel (%p300) target = $region24
      $region23: #{_run_level.1} parent=11 // pred_region
        _
      $region24: #{_run_level.1} parent=11 // pred_fallthru
        _
      // Predicated region
      $region25: #{_run_level.1} parent=11 // pred_check
        %p303 = pneg %p127
      $region26: #{_run_level.1} parent=11 // pred_check_branch
        %305 = sbr.rel (%p303) target = $region28
      $region27: #{_run_level.1} parent=11 // pred_region
        _
      $region28: #{_run_level.1} parent=11 // pred_fallthru
        _
      // Predicated region
      $region29: #{_run_level.1} parent=11 // pred_check
        %p306 = pneg %p148
      $region30: #{_run_level.1} parent=11 // pred_check_branch
        %308 = sbr.rel (%p306) target = $region32
      $region31: #{_run_level.1} parent=11 // pred_region
        _
      $region32: #{_run_level.1} parent=11 // pred_fallthru
        _
      // Predicated region
      $region33: #{_run_level.1} parent=11 // pred_check
        %p309 = pneg %p169
      $region34: #{_run_level.1} parent=11 // pred_check_branch
        %311 = sbr.rel (%p309) target = $region36
      $region35: #{_run_level.1} parent=11 // pred_region
        _
      $region36: #{_run_level.1} parent=11 // pred_fallthru
        _
      // Predicated region
      $region37: #{_run_level.1} parent=11 // pred_check
        %p312 = pneg %p190
      $region38: #{_run_level.1} parent=11 // pred_check_branch
        %314 = sbr.rel (%p312) target = $region40
      $region39: #{_run_level.1} parent=11 // pred_region
        _
      $region40: #{_run_level.1} parent=11 // pred_fallthru
        _
      // Predicated region
      $region41: #{_run_level.1} parent=11 // pred_check
        %p315 = pneg %p211
      $region42: #{_run_level.1} parent=11 // pred_check_branch
        %317 = sbr.rel (%p315) target = $region44
      $region43: #{_run_level.1} parent=11 // pred_region
        _
      $region44: #{_run_level.1} parent=11 // pred_fallthru
        _
      // Predicated region
      $region45: #{_run_level.1} parent=11 // pred_check
        %p318 = pneg %p232
      $region46: #{_run_level.1} parent=11 // pred_check_branch
        %320 = sbr.rel (%p318) target = $region48
      $region47: #{_run_level.1} parent=11 // pred_region
        _
      $region48: #{_run_level.1} parent=11 // pred_fallthru
        _
      // Predicated region
      $region49: #{_run_level.1} parent=11 // pred_check
        %p321 = pneg %p253
      $region50: #{_run_level.1} parent=11 // pred_check_branch
        %323 = sbr.rel (%p321) target = $region52
      $region51: #{_run_level.1} parent=11 // pred_region
        _
      $region52: #{_run_level.1} parent=11 // pred_fallthru
        _
    $region12: #{_run_level.1} parent=5 // pred_fallthru
      _
    %p324 = scmp.lt.s32.totalorder %s17, 2
    // Predicated region
    $region53: #{_run_level.1} parent=5 // pred_check
      %p325 = pneg %p324
    $region54: #{_run_level.1} parent=5 // pred_check_branch
      %327 = sbr.rel (%p325) target = $region56
    $region55: #{_run_level.1} parent=5 // pred_region
      // Predicated region
      $region57: #{_run_level.1} parent=55 // pred_check
        %p328 = pneg %p37
      $region58: #{_run_level.1} parent=55 // pred_check_branch
        %330 = sbr.rel (%p328) target = $region60
      $region59: #{_run_level.1} parent=55 // pred_region
        %p331 = scmp.lt.s32.totalorder %s17, 1
        %s332 = scalar_select %p331, %s17, 1
        %s333 = smul.addr %s332, 32
        %s334 = smul.addr %s333, 8
        %s335 = scalar_lea.vmem %s0, %s334
      $region60: #{_run_level.1} parent=55 // pred_fallthru
        _
    $region56: #{_run_level.1} parent=5 // pred_fallthru
      _
    %p336 = scmp.le.s32.totalorder 1, %s17
    %p337 = scmp.lt.s32.totalorder %s17, 3
    %p338 = pnand %p336, %p337
    %p339 = pneg %p338
    // Predicated region
    $region61: #{_run_level.1} parent=5 // pred_check
      _
    $region62: #{_run_level.1} parent=5 // pred_check_branch
      %341 = sbr.rel (%p338) target = $region64
    $region63: #{_run_level.1} parent=5 // pred_region
      %s342 = ssub.s32 %s17, 1
      %p343 = scmp.lt.s32.totalorder %s22, 1
      %s344 = scalar_select %p343, %s22, 1
      %s345 = smul.addr %s344, 32
      %s346 = smul.addr %s345, 8
      %s347 = scalar_lea.vmem %s0, %s346
      %p348 = pneg %p43
      %p349 = pneg %p40
      %p350 = pneg %p64
      %p351 = pneg %p61
      %p352 = pneg %p85
      %p353 = pneg %p82
      %p354 = pneg %p106
      %p355 = pneg %p103
      %p356 = pneg %p127
      %p357 = pneg %p124
      %p358 = pneg %p148
      %p359 = pneg %p145
      %p360 = pneg %p169
      %p361 = pneg %p166
      %p362 = pneg %p190
      %p363 = pneg %p187
      %p364 = pneg %p211
      %p365 = pneg %p208
      %p366 = pneg %p232
      %p367 = pneg %p229
      %p368 = pneg %p253
      %p369 = pneg %p250
      %p370 = pneg %p279
      %p371 = pneg %p276
      %p372 = scmp.lt.s32.totalorder %s22, 1
      %s373 = scalar_select %p372, %s22, 1
      %s374 = smul.addr %s373, 32
      %s375 = smul.addr %s374, 8
      %s376 = scalar_lea.vmem %s11, %s375
      %p377 = scmp.lt.s32.totalorder %s22, 1
      %s378 = scalar_select %p377, %s22, 1
      %s379 = smul.addr %s378, 32
      %s380 = smul.addr %s379, 8
      %s381 = scalar_lea.vmem %s0, %s380
      %p382 = scmp.lt.s32.totalorder %s22, 1
      %s383 = scalar_select %p382, %s22, 1
      %s384 = smul.addr %s383, 32
      %s385 = smul.addr %s384, 8
      %s386 = scalar_lea.vmem %s11, %s385
      %v388 = vld [vmem:[%s381] sm:$0xff]
      %v389 = vld [vmem:[%s381 + $0x8] sm:$0xff]
      %v390 = vld [vmem:[%s381 + $0x10] sm:$0xff]
      %v391 = vld [vmem:[%s381 + $0x18] sm:$0xff]
      %v392 = vld [vmem:[%s381 + $0x20] sm:$0xff]
      %v393 = vld [vmem:[%s381 + $0x28] sm:$0xff]
      %v394 = vld [vmem:[%s381 + $0x30] sm:$0xff]
      %v395 = vld [vmem:[%s381 + $0x38] sm:$0xff]
      %v396 = vld [vmem:[%s381 + $0x40] sm:$0xff]
      %v397 = vld [vmem:[%s381 + $0x48] sm:$0xff]
      %v398 = vld [vmem:[%s381 + $0x50] sm:$0xff]
      %v399 = vld [vmem:[%s381 + $0x58] sm:$0xff]
      %v400 = vld [vmem:[%s381 + $0x60] sm:$0xff]
      %v401 = vld [vmem:[%s381 + $0x68] sm:$0xff]
      %v402 = vld [vmem:[%s381 + $0x70] sm:$0xff]
      %v403 = vld [vmem:[%s381 + $0x78] sm:$0xff]
      %v404 = vld [vmem:[%s381 + $0x80] sm:$0xff]
      %v405 = vld [vmem:[%s381 + $0x88] sm:$0xff]
      %v406 = vld [vmem:[%s381 + $0x90] sm:$0xff]
      %v407 = vld [vmem:[%s381 + $0x98] sm:$0xff]
      %v408 = vld [vmem:[%s381 + $0xa0] sm:$0xff]
      %v409 = vld [vmem:[%s381 + $0xa8] sm:$0xff]
      %v410 = vld [vmem:[%s381 + $0xb0] sm:$0xff]
      %v411 = vld [vmem:[%s381 + $0xb8] sm:$0xff]
      %v412 = vld [vmem:[%s381 + $0xc0] sm:$0xff]
      %v413 = vld [vmem:[%s381 + $0xc8] sm:$0xff]
      %v414 = vld [vmem:[%s381 + $0xd0] sm:$0xff]
      %v415 = vld [vmem:[%s381 + $0xd8] sm:$0xff]
      %v416 = vld [vmem:[%s381 + $0xe0] sm:$0xff]
      %v417 = vld [vmem:[%s381 + $0xe8] sm:$0xff]
      %v418 = vld [vmem:[%s381 + $0xf0] sm:$0xff]
      %v419 = vld [vmem:[%s381 + $0xf8] sm:$0xff]
      %v420 = vpack.c.bf16 %v389, %v388
      %v421 = vpack.c.bf16 %v391, %v390
      %v422 = vpack.c.bf16 %v393, %v392
      %v423 = vpack.c.bf16 %v395, %v394
      %v424 = vpack.c.bf16 %v397, %v396
      %v425 = vpack.c.bf16 %v399, %v398
      %v426 = vpack.c.bf16 %v401, %v400
      %v427 = vpack.c.bf16 %v403, %v402
      %v428 = vpack.c.bf16 %v405, %v404
      %v429 = vpack.c.bf16 %v407, %v406
      %v430 = vpack.c.bf16 %v409, %v408
      %v431 = vpack.c.bf16 %v411, %v410
      %v432 = vpack.c.bf16 %v413, %v412
      %v433 = vpack.c.bf16 %v415, %v414
      %v434 = vpack.c.bf16 %v417, %v416
      %v435 = vpack.c.bf16 %v419, %v418
      %v436 = vld [vmem:[%s1] sm:$0xf]
      %v437 = vld [vmem:[%s1 + $0x4] sm:$0xf]
      %v438 = vld [vmem:[%s1 + $0x8] sm:$0xf]
      %v439 = vld [vmem:[%s1 + $0xc] sm:$0xf]
      %v440 = vld [vmem:[%s2] sm:$0x1]
      %v442 = vlaneseq
      %v443 = vshrl.u32 %v442, 7
      %v444 = vsub.s32 0, %v443
      %v445 = vrot.slane %v440, %v444
      %v451 = vunpack.c.l.b16 %v436
      %v452 = vunpack.c.l.b16 %v437
      %v453 = vunpack.c.l.b16 %v438
      %v454 = vunpack.c.l.b16 %v439
      %v455 = vpack.c.b16 %v452, %v451
      %v456 = vpack.c.b16 %v454, %v453
      %vm459 = vcmask 261120
      %v461 = vsel %vm459, %v420, 0
      %v464 = vsel %vm459, %v421, 0
      %v467 = vsel %vm459, %v422, 0
      %v470 = vsel %vm459, %v423, 0
      %v473 = vsel %vm459, %v424, 0
      %v476 = vsel %vm459, %v425, 0
      %v479 = vsel %vm459, %v426, 0
      %v482 = vsel %vm459, %v427, 0
      %v485 = vsel %vm459, %v428, 0
      %v488 = vsel %vm459, %v429, 0
      %v491 = vsel %vm459, %v430, 0
      %v494 = vsel %vm459, %v431, 0
      %v497 = vsel %vm459, %v432, 0
      %v500 = vsel %vm459, %v433, 0
      %v503 = vsel %vm459, %v434, 0
      %v506 = vsel %vm459, %v435, 0
      %508 = vmatprep.subr.bf16.mxu0 0
      %509 = vmatpush1.bf16.msra.mxu0 0
      %510 = vmatprep.subr.bf16.mxu0 0
      %511 = vmatpush1.bf16.msra.mxu0 0
      %512 = vmatprep.subr.bf16.mxu0 0
      %513 = vmatpush1.bf16.msra.mxu0 0
      %514 = vmatprep.subr.bf16.mxu0 0
      %515 = vmatpush1.bf16.msra.mxu0 0
      %516 = vmatprep.subr.bf16.mxu0 0
      %517 = vmatpush1.bf16.msra.mxu0 0
      %518 = vmatprep.subr.bf16.mxu0 0
      %519 = vmatpush1.bf16.msra.mxu0 0
      %520 = vmatprep.subr.bf16.mxu0 0
      %521 = vmatpush1.bf16.msra.mxu0 %v456
      %522 = vmatprep.subr.bf16.mxu0 0
      %523 = vmatpush1.bf16.msra.mxu0 %v455
      %524 = vmatprep.subr.bf16.mxu0 0
      %525 = vmatpush2.bf16.msra.mxu0 0
      %526 = vmatprep.subr.bf16.mxu0 0
      %527 = vmatpush2.bf16.msra.mxu0 0
      %528 = vmatprep.subr.bf16.mxu0 0
      %529 = vmatpush2.bf16.msra.mxu0 0
      %530 = vmatprep.subr.bf16.mxu0 0
      %531 = vmatpush2.bf16.msra.mxu0 0
      %532 = vmatprep.subr.bf16.mxu0 0
      %533 = vmatpush2.bf16.msra.mxu0 0
      %534 = vmatprep.subr.bf16.mxu0 0
      %535 = vmatpush2.bf16.msra.mxu0 0
      %536 = vmatprep.subr.bf16.mxu0 0
      %537 = vmatpush2.bf16.msra.mxu0 0
      %538 = vmatprep.subr.bf16.mxu0 0
      %539 = vmatpush2.bf16.msra.mxu0 0
      %540 = vmatprep.mubr.bf16.mxu0 0
      %541 = vmatmul.mubr.bf16.gmra.mxu0 %v461
      %v542 = vpop.f32.mrf.mxu0
      %v543 = vadd.f32 %v445, %v542
      %v544 = vpop.f32.mrf.mxu0
      %v545 = vpop.f32.mrf.mxu0
      %v546 = vadd.f32 %v445, %v545
      %v547 = vpop.f32.mrf.mxu0
      %548 = vmatprep.mubr.bf16.mxu0 0
      %549 = vmatmul.mubr.bf16.gmra.mxu0 %v464
      %v550 = vpop.f32.mrf.mxu0
      %v551 = vadd.f32 %v445, %v550
      %v552 = vpop.f32.mrf.mxu0
      %v553 = vpop.f32.mrf.mxu0
      %v554 = vadd.f32 %v445, %v553
      %v555 = vpop.f32.mrf.mxu0
      %556 = vmatprep.mubr.bf16.mxu0 0
      %557 = vmatmul.mubr.bf16.gmra.mxu0 %v467
      %v558 = vpop.f32.mrf.mxu0
      %v559 = vadd.f32 %v445, %v558
      %v560 = vpop.f32.mrf.mxu0
      %v561 = vpop.f32.mrf.mxu0
      %v562 = vadd.f32 %v445, %v561
      %v563 = vpop.f32.mrf.mxu0
      %564 = vmatprep.mubr.bf16.mxu0 0
      %565 = vmatmul.mubr.bf16.gmra.mxu0 %v470
      %v566 = vpop.f32.mrf.mxu0
      %v567 = vadd.f32 %v445, %v566
      %v568 = vpop.f32.mrf.mxu0
      %v569 = vpop.f32.mrf.mxu0
      %v570 = vadd.f32 %v445, %v569
      %v571 = vpop.f32.mrf.mxu0
      %572 = vmatprep.mubr.bf16.mxu0 0
      %573 = vmatmul.mubr.bf16.gmra.mxu0 %v473
      %v574 = vpop.f32.mrf.mxu0
      %v575 = vadd.f32 %v445, %v574
      %v576 = vpop.f32.mrf.mxu0
      %v577 = vpop.f32.mrf.mxu0
      %v578 = vadd.f32 %v445, %v577
      %v579 = vpop.f32.mrf.mxu0
      %580 = vmatprep.mubr.bf16.mxu0 0
      %581 = vmatmul.mubr.bf16.gmra.mxu0 %v476
      %v582 = vpop.f32.mrf.mxu0
      %v583 = vadd.f32 %v445, %v582
      %v584 = vpop.f32.mrf.mxu0
      %v585 = vpop.f32.mrf.mxu0
      %v586 = vadd.f32 %v445, %v585
      %v587 = vpop.f32.mrf.mxu0
      %588 = vmatprep.mubr.bf16.mxu0 0
      %589 = vmatmul.mubr.bf16.gmra.mxu0 %v479
      %v590 = vpop.f32.mrf.mxu0
      %v591 = vadd.f32 %v445, %v590
      %v592 = vpop.f32.mrf.mxu0
      %v593 = vpop.f32.mrf.mxu0
      %v594 = vadd.f32 %v445, %v593
      %v595 = vpop.f32.mrf.mxu0
      %596 = vmatprep.mubr.bf16.mxu0 0
      %597 = vmatmul.mubr.bf16.gmra.mxu0 %v482
      %v598 = vpop.f32.mrf.mxu0
      %v599 = vadd.f32 %v445, %v598
      %v600 = vpop.f32.mrf.mxu0
      %v601 = vpop.f32.mrf.mxu0
      %v602 = vadd.f32 %v445, %v601
      %v603 = vpop.f32.mrf.mxu0
      %604 = vmatprep.mubr.bf16.mxu0 0
      %605 = vmatmul.mubr.bf16.gmra.mxu0 %v485
      %v606 = vpop.f32.mrf.mxu0
      %v607 = vadd.f32 %v445, %v606
      %v608 = vpop.f32.mrf.mxu0
      %v609 = vpop.f32.mrf.mxu0
      %v610 = vadd.f32 %v445, %v609
      %v611 = vpop.f32.mrf.mxu0
      %612 = vmatprep.mubr.bf16.mxu0 0
      %613 = vmatmul.mubr.bf16.gmra.mxu0 %v488
      %v614 = vpop.f32.mrf.mxu0
      %v615 = vadd.f32 %v445, %v614
      %v616 = vpop.f32.mrf.mxu0
      %v617 = vpop.f32.mrf.mxu0
      %v618 = vadd.f32 %v445, %v617
      %v619 = vpop.f32.mrf.mxu0
      %620 = vmatprep.mubr.bf16.mxu0 0
      %621 = vmatmul.mubr.bf16.gmra.mxu0 %v491
      %v622 = vpop.f32.mrf.mxu0
      %v623 = vadd.f32 %v445, %v622
      %v624 = vpop.f32.mrf.mxu0
      %v625 = vpop.f32.mrf.mxu0
      %v626 = vadd.f32 %v445, %v625
      %v627 = vpop.f32.mrf.mxu0
      %628 = vmatprep.mubr.bf16.mxu0 0
      %629 = vmatmul.mubr.bf16.gmra.mxu0 %v494
      %v630 = vpop.f32.mrf.mxu0
      %v631 = vadd.f32 %v445, %v630
      %v632 = vpop.f32.mrf.mxu0
      %v633 = vpop.f32.mrf.mxu0
      %v634 = vadd.f32 %v445, %v633
      %v635 = vpop.f32.mrf.mxu0
      %636 = vmatprep.mubr.bf16.mxu0 0
      %637 = vmatmul.mubr.bf16.gmra.mxu0 %v497
      %v638 = vpop.f32.mrf.mxu0
      %v639 = vadd.f32 %v445, %v638
      %v640 = vpop.f32.mrf.mxu0
      %v641 = vpop.f32.mrf.mxu0
      %v642 = vadd.f32 %v445, %v641
      %v643 = vpop.f32.mrf.mxu0
      %644 = vmatprep.mubr.bf16.mxu0 0
      %645 = vmatmul.mubr.bf16.gmra.mxu0 %v500
      %v646 = vpop.f32.mrf.mxu0
      %v647 = vadd.f32 %v445, %v646
      %v648 = vpop.f32.mrf.mxu0
      %v649 = vpop.f32.mrf.mxu0
      %v650 = vadd.f32 %v445, %v649
      %v651 = vpop.f32.mrf.mxu0
      %652 = vmatprep.mubr.bf16.mxu0 0
      %653 = vmatmul.mubr.bf16.gmra.mxu0 %v503
      %v654 = vpop.f32.mrf.mxu0
      %v655 = vadd.f32 %v445, %v654
      %v656 = vpop.f32.mrf.mxu0
      %v657 = vpop.f32.mrf.mxu0
      %v658 = vadd.f32 %v445, %v657
      %v659 = vpop.f32.mrf.mxu0
      %660 = vmatprep.mubr.bf16.mxu0 0
      %661 = vmatmul.mubr.bf16.gmra.mxu0 %v506
      %v662 = vpop.f32.mrf.mxu0
      %v663 = vadd.f32 %v445, %v662
      %v664 = vpop.f32.mrf.mxu0
      %v665 = vpop.f32.mrf.mxu0
      %v666 = vadd.f32 %v445, %v665
      %v667 = vpop.f32.mrf.mxu0
      %668 = vdwg.mxu0
      %v669 = vmul.f32 %v543, 0.1
      %v670 = vmul.f32 %v546, 0.1
      %v671 = vmul.f32 %v551, 0.1
      %v672 = vmul.f32 %v554, 0.1
      %v673 = vmul.f32 %v559, 0.1
      %v674 = vmul.f32 %v562, 0.1
      %v675 = vmul.f32 %v567, 0.1
      %v676 = vmul.f32 %v570, 0.1
      %v677 = vmul.f32 %v575, 0.1
      %v678 = vmul.f32 %v578, 0.1
      %v679 = vmul.f32 %v583, 0.1
      %v680 = vmul.f32 %v586, 0.1
      %v681 = vmul.f32 %v591, 0.1
      %v682 = vmul.f32 %v594, 0.1
      %v683 = vmul.f32 %v599, 0.1
      %v684 = vmul.f32 %v602, 0.1
      %v685 = vmul.f32 %v607, 0.1
      %v686 = vmul.f32 %v610, 0.1
      %v687 = vmul.f32 %v615, 0.1
      %v688 = vmul.f32 %v618, 0.1
      %v689 = vmul.f32 %v623, 0.1
      %v690 = vmul.f32 %v626, 0.1
      %v691 = vmul.f32 %v631, 0.1
      %v692 = vmul.f32 %v634, 0.1
      %v693 = vmul.f32 %v639, 0.1
      %v694 = vmul.f32 %v642, 0.1
      %v695 = vmul.f32 %v647, 0.1
      %v696 = vmul.f32 %v650, 0.1
      %v697 = vmul.f32 %v655, 0.1
      %v698 = vmul.f32 %v658, 0.1
      %v699 = vmul.f32 %v663, 0.1
      %v700 = vmul.f32 %v666, 0.1
      %v701 = vmax.f32 %v543, %v669
      %v702 = vmax.f32 %v546, %v670
      %v703 = vmax.f32 %v551, %v671
      %v704 = vmax.f32 %v554, %v672
      %v705 = vmax.f32 %v559, %v673
      %v706 = vmax.f32 %v562, %v674
      %v707 = vmax.f32 %v567, %v675
      %v708 = vmax.f32 %v570, %v676
      %v709 = vmax.f32 %v575, %v677
      %v710 = vmax.f32 %v578, %v678
      %v711 = vmax.f32 %v583, %v679
      %v712 = vmax.f32 %v586, %v680
      %v713 = vmax.f32 %v591, %v681
      %v714 = vmax.f32 %v594, %v682
      %v715 = vmax.f32 %v599, %v683
      %v716 = vmax.f32 %v602, %v684
      %v717 = vmax.f32 %v607, %v685
      %v718 = vmax.f32 %v610, %v686
      %v719 = vmax.f32 %v615, %v687
      %v720 = vmax.f32 %v618, %v688
      %v721 = vmax.f32 %v623, %v689
      %v722 = vmax.f32 %v626, %v690
      %v723 = vmax.f32 %v631, %v691
      %v724 = vmax.f32 %v634, %v692
      %v725 = vmax.f32 %v639, %v693
      %v726 = vmax.f32 %v642, %v694
      %v727 = vmax.f32 %v647, %v695
      %v728 = vmax.f32 %v650, %v696
      %v729 = vmax.f32 %v655, %v697
      %v730 = vmax.f32 %v658, %v698
      %v731 = vmax.f32 %v663, %v699
      %v732 = vmax.f32 %v666, %v700
      %733 = vst.msk [vmem:[#allocation2] sm:$0xff] %vm459, 0.0
      %734 = vst.msk [vmem:[#allocation2 + $0x8] sm:$0xff] %vm459, 0.0
      %vm735 = vcmask 254976
      %736 = vst.msk [vmem:[#allocation2 + $0x10] sm:$0x3] %vm735, 0.0
      %737 = vst.msk [vmem:[#allocation2 + $0x18] sm:$0xff] %vm459, 0.0
      %738 = vst.msk [vmem:[#allocation2 + $0x20] sm:$0xff] %vm459, 0.0
      %739 = vst.msk [vmem:[#allocation2 + $0x28] sm:$0x3] %vm735, 0.0
      %740 = vst.msk [vmem:[#allocation2 + $0x30] sm:$0xff] %vm459, 0.0
      %741 = vst.msk [vmem:[#allocation2 + $0x38] sm:$0xff] %vm459, 0.0
      %742 = vst.msk [vmem:[#allocation2 + $0x40] sm:$0x3] %vm735, 0.0
      %743 = vst.msk [vmem:[#allocation2 + $0x48] sm:$0xff] %vm459, 0.0
      %744 = vst.msk [vmem:[#allocation2 + $0x50] sm:$0xff] %vm459, 0.0
      %745 = vst.msk [vmem:[#allocation2 + $0x58] sm:$0x3] %vm735, 0.0
      %746 = vst.msk [vmem:[#allocation2 + $0x60] sm:$0xff] %vm459, 0.0
      %747 = vst.msk [vmem:[#allocation2 + $0x68] sm:$0xff] %vm459, 0.0
      %748 = vst.msk [vmem:[#allocation2 + $0x70] sm:$0x3] %vm735, 0.0
      %749 = vst.msk [vmem:[#allocation2 + $0x78] sm:$0xff] %vm459, 0.0
      %750 = vst.msk [vmem:[#allocation2 + $0x80] sm:$0xff] %vm459, 0.0
      %751 = vst.msk [vmem:[#allocation2 + $0x88] sm:$0x3] %vm735, 0.0
      %752 = vst.msk [vmem:[#allocation2 + $0x90] sm:$0xff] %vm459, 0.0
      %753 = vst.msk [vmem:[#allocation2 + $0x98] sm:$0xff] %vm459, 0.0
      %754 = vst.msk [vmem:[#allocation2 + $0xa0] sm:$0x3] %vm735, 0.0
      %755 = vst.msk [vmem:[#allocation2 + $0xa8] sm:$0xff] %vm459, 0.0
      %756 = vst.msk [vmem:[#allocation2 + $0xb0] sm:$0xff] %vm459, 0.0
      %757 = vst.msk [vmem:[#allocation2 + $0xb8] sm:$0x3] %vm735, 0.0
      %758 = vst.msk [vmem:[#allocation2 + $0xc0] sm:$0xff] %vm459, 0.0
      %759 = vst.msk [vmem:[#allocation2 + $0xc8] sm:$0xff] %vm459, 0.0
      %760 = vst.msk [vmem:[#allocation2 + $0xd0] sm:$0x3] %vm735, 0.0
      %761 = vst.msk [vmem:[#allocation2 + $0xd8] sm:$0xff] %vm459, 0.0
      %762 = vst.msk [vmem:[#allocation2 + $0xe0] sm:$0xff] %vm459, 0.0
      %763 = vst.msk [vmem:[#allocation2 + $0xe8] sm:$0x3] %vm735, 0.0
      %764 = vst.msk [vmem:[#allocation2 + $0xf0] sm:$0xff] %vm459, 0.0
      %765 = vst.msk [vmem:[#allocation2 + $0xf8] sm:$0xff] %vm459, 0.0
      %766 = vst.msk [vmem:[#allocation2 + $0x100] sm:$0x3] %vm735, 0.0
      %767 = vst.msk [vmem:[#allocation2 + $0x108] sm:$0xff] %vm459, 0.0
      %768 = vst.msk [vmem:[#allocation2 + $0x110] sm:$0xff] %vm459, 0.0
      %769 = vst.msk [vmem:[#allocation2 + $0x118] sm:$0x3] %vm735, 0.0
      %770 = vst.msk [vmem:[#allocation2 + $0x120] sm:$0xff] %vm459, 0.0
      %771 = vst.msk [vmem:[#allocation2 + $0x128] sm:$0xff] %vm459, 0.0
      %772 = vst.msk [vmem:[#allocation2 + $0x130] sm:$0x3] %vm735, 0.0
      %773 = vst.msk [vmem:[#allocation2 + $0x138] sm:$0xff] %vm459, 0.0
      %774 = vst.msk [vmem:[#allocation2 + $0x140] sm:$0xff] %vm459, 0.0
      %775 = vst.msk [vmem:[#allocation2 + $0x148] sm:$0x3] %vm735, 0.0
      %776 = vst.msk [vmem:[#allocation2 + $0x150] sm:$0xff] %vm459, 0.0
      %777 = vst.msk [vmem:[#allocation2 + $0x158] sm:$0xff] %vm459, 0.0
      %778 = vst.msk [vmem:[#allocation2 + $0x160] sm:$0x3] %vm735, 0.0
      %779 = vst.msk [vmem:[#allocation2 + $0x168] sm:$0xff] %vm459, 0.0
      %780 = vst.msk [vmem:[#allocation2 + $0x170] sm:$0xff] %vm459, 0.0
      %781 = vst.msk [vmem:[#allocation2 + $0x178] sm:$0x3] %vm735, 0.0
      %782 = vst.msk [vmem:[#allocation2 + $0x180] sm:$0xff] %vm459, 0.0
      %783 = vst.msk [vmem:[#allocation2 + $0x188] sm:$0xff] %vm459, 0.0
      %784 = vst.msk [vmem:[#allocation2 + $0x190] sm:$0x3] %vm735, 0.0
      %785 = vst.msk [vmem:[#allocation2 + $0x198] sm:$0xff] %vm459, 0.0
      %786 = vst.msk [vmem:[#allocation2 + $0x1a0] sm:$0xff] %vm459, 0.0
      %787 = vst.msk [vmem:[#allocation2 + $0x1a8] sm:$0x3] %vm735, 0.0
      %s788 = scalar_lea.vmem [#allocation2], 24
      %789 = vst.msk [vmem:[%s788 + $0x1] sm:$0xff] %vm459, %v701
      %790 = vst.msk [vmem:[%s788 + $0x9] sm:$0xff] %vm459, %v702
      %791 = vst.msk [vmem:[%s788 + $0x19] sm:$0xff] %vm459, %v703
      %792 = vst.msk [vmem:[%s788 + $0x21] sm:$0xff] %vm459, %v704
      %793 = vst.msk [vmem:[%s788 + $0x31] sm:$0xff] %vm459, %v705
      %794 = vst.msk [vmem:[%s788 + $0x39] sm:$0xff] %vm459, %v706
      %795 = vst.msk [vmem:[%s788 + $0x49] sm:$0xff] %vm459, %v707
      %796 = vst.msk [vmem:[%s788 + $0x51] sm:$0xff] %vm459, %v708
      %797 = vst.msk [vmem:[%s788 + $0x61] sm:$0xff] %vm459, %v709
      %798 = vst.msk [vmem:[%s788 + $0x69] sm:$0xff] %vm459, %v710
      %799 = vst.msk [vmem:[%s788 + $0x79] sm:$0xff] %vm459, %v711
      %800 = vst.msk [vmem:[%s788 + $0x81] sm:$0xff] %vm459, %v712
      %801 = vst.msk [vmem:[%s788 + $0x91] sm:$0xff] %vm459, %v713
      %802 = vst.msk [vmem:[%s788 + $0x99] sm:$0xff] %vm459, %v714
      %803 = vst.msk [vmem:[%s788 + $0xa9] sm:$0xff] %vm459, %v715
      %804 = vst.msk [vmem:[%s788 + $0xb1] sm:$0xff] %vm459, %v716
      %805 = vst.msk [vmem:[%s788 + $0xc1] sm:$0xff] %vm459, %v717
      %806 = vst.msk [vmem:[%s788 + $0xc9] sm:$0xff] %vm459, %v718
      %807 = vst.msk [vmem:[%s788 + $0xd9] sm:$0xff] %vm459, %v719
      %808 = vst.msk [vmem:[%s788 + $0xe1] sm:$0xff] %vm459, %v720
      %809 = vst.msk [vmem:[%s788 + $0xf1] sm:$0xff] %vm459, %v721
      %810 = vst.msk [vmem:[%s788 + $0xf9] sm:$0xff] %vm459, %v722
      %811 = vst.msk [vmem:[%s788 + $0x109] sm:$0xff] %vm459, %v723
      %812 = vst.msk [vmem:[%s788 + $0x111] sm:$0xff] %vm459, %v724
      %813 = vst.msk [vmem:[%s788 + $0x121] sm:$0xff] %vm459, %v725
      %814 = vst.msk [vmem:[%s788 + $0x129] sm:$0xff] %vm459, %v726
      %815 = vst.msk [vmem:[%s788 + $0x139] sm:$0xff] %vm459, %v727
      %816 = vst.msk [vmem:[%s788 + $0x141] sm:$0xff] %vm459, %v728
      %817 = vst.msk [vmem:[%s788 + $0x151] sm:$0xff] %vm459, %v729
      %818 = vst.msk [vmem:[%s788 + $0x159] sm:$0xff] %vm459, %v730
      %819 = vst.msk [vmem:[%s788 + $0x169] sm:$0xff] %vm459, %v731
      %820 = vst.msk [vmem:[%s788 + $0x171] sm:$0xff] %vm459, %v732
      %v821 = vld [vmem:[#allocation2] sm:$0xff]
      %v822 = vld [vmem:[#allocation2 + $0x8] sm:$0xff]
      %v823 = vld [vmem:[#allocation2 + $0x18] sm:$0xff]
      %v824 = vld [vmem:[#allocation2 + $0x20] sm:$0xff]
      %v825 = vld [vmem:[#allocation2 + $0x30] sm:$0xff]
      %v826 = vld [vmem:[#allocation2 + $0x38] sm:$0xff]
      %v827 = vld [vmem:[#allocation2 + $0x48] sm:$0xff]
      %v828 = vld [vmem:[#allocation2 + $0x50] sm:$0xff]
      %v829 = vld [vmem:[#allocation2 + $0x60] sm:$0xff]
      %v830 = vld [vmem:[#allocation2 + $0x68] sm:$0xff]
      %v831 = vld [vmem:[#allocation2 + $0x78] sm:$0xff]
      %v832 = vld [vmem:[#allocation2 + $0x80] sm:$0xff]
      %v833 = vld [vmem:[#allocation2 + $0x90] sm:$0xff]
      %v834 = vld [vmem:[#allocation2 + $0x98] sm:$0xff]
      %v835 = vld [vmem:[#allocation2 + $0xa8] sm:$0xff]
      %v836 = vld [vmem:[#allocation2 + $0xb0] sm:$0xff]
      %v837 = vld [vmem:[#allocation2 + $0xc0] sm:$0xff]
      %v838 = vld [vmem:[#allocation2 + $0xc8] sm:$0xff]
      %v839 = vld [vmem:[#allocation2 + $0xd8] sm:$0xff]
      %v840 = vld [vmem:[#allocation2 + $0xe0] sm:$0xff]
      %v841 = vld [vmem:[#allocation2 + $0xf0] sm:$0xff]
      %v842 = vld [vmem:[#allocation2 + $0xf8] sm:$0xff]
      %v843 = vld [vmem:[#allocation2 + $0x108] sm:$0xff]
      %v844 = vld [vmem:[#allocation2 + $0x110] sm:$0xff]
      %v845 = vld [vmem:[#allocation2 + $0x120] sm:$0xff]
      %v846 = vld [vmem:[#allocation2 + $0x128] sm:$0xff]
      %v847 = vld [vmem:[#allocation2 + $0x138] sm:$0xff]
      %v848 = vld [vmem:[#allocation2 + $0x140] sm:$0xff]
      %v849 = vld [vmem:[#allocation2 + $0x150] sm:$0xff]
      %v850 = vld [vmem:[#allocation2 + $0x158] sm:$0xff]
      %v851 = vld [vmem:[#allocation2 + $0x168] sm:$0xff]
      %v852 = vld [vmem:[#allocation2 + $0x170] sm:$0xff]
      %v853 = vld [vmem:[#allocation2 + $0x1] sm:$0xff]
      %v854 = vld [vmem:[#allocation2 + $0x9] sm:$0xff]
      %v855 = vld [vmem:[#allocation2 + $0x19] sm:$0xff]
      %v856 = vld [vmem:[#allocation2 + $0x21] sm:$0xff]
      %v857 = vld [vmem:[#allocation2 + $0x31] sm:$0xff]
      %v858 = vld [vmem:[#allocation2 + $0x39] sm:$0xff]
      %v859 = vld [vmem:[#allocation2 + $0x49] sm:$0xff]
      %v860 = vld [vmem:[#allocation2 + $0x51] sm:$0xff]
      %v861 = vld [vmem:[#allocation2 + $0x61] sm:$0xff]
      %v862 = vld [vmem:[#allocation2 + $0x69] sm:$0xff]
      %v863 = vld [vmem:[#allocation2 + $0x79] sm:$0xff]
      %v864 = vld [vmem:[#allocation2 + $0x81] sm:$0xff]
      %v865 = vld [vmem:[#allocation2 + $0x91] sm:$0xff]
      %v866 = vld [vmem:[#allocation2 + $0x99] sm:$0xff]
      %v867 = vld [vmem:[#allocation2 + $0xa9] sm:$0xff]
      %v868 = vld [vmem:[#allocation2 + $0xb1] sm:$0xff]
      %v869 = vld [vmem:[#allocation2 + $0xc1] sm:$0xff]
      %v870 = vld [vmem:[#allocation2 + $0xc9] sm:$0xff]
      %v871 = vld [vmem:[#allocation2 + $0xd9] sm:$0xff]
      %v872 = vld [vmem:[#allocation2 + $0xe1] sm:$0xff]
      %v873 = vld [vmem:[#allocation2 + $0xf1] sm:$0xff]
      %v874 = vld [vmem:[#allocation2 + $0xf9] sm:$0xff]
      %v875 = vld [vmem:[#allocation2 + $0x109] sm:$0xff]
      %v876 = vld [vmem:[#allocation2 + $0x111] sm:$0xff]
      %v877 = vld [vmem:[#allocation2 + $0x121] sm:$0xff]
      %v878 = vld [vmem:[#allocation2 + $0x129] sm:$0xff]
      %v879 = vld [vmem:[#allocation2 + $0x139] sm:$0xff]
      %v880 = vld [vmem:[#allocation2 + $0x141] sm:$0xff]
      %v881 = vld [vmem:[#allocation2 + $0x151] sm:$0xff]
      %v882 = vld [vmem:[#allocation2 + $0x159] sm:$0xff]
      %v883 = vld [vmem:[#allocation2 + $0x169] sm:$0xff]
      %v884 = vld [vmem:[#allocation2 + $0x171] sm:$0xff]
      %v885 = vld [vmem:[#allocation2 + $0x2] sm:$0xff]
      %v886 = vld [vmem:[#allocation2 + $0xa] sm:$0xff]
      %v887 = vld [vmem:[#allocation2 + $0x1a] sm:$0xff]
      %v888 = vld [vmem:[#allocation2 + $0x22] sm:$0xff]
      %v889 = vld [vmem:[#allocation2 + $0x32] sm:$0xff]
      %v890 = vld [vmem:[#allocation2 + $0x3a] sm:$0xff]
      %v891 = vld [vmem:[#allocation2 + $0x4a] sm:$0xff]
      %v892 = vld [vmem:[#allocation2 + $0x52] sm:$0xff]
      %v893 = vld [vmem:[#allocation2 + $0x62] sm:$0xff]
      %v894 = vld [vmem:[#allocation2 + $0x6a] sm:$0xff]
      %v895 = vld [vmem:[#allocation2 + $0x7a] sm:$0xff]
      %v896 = vld [vmem:[#allocation2 + $0x82] sm:$0xff]
      %v897 = vld [vmem:[#allocation2 + $0x92] sm:$0xff]
      %v898 = vld [vmem:[#allocation2 + $0x9a] sm:$0xff]
      %v899 = vld [vmem:[#allocation2 + $0xaa] sm:$0xff]
      %v900 = vld [vmem:[#allocation2 + $0xb2] sm:$0xff]
      %v901 = vld [vmem:[#allocation2 + $0xc2] sm:$0xff]
      %v902 = vld [vmem:[#allocation2 + $0xca] sm:$0xff]
      %v903 = vld [vmem:[#allocation2 + $0xda] sm:$0xff]
      %v904 = vld [vmem:[#allocation2 + $0xe2] sm:$0xff]
      %v905 = vld [vmem:[#allocation2 + $0xf2] sm:$0xff]
      %v906 = vld [vmem:[#allocation2 + $0xfa] sm:$0xff]
      %v907 = vld [vmem:[#allocation2 + $0x10a] sm:$0xff]
      %v908 = vld [vmem:[#allocation2 + $0x112] sm:$0xff]
      %v909 = vld [vmem:[#allocation2 + $0x122] sm:$0xff]
      %v910 = vld [vmem:[#allocation2 + $0x12a] sm:$0xff]
      %v911 = vld [vmem:[#allocation2 + $0x13a] sm:$0xff]
      %v912 = vld [vmem:[#allocation2 + $0x142] sm:$0xff]
      %v913 = vld [vmem:[#allocation2 + $0x152] sm:$0xff]
      %v914 = vld [vmem:[#allocation2 + $0x15a] sm:$0xff]
      %v915 = vld [vmem:[#allocation2 + $0x16a] sm:$0xff]
      %v916 = vld [vmem:[#allocation2 + $0x172] sm:$0xff]
      %v917 = vld [vmem:[%s788] sm:$0xff]
      %v918 = vld [vmem:[%s788 + $0x8] sm:$0xff]
      %v919 = vld [vmem:[%s788 + $0x18] sm:$0xff]
      %v920 = vld [vmem:[%s788 + $0x20] sm:$0xff]
      %v921 = vld [vmem:[%s788 + $0x30] sm:$0xff]
      %v922 = vld [vmem:[%s788 + $0x38] sm:$0xff]
      %v923 = vld [vmem:[%s788 + $0x48] sm:$0xff]
      %v924 = vld [vmem:[%s788 + $0x50] sm:$0xff]
      %v925 = vld [vmem:[%s788 + $0x60] sm:$0xff]
      %v926 = vld [vmem:[%s788 + $0x68] sm:$0xff]
      %v927 = vld [vmem:[%s788 + $0x78] sm:$0xff]
      %v928 = vld [vmem:[%s788 + $0x80] sm:$0xff]
      %v929 = vld [vmem:[%s788 + $0x90] sm:$0xff]
      %v930 = vld [vmem:[%s788 + $0x98] sm:$0xff]
      %v931 = vld [vmem:[%s788 + $0xa8] sm:$0xff]
      %v932 = vld [vmem:[%s788 + $0xb0] sm:$0xff]
      %v933 = vld [vmem:[%s788 + $0xc0] sm:$0xff]
      %v934 = vld [vmem:[%s788 + $0xc8] sm:$0xff]
      %v935 = vld [vmem:[%s788 + $0xd8] sm:$0xff]
      %v936 = vld [vmem:[%s788 + $0xe0] sm:$0xff]
      %v937 = vld [vmem:[%s788 + $0xf0] sm:$0xff]
      %v938 = vld [vmem:[%s788 + $0xf8] sm:$0xff]
      %v939 = vld [vmem:[%s788 + $0x108] sm:$0xff]
      %v940 = vld [vmem:[%s788 + $0x110] sm:$0xff]
      %v941 = vld [vmem:[%s788 + $0x120] sm:$0xff]
      %v942 = vld [vmem:[%s788 + $0x128] sm:$0xff]
      %v943 = vld [vmem:[%s788 + $0x138] sm:$0xff]
      %v944 = vld [vmem:[%s788 + $0x140] sm:$0xff]
      %v945 = vld [vmem:[%s788 + $0x150] sm:$0xff]
      %v946 = vld [vmem:[%s788 + $0x158] sm:$0xff]
      %v947 = vld [vmem:[%s788 + $0x168] sm:$0xff]
      %v948 = vld [vmem:[%s788 + $0x170] sm:$0xff]
      %v949 = vld [vmem:[%s788 + $0x1] sm:$0xff]
      %v950 = vld [vmem:[%s788 + $0x9] sm:$0xff]
      %v951 = vld [vmem:[%s788 + $0x19] sm:$0xff]
      %v952 = vld [vmem:[%s788 + $0x21] sm:$0xff]
      %v953 = vld [vmem:[%s788 + $0x31] sm:$0xff]
      %v954 = vld [vmem:[%s788 + $0x39] sm:$0xff]
      %v955 = vld [vmem:[%s788 + $0x49] sm:$0xff]
      %v956 = vld [vmem:[%s788 + $0x51] sm:$0xff]
      %v957 = vld [vmem:[%s788 + $0x61] sm:$0xff]
      %v958 = vld [vmem:[%s788 + $0x69] sm:$0xff]
      %v959 = vld [vmem:[%s788 + $0x79] sm:$0xff]
      %v960 = vld [vmem:[%s788 + $0x81] sm:$0xff]
      %v961 = vld [vmem:[%s788 + $0x91] sm:$0xff]
      %v962 = vld [vmem:[%s788 + $0x99] sm:$0xff]
      %v963 = vld [vmem:[%s788 + $0xa9] sm:$0xff]
      %v964 = vld [vmem:[%s788 + $0xb1] sm:$0xff]
      %v965 = vld [vmem:[%s788 + $0xc1] sm:$0xff]
      %v966 = vld [vmem:[%s788 + $0xc9] sm:$0xff]
      %v967 = vld [vmem:[%s788 + $0xd9] sm:$0xff]
      %v968 = vld [vmem:[%s788 + $0xe1] sm:$0xff]
      %v969 = vld [vmem:[%s788 + $0xf1] sm:$0xff]
      %v970 = vld [vmem:[%s788 + $0xf9] sm:$0xff]
      %v971 = vld [vmem:[%s788 + $0x109] sm:$0xff]
      %v972 = vld [vmem:[%s788 + $0x111] sm:$0xff]
      %v973 = vld [vmem:[%s788 + $0x121] sm:$0xff]
      %v974 = vld [vmem:[%s788 + $0x129] sm:$0xff]
      %v975 = vld [vmem:[%s788 + $0x139] sm:$0xff]
      %v976 = vld [vmem:[%s788 + $0x141] sm:$0xff]
      %v977 = vld [vmem:[%s788 + $0x151] sm:$0xff]
      %v978 = vld [vmem:[%s788 + $0x159] sm:$0xff]
      %v979 = vld [vmem:[%s788 + $0x169] sm:$0xff]
      %v980 = vld [vmem:[%s788 + $0x171] sm:$0xff]
      %v981 = vld [vmem:[%s788 + $0x2] sm:$0xff]
      %v982 = vld [vmem:[%s788 + $0xa] sm:$0xff]
      %v983 = vld [vmem:[%s788 + $0x1a] sm:$0xff]
      %v984 = vld [vmem:[%s788 + $0x22] sm:$0xff]
      %v985 = vld [vmem:[%s788 + $0x32] sm:$0xff]
      %v986 = vld [vmem:[%s788 + $0x3a] sm:$0xff]
      %v987 = vld [vmem:[%s788 + $0x4a] sm:$0xff]
      %v988 = vld [vmem:[%s788 + $0x52] sm:$0xff]
      %v989 = vld [vmem:[%s788 + $0x62] sm:$0xff]
      %v990 = vld [vmem:[%s788 + $0x6a] sm:$0xff]
      %v991 = vld [vmem:[%s788 + $0x7a] sm:$0xff]
      %v992 = vld [vmem:[%s788 + $0x82] sm:$0xff]
      %v993 = vld [vmem:[%s788 + $0x92] sm:$0xff]
      %v994 = vld [vmem:[%s788 + $0x9a] sm:$0xff]
      %v995 = vld [vmem:[%s788 + $0xaa] sm:$0xff]
      %v996 = vld [vmem:[%s788 + $0xb2] sm:$0xff]
      %v997 = vld [vmem:[%s788 + $0xc2] sm:$0xff]
      %v998 = vld [vmem:[%s788 + $0xca] sm:$0xff]
      %v999 = vld [vmem:[%s788 + $0xda] sm:$0xff]
      %v1000 = vld [vmem:[%s788 + $0xe2] sm:$0xff]
      %v1001 = vld [vmem:[%s788 + $0xf2] sm:$0xff]
      %v1002 = vld [vmem:[%s788 + $0xfa] sm:$0xff]
      %v1003 = vld [vmem:[%s788 + $0x10a] sm:$0xff]
      %v1004 = vld [vmem:[%s788 + $0x112] sm:$0xff]
      %v1005 = vld [vmem:[%s788 + $0x122] sm:$0xff]
      %v1006 = vld [vmem:[%s788 + $0x12a] sm:$0xff]
      %v1007 = vld [vmem:[%s788 + $0x13a] sm:$0xff]
      %v1008 = vld [vmem:[%s788 + $0x142] sm:$0xff]
      %v1009 = vld [vmem:[%s788 + $0x152] sm:$0xff]
      %v1010 = vld [vmem:[%s788 + $0x15a] sm:$0xff]
      %v1011 = vld [vmem:[%s788 + $0x16a] sm:$0xff]
      %v1012 = vld [vmem:[%s788 + $0x172] sm:$0xff]
      %s1013 = scalar_lea.vmem [#allocation2], 48
      %v1014 = vld [vmem:[%s1013] sm:$0xff]
      %v1015 = vld [vmem:[%s1013 + $0x8] sm:$0xff]
      %v1016 = vld [vmem:[%s1013 + $0x18] sm:$0xff]
      %v1017 = vld [vmem:[%s1013 + $0x20] sm:$0xff]
      %v1018 = vld [vmem:[%s1013 + $0x30] sm:$0xff]
      %v1019 = vld [vmem:[%s1013 + $0x38] sm:$0xff]
      %v1020 = vld [vmem:[%s1013 + $0x48] sm:$0xff]
      %v1021 = vld [vmem:[%s1013 + $0x50] sm:$0xff]
      %v1022 = vld [vmem:[%s1013 + $0x60] sm:$0xff]
      %v1023 = vld [vmem:[%s1013 + $0x68] sm:$0xff]
      %v1024 = vld [vmem:[%s1013 + $0x78] sm:$0xff]
      %v1025 = vld [vmem:[%s1013 + $0x80] sm:$0xff]
      %v1026 = vld [vmem:[%s1013 + $0x90] sm:$0xff]
      %v1027 = vld [vmem:[%s1013 + $0x98] sm:$0xff]
      %v1028 = vld [vmem:[%s1013 + $0xa8] sm:$0xff]
      %v1029 = vld [vmem:[%s1013 + $0xb0] sm:$0xff]
      %v1030 = vld [vmem:[%s1013 + $0xc0] sm:$0xff]
      %v1031 = vld [vmem:[%s1013 + $0xc8] sm:$0xff]
      %v1032 = vld [vmem:[%s1013 + $0xd8] sm:$0xff]
      %v1033 = vld [vmem:[%s1013 + $0xe0] sm:$0xff]
      %v1034 = vld [vmem:[%s1013 + $0xf0] sm:$0xff]
      %v1035 = vld [vmem:[%s1013 + $0xf8] sm:$0xff]
      %v1036 = vld [vmem:[%s1013 + $0x108] sm:$0xff]
      %v1037 = vld [vmem:[%s1013 + $0x110] sm:$0xff]
      %v1038 = vld [vmem:[%s1013 + $0x120] sm:$0xff]
      %v1039 = vld [vmem:[%s1013 + $0x128] sm:$0xff]
      %v1040 = vld [vmem:[%s1013 + $0x138] sm:$0xff]
      %v1041 = vld [vmem:[%s1013 + $0x140] sm:$0xff]
      %v1042 = vld [vmem:[%s1013 + $0x150] sm:$0xff]
      %v1043 = vld [vmem:[%s1013 + $0x158] sm:$0xff]
      %v1044 = vld [vmem:[%s1013 + $0x168] sm:$0xff]
      %v1045 = vld [vmem:[%s1013 + $0x170] sm:$0xff]
      %v1046 = vld [vmem:[%s1013 + $0x1] sm:$0xff]
      %v1047 = vld [vmem:[%s1013 + $0x9] sm:$0xff]
      %v1048 = vld [vmem:[%s1013 + $0x19] sm:$0xff]
      %v1049 = vld [vmem:[%s1013 + $0x21] sm:$0xff]
      %v1050 = vld [vmem:[%s1013 + $0x31] sm:$0xff]
      %v1051 = vld [vmem:[%s1013 + $0x39] sm:$0xff]
      %v1052 = vld [vmem:[%s1013 + $0x49] sm:$0xff]
      %v1053 = vld [vmem:[%s1013 + $0x51] sm:$0xff]
      %v1054 = vld [vmem:[%s1013 + $0x61] sm:$0xff]
      %v1055 = vld [vmem:[%s1013 + $0x69] sm:$0xff]
      %v1056 = vld [vmem:[%s1013 + $0x79] sm:$0xff]
      %v1057 = vld [vmem:[%s1013 + $0x81] sm:$0xff]
      %v1058 = vld [vmem:[%s1013 + $0x91] sm:$0xff]
      %v1059 = vld [vmem:[%s1013 + $0x99] sm:$0xff]
      %v1060 = vld [vmem:[%s1013 + $0xa9] sm:$0xff]
      %v1061 = vld [vmem:[%s1013 + $0xb1] sm:$0xff]
      %v1062 = vld [vmem:[%s1013 + $0xc1] sm:$0xff]
      %v1063 = vld [vmem:[%s1013 + $0xc9] sm:$0xff]
      %v1064 = vld [vmem:[%s1013 + $0xd9] sm:$0xff]
      %v1065 = vld [vmem:[%s1013 + $0xe1] sm:$0xff]
      %v1066 = vld [vmem:[%s1013 + $0xf1] sm:$0xff]
      %v1067 = vld [vmem:[%s1013 + $0xf9] sm:$0xff]
      %v1068 = vld [vmem:[%s1013 + $0x109] sm:$0xff]
      %v1069 = vld [vmem:[%s1013 + $0x111] sm:$0xff]
      %v1070 = vld [vmem:[%s1013 + $0x121] sm:$0xff]
      %v1071 = vld [vmem:[%s1013 + $0x129] sm:$0xff]
      %v1072 = vld [vmem:[%s1013 + $0x139] sm:$0xff]
      %v1073 = vld [vmem:[%s1013 + $0x141] sm:$0xff]
      %v1074 = vld [vmem:[%s1013 + $0x151] sm:$0xff]
      %v1075 = vld [vmem:[%s1013 + $0x159] sm:$0xff]
      %v1076 = vld [vmem:[%s1013 + $0x169] sm:$0xff]
      %v1077 = vld [vmem:[%s1013 + $0x171] sm:$0xff]
      %v1078 = vld [vmem:[%s1013 + $0x2] sm:$0xff]
      %v1079 = vld [vmem:[%s1013 + $0xa] sm:$0xff]
      %v1080 = vld [vmem:[%s1013 + $0x1a] sm:$0xff]
      %v1081 = vld [vmem:[%s1013 + $0x22] sm:$0xff]
      %v1082 = vld [vmem:[%s1013 + $0x32] sm:$0xff]
      %v1083 = vld [vmem:[%s1013 + $0x3a] sm:$0xff]
      %v1084 = vld [vmem:[%s1013 + $0x4a] sm:$0xff]
      %v1085 = vld [vmem:[%s1013 + $0x52] sm:$0xff]
      %v1086 = vld [vmem:[%s1013 + $0x62] sm:$0xff]
      %v1087 = vld [vmem:[%s1013 + $0x6a] sm:$0xff]
      %v1088 = vld [vmem:[%s1013 + $0x7a] sm:$0xff]
      %v1089 = vld [vmem:[%s1013 + $0x82] sm:$0xff]
      %v1090 = vld [vmem:[%s1013 + $0x92] sm:$0xff]
      %v1091 = vld [vmem:[%s1013 + $0x9a] sm:$0xff]
      %v1092 = vld [vmem:[%s1013 + $0xaa] sm:$0xff]
      %v1093 = vld [vmem:[%s1013 + $0xb2] sm:$0xff]
      %v1094 = vld [vmem:[%s1013 + $0xc2] sm:$0xff]
      %v1095 = vld [vmem:[%s1013 + $0xca] sm:$0xff]
      %v1096 = vld [vmem:[%s1013 + $0xda] sm:$0xff]
      %v1097 = vld [vmem:[%s1013 + $0xe2] sm:$0xff]
      %v1098 = vld [vmem:[%s1013 + $0xf2] sm:$0xff]
      %v1099 = vld [vmem:[%s1013 + $0xfa] sm:$0xff]
      %v1100 = vld [vmem:[%s1013 + $0x10a] sm:$0xff]
      %v1101 = vld [vmem:[%s1013 + $0x112] sm:$0xff]
      %v1102 = vld [vmem:[%s1013 + $0x122] sm:$0xff]
      %v1103 = vld [vmem:[%s1013 + $0x12a] sm:$0xff]
      %v1104 = vld [vmem:[%s1013 + $0x13a] sm:$0xff]
      %v1105 = vld [vmem:[%s1013 + $0x142] sm:$0xff]
      %v1106 = vld [vmem:[%s1013 + $0x152] sm:$0xff]
      %v1107 = vld [vmem:[%s1013 + $0x15a] sm:$0xff]
      %v1108 = vld [vmem:[%s1013 + $0x16a] sm:$0xff]
      %v1109 = vld [vmem:[%s1013 + $0x172] sm:$0xff]
      %1142 = vrot.lane.b32.xlu0 %v853, 32
      %v1143 = vpop.permute.xlu0 %1142
      %1144 = vrot.lane.b32.xlu0 %v854, 32
      %v1145 = vpop.permute.xlu0 %1144
      %1146 = vrot.lane.b32.xlu0 %v855, 32
      %v1147 = vpop.permute.xlu0 %1146
      %1148 = vrot.lane.b32.xlu0 %v856, 32
      %v1149 = vpop.permute.xlu0 %1148
      %1150 = vrot.lane.b32.xlu0 %v857, 32
      %v1151 = vpop.permute.xlu0 %1150
      %1152 = vrot.lane.b32.xlu0 %v858, 32
      %v1153 = vpop.permute.xlu0 %1152
      %1154 = vrot.lane.b32.xlu0 %v859, 32
      %v1155 = vpop.permute.xlu0 %1154
      %1156 = vrot.lane.b32.xlu0 %v860, 32
      %v1157 = vpop.permute.xlu0 %1156
      %1158 = vrot.lane.b32.xlu0 %v861, 32
      %v1159 = vpop.permute.xlu0 %1158
      %1160 = vrot.lane.b32.xlu0 %v862, 32
      %v1161 = vpop.permute.xlu0 %1160
      %1162 = vrot.lane.b32.xlu0 %v863, 32
      %v1163 = vpop.permute.xlu0 %1162
      %1164 = vrot.lane.b32.xlu0 %v864, 32
      %v1165 = vpop.permute.xlu0 %1164
      %1166 = vrot.lane.b32.xlu0 %v865, 32
      %v1167 = vpop.permute.xlu0 %1166
      %1168 = vrot.lane.b32.xlu0 %v866, 32
      %v1169 = vpop.permute.xlu0 %1168
      %1170 = vrot.lane.b32.xlu0 %v867, 32
      %v1171 = vpop.permute.xlu0 %1170
      %1172 = vrot.lane.b32.xlu0 %v868, 32
      %v1173 = vpop.permute.xlu0 %1172
      %1174 = vrot.lane.b32.xlu0 %v869, 32
      %v1175 = vpop.permute.xlu0 %1174
      %1176 = vrot.lane.b32.xlu0 %v870, 32
      %v1177 = vpop.permute.xlu0 %1176
      %1178 = vrot.lane.b32.xlu0 %v871, 32
      %v1179 = vpop.permute.xlu0 %1178
      %1180 = vrot.lane.b32.xlu0 %v872, 32
      %v1181 = vpop.permute.xlu0 %1180
      %1182 = vrot.lane.b32.xlu0 %v873, 32
      %v1183 = vpop.permute.xlu0 %1182
      %1184 = vrot.lane.b32.xlu0 %v874, 32
      %v1185 = vpop.permute.xlu0 %1184
      %1186 = vrot.lane.b32.xlu0 %v875, 32
      %v1187 = vpop.permute.xlu0 %1186
      %1188 = vrot.lane.b32.xlu0 %v876, 32
      %v1189 = vpop.permute.xlu0 %1188
      %1190 = vrot.lane.b32.xlu0 %v877, 32
      %v1191 = vpop.permute.xlu0 %1190
      %1192 = vrot.lane.b32.xlu0 %v878, 32
      %v1193 = vpop.permute.xlu0 %1192
      %1194 = vrot.lane.b32.xlu0 %v879, 32
      %v1195 = vpop.permute.xlu0 %1194
      %1196 = vrot.lane.b32.xlu0 %v880, 32
      %v1197 = vpop.permute.xlu0 %1196
      %1198 = vrot.lane.b32.xlu0 %v881, 32
      %v1199 = vpop.permute.xlu0 %1198
      %1200 = vrot.lane.b32.xlu0 %v882, 32
      %v1201 = vpop.permute.xlu0 %1200
      %1202 = vrot.lane.b32.xlu0 %v883, 32
      %v1203 = vpop.permute.xlu0 %1202
      %1204 = vrot.lane.b32.xlu0 %v884, 32
      %v1205 = vpop.permute.xlu0 %1204
      %1270 = vrot.lane.b32.xlu0 %v885, 64
      %v1271 = vpop.permute.xlu0 %1270
      %1272 = vrot.lane.b32.xlu0 %v886, 64
      %v1273 = vpop.permute.xlu0 %1272
      %1274 = vrot.lane.b32.xlu0 %v887, 64
      %v1275 = vpop.permute.xlu0 %1274
      %1276 = vrot.lane.b32.xlu0 %v888, 64
      %v1277 = vpop.permute.xlu0 %1276
      %1278 = vrot.lane.b32.xlu0 %v889, 64
      %v1279 = vpop.permute.xlu0 %1278
      %1280 = vrot.lane.b32.xlu0 %v890, 64
      %v1281 = vpop.permute.xlu0 %1280
      %1282 = vrot.lane.b32.xlu0 %v891, 64
      %v1283 = vpop.permute.xlu0 %1282
      %1284 = vrot.lane.b32.xlu0 %v892, 64
      %v1285 = vpop.permute.xlu0 %1284
      %1286 = vrot.lane.b32.xlu0 %v893, 64
      %v1287 = vpop.permute.xlu0 %1286
      %1288 = vrot.lane.b32.xlu0 %v894, 64
      %v1289 = vpop.permute.xlu0 %1288
      %1290 = vrot.lane.b32.xlu0 %v895, 64
      %v1291 = vpop.permute.xlu0 %1290
      %1292 = vrot.lane.b32.xlu0 %v896, 64
      %v1293 = vpop.permute.xlu0 %1292
      %1294 = vrot.lane.b32.xlu0 %v897, 64
      %v1295 = vpop.permute.xlu0 %1294
      %1296 = vrot.lane.b32.xlu0 %v898, 64
      %v1297 = vpop.permute.xlu0 %1296
      %1298 = vrot.lane.b32.xlu0 %v899, 64
      %v1299 = vpop.permute.xlu0 %1298
      %1300 = vrot.lane.b32.xlu0 %v900, 64
      %v1301 = vpop.permute.xlu0 %1300
      %1302 = vrot.lane.b32.xlu0 %v901, 64
      %v1303 = vpop.permute.xlu0 %1302
      %1304 = vrot.lane.b32.xlu0 %v902, 64
      %v1305 = vpop.permute.xlu0 %1304
      %1306 = vrot.lane.b32.xlu0 %v903, 64
      %v1307 = vpop.permute.xlu0 %1306
      %1308 = vrot.lane.b32.xlu0 %v904, 64
      %v1309 = vpop.permute.xlu0 %1308
      %1310 = vrot.lane.b32.xlu0 %v905, 64
      %v1311 = vpop.permute.xlu0 %1310
      %1312 = vrot.lane.b32.xlu0 %v906, 64
      %v1313 = vpop.permute.xlu0 %1312
      %1314 = vrot.lane.b32.xlu0 %v907, 64
      %v1315 = vpop.permute.xlu0 %1314
      %1316 = vrot.lane.b32.xlu0 %v908, 64
      %v1317 = vpop.permute.xlu0 %1316
      %1318 = vrot.lane.b32.xlu0 %v909, 64
      %v1319 = vpop.permute.xlu0 %1318
      %1320 = vrot.lane.b32.xlu0 %v910, 64
      %v1321 = vpop.permute.xlu0 %1320
      %1322 = vrot.lane.b32.xlu0 %v911, 64
      %v1323 = vpop.permute.xlu0 %1322
      %1324 = vrot.lane.b32.xlu0 %v912, 64
      %v1325 = vpop.permute.xlu0 %1324
      %1326 = vrot.lane.b32.xlu0 %v913, 64
      %v1327 = vpop.permute.xlu0 %1326
      %1328 = vrot.lane.b32.xlu0 %v914, 64
      %v1329 = vpop.permute.xlu0 %1328
      %1330 = vrot.lane.b32.xlu0 %v915, 64
      %v1331 = vpop.permute.xlu0 %1330
      %1332 = vrot.lane.b32.xlu0 %v916, 64
      %v1333 = vpop.permute.xlu0 %1332
      %1398 = vrot.lane.b32.xlu0 %v917, 96
      %v1399 = vpop.permute.xlu0 %1398
      %1400 = vrot.lane.b32.xlu0 %v918, 96
      %v1401 = vpop.permute.xlu0 %1400
      %1402 = vrot.lane.b32.xlu0 %v919, 96
      %v1403 = vpop.permute.xlu0 %1402
      %1404 = vrot.lane.b32.xlu0 %v920, 96
      %v1405 = vpop.permute.xlu0 %1404
      %1406 = vrot.lane.b32.xlu0 %v921, 96
      %v1407 = vpop.permute.xlu0 %1406
      %1408 = vrot.lane.b32.xlu0 %v922, 96
      %v1409 = vpop.permute.xlu0 %1408
      %1410 = vrot.lane.b32.xlu0 %v923, 96
      %v1411 = vpop.permute.xlu0 %1410
      %1412 = vrot.lane.b32.xlu0 %v924, 96
      %v1413 = vpop.permute.xlu0 %1412
      %1414 = vrot.lane.b32.xlu0 %v925, 96
      %v1415 = vpop.permute.xlu0 %1414
      %1416 = vrot.lane.b32.xlu0 %v926, 96
      %v1417 = vpop.permute.xlu0 %1416
      %1418 = vrot.lane.b32.xlu0 %v927, 96
      %v1419 = vpop.permute.xlu0 %1418
      %1420 = vrot.lane.b32.xlu0 %v928, 96
      %v1421 = vpop.permute.xlu0 %1420
      %1422 = vrot.lane.b32.xlu0 %v929, 96
      %v1423 = vpop.permute.xlu0 %1422
      %1424 = vrot.lane.b32.xlu0 %v930, 96
      %v1425 = vpop.permute.xlu0 %1424
      %1426 = vrot.lane.b32.xlu0 %v931, 96
      %v1427 = vpop.permute.xlu0 %1426
      %1428 = vrot.lane.b32.xlu0 %v932, 96
      %v1429 = vpop.permute.xlu0 %1428
      %1430 = vrot.lane.b32.xlu0 %v933, 96
      %v1431 = vpop.permute.xlu0 %1430
      %1432 = vrot.lane.b32.xlu0 %v934, 96
      %v1433 = vpop.permute.xlu0 %1432
      %1434 = vrot.lane.b32.xlu0 %v935, 96
      %v1435 = vpop.permute.xlu0 %1434
      %1436 = vrot.lane.b32.xlu0 %v936, 96
      %v1437 = vpop.permute.xlu0 %1436
      %1438 = vrot.lane.b32.xlu0 %v937, 96
      %v1439 = vpop.permute.xlu0 %1438
      %1440 = vrot.lane.b32.xlu0 %v938, 96
      %v1441 = vpop.permute.xlu0 %1440
      %1442 = vrot.lane.b32.xlu0 %v939, 96
      %v1443 = vpop.permute.xlu0 %1442
      %1444 = vrot.lane.b32.xlu0 %v940, 96
      %v1445 = vpop.permute.xlu0 %1444
      %1446 = vrot.lane.b32.xlu0 %v941, 96
      %v1447 = vpop.permute.xlu0 %1446
      %1448 = vrot.lane.b32.xlu0 %v942, 96
      %v1449 = vpop.permute.xlu0 %1448
      %1450 = vrot.lane.b32.xlu0 %v943, 96
      %v1451 = vpop.permute.xlu0 %1450
      %1452 = vrot.lane.b32.xlu0 %v944, 96
      %v1453 = vpop.permute.xlu0 %1452
      %1454 = vrot.lane.b32.xlu0 %v945, 96
      %v1455 = vpop.permute.xlu0 %1454
      %1456 = vrot.lane.b32.xlu0 %v946, 96
      %v1457 = vpop.permute.xlu0 %1456
      %1458 = vrot.lane.b32.xlu0 %v947, 96
      %v1459 = vpop.permute.xlu0 %1458
      %1460 = vrot.lane.b32.xlu0 %v948, 96
      %v1461 = vpop.permute.xlu0 %1460
      %1526 = vrot.lane.b32.xlu0 %v981, 32
      %v1527 = vpop.permute.xlu0 %1526
      %1528 = vrot.lane.b32.xlu0 %v982, 32
      %v1529 = vpop.permute.xlu0 %1528
      %1530 = vrot.lane.b32.xlu0 %v983, 32
      %v1531 = vpop.permute.xlu0 %1530
      %1532 = vrot.lane.b32.xlu0 %v984, 32
      %v1533 = vpop.permute.xlu0 %1532
      %1534 = vrot.lane.b32.xlu0 %v985, 32
      %v1535 = vpop.permute.xlu0 %1534
      %1536 = vrot.lane.b32.xlu0 %v986, 32
      %v1537 = vpop.permute.xlu0 %1536
      %1538 = vrot.lane.b32.xlu0 %v987, 32
      %v1539 = vpop.permute.xlu0 %1538
      %1540 = vrot.lane.b32.xlu0 %v988, 32
      %v1541 = vpop.permute.xlu0 %1540
      %1542 = vrot.lane.b32.xlu0 %v989, 32
      %v1543 = vpop.permute.xlu0 %1542
      %1544 = vrot.lane.b32.xlu0 %v990, 32
      %v1545 = vpop.permute.xlu0 %1544
      %1546 = vrot.lane.b32.xlu0 %v991, 32
      %v1547 = vpop.permute.xlu0 %1546
      %1548 = vrot.lane.b32.xlu0 %v992, 32
      %v1549 = vpop.permute.xlu0 %1548
      %1550 = vrot.lane.b32.xlu0 %v993, 32
      %v1551 = vpop.permute.xlu0 %1550
      %1552 = vrot.lane.b32.xlu0 %v994, 32
      %v1553 = vpop.permute.xlu0 %1552
      %1554 = vrot.lane.b32.xlu0 %v995, 32
      %v1555 = vpop.permute.xlu0 %1554
      %1556 = vrot.lane.b32.xlu0 %v996, 32
      %v1557 = vpop.permute.xlu0 %1556
      %1558 = vrot.lane.b32.xlu0 %v997, 32
      %v1559 = vpop.permute.xlu0 %1558
      %1560 = vrot.lane.b32.xlu0 %v998, 32
      %v1561 = vpop.permute.xlu0 %1560
      %1562 = vrot.lane.b32.xlu0 %v999, 32
      %v1563 = vpop.permute.xlu0 %1562
      %1564 = vrot.lane.b32.xlu0 %v1000, 32
      %v1565 = vpop.permute.xlu0 %1564
      %1566 = vrot.lane.b32.xlu0 %v1001, 32
      %v1567 = vpop.permute.xlu0 %1566
      %1568 = vrot.lane.b32.xlu0 %v1002, 32
      %v1569 = vpop.permute.xlu0 %1568
      %1570 = vrot.lane.b32.xlu0 %v1003, 32
      %v1571 = vpop.permute.xlu0 %1570
      %1572 = vrot.lane.b32.xlu0 %v1004, 32
      %v1573 = vpop.permute.xlu0 %1572
      %1574 = vrot.lane.b32.xlu0 %v1005, 32
      %v1575 = vpop.permute.xlu0 %1574
      %1576 = vrot.lane.b32.xlu0 %v1006, 32
      %v1577 = vpop.permute.xlu0 %1576
      %1578 = vrot.lane.b32.xlu0 %v1007, 32
      %v1579 = vpop.permute.xlu0 %1578
      %1580 = vrot.lane.b32.xlu0 %v1008, 32
      %v1581 = vpop.permute.xlu0 %1580
      %1582 = vrot.lane.b32.xlu0 %v1009, 32
      %v1583 = vpop.permute.xlu0 %1582
      %1584 = vrot.lane.b32.xlu0 %v1010, 32
      %v1585 = vpop.permute.xlu0 %1584
      %1586 = vrot.lane.b32.xlu0 %v1011, 32
      %v1587 = vpop.permute.xlu0 %1586
      %1588 = vrot.lane.b32.xlu0 %v1012, 32
      %v1589 = vpop.permute.xlu0 %1588
      %1654 = vrot.lane.b32.xlu0 %v1014, 64
      %v1655 = vpop.permute.xlu0 %1654
      %1656 = vrot.lane.b32.xlu0 %v1015, 64
      %v1657 = vpop.permute.xlu0 %1656
      %1658 = vrot.lane.b32.xlu0 %v1016, 64
      %v1659 = vpop.permute.xlu0 %1658
      %1660 = vrot.lane.b32.xlu0 %v1017, 64
      %v1661 = vpop.permute.xlu0 %1660
      %1662 = vrot.lane.b32.xlu0 %v1018, 64
      %v1663 = vpop.permute.xlu0 %1662
      %1664 = vrot.lane.b32.xlu0 %v1019, 64
      %v1665 = vpop.permute.xlu0 %1664
      %1666 = vrot.lane.b32.xlu0 %v1020, 64
      %v1667 = vpop.permute.xlu0 %1666
      %1668 = vrot.lane.b32.xlu0 %v1021, 64
      %v1669 = vpop.permute.xlu0 %1668
      %1670 = vrot.lane.b32.xlu0 %v1022, 64
      %v1671 = vpop.permute.xlu0 %1670
      %1672 = vrot.lane.b32.xlu0 %v1023, 64
      %v1673 = vpop.permute.xlu0 %1672
      %1674 = vrot.lane.b32.xlu0 %v1024, 64
      %v1675 = vpop.permute.xlu0 %1674
      %1676 = vrot.lane.b32.xlu0 %v1025, 64
      %v1677 = vpop.permute.xlu0 %1676
      %1678 = vrot.lane.b32.xlu0 %v1026, 64
      %v1679 = vpop.permute.xlu0 %1678
      %1680 = vrot.lane.b32.xlu0 %v1027, 64
      %v1681 = vpop.permute.xlu0 %1680
      %1682 = vrot.lane.b32.xlu0 %v1028, 64
      %v1683 = vpop.permute.xlu0 %1682
      %1684 = vrot.lane.b32.xlu0 %v1029, 64
      %v1685 = vpop.permute.xlu0 %1684
      %1686 = vrot.lane.b32.xlu0 %v1030, 64
      %v1687 = vpop.permute.xlu0 %1686
      %1688 = vrot.lane.b32.xlu0 %v1031, 64
      %v1689 = vpop.permute.xlu0 %1688
      %1690 = vrot.lane.b32.xlu0 %v1032, 64
      %v1691 = vpop.permute.xlu0 %1690
      %1692 = vrot.lane.b32.xlu0 %v1033, 64
      %v1693 = vpop.permute.xlu0 %1692
      %1694 = vrot.lane.b32.xlu0 %v1034, 64
      %v1695 = vpop.permute.xlu0 %1694
      %1696 = vrot.lane.b32.xlu0 %v1035, 64
      %v1697 = vpop.permute.xlu0 %1696
      %1698 = vrot.lane.b32.xlu0 %v1036, 64
      %v1699 = vpop.permute.xlu0 %1698
      %1700 = vrot.lane.b32.xlu0 %v1037, 64
      %v1701 = vpop.permute.xlu0 %1700
      %1702 = vrot.lane.b32.xlu0 %v1038, 64
      %v1703 = vpop.permute.xlu0 %1702
      %1704 = vrot.lane.b32.xlu0 %v1039, 64
      %v1705 = vpop.permute.xlu0 %1704
      %1706 = vrot.lane.b32.xlu0 %v1040, 64
      %v1707 = vpop.permute.xlu0 %1706
      %1708 = vrot.lane.b32.xlu0 %v1041, 64
      %v1709 = vpop.permute.xlu0 %1708
      %1710 = vrot.lane.b32.xlu0 %v1042, 64
      %v1711 = vpop.permute.xlu0 %1710
      %1712 = vrot.lane.b32.xlu0 %v1043, 64
      %v1713 = vpop.permute.xlu0 %1712
      %1714 = vrot.lane.b32.xlu0 %v1044, 64
      %v1715 = vpop.permute.xlu0 %1714
      %1716 = vrot.lane.b32.xlu0 %v1045, 64
      %v1717 = vpop.permute.xlu0 %1716
      %1782 = vrot.lane.b32.xlu0 %v1046, 96
      %v1783 = vpop.permute.xlu0 %1782
      %1784 = vrot.lane.b32.xlu0 %v1047, 96
      %v1785 = vpop.permute.xlu0 %1784
      %1786 = vrot.lane.b32.xlu0 %v1048, 96
      %v1787 = vpop.permute.xlu0 %1786
      %1788 = vrot.lane.b32.xlu0 %v1049, 96
      %v1789 = vpop.permute.xlu0 %1788
      %1790 = vrot.lane.b32.xlu0 %v1050, 96
      %v1791 = vpop.permute.xlu0 %1790
      %1792 = vrot.lane.b32.xlu0 %v1051, 96
      %v1793 = vpop.permute.xlu0 %1792
      %1794 = vrot.lane.b32.xlu0 %v1052, 96
      %v1795 = vpop.permute.xlu0 %1794
      %1796 = vrot.lane.b32.xlu0 %v1053, 96
      %v1797 = vpop.permute.xlu0 %1796
      %1798 = vrot.lane.b32.xlu0 %v1054, 96
      %v1799 = vpop.permute.xlu0 %1798
      %1800 = vrot.lane.b32.xlu0 %v1055, 96
      %v1801 = vpop.permute.xlu0 %1800
      %1802 = vrot.lane.b32.xlu0 %v1056, 96
      %v1803 = vpop.permute.xlu0 %1802
      %1804 = vrot.lane.b32.xlu0 %v1057, 96
      %v1805 = vpop.permute.xlu0 %1804
      %1806 = vrot.lane.b32.xlu0 %v1058, 96
      %v1807 = vpop.permute.xlu0 %1806
      %1808 = vrot.lane.b32.xlu0 %v1059, 96
      %v1809 = vpop.permute.xlu0 %1808
      %1810 = vrot.lane.b32.xlu0 %v1060, 96
      %v1811 = vpop.permute.xlu0 %1810
      %1812 = vrot.lane.b32.xlu0 %v1061, 96
      %v1813 = vpop.permute.xlu0 %1812
      %1814 = vrot.lane.b32.xlu0 %v1062, 96
      %v1815 = vpop.permute.xlu0 %1814
      %1816 = vrot.lane.b32.xlu0 %v1063, 96
      %v1817 = vpop.permute.xlu0 %1816
      %1818 = vrot.lane.b32.xlu0 %v1064, 96
      %v1819 = vpop.permute.xlu0 %1818
      %1820 = vrot.lane.b32.xlu0 %v1065, 96
      %v1821 = vpop.permute.xlu0 %1820
      %1822 = vrot.lane.b32.xlu0 %v1066, 96
      %v1823 = vpop.permute.xlu0 %1822
      %1824 = vrot.lane.b32.xlu0 %v1067, 96
      %v1825 = vpop.permute.xlu0 %1824
      %1826 = vrot.lane.b32.xlu0 %v1068, 96
      %v1827 = vpop.permute.xlu0 %1826
      %1828 = vrot.lane.b32.xlu0 %v1069, 96
      %v1829 = vpop.permute.xlu0 %1828
      %1830 = vrot.lane.b32.xlu0 %v1070, 96
      %v1831 = vpop.permute.xlu0 %1830
      %1832 = vrot.lane.b32.xlu0 %v1071, 96
      %v1833 = vpop.permute.xlu0 %1832
      %1834 = vrot.lane.b32.xlu0 %v1072, 96
      %v1835 = vpop.permute.xlu0 %1834
      %1836 = vrot.lane.b32.xlu0 %v1073, 96
      %v1837 = vpop.permute.xlu0 %1836
      %1838 = vrot.lane.b32.xlu0 %v1074, 96
      %v1839 = vpop.permute.xlu0 %1838
      %1840 = vrot.lane.b32.xlu0 %v1075, 96
      %v1841 = vpop.permute.xlu0 %1840
      %1842 = vrot.lane.b32.xlu0 %v1076, 96
      %v1843 = vpop.permute.xlu0 %1842
      %1844 = vrot.lane.b32.xlu0 %v1077, 96
      %v1845 = vpop.permute.xlu0 %1844
      %v1878 = vsel %vm459, %v821, %v1143
      %v1879 = vsel %vm459, %v822, %v1145
      %v1880 = vsel %vm459, %v823, %v1147
      %v1881 = vsel %vm459, %v824, %v1149
      %v1882 = vsel %vm459, %v825, %v1151
      %v1883 = vsel %vm459, %v826, %v1153
      %v1884 = vsel %vm459, %v827, %v1155
      %v1885 = vsel %vm459, %v828, %v1157
      %v1886 = vsel %vm459, %v829, %v1159
      %v1887 = vsel %vm459, %v830, %v1161
      %v1888 = vsel %vm459, %v831, %v1163
      %v1889 = vsel %vm459, %v832, %v1165
      %v1890 = vsel %vm459, %v833, %v1167
      %v1891 = vsel %vm459, %v834, %v1169
      %v1892 = vsel %vm459, %v835, %v1171
      %v1893 = vsel %vm459, %v836, %v1173
      %v1894 = vsel %vm459, %v837, %v1175
      %v1895 = vsel %vm459, %v838, %v1177
      %v1896 = vsel %vm459, %v839, %v1179
      %v1897 = vsel %vm459, %v840, %v1181
      %v1898 = vsel %vm459, %v841, %v1183
      %v1899 = vsel %vm459, %v842, %v1185
      %v1900 = vsel %vm459, %v843, %v1187
      %v1901 = vsel %vm459, %v844, %v1189
      %v1902 = vsel %vm459, %v845, %v1191
      %v1903 = vsel %vm459, %v846, %v1193
      %v1904 = vsel %vm459, %v847, %v1195
      %v1905 = vsel %vm459, %v848, %v1197
      %v1906 = vsel %vm459, %v849, %v1199
      %v1907 = vsel %vm459, %v850, %v1201
      %v1908 = vsel %vm459, %v851, %v1203
      %v1909 = vsel %vm459, %v852, %v1205
      %vm1910 = vcmask 523264
      %v1911 = vsel %vm1910, %v1878, %v1271
      %v1912 = vsel %vm1910, %v1879, %v1273
      %v1913 = vsel %vm1910, %v1880, %v1275
      %v1914 = vsel %vm1910, %v1881, %v1277
      %v1915 = vsel %vm1910, %v1882, %v1279
      %v1916 = vsel %vm1910, %v1883, %v1281
      %v1917 = vsel %vm1910, %v1884, %v1283
      %v1918 = vsel %vm1910, %v1885, %v1285
      %v1919 = vsel %vm1910, %v1886, %v1287
      %v1920 = vsel %vm1910, %v1887, %v1289
      %v1921 = vsel %vm1910, %v1888, %v1291
      %v1922 = vsel %vm1910, %v1889, %v1293
      %v1923 = vsel %vm1910, %v1890, %v1295
      %v1924 = vsel %vm1910, %v1891, %v1297
      %v1925 = vsel %vm1910, %v1892, %v1299
      %v1926 = vsel %vm1910, %v1893, %v1301
      %v1927 = vsel %vm1910, %v1894, %v1303
      %v1928 = vsel %vm1910, %v1895, %v1305
      %v1929 = vsel %vm1910, %v1896, %v1307
      %v1930 = vsel %vm1910, %v1897, %v1309
      %v1931 = vsel %vm1910, %v1898, %v1311
      %v1932 = vsel %vm1910, %v1899, %v1313
      %v1933 = vsel %vm1910, %v1900, %v1315
      %v1934 = vsel %vm1910, %v1901, %v1317
      %v1935 = vsel %vm1910, %v1902, %v1319
      %v1936 = vsel %vm1910, %v1903, %v1321
      %v1937 = vsel %vm1910, %v1904, %v1323
      %v1938 = vsel %vm1910, %v1905, %v1325
      %v1939 = vsel %vm1910, %v1906, %v1327
      %v1940 = vsel %vm1910, %v1907, %v1329
      %v1941 = vsel %vm1910, %v1908, %v1331
      %v1942 = vsel %vm1910, %v1909, %v1333
      %vm1943 = vcmask 785408
      %v1944 = vsel %vm1943, %v1911, %v1399
      %v1945 = vsel %vm1943, %v1912, %v1401
      %v1946 = vsel %vm1943, %v1913, %v1403
      %v1947 = vsel %vm1943, %v1914, %v1405
      %v1948 = vsel %vm1943, %v1915, %v1407
      %v1949 = vsel %vm1943, %v1916, %v1409
      %v1950 = vsel %vm1943, %v1917, %v1411
      %v1951 = vsel %vm1943, %v1918, %v1413
      %v1952 = vsel %vm1943, %v1919, %v1415
      %v1953 = vsel %vm1943, %v1920, %v1417
      %v1954 = vsel %vm1943, %v1921, %v1419
      %v1955 = vsel %vm1943, %v1922, %v1421
      %v1956 = vsel %vm1943, %v1923, %v1423
      %v1957 = vsel %vm1943, %v1924, %v1425
      %v1958 = vsel %vm1943, %v1925, %v1427
      %v1959 = vsel %vm1943, %v1926, %v1429
      %v1960 = vsel %vm1943, %v1927, %v1431
      %v1961 = vsel %vm1943, %v1928, %v1433
      %v1962 = vsel %vm1943, %v1929, %v1435
      %v1963 = vsel %vm1943, %v1930, %v1437
      %v1964 = vsel %vm1943, %v1931, %v1439
      %v1965 = vsel %vm1943, %v1932, %v1441
      %v1966 = vsel %vm1943, %v1933, %v1443
      %v1967 = vsel %vm1943, %v1934, %v1445
      %v1968 = vsel %vm1943, %v1935, %v1447
      %v1969 = vsel %vm1943, %v1936, %v1449
      %v1970 = vsel %vm1943, %v1937, %v1451
      %v1971 = vsel %vm1943, %v1938, %v1453
      %v1972 = vsel %vm1943, %v1939, %v1455
      %v1973 = vsel %vm1943, %v1940, %v1457
      %v1974 = vsel %vm1943, %v1941, %v1459
      %v1975 = vsel %vm1943, %v1942, %v1461
      %v1976 = vsel %vm459, %v949, %v1527
      %v1977 = vsel %vm459, %v950, %v1529
      %v1978 = vsel %vm459, %v951, %v1531
      %v1979 = vsel %vm459, %v952, %v1533
      %v1980 = vsel %vm459, %v953, %v1535
      %v1981 = vsel %vm459, %v954, %v1537
      %v1982 = vsel %vm459, %v955, %v1539
      %v1983 = vsel %vm459, %v956, %v1541
      %v1984 = vsel %vm459, %v957, %v1543
      %v1985 = vsel %vm459, %v958, %v1545
      %v1986 = vsel %vm459, %v959, %v1547
      %v1987 = vsel %vm459, %v960, %v1549
      %v1988 = vsel %vm459, %v961, %v1551
      %v1989 = vsel %vm459, %v962, %v1553
      %v1990 = vsel %vm459, %v963, %v1555
      %v1991 = vsel %vm459, %v964, %v1557
      %v1992 = vsel %vm459, %v965, %v1559
      %v1993 = vsel %vm459, %v966, %v1561
      %v1994 = vsel %vm459, %v967, %v1563
      %v1995 = vsel %vm459, %v968, %v1565
      %v1996 = vsel %vm459, %v969, %v1567
      %v1997 = vsel %vm459, %v970, %v1569
      %v1998 = vsel %vm459, %v971, %v1571
      %v1999 = vsel %vm459, %v972, %v1573
      %v2000 = vsel %vm459, %v973, %v1575
      %v2001 = vsel %vm459, %v974, %v1577
      %v2002 = vsel %vm459, %v975, %v1579
      %v2003 = vsel %vm459, %v976, %v1581
      %v2004 = vsel %vm459, %v977, %v1583
      %v2005 = vsel %vm459, %v978, %v1585
      %v2006 = vsel %vm459, %v979, %v1587
      %v2007 = vsel %vm459, %v980, %v1589
      %v2008 = vsel %vm1910, %v1976, %v1655
      %v2009 = vsel %vm1910, %v1977, %v1657
      %v2010 = vsel %vm1910, %v1978, %v1659
      %v2011 = vsel %vm1910, %v1979, %v1661
      %v2012 = vsel %vm1910, %v1980, %v1663
      %v2013 = vsel %vm1910, %v1981, %v1665
      %v2014 = vsel %vm1910, %v1982, %v1667
      %v2015 = vsel %vm1910, %v1983, %v1669
      %v2016 = vsel %vm1910, %v1984, %v1671
      %v2017 = vsel %vm1910, %v1985, %v1673
      %v2018 = vsel %vm1910, %v1986, %v1675
      %v2019 = vsel %vm1910, %v1987, %v1677
      %v2020 = vsel %vm1910, %v1988, %v1679
      %v2021 = vsel %vm1910, %v1989, %v1681
      %v2022 = vsel %vm1910, %v1990, %v1683
      %v2023 = vsel %vm1910, %v1991, %v1685
      %v2024 = vsel %vm1910, %v1992, %v1687
      %v2025 = vsel %vm1910, %v1993, %v1689
      %v2026 = vsel %vm1910, %v1994, %v1691
      %v2027 = vsel %vm1910, %v1995, %v1693
      %v2028 = vsel %vm1910, %v1996, %v1695
      %v2029 = vsel %vm1910, %v1997, %v1697
      %v2030 = vsel %vm1910, %v1998, %v1699
      %v2031 = vsel %vm1910, %v1999, %v1701
      %v2032 = vsel %vm1910, %v2000, %v1703
      %v2033 = vsel %vm1910, %v2001, %v1705
      %v2034 = vsel %vm1910, %v2002, %v1707
      %v2035 = vsel %vm1910, %v2003, %v1709
      %v2036 = vsel %vm1910, %v2004, %v1711
      %v2037 = vsel %vm1910, %v2005, %v1713
      %v2038 = vsel %vm1910, %v2006, %v1715
      %v2039 = vsel %vm1910, %v2007, %v1717
      %v2040 = vsel %vm1943, %v2008, %v1783
      %v2041 = vsel %vm1943, %v2009, %v1785
      %v2042 = vsel %vm1943, %v2010, %v1787
      %v2043 = vsel %vm1943, %v2011, %v1789
      %v2044 = vsel %vm1943, %v2012, %v1791
      %v2045 = vsel %vm1943, %v2013, %v1793
      %v2046 = vsel %vm1943, %v2014, %v1795
      %v2047 = vsel %vm1943, %v2015, %v1797
      %v2048 = vsel %vm1943, %v2016, %v1799
      %v2049 = vsel %vm1943, %v2017, %v1801
      %v2050 = vsel %vm1943, %v2018, %v1803
      %v2051 = vsel %vm1943, %v2019, %v1805
      %v2052 = vsel %vm1943, %v2020, %v1807
      %v2053 = vsel %vm1943, %v2021, %v1809
      %v2054 = vsel %vm1943, %v2022, %v1811
      %v2055 = vsel %vm1943, %v2023, %v1813
      %v2056 = vsel %vm1943, %v2024, %v1815
      %v2057 = vsel %vm1943, %v2025, %v1817
      %v2058 = vsel %vm1943, %v2026, %v1819
      %v2059 = vsel %vm1943, %v2027, %v1821
      %v2060 = vsel %vm1943, %v2028, %v1823
      %v2061 = vsel %vm1943, %v2029, %v1825
      %v2062 = vsel %vm1943, %v2030, %v1827
      %v2063 = vsel %vm1943, %v2031, %v1829
      %v2064 = vsel %vm1943, %v2032, %v1831
      %v2065 = vsel %vm1943, %v2033, %v1833
      %v2066 = vsel %vm1943, %v2034, %v1835
      %v2067 = vsel %vm1943, %v2035, %v1837
      %v2068 = vsel %vm1943, %v2036, %v1839
      %v2069 = vsel %vm1943, %v2037, %v1841
      %v2070 = vsel %vm1943, %v2038, %v1843
      %v2071 = vsel %vm1943, %v2039, %v1845
      %v2072 = vpack.c.bf16 %v1945, %v1944
      %v2073 = vpack.c.bf16 %v2041, %v2040
      %v2074 = vpack.c.bf16 %v1079, %v1078
      %v2075 = vpack.c.bf16 %v1947, %v1946
      %v2076 = vpack.c.bf16 %v2043, %v2042
      %v2077 = vpack.c.bf16 %v1081, %v1080
      %v2078 = vpack.c.bf16 %v1949, %v1948
      %v2079 = vpack.c.bf16 %v2045, %v2044
      %v2080 = vpack.c.bf16 %v1083, %v1082
      %v2081 = vpack.c.bf16 %v1951, %v1950
      %v2082 = vpack.c.bf16 %v2047, %v2046
      %v2083 = vpack.c.bf16 %v1085, %v1084
      %v2084 = vpack.c.bf16 %v1953, %v1952
      %v2085 = vpack.c.bf16 %v2049, %v2048
      %v2086 = vpack.c.bf16 %v1087, %v1086
      %v2087 = vpack.c.bf16 %v1955, %v1954
      %v2088 = vpack.c.bf16 %v2051, %v2050
      %v2089 = vpack.c.bf16 %v1089, %v1088
      %v2090 = vpack.c.bf16 %v1957, %v1956
      %v2091 = vpack.c.bf16 %v2053, %v2052
      %v2092 = vpack.c.bf16 %v1091, %v1090
      %v2093 = vpack.c.bf16 %v1959, %v1958
      %v2094 = vpack.c.bf16 %v2055, %v2054
      %v2095 = vpack.c.bf16 %v1093, %v1092
      %v2096 = vpack.c.bf16 %v1961, %v1960
      %v2097 = vpack.c.bf16 %v2057, %v2056
      %v2098 = vpack.c.bf16 %v1095, %v1094
      %v2099 = vpack.c.bf16 %v1963, %v1962
      %v2100 = vpack.c.bf16 %v2059, %v2058
      %v2101 = vpack.c.bf16 %v1097, %v1096
      %v2102 = vpack.c.bf16 %v1965, %v1964
      %v2103 = vpack.c.bf16 %v2061, %v2060
      %v2104 = vpack.c.bf16 %v1099, %v1098
      %v2105 = vpack.c.bf16 %v1967, %v1966
      %v2106 = vpack.c.bf16 %v2063, %v2062
      %v2107 = vpack.c.bf16 %v1101, %v1100
      %v2108 = vpack.c.bf16 %v1969, %v1968
      %v2109 = vpack.c.bf16 %v2065, %v2064
      %v2110 = vpack.c.bf16 %v1103, %v1102
      %v2111 = vpack.c.bf16 %v1971, %v1970
      %v2112 = vpack.c.bf16 %v2067, %v2066
      %v2113 = vpack.c.bf16 %v1105, %v1104
      %v2114 = vpack.c.bf16 %v1973, %v1972
      %v2115 = vpack.c.bf16 %v2069, %v2068
      %v2116 = vpack.c.bf16 %v1107, %v1106
      %v2117 = vpack.c.bf16 %v1975, %v1974
      %v2118 = vpack.c.bf16 %v2071, %v2070
      %v2119 = vpack.c.bf16 %v1109, %v1108
      %v2120 = vld [vmem:[%s3] sm:$0xf]
      %v2121 = vld [vmem:[%s3 + $0x4] sm:$0xf]
      %v2122 = vld [vmem:[%s3 + $0x8] sm:$0xf]
      %v2123 = vld [vmem:[%s3 + $0xc] sm:$0xf]
      %v2124 = vld [vmem:[%s3 + $0x10] sm:$0xf]
      %v2125 = vld [vmem:[%s3 + $0x14] sm:$0xf]
      %v2126 = vld [vmem:[%s3 + $0x18] sm:$0xf]
      %v2127 = vld [vmem:[%s3 + $0x1c] sm:$0xf]
      %v2128 = vld [vmem:[%s3 + $0x20] sm:$0xf]
      %v2129 = vld [vmem:[%s3 + $0x24] sm:$0xf]
      %v2130 = vld [vmem:[%s3 + $0x28] sm:$0xf]
      %v2131 = vld [vmem:[%s3 + $0x2c] sm:$0xf]
      %v2132 = vld [vmem:[%s3 + $0x30] sm:$0xf]
      %v2133 = vld [vmem:[%s3 + $0x34] sm:$0xf]
      %v2134 = vld [vmem:[%s3 + $0x38] sm:$0xf]
      %v2135 = vld [vmem:[%s3 + $0x3c] sm:$0xf]
      %v2136 = vld [vmem:[%s3 + $0x40] sm:$0xf]
      %v2137 = vld [vmem:[%s3 + $0x44] sm:$0xf]
      %v2138 = vld [vmem:[%s3 + $0x48] sm:$0xf]
      %v2139 = vld [vmem:[%s3 + $0x4c] sm:$0xf]
      %v2140 = vld [vmem:[%s3 + $0x50] sm:$0xf]
      %v2141 = vld [vmem:[%s3 + $0x54] sm:$0xf]
      %v2142 = vld [vmem:[%s3 + $0x58] sm:$0xf]
      %v2143 = vld [vmem:[%s3 + $0x5c] sm:$0xf]
      %v2144 = vld [vmem:[%s3 + $0x60] sm:$0xf]
      %v2145 = vld [vmem:[%s3 + $0x64] sm:$0xf]
      %v2146 = vld [vmem:[%s3 + $0x68] sm:$0xf]
      %v2147 = vld [vmem:[%s3 + $0x6c] sm:$0xf]
      %v2148 = vld [vmem:[%s3 + $0x70] sm:$0xf]
      %v2149 = vld [vmem:[%s3 + $0x74] sm:$0xf]
      %v2150 = vld [vmem:[%s3 + $0x78] sm:$0xf]
      %v2151 = vld [vmem:[%s3 + $0x7c] sm:$0xf]
      %v2152 = vld [vmem:[%s3 + $0x80] sm:$0xf]
      %v2153 = vld [vmem:[%s3 + $0x84] sm:$0xf]
      %v2154 = vld [vmem:[%s3 + $0x88] sm:$0xf]
      %v2155 = vld [vmem:[%s3 + $0x8c] sm:$0xf]
      %v2156 = vld [vmem:[%s4] sm:$0x1]
      %v2158 = vlaneseq
      %v2159 = vshrl.u32 %v2158, 7
      %v2160 = vsub.s32 0, %v2159
      %v2161 = vrot.slane %v2156, %v2160
      %v2199 = vunpack.c.l.b16 %v2120
      %v2200 = vunpack.c.l.b16 %v2121
      %v2201 = vunpack.c.l.b16 %v2122
      %v2202 = vunpack.c.l.b16 %v2123
      %v2203 = vunpack.c.l.b16 %v2124
      %v2204 = vunpack.c.l.b16 %v2125
      %v2205 = vunpack.c.l.b16 %v2126
      %v2206 = vunpack.c.l.b16 %v2127
      %v2207 = vunpack.c.l.b16 %v2128
      %v2208 = vunpack.c.l.b16 %v2129
      %v2209 = vunpack.c.l.b16 %v2130
      %v2210 = vunpack.c.l.b16 %v2131
      %v2211 = vunpack.c.l.b16 %v2132
      %v2212 = vunpack.c.l.b16 %v2133
      %v2213 = vunpack.c.l.b16 %v2134
      %v2214 = vunpack.c.l.b16 %v2135
      %v2215 = vunpack.c.l.b16 %v2136
      %v2216 = vunpack.c.l.b16 %v2137
      %v2217 = vunpack.c.l.b16 %v2138
      %v2218 = vunpack.c.l.b16 %v2139
      %v2219 = vunpack.c.l.b16 %v2140
      %v2220 = vunpack.c.l.b16 %v2141
      %v2221 = vunpack.c.l.b16 %v2142
      %v2222 = vunpack.c.l.b16 %v2143
      %v2223 = vunpack.c.l.b16 %v2144
      %v2224 = vunpack.c.l.b16 %v2145
      %v2225 = vunpack.c.l.b16 %v2146
      %v2226 = vunpack.c.l.b16 %v2147
      %v2227 = vunpack.c.l.b16 %v2148
      %v2228 = vunpack.c.l.b16 %v2149
      %v2229 = vunpack.c.l.b16 %v2150
      %v2230 = vunpack.c.l.b16 %v2151
      %v2231 = vunpack.c.l.b16 %v2152
      %v2232 = vunpack.c.l.b16 %v2153
      %v2233 = vunpack.c.l.b16 %v2154
      %v2234 = vunpack.c.l.b16 %v2155
      %v2235 = vpack.c.b16 %v2200, %v2199
      %v2236 = vpack.c.b16 %v2202, %v2201
      %v2237 = vpack.c.b16 %v2204, %v2203
      %v2238 = vpack.c.b16 %v2206, %v2205
      %v2239 = vpack.c.b16 %v2208, %v2207
      %v2240 = vpack.c.b16 %v2210, %v2209
      %v2241 = vpack.c.b16 %v2212, %v2211
      %v2242 = vpack.c.b16 %v2214, %v2213
      %v2243 = vpack.c.b16 %v2216, %v2215
      %v2244 = vpack.c.b16 %v2218, %v2217
      %v2245 = vpack.c.b16 %v2220, %v2219
      %v2246 = vpack.c.b16 %v2222, %v2221
      %v2247 = vpack.c.b16 %v2224, %v2223
      %v2248 = vpack.c.b16 %v2226, %v2225
      %v2249 = vpack.c.b16 %v2228, %v2227
      %v2250 = vpack.c.b16 %v2230, %v2229
      %v2251 = vpack.c.b16 %v2232, %v2231
      %v2252 = vpack.c.b16 %v2234, %v2233
      %v2272 = vsel %vm459, %v2074, 0
      %v2275 = vsel %vm459, %v2077, 0
      %v2278 = vsel %vm459, %v2080, 0
      %v2281 = vsel %vm459, %v2083, 0
      %v2284 = vsel %vm459, %v2086, 0
      %v2287 = vsel %vm459, %v2089, 0
      %v2290 = vsel %vm459, %v2092, 0
      %v2293 = vsel %vm459, %v2095, 0
      %v2296 = vsel %vm459, %v2098, 0
      %v2299 = vsel %vm459, %v2101, 0
      %v2302 = vsel %vm459, %v2104, 0
      %v2305 = vsel %vm459, %v2107, 0
      %v2308 = vsel %vm459, %v2110, 0
      %v2311 = vsel %vm459, %v2113, 0
      %v2314 = vsel %vm459, %v2116, 0
      %v2317 = vsel %vm459, %v2119, 0
      %2319 = vmatprep.subr.bf16.mxu0 0
      %2320 = vmatpush1.bf16.msra.mxu0 %v2242
      %2321 = vmatprep.subr.bf16.mxu0 0
      %2322 = vmatpush1.bf16.msra.mxu0 %v2241
      %2323 = vmatprep.subr.bf16.mxu0 0
      %2324 = vmatpush1.bf16.msra.mxu0 %v2240
      %2325 = vmatprep.subr.bf16.mxu0 0
      %2326 = vmatpush1.bf16.msra.mxu0 %v2239
      %2327 = vmatprep.subr.bf16.mxu0 0
      %2328 = vmatpush1.bf16.msra.mxu0 %v2238
      %2329 = vmatprep.subr.bf16.mxu0 0
      %2330 = vmatpush1.bf16.msra.mxu0 %v2237
      %2331 = vmatprep.subr.bf16.mxu0 0
      %2332 = vmatpush1.bf16.msra.mxu0 %v2236
      %2333 = vmatprep.subr.bf16.mxu0 0
      %2334 = vmatpush1.bf16.msra.mxu0 %v2235
      %2335 = vmatprep.subr.bf16.mxu0 0
      %2336 = vmatpush2.bf16.msra.mxu0 %v2250
      %2337 = vmatprep.subr.bf16.mxu0 0
      %2338 = vmatpush2.bf16.msra.mxu0 %v2249
      %2339 = vmatprep.subr.bf16.mxu0 0
      %2340 = vmatpush2.bf16.msra.mxu0 %v2248
      %2341 = vmatprep.subr.bf16.mxu0 0
      %2342 = vmatpush2.bf16.msra.mxu0 %v2247
      %2343 = vmatprep.subr.bf16.mxu0 0
      %2344 = vmatpush2.bf16.msra.mxu0 %v2246
      %2345 = vmatprep.subr.bf16.mxu0 0
      %2346 = vmatpush2.bf16.msra.mxu0 %v2245
      %2347 = vmatprep.subr.bf16.mxu0 0
      %2348 = vmatpush2.bf16.msra.mxu0 %v2244
      %2349 = vmatprep.subr.bf16.mxu0 0
      %2350 = vmatpush2.bf16.msra.mxu0 %v2243
      %2351 = vmatprep.mubr.bf16.mxu0 %v2073
      %2352 = vmatmul.mubr.bf16.gmra.mxu0 %v2072
      %v2353 = vpop.f32.mrf.mxu0
      %v2354 = vadd.f32 %v2161, %v2353
      %v2355 = vpop.f32.mrf.mxu0
      %v2356 = vpop.f32.mrf.mxu0
      %v2357 = vadd.f32 %v2161, %v2356
      %v2358 = vpop.f32.mrf.mxu0
      %2359 = vmatprep.mubr.bf16.mxu0 %v2076
      %2360 = vmatmul.mubr.bf16.gmra.mxu0 %v2075
      %v2361 = vpop.f32.mrf.mxu0
      %v2362 = vadd.f32 %v2161, %v2361
      %v2363 = vpop.f32.mrf.mxu0
      %v2364 = vpop.f32.mrf.mxu0
      %v2365 = vadd.f32 %v2161, %v2364
      %v2366 = vpop.f32.mrf.mxu0
      %2367 = vmatprep.mubr.bf16.mxu0 %v2079
      %2368 = vmatmul.mubr.bf16.gmra.mxu0 %v2078
      %v2369 = vpop.f32.mrf.mxu0
      %v2370 = vadd.f32 %v2161, %v2369
      %v2371 = vpop.f32.mrf.mxu0
      %v2372 = vpop.f32.mrf.mxu0
      %v2373 = vadd.f32 %v2161, %v2372
      %v2374 = vpop.f32.mrf.mxu0
      %2375 = vmatprep.mubr.bf16.mxu0 %v2082
      %2376 = vmatmul.mubr.bf16.gmra.mxu0 %v2081
      %v2377 = vpop.f32.mrf.mxu0
      %v2378 = vadd.f32 %v2161, %v2377
      %v2379 = vpop.f32.mrf.mxu0
      %v2380 = vpop.f32.mrf.mxu0
      %v2381 = vadd.f32 %v2161, %v2380
      %v2382 = vpop.f32.mrf.mxu0
      %2383 = vmatprep.mubr.bf16.mxu0 %v2085
      %2384 = vmatmul.mubr.bf16.gmra.mxu0 %v2084
      %v2385 = vpop.f32.mrf.mxu0
      %v2386 = vadd.f32 %v2161, %v2385
      %v2387 = vpop.f32.mrf.mxu0
      %v2388 = vpop.f32.mrf.mxu0
      %v2389 = vadd.f32 %v2161, %v2388
      %v2390 = vpop.f32.mrf.mxu0
      %2391 = vmatprep.mubr.bf16.mxu0 %v2088
      %2392 = vmatmul.mubr.bf16.gmra.mxu0 %v2087
      %v2393 = vpop.f32.mrf.mxu0
      %v2394 = vadd.f32 %v2161, %v2393
      %v2395 = vpop.f32.mrf.mxu0
      %v2396 = vpop.f32.mrf.mxu0
      %v2397 = vadd.f32 %v2161, %v2396
      %v2398 = vpop.f32.mrf.mxu0
      %2399 = vmatprep.mubr.bf16.mxu0 %v2091
      %2400 = vmatmul.mubr.bf16.gmra.mxu0 %v2090
      %v2401 = vpop.f32.mrf.mxu0
      %v2402 = vadd.f32 %v2161, %v2401
      %v2403 = vpop.f32.mrf.mxu0
      %v2404 = vpop.f32.mrf.mxu0
      %v2405 = vadd.f32 %v2161, %v2404
      %v2406 = vpop.f32.mrf.mxu0
      %2407 = vmatprep.mubr.bf16.mxu0 %v2094
      %2408 = vmatmul.mubr.bf16.gmra.mxu0 %v2093
      %v2409 = vpop.f32.mrf.mxu0
      %v2410 = vadd.f32 %v2161, %v2409
      %v2411 = vpop.f32.mrf.mxu0
      %v2412 = vpop.f32.mrf.mxu0
      %v2413 = vadd.f32 %v2161, %v2412
      %v2414 = vpop.f32.mrf.mxu0
      %2415 = vmatprep.mubr.bf16.mxu0 %v2097
      %2416 = vmatmul.mubr.bf16.gmra.mxu0 %v2096
      %v2417 = vpop.f32.mrf.mxu0
      %v2418 = vadd.f32 %v2161, %v2417
      %v2419 = vpop.f32.mrf.mxu0
      %v2420 = vpop.f32.mrf.mxu0
      %v2421 = vadd.f32 %v2161, %v2420
      %v2422 = vpop.f32.mrf.mxu0
      %2423 = vmatprep.mubr.bf16.mxu0 %v2100
      %2424 = vmatmul.mubr.bf16.gmra.mxu0 %v2099
      %v2425 = vpop.f32.mrf.mxu0
      %v2426 = vadd.f32 %v2161, %v2425
      %v2427 = vpop.f32.mrf.mxu0
      %v2428 = vpop.f32.mrf.mxu0
      %v2429 = vadd.f32 %v2161, %v2428
      %v2430 = vpop.f32.mrf.mxu0
      %2431 = vmatprep.mubr.bf16.mxu0 %v2103
      %2432 = vmatmul.mubr.bf16.gmra.mxu0 %v2102
      %v2433 = vpop.f32.mrf.mxu0
      %v2434 = vadd.f32 %v2161, %v2433
      %v2435 = vpop.f32.mrf.mxu0
      %v2436 = vpop.f32.mrf.mxu0
      %v2437 = vadd.f32 %v2161, %v2436
      %v2438 = vpop.f32.mrf.mxu0
      %2439 = vmatprep.mubr.bf16.mxu0 %v2106
      %2440 = vmatmul.mubr.bf16.gmra.mxu0 %v2105
      %v2441 = vpop.f32.mrf.mxu0
      %v2442 = vadd.f32 %v2161, %v2441
      %v2443 = vpop.f32.mrf.mxu0
      %v2444 = vpop.f32.mrf.mxu0
      %v2445 = vadd.f32 %v2161, %v2444
      %v2446 = vpop.f32.mrf.mxu0
      %2447 = vmatprep.mubr.bf16.mxu0 %v2109
      %2448 = vmatmul.mubr.bf16.gmra.mxu0 %v2108
      %v2449 = vpop.f32.mrf.mxu0
      %v2450 = vadd.f32 %v2161, %v2449
      %v2451 = vpop.f32.mrf.mxu0
      %v2452 = vpop.f32.mrf.mxu0
      %v2453 = vadd.f32 %v2161, %v2452
      %v2454 = vpop.f32.mrf.mxu0
      %2455 = vmatprep.mubr.bf16.mxu0 %v2112
      %2456 = vmatmul.mubr.bf16.gmra.mxu0 %v2111
      %v2457 = vpop.f32.mrf.mxu0
      %v2458 = vadd.f32 %v2161, %v2457
      %v2459 = vpop.f32.mrf.mxu0
      %v2460 = vpop.f32.mrf.mxu0
      %v2461 = vadd.f32 %v2161, %v2460
      %v2462 = vpop.f32.mrf.mxu0
      %2463 = vmatprep.mubr.bf16.mxu0 %v2115
      %2464 = vmatmul.mubr.bf16.gmra.mxu0 %v2114
      %v2465 = vpop.f32.mrf.mxu0
      %v2466 = vadd.f32 %v2161, %v2465
      %v2467 = vpop.f32.mrf.mxu0
      %v2468 = vpop.f32.mrf.mxu0
      %v2469 = vadd.f32 %v2161, %v2468
      %v2470 = vpop.f32.mrf.mxu0
      %2471 = vmatprep.mubr.bf16.mxu0 %v2118
      %2472 = vmatmul.mubr.bf16.gmra.mxu0 %v2117
      %v2473 = vpop.f32.mrf.mxu0
      %v2474 = vadd.f32 %v2161, %v2473
      %v2475 = vpop.f32.mrf.mxu0
      %v2476 = vpop.f32.mrf.mxu0
      %v2477 = vadd.f32 %v2161, %v2476
      %v2478 = vpop.f32.mrf.mxu0
      %2479 = vdwg.mxu0
      %2480 = vmatprep.subr.bf16.mxu0 0
      %2481 = vmatpush1.bf16.msra.mxu0 0
      %2482 = vmatprep.subr.bf16.mxu0 0
      %2483 = vmatpush1.bf16.msra.mxu0 0
      %2484 = vmatprep.subr.bf16.mxu0 0
      %2485 = vmatpush1.bf16.msra.mxu0 0
      %2486 = vmatprep.subr.bf16.mxu0 0
      %2487 = vmatpush1.bf16.msra.mxu0 0
      %2488 = vmatprep.subr.bf16.mxu0 0
      %2489 = vmatpush1.bf16.msra.mxu0 0
      %2490 = vmatprep.subr.bf16.mxu0 0
      %2491 = vmatpush1.bf16.msra.mxu0 0
      %2492 = vmatprep.subr.bf16.mxu0 0
      %2493 = vmatpush1.bf16.msra.mxu0 %v2252
      %2494 = vmatprep.subr.bf16.mxu0 0
      %2495 = vmatpush1.bf16.msra.mxu0 %v2251
      %2496 = vmatprep.subr.bf16.mxu0 0
      %2497 = vmatpush2.bf16.msra.mxu0 0
      %2498 = vmatprep.subr.bf16.mxu0 0
      %2499 = vmatpush2.bf16.msra.mxu0 0
      %2500 = vmatprep.subr.bf16.mxu0 0
      %2501 = vmatpush2.bf16.msra.mxu0 0
      %2502 = vmatprep.subr.bf16.mxu0 0
      %2503 = vmatpush2.bf16.msra.mxu0 0
      %2504 = vmatprep.subr.bf16.mxu0 0
      %2505 = vmatpush2.bf16.msra.mxu0 0
      %2506 = vmatprep.subr.bf16.mxu0 0
      %2507 = vmatpush2.bf16.msra.mxu0 0
      %2508 = vmatprep.subr.bf16.mxu0 0
      %2509 = vmatpush2.bf16.msra.mxu0 0
      %2510 = vmatprep.subr.bf16.mxu0 0
      %2511 = vmatpush2.bf16.msra.mxu0 0
      %2512 = vmatprep.mubr.bf16.mxu0 0
      %2513 = vmatmul.mubr.bf16.gmra.mxu0 %v2272
      %v2514 = vpop.f32.mrf.mxu0
      %v2515 = vadd.f32 %v2354, %v2514
      %v2516 = vpop.f32.mrf.mxu0
      %v2517 = vpop.f32.mrf.mxu0
      %v2518 = vadd.f32 %v2357, %v2517
      %v2519 = vpop.f32.mrf.mxu0
      %2520 = vmatprep.mubr.bf16.mxu0 0
      %2521 = vmatmul.mubr.bf16.gmra.mxu0 %v2275
      %v2522 = vpop.f32.mrf.mxu0
      %v2523 = vadd.f32 %v2362, %v2522
      %v2524 = vpop.f32.mrf.mxu0
      %v2525 = vpop.f32.mrf.mxu0
      %v2526 = vadd.f32 %v2365, %v2525
      %v2527 = vpop.f32.mrf.mxu0
      %2528 = vmatprep.mubr.bf16.mxu0 0
      %2529 = vmatmul.mubr.bf16.gmra.mxu0 %v2278
      %v2530 = vpop.f32.mrf.mxu0
      %v2531 = vadd.f32 %v2370, %v2530
      %v2532 = vpop.f32.mrf.mxu0
      %v2533 = vpop.f32.mrf.mxu0
      %v2534 = vadd.f32 %v2373, %v2533
      %v2535 = vpop.f32.mrf.mxu0
      %2536 = vmatprep.mubr.bf16.mxu0 0
      %2537 = vmatmul.mubr.bf16.gmra.mxu0 %v2281
      %v2538 = vpop.f32.mrf.mxu0
      %v2539 = vadd.f32 %v2378, %v2538
      %v2540 = vpop.f32.mrf.mxu0
      %v2541 = vpop.f32.mrf.mxu0
      %v2542 = vadd.f32 %v2381, %v2541
      %v2543 = vpop.f32.mrf.mxu0
      %2544 = vmatprep.mubr.bf16.mxu0 0
      %2545 = vmatmul.mubr.bf16.gmra.mxu0 %v2284
      %v2546 = vpop.f32.mrf.mxu0
      %v2547 = vadd.f32 %v2386, %v2546
      %v2548 = vpop.f32.mrf.mxu0
      %v2549 = vpop.f32.mrf.mxu0
      %v2550 = vadd.f32 %v2389, %v2549
      %v2551 = vpop.f32.mrf.mxu0
      %2552 = vmatprep.mubr.bf16.mxu0 0
      %2553 = vmatmul.mubr.bf16.gmra.mxu0 %v2287
      %v2554 = vpop.f32.mrf.mxu0
      %v2555 = vadd.f32 %v2394, %v2554
      %v2556 = vpop.f32.mrf.mxu0
      %v2557 = vpop.f32.mrf.mxu0
      %v2558 = vadd.f32 %v2397, %v2557
      %v2559 = vpop.f32.mrf.mxu0
      %2560 = vmatprep.mubr.bf16.mxu0 0
      %2561 = vmatmul.mubr.bf16.gmra.mxu0 %v2290
      %v2562 = vpop.f32.mrf.mxu0
      %v2563 = vadd.f32 %v2402, %v2562
      %v2564 = vpop.f32.mrf.mxu0
      %v2565 = vpop.f32.mrf.mxu0
      %v2566 = vadd.f32 %v2405, %v2565
      %v2567 = vpop.f32.mrf.mxu0
      %2568 = vmatprep.mubr.bf16.mxu0 0
      %2569 = vmatmul.mubr.bf16.gmra.mxu0 %v2293
      %v2570 = vpop.f32.mrf.mxu0
      %v2571 = vadd.f32 %v2410, %v2570
      %v2572 = vpop.f32.mrf.mxu0
      %v2573 = vpop.f32.mrf.mxu0
      %v2574 = vadd.f32 %v2413, %v2573
      %v2575 = vpop.f32.mrf.mxu0
      %2576 = vmatprep.mubr.bf16.mxu0 0
      %2577 = vmatmul.mubr.bf16.gmra.mxu0 %v2296
      %v2578 = vpop.f32.mrf.mxu0
      %v2579 = vadd.f32 %v2418, %v2578
      %v2580 = vpop.f32.mrf.mxu0
      %v2581 = vpop.f32.mrf.mxu0
      %v2582 = vadd.f32 %v2421, %v2581
      %v2583 = vpop.f32.mrf.mxu0
      %2584 = vmatprep.mubr.bf16.mxu0 0
      %2585 = vmatmul.mubr.bf16.gmra.mxu0 %v2299
      %v2586 = vpop.f32.mrf.mxu0
      %v2587 = vadd.f32 %v2426, %v2586
      %v2588 = vpop.f32.mrf.mxu0
      %v2589 = vpop.f32.mrf.mxu0
      %v2590 = vadd.f32 %v2429, %v2589
      %v2591 = vpop.f32.mrf.mxu0
      %2592 = vmatprep.mubr.bf16.mxu0 0
      %2593 = vmatmul.mubr.bf16.gmra.mxu0 %v2302
      %v2594 = vpop.f32.mrf.mxu0
      %v2595 = vadd.f32 %v2434, %v2594
      %v2596 = vpop.f32.mrf.mxu0
      %v2597 = vpop.f32.mrf.mxu0
      %v2598 = vadd.f32 %v2437, %v2597
      %v2599 = vpop.f32.mrf.mxu0
      %2600 = vmatprep.mubr.bf16.mxu0 0
      %2601 = vmatmul.mubr.bf16.gmra.mxu0 %v2305
      %v2602 = vpop.f32.mrf.mxu0
      %v2603 = vadd.f32 %v2442, %v2602
      %v2604 = vpop.f32.mrf.mxu0
      %v2605 = vpop.f32.mrf.mxu0
      %v2606 = vadd.f32 %v2445, %v2605
      %v2607 = vpop.f32.mrf.mxu0
      %2608 = vmatprep.mubr.bf16.mxu0 0
      %2609 = vmatmul.mubr.bf16.gmra.mxu0 %v2308
      %v2610 = vpop.f32.mrf.mxu0
      %v2611 = vadd.f32 %v2450, %v2610
      %v2612 = vpop.f32.mrf.mxu0
      %v2613 = vpop.f32.mrf.mxu0
      %v2614 = vadd.f32 %v2453, %v2613
      %v2615 = vpop.f32.mrf.mxu0
      %2616 = vmatprep.mubr.bf16.mxu0 0
      %2617 = vmatmul.mubr.bf16.gmra.mxu0 %v2311
      %v2618 = vpop.f32.mrf.mxu0
      %v2619 = vadd.f32 %v2458, %v2618
      %v2620 = vpop.f32.mrf.mxu0
      %v2621 = vpop.f32.mrf.mxu0
      %v2622 = vadd.f32 %v2461, %v2621
      %v2623 = vpop.f32.mrf.mxu0
      %2624 = vmatprep.mubr.bf16.mxu0 0
      %2625 = vmatmul.mubr.bf16.gmra.mxu0 %v2314
      %v2626 = vpop.f32.mrf.mxu0
      %v2627 = vadd.f32 %v2466, %v2626
      %v2628 = vpop.f32.mrf.mxu0
      %v2629 = vpop.f32.mrf.mxu0
      %v2630 = vadd.f32 %v2469, %v2629
      %v2631 = vpop.f32.mrf.mxu0
      %2632 = vmatprep.mubr.bf16.mxu0 0
      %2633 = vmatmul.mubr.bf16.gmra.mxu0 %v2317
      %v2634 = vpop.f32.mrf.mxu0
      %v2635 = vadd.f32 %v2474, %v2634
      %v2636 = vpop.f32.mrf.mxu0
      %v2637 = vpop.f32.mrf.mxu0
      %v2638 = vadd.f32 %v2477, %v2637
      %v2639 = vpop.f32.mrf.mxu0
      %2640 = vdwg.mxu0
      %v2641 = vmul.f32 %v2515, 0.1
      %v2642 = vmul.f32 %v2518, 0.1
      %v2643 = vmul.f32 %v2523, 0.1
      %v2644 = vmul.f32 %v2526, 0.1
      %v2645 = vmul.f32 %v2531, 0.1
      %v2646 = vmul.f32 %v2534, 0.1
      %v2647 = vmul.f32 %v2539, 0.1
      %v2648 = vmul.f32 %v2542, 0.1
      %v2649 = vmul.f32 %v2547, 0.1
      %v2650 = vmul.f32 %v2550, 0.1
      %v2651 = vmul.f32 %v2555, 0.1
      %v2652 = vmul.f32 %v2558, 0.1
      %v2653 = vmul.f32 %v2563, 0.1
      %v2654 = vmul.f32 %v2566, 0.1
      %v2655 = vmul.f32 %v2571, 0.1
      %v2656 = vmul.f32 %v2574, 0.1
      %v2657 = vmul.f32 %v2579, 0.1
      %v2658 = vmul.f32 %v2582, 0.1
      %v2659 = vmul.f32 %v2587, 0.1
      %v2660 = vmul.f32 %v2590, 0.1
      %v2661 = vmul.f32 %v2595, 0.1
      %v2662 = vmul.f32 %v2598, 0.1
      %v2663 = vmul.f32 %v2603, 0.1
      %v2664 = vmul.f32 %v2606, 0.1
      %v2665 = vmul.f32 %v2611, 0.1
      %v2666 = vmul.f32 %v2614, 0.1
      %v2667 = vmul.f32 %v2619, 0.1
      %v2668 = vmul.f32 %v2622, 0.1
      %v2669 = vmul.f32 %v2627, 0.1
      %v2670 = vmul.f32 %v2630, 0.1
      %v2671 = vmul.f32 %v2635, 0.1
      %v2672 = vmul.f32 %v2638, 0.1
      %v2673 = vmax.f32 %v2515, %v2641
      %v2674 = vmax.f32 %v2518, %v2642
      %v2675 = vmax.f32 %v2523, %v2643
      %v2676 = vmax.f32 %v2526, %v2644
      %v2677 = vmax.f32 %v2531, %v2645
      %v2678 = vmax.f32 %v2534, %v2646
      %v2679 = vmax.f32 %v2539, %v2647
      %v2680 = vmax.f32 %v2542, %v2648
      %v2681 = vmax.f32 %v2547, %v2649
      %v2682 = vmax.f32 %v2550, %v2650
      %v2683 = vmax.f32 %v2555, %v2651
      %v2684 = vmax.f32 %v2558, %v2652
      %v2685 = vmax.f32 %v2563, %v2653
      %v2686 = vmax.f32 %v2566, %v2654
      %v2687 = vmax.f32 %v2571, %v2655
      %v2688 = vmax.f32 %v2574, %v2656
      %v2689 = vmax.f32 %v2579, %v2657
      %v2690 = vmax.f32 %v2582, %v2658
      %v2691 = vmax.f32 %v2587, %v2659
      %v2692 = vmax.f32 %v2590, %v2660
      %v2693 = vmax.f32 %v2595, %v2661
      %v2694 = vmax.f32 %v2598, %v2662
      %v2695 = vmax.f32 %v2603, %v2663
      %v2696 = vmax.f32 %v2606, %v2664
      %v2697 = vmax.f32 %v2611, %v2665
      %v2698 = vmax.f32 %v2614, %v2666
      %v2699 = vmax.f32 %v2619, %v2667
      %v2700 = vmax.f32 %v2622, %v2668
      %v2701 = vmax.f32 %v2627, %v2669
      %v2702 = vmax.f32 %v2630, %v2670
      %v2703 = vmax.f32 %v2635, %v2671
      %v2704 = vmax.f32 %v2638, %v2672
      %2705 = vst.msk [vmem:[#allocation3] sm:$0xff] %vm459, 0.0
      %2706 = vst.msk [vmem:[#allocation3 + $0x8] sm:$0xff] %vm459, 0.0
      %2707 = vst.msk [vmem:[#allocation3 + $0x10] sm:$0x3] %vm735, 0.0
      %2708 = vst.msk [vmem:[#allocation3 + $0x18] sm:$0xff] %vm459, 0.0
      %2709 = vst.msk [vmem:[#allocation3 + $0x20] sm:$0xff] %vm459, 0.0
      %2710 = vst.msk [vmem:[#allocation3 + $0x28] sm:$0x3] %vm735, 0.0
      %2711 = vst.msk [vmem:[#allocation3 + $0x30] sm:$0xff] %vm459, 0.0
      %2712 = vst.msk [vmem:[#allocation3 + $0x38] sm:$0xff] %vm459, 0.0
      %2713 = vst.msk [vmem:[#allocation3 + $0x40] sm:$0x3] %vm735, 0.0
      %2714 = vst.msk [vmem:[#allocation3 + $0x48] sm:$0xff] %vm459, 0.0
      %2715 = vst.msk [vmem:[#allocation3 + $0x50] sm:$0xff] %vm459, 0.0
      %2716 = vst.msk [vmem:[#allocation3 + $0x58] sm:$0x3] %vm735, 0.0
      %2717 = vst.msk [vmem:[#allocation3 + $0x60] sm:$0xff] %vm459, 0.0
      %2718 = vst.msk [vmem:[#allocation3 + $0x68] sm:$0xff] %vm459, 0.0
      %2719 = vst.msk [vmem:[#allocation3 + $0x70] sm:$0x3] %vm735, 0.0
      %2720 = vst.msk [vmem:[#allocation3 + $0x78] sm:$0xff] %vm459, 0.0
      %2721 = vst.msk [vmem:[#allocation3 + $0x80] sm:$0xff] %vm459, 0.0
      %2722 = vst.msk [vmem:[#allocation3 + $0x88] sm:$0x3] %vm735, 0.0
      %2723 = vst.msk [vmem:[#allocation3 + $0x90] sm:$0xff] %vm459, 0.0
      %2724 = vst.msk [vmem:[#allocation3 + $0x98] sm:$0xff] %vm459, 0.0
      %2725 = vst.msk [vmem:[#allocation3 + $0xa0] sm:$0x3] %vm735, 0.0
      %2726 = vst.msk [vmem:[#allocation3 + $0xa8] sm:$0xff] %vm459, 0.0
      %2727 = vst.msk [vmem:[#allocation3 + $0xb0] sm:$0xff] %vm459, 0.0
      %2728 = vst.msk [vmem:[#allocation3 + $0xb8] sm:$0x3] %vm735, 0.0
      %2729 = vst.msk [vmem:[#allocation3 + $0xc0] sm:$0xff] %vm459, 0.0
      %2730 = vst.msk [vmem:[#allocation3 + $0xc8] sm:$0xff] %vm459, 0.0
      %2731 = vst.msk [vmem:[#allocation3 + $0xd0] sm:$0x3] %vm735, 0.0
      %2732 = vst.msk [vmem:[#allocation3 + $0xd8] sm:$0xff] %vm459, 0.0
      %2733 = vst.msk [vmem:[#allocation3 + $0xe0] sm:$0xff] %vm459, 0.0
      %2734 = vst.msk [vmem:[#allocation3 + $0xe8] sm:$0x3] %vm735, 0.0
      %2735 = vst.msk [vmem:[#allocation3 + $0xf0] sm:$0xff] %vm459, 0.0
      %2736 = vst.msk [vmem:[#allocation3 + $0xf8] sm:$0xff] %vm459, 0.0
      %2737 = vst.msk [vmem:[#allocation3 + $0x100] sm:$0x3] %vm735, 0.0
      %2738 = vst.msk [vmem:[#allocation3 + $0x108] sm:$0xff] %vm459, 0.0
      %2739 = vst.msk [vmem:[#allocation3 + $0x110] sm:$0xff] %vm459, 0.0
      %2740 = vst.msk [vmem:[#allocation3 + $0x118] sm:$0x3] %vm735, 0.0
      %2741 = vst.msk [vmem:[#allocation3 + $0x120] sm:$0xff] %vm459, 0.0
      %2742 = vst.msk [vmem:[#allocation3 + $0x128] sm:$0xff] %vm459, 0.0
      %2743 = vst.msk [vmem:[#allocation3 + $0x130] sm:$0x3] %vm735, 0.0
      %2744 = vst.msk [vmem:[#allocation3 + $0x138] sm:$0xff] %vm459, 0.0
      %2745 = vst.msk [vmem:[#allocation3 + $0x140] sm:$0xff] %vm459, 0.0
      %2746 = vst.msk [vmem:[#allocation3 + $0x148] sm:$0x3] %vm735, 0.0
      %2747 = vst.msk [vmem:[#allocation3 + $0x150] sm:$0xff] %vm459, 0.0
      %2748 = vst.msk [vmem:[#allocation3 + $0x158] sm:$0xff] %vm459, 0.0
      %2749 = vst.msk [vmem:[#allocation3 + $0x160] sm:$0x3] %vm735, 0.0
      %2750 = vst.msk [vmem:[#allocation3 + $0x168] sm:$0xff] %vm459, 0.0
      %2751 = vst.msk [vmem:[#allocation3 + $0x170] sm:$0xff] %vm459, 0.0
      %2752 = vst.msk [vmem:[#allocation3 + $0x178] sm:$0x3] %vm735, 0.0
      %2753 = vst.msk [vmem:[#allocation3 + $0x180] sm:$0xff] %vm459, 0.0
      %2754 = vst.msk [vmem:[#allocation3 + $0x188] sm:$0xff] %vm459, 0.0
      %2755 = vst.msk [vmem:[#allocation3 + $0x190] sm:$0x3] %vm735, 0.0
      %2756 = vst.msk [vmem:[#allocation3 + $0x198] sm:$0xff] %vm459, 0.0
      %2757 = vst.msk [vmem:[#allocation3 + $0x1a0] sm:$0xff] %vm459, 0.0
      %2758 = vst.msk [vmem:[#allocation3 + $0x1a8] sm:$0x3] %vm735, 0.0
      %2759 = vst.msk [vmem:[#allocation4] sm:$0xff] %vm459, 0.0
      %2760 = vst.msk [vmem:[#allocation4 + $0x8] sm:$0xff] %vm459, 0.0
      %2761 = vst.msk [vmem:[#allocation4 + $0x10] sm:$0x3] %vm735, 0.0
      %2762 = vst.msk [vmem:[#allocation4 + $0x18] sm:$0xff] %vm459, 0.0
      %2763 = vst.msk [vmem:[#allocation4 + $0x20] sm:$0xff] %vm459, 0.0
      %2764 = vst.msk [vmem:[#allocation4 + $0x28] sm:$0x3] %vm735, 0.0
      %2765 = vst.msk [vmem:[#allocation4 + $0x30] sm:$0xff] %vm459, 0.0
      %2766 = vst.msk [vmem:[#allocation4 + $0x38] sm:$0xff] %vm459, 0.0
      %2767 = vst.msk [vmem:[#allocation4 + $0x40] sm:$0x3] %vm735, 0.0
      %2768 = vst.msk [vmem:[#allocation4 + $0x48] sm:$0xff] %vm459, 0.0
      %2769 = vst.msk [vmem:[#allocation4 + $0x50] sm:$0xff] %vm459, 0.0
      %2770 = vst.msk [vmem:[#allocation4 + $0x58] sm:$0x3] %vm735, 0.0
      %2771 = vst.msk [vmem:[#allocation4 + $0x60] sm:$0xff] %vm459, 0.0
      %2772 = vst.msk [vmem:[#allocation4 + $0x68] sm:$0xff] %vm459, 0.0
      %2773 = vst.msk [vmem:[#allocation4 + $0x70] sm:$0x3] %vm735, 0.0
      %2774 = vst.msk [vmem:[#allocation4 + $0x78] sm:$0xff] %vm459, 0.0
      %2775 = vst.msk [vmem:[#allocation4 + $0x80] sm:$0xff] %vm459, 0.0
      %2776 = vst.msk [vmem:[#allocation4 + $0x88] sm:$0x3] %vm735, 0.0
      %2777 = vst.msk [vmem:[#allocation4 + $0x90] sm:$0xff] %vm459, 0.0
      %2778 = vst.msk [vmem:[#allocation4 + $0x98] sm:$0xff] %vm459, 0.0
      %2779 = vst.msk [vmem:[#allocation4 + $0xa0] sm:$0x3] %vm735, 0.0
      %2780 = vst.msk [vmem:[#allocation4 + $0xa8] sm:$0xff] %vm459, 0.0
      %2781 = vst.msk [vmem:[#allocation4 + $0xb0] sm:$0xff] %vm459, 0.0
      %2782 = vst.msk [vmem:[#allocation4 + $0xb8] sm:$0x3] %vm735, 0.0
      %2783 = vst.msk [vmem:[#allocation4 + $0xc0] sm:$0xff] %vm459, 0.0
      %2784 = vst.msk [vmem:[#allocation4 + $0xc8] sm:$0xff] %vm459, 0.0
      %2785 = vst.msk [vmem:[#allocation4 + $0xd0] sm:$0x3] %vm735, 0.0
      %2786 = vst.msk [vmem:[#allocation4 + $0xd8] sm:$0xff] %vm459, 0.0
      %2787 = vst.msk [vmem:[#allocation4 + $0xe0] sm:$0xff] %vm459, 0.0
      %2788 = vst.msk [vmem:[#allocation4 + $0xe8] sm:$0x3] %vm735, 0.0
      %2789 = vst.msk [vmem:[#allocation4 + $0xf0] sm:$0xff] %vm459, 0.0
      %2790 = vst.msk [vmem:[#allocation4 + $0xf8] sm:$0xff] %vm459, 0.0
      %2791 = vst.msk [vmem:[#allocation4 + $0x100] sm:$0x3] %vm735, 0.0
      %2792 = vst.msk [vmem:[#allocation4 + $0x108] sm:$0xff] %vm459, 0.0
      %2793 = vst.msk [vmem:[#allocation4 + $0x110] sm:$0xff] %vm459, 0.0
      %2794 = vst.msk [vmem:[#allocation4 + $0x118] sm:$0x3] %vm735, 0.0
      %2795 = vst.msk [vmem:[#allocation4 + $0x120] sm:$0xff] %vm459, 0.0
      %2796 = vst.msk [vmem:[#allocation4 + $0x128] sm:$0xff] %vm459, 0.0
      %2797 = vst.msk [vmem:[#allocation4 + $0x130] sm:$0x3] %vm735, 0.0
      %2798 = vst.msk [vmem:[#allocation4 + $0x138] sm:$0xff] %vm459, 0.0
      %2799 = vst.msk [vmem:[#allocation4 + $0x140] sm:$0xff] %vm459, 0.0
      %2800 = vst.msk [vmem:[#allocation4 + $0x148] sm:$0x3] %vm735, 0.0
      %2801 = vst.msk [vmem:[#allocation4 + $0x150] sm:$0xff] %vm459, 0.0
      %2802 = vst.msk [vmem:[#allocation4 + $0x158] sm:$0xff] %vm459, 0.0
      %2803 = vst.msk [vmem:[#allocation4 + $0x160] sm:$0x3] %vm735, 0.0
      %2804 = vst.msk [vmem:[#allocation4 + $0x168] sm:$0xff] %vm459, 0.0
      %2805 = vst.msk [vmem:[#allocation4 + $0x170] sm:$0xff] %vm459, 0.0
      %2806 = vst.msk [vmem:[#allocation4 + $0x178] sm:$0x3] %vm735, 0.0
      %2807 = vst.msk [vmem:[#allocation4 + $0x180] sm:$0xff] %vm459, 0.0
      %2808 = vst.msk [vmem:[#allocation4 + $0x188] sm:$0xff] %vm459, 0.0
      %2809 = vst.msk [vmem:[#allocation4 + $0x190] sm:$0x3] %vm735, 0.0
      %2810 = vst.msk [vmem:[#allocation4 + $0x198] sm:$0xff] %vm459, 0.0
      %2811 = vst.msk [vmem:[#allocation4 + $0x1a0] sm:$0xff] %vm459, 0.0
      %2812 = vst.msk [vmem:[#allocation4 + $0x1a8] sm:$0x3] %vm735, 0.0
      %s2813 = scalar_lea.vmem [#allocation3], 24
      %2814 = vst.msk [vmem:[%s2813 + $0x1] sm:$0xff] %vm459, %v2673
      %2815 = vst.msk [vmem:[%s2813 + $0x9] sm:$0xff] %vm459, %v2674
      %2816 = vst.msk [vmem:[%s2813 + $0x19] sm:$0xff] %vm459, %v2675
      %2817 = vst.msk [vmem:[%s2813 + $0x21] sm:$0xff] %vm459, %v2676
      %2818 = vst.msk [vmem:[%s2813 + $0x31] sm:$0xff] %vm459, %v2677
      %2819 = vst.msk [vmem:[%s2813 + $0x39] sm:$0xff] %vm459, %v2678
      %2820 = vst.msk [vmem:[%s2813 + $0x49] sm:$0xff] %vm459, %v2679
      %2821 = vst.msk [vmem:[%s2813 + $0x51] sm:$0xff] %vm459, %v2680
      %2822 = vst.msk [vmem:[%s2813 + $0x61] sm:$0xff] %vm459, %v2681
      %2823 = vst.msk [vmem:[%s2813 + $0x69] sm:$0xff] %vm459, %v2682
      %2824 = vst.msk [vmem:[%s2813 + $0x79] sm:$0xff] %vm459, %v2683
      %2825 = vst.msk [vmem:[%s2813 + $0x81] sm:$0xff] %vm459, %v2684
      %2826 = vst.msk [vmem:[%s2813 + $0x91] sm:$0xff] %vm459, %v2685
      %2827 = vst.msk [vmem:[%s2813 + $0x99] sm:$0xff] %vm459, %v2686
      %2828 = vst.msk [vmem:[%s2813 + $0xa9] sm:$0xff] %vm459, %v2687
      %2829 = vst.msk [vmem:[%s2813 + $0xb1] sm:$0xff] %vm459, %v2688
      %2830 = vst.msk [vmem:[%s2813 + $0xc1] sm:$0xff] %vm459, %v2689
      %2831 = vst.msk [vmem:[%s2813 + $0xc9] sm:$0xff] %vm459, %v2690
      %2832 = vst.msk [vmem:[%s2813 + $0xd9] sm:$0xff] %vm459, %v2691
      %2833 = vst.msk [vmem:[%s2813 + $0xe1] sm:$0xff] %vm459, %v2692
      %2834 = vst.msk [vmem:[%s2813 + $0xf1] sm:$0xff] %vm459, %v2693
      %2835 = vst.msk [vmem:[%s2813 + $0xf9] sm:$0xff] %vm459, %v2694
      %2836 = vst.msk [vmem:[%s2813 + $0x109] sm:$0xff] %vm459, %v2695
      %2837 = vst.msk [vmem:[%s2813 + $0x111] sm:$0xff] %vm459, %v2696
      %2838 = vst.msk [vmem:[%s2813 + $0x121] sm:$0xff] %vm459, %v2697
      %2839 = vst.msk [vmem:[%s2813 + $0x129] sm:$0xff] %vm459, %v2698
      %2840 = vst.msk [vmem:[%s2813 + $0x139] sm:$0xff] %vm459, %v2699
      %2841 = vst.msk [vmem:[%s2813 + $0x141] sm:$0xff] %vm459, %v2700
      %2842 = vst.msk [vmem:[%s2813 + $0x151] sm:$0xff] %vm459, %v2701
      %2843 = vst.msk [vmem:[%s2813 + $0x159] sm:$0xff] %vm459, %v2702
      %2844 = vst.msk [vmem:[%s2813 + $0x169] sm:$0xff] %vm459, %v2703
      %2845 = vst.msk [vmem:[%s2813 + $0x171] sm:$0xff] %vm459, %v2704
      %2878 = vrot.lane.b32.xlu0 %v2673, 96
      %v2879 = vpop.permute.xlu0 %2878
      %2880 = vrot.lane.b32.xlu0 %v2674, 96
      %v2881 = vpop.permute.xlu0 %2880
      %2882 = vrot.lane.b32.xlu0 %v2675, 96
      %v2883 = vpop.permute.xlu0 %2882
      %2884 = vrot.lane.b32.xlu0 %v2676, 96
      %v2885 = vpop.permute.xlu0 %2884
      %2886 = vrot.lane.b32.xlu0 %v2677, 96
      %v2887 = vpop.permute.xlu0 %2886
      %2888 = vrot.lane.b32.xlu0 %v2678, 96
      %v2889 = vpop.permute.xlu0 %2888
      %2890 = vrot.lane.b32.xlu0 %v2679, 96
      %v2891 = vpop.permute.xlu0 %2890
      %2892 = vrot.lane.b32.xlu0 %v2680, 96
      %v2893 = vpop.permute.xlu0 %2892
      %2894 = vrot.lane.b32.xlu0 %v2681, 96
      %v2895 = vpop.permute.xlu0 %2894
      %2896 = vrot.lane.b32.xlu0 %v2682, 96
      %v2897 = vpop.permute.xlu0 %2896
      %2898 = vrot.lane.b32.xlu0 %v2683, 96
      %v2899 = vpop.permute.xlu0 %2898
      %2900 = vrot.lane.b32.xlu0 %v2684, 96
      %v2901 = vpop.permute.xlu0 %2900
      %2902 = vrot.lane.b32.xlu0 %v2685, 96
      %v2903 = vpop.permute.xlu0 %2902
      %2904 = vrot.lane.b32.xlu0 %v2686, 96
      %v2905 = vpop.permute.xlu0 %2904
      %2906 = vrot.lane.b32.xlu0 %v2687, 96
      %v2907 = vpop.permute.xlu0 %2906
      %2908 = vrot.lane.b32.xlu0 %v2688, 96
      %v2909 = vpop.permute.xlu0 %2908
      %2910 = vrot.lane.b32.xlu0 %v2689, 96
      %v2911 = vpop.permute.xlu0 %2910
      %2912 = vrot.lane.b32.xlu0 %v2690, 96
      %v2913 = vpop.permute.xlu0 %2912
      %2914 = vrot.lane.b32.xlu0 %v2691, 96
      %v2915 = vpop.permute.xlu0 %2914
      %2916 = vrot.lane.b32.xlu0 %v2692, 96
      %v2917 = vpop.permute.xlu0 %2916
      %2918 = vrot.lane.b32.xlu0 %v2693, 96
      %v2919 = vpop.permute.xlu0 %2918
      %2920 = vrot.lane.b32.xlu0 %v2694, 96
      %v2921 = vpop.permute.xlu0 %2920
      %2922 = vrot.lane.b32.xlu0 %v2695, 96
      %v2923 = vpop.permute.xlu0 %2922
      %2924 = vrot.lane.b32.xlu0 %v2696, 96
      %v2925 = vpop.permute.xlu0 %2924
      %2926 = vrot.lane.b32.xlu0 %v2697, 96
      %v2927 = vpop.permute.xlu0 %2926
      %2928 = vrot.lane.b32.xlu0 %v2698, 96
      %v2929 = vpop.permute.xlu0 %2928
      %2930 = vrot.lane.b32.xlu0 %v2699, 96
      %v2931 = vpop.permute.xlu0 %2930
      %2932 = vrot.lane.b32.xlu0 %v2700, 96
      %v2933 = vpop.permute.xlu0 %2932
      %2934 = vrot.lane.b32.xlu0 %v2701, 96
      %v2935 = vpop.permute.xlu0 %2934
      %2936 = vrot.lane.b32.xlu0 %v2702, 96
      %v2937 = vpop.permute.xlu0 %2936
      %2938 = vrot.lane.b32.xlu0 %v2703, 96
      %v2939 = vpop.permute.xlu0 %2938
      %2940 = vrot.lane.b32.xlu0 %v2704, 96
      %v2941 = vpop.permute.xlu0 %2940
      %s2974 = scalar_lea.vmem [#allocation4], 24
      %2975 = vst.msk [vmem:[%s2974 + $0x1] sm:$0xff] %vm459, %v2879
      %2976 = vst.msk [vmem:[%s2974 + $0x9] sm:$0xff] %vm459, %v2881
      %2977 = vst.msk [vmem:[%s2974 + $0x19] sm:$0xff] %vm459, %v2883
      %2978 = vst.msk [vmem:[%s2974 + $0x21] sm:$0xff] %vm459, %v2885
      %2979 = vst.msk [vmem:[%s2974 + $0x31] sm:$0xff] %vm459, %v2887
      %2980 = vst.msk [vmem:[%s2974 + $0x39] sm:$0xff] %vm459, %v2889
      %2981 = vst.msk [vmem:[%s2974 + $0x49] sm:$0xff] %vm459, %v2891
      %2982 = vst.msk [vmem:[%s2974 + $0x51] sm:$0xff] %vm459, %v2893
      %2983 = vst.msk [vmem:[%s2974 + $0x61] sm:$0xff] %vm459, %v2895
      %2984 = vst.msk [vmem:[%s2974 + $0x69] sm:$0xff] %vm459, %v2897
      %2985 = vst.msk [vmem:[%s2974 + $0x79] sm:$0xff] %vm459, %v2899
      %2986 = vst.msk [vmem:[%s2974 + $0x81] sm:$0xff] %vm459, %v2901
      %2987 = vst.msk [vmem:[%s2974 + $0x91] sm:$0xff] %vm459, %v2903
      %2988 = vst.msk [vmem:[%s2974 + $0x99] sm:$0xff] %vm459, %v2905
      %2989 = vst.msk [vmem:[%s2974 + $0xa9] sm:$0xff] %vm459, %v2907
      %2990 = vst.msk [vmem:[%s2974 + $0xb1] sm:$0xff] %vm459, %v2909
      %2991 = vst.msk [vmem:[%s2974 + $0xc1] sm:$0xff] %vm459, %v2911
      %2992 = vst.msk [vmem:[%s2974 + $0xc9] sm:$0xff] %vm459, %v2913
      %2993 = vst.msk [vmem:[%s2974 + $0xd9] sm:$0xff] %vm459, %v2915
      %2994 = vst.msk [vmem:[%s2974 + $0xe1] sm:$0xff] %vm459, %v2917
      %2995 = vst.msk [vmem:[%s2974 + $0xf1] sm:$0xff] %vm459, %v2919
      %2996 = vst.msk [vmem:[%s2974 + $0xf9] sm:$0xff] %vm459, %v2921
      %2997 = vst.msk [vmem:[%s2974 + $0x109] sm:$0xff] %vm459, %v2923
      %2998 = vst.msk [vmem:[%s2974 + $0x111] sm:$0xff] %vm459, %v2925
      %2999 = vst.msk [vmem:[%s2974 + $0x121] sm:$0xff] %vm459, %v2927
      %3000 = vst.msk [vmem:[%s2974 + $0x129] sm:$0xff] %vm459, %v2929
      %3001 = vst.msk [vmem:[%s2974 + $0x139] sm:$0xff] %vm459, %v2931
      %3002 = vst.msk [vmem:[%s2974 + $0x141] sm:$0xff] %vm459, %v2933
      %3003 = vst.msk [vmem:[%s2974 + $0x151] sm:$0xff] %vm459, %v2935
      %3004 = vst.msk [vmem:[%s2974 + $0x159] sm:$0xff] %vm459, %v2937
      %3005 = vst.msk [vmem:[%s2974 + $0x169] sm:$0xff] %vm459, %v2939
      %3006 = vst.msk [vmem:[%s2974 + $0x171] sm:$0xff] %vm459, %v2941
      %v3007 = vld [vmem:[#allocation3] sm:$0xff]
      %v3008 = vld [vmem:[#allocation3 + $0x8] sm:$0xff]
      %v3009 = vld [vmem:[#allocation3 + $0x18] sm:$0xff]
      %v3010 = vld [vmem:[#allocation3 + $0x20] sm:$0xff]
      %v3011 = vld [vmem:[#allocation3 + $0x30] sm:$0xff]
      %v3012 = vld [vmem:[#allocation3 + $0x38] sm:$0xff]
      %v3013 = vld [vmem:[#allocation3 + $0x48] sm:$0xff]
      %v3014 = vld [vmem:[#allocation3 + $0x50] sm:$0xff]
      %v3015 = vld [vmem:[#allocation3 + $0x60] sm:$0xff]
      %v3016 = vld [vmem:[#allocation3 + $0x68] sm:$0xff]
      %v3017 = vld [vmem:[#allocation3 + $0x78] sm:$0xff]
      %v3018 = vld [vmem:[#allocation3 + $0x80] sm:$0xff]
      %v3019 = vld [vmem:[#allocation3 + $0x90] sm:$0xff]
      %v3020 = vld [vmem:[#allocation3 + $0x98] sm:$0xff]
      %v3021 = vld [vmem:[#allocation3 + $0xa8] sm:$0xff]
      %v3022 = vld [vmem:[#allocation3 + $0xb0] sm:$0xff]
      %v3023 = vld [vmem:[#allocation3 + $0xc0] sm:$0xff]
      %v3024 = vld [vmem:[#allocation3 + $0xc8] sm:$0xff]
      %v3025 = vld [vmem:[#allocation3 + $0xd8] sm:$0xff]
      %v3026 = vld [vmem:[#allocation3 + $0xe0] sm:$0xff]
      %v3027 = vld [vmem:[#allocation3 + $0xf0] sm:$0xff]
      %v3028 = vld [vmem:[#allocation3 + $0xf8] sm:$0xff]
      %v3029 = vld [vmem:[#allocation3 + $0x108] sm:$0xff]
      %v3030 = vld [vmem:[#allocation3 + $0x110] sm:$0xff]
      %v3031 = vld [vmem:[#allocation3 + $0x120] sm:$0xff]
      %v3032 = vld [vmem:[#allocation3 + $0x128] sm:$0xff]
      %v3033 = vld [vmem:[#allocation3 + $0x138] sm:$0xff]
      %v3034 = vld [vmem:[#allocation3 + $0x140] sm:$0xff]
      %v3035 = vld [vmem:[#allocation3 + $0x150] sm:$0xff]
      %v3036 = vld [vmem:[#allocation3 + $0x158] sm:$0xff]
      %v3037 = vld [vmem:[#allocation3 + $0x168] sm:$0xff]
      %v3038 = vld [vmem:[#allocation3 + $0x170] sm:$0xff]
      %v3039 = vld [vmem:[#allocation3 + $0x1] sm:$0xff]
      %v3040 = vld [vmem:[#allocation3 + $0x9] sm:$0xff]
      %v3041 = vld [vmem:[#allocation3 + $0x19] sm:$0xff]
      %v3042 = vld [vmem:[#allocation3 + $0x21] sm:$0xff]
      %v3043 = vld [vmem:[#allocation3 + $0x31] sm:$0xff]
      %v3044 = vld [vmem:[#allocation3 + $0x39] sm:$0xff]
      %v3045 = vld [vmem:[#allocation3 + $0x49] sm:$0xff]
      %v3046 = vld [vmem:[#allocation3 + $0x51] sm:$0xff]
      %v3047 = vld [vmem:[#allocation3 + $0x61] sm:$0xff]
      %v3048 = vld [vmem:[#allocation3 + $0x69] sm:$0xff]
      %v3049 = vld [vmem:[#allocation3 + $0x79] sm:$0xff]
      %v3050 = vld [vmem:[#allocation3 + $0x81] sm:$0xff]
      %v3051 = vld [vmem:[#allocation3 + $0x91] sm:$0xff]
      %v3052 = vld [vmem:[#allocation3 + $0x99] sm:$0xff]
      %v3053 = vld [vmem:[#allocation3 + $0xa9] sm:$0xff]
      %v3054 = vld [vmem:[#allocation3 + $0xb1] sm:$0xff]
      %v3055 = vld [vmem:[#allocation3 + $0xc1] sm:$0xff]
      %v3056 = vld [vmem:[#allocation3 + $0xc9] sm:$0xff]
      %v3057 = vld [vmem:[#allocation3 + $0xd9] sm:$0xff]
      %v3058 = vld [vmem:[#allocation3 + $0xe1] sm:$0xff]
      %v3059 = vld [vmem:[#allocation3 + $0xf1] sm:$0xff]
      %v3060 = vld [vmem:[#allocation3 + $0xf9] sm:$0xff]
      %v3061 = vld [vmem:[#allocation3 + $0x109] sm:$0xff]
      %v3062 = vld [vmem:[#allocation3 + $0x111] sm:$0xff]
      %v3063 = vld [vmem:[#allocation3 + $0x121] sm:$0xff]
      %v3064 = vld [vmem:[#allocation3 + $0x129] sm:$0xff]
      %v3065 = vld [vmem:[#allocation3 + $0x139] sm:$0xff]
      %v3066 = vld [vmem:[#allocation3 + $0x141] sm:$0xff]
      %v3067 = vld [vmem:[#allocation3 + $0x151] sm:$0xff]
      %v3068 = vld [vmem:[#allocation3 + $0x159] sm:$0xff]
      %v3069 = vld [vmem:[#allocation3 + $0x169] sm:$0xff]
      %v3070 = vld [vmem:[#allocation3 + $0x171] sm:$0xff]
      %v3071 = vld [vmem:[#allocation3 + $0x2] sm:$0xff]
      %v3072 = vld [vmem:[#allocation3 + $0xa] sm:$0xff]
      %v3073 = vld [vmem:[#allocation3 + $0x1a] sm:$0xff]
      %v3074 = vld [vmem:[#allocation3 + $0x22] sm:$0xff]
      %v3075 = vld [vmem:[#allocation3 + $0x32] sm:$0xff]
      %v3076 = vld [vmem:[#allocation3 + $0x3a] sm:$0xff]
      %v3077 = vld [vmem:[#allocation3 + $0x4a] sm:$0xff]
      %v3078 = vld [vmem:[#allocation3 + $0x52] sm:$0xff]
      %v3079 = vld [vmem:[#allocation3 + $0x62] sm:$0xff]
      %v3080 = vld [vmem:[#allocation3 + $0x6a] sm:$0xff]
      %v3081 = vld [vmem:[#allocation3 + $0x7a] sm:$0xff]
      %v3082 = vld [vmem:[#allocation3 + $0x82] sm:$0xff]
      %v3083 = vld [vmem:[#allocation3 + $0x92] sm:$0xff]
      %v3084 = vld [vmem:[#allocation3 + $0x9a] sm:$0xff]
      %v3085 = vld [vmem:[#allocation3 + $0xaa] sm:$0xff]
      %v3086 = vld [vmem:[#allocation3 + $0xb2] sm:$0xff]
      %v3087 = vld [vmem:[#allocation3 + $0xc2] sm:$0xff]
      %v3088 = vld [vmem:[#allocation3 + $0xca] sm:$0xff]
      %v3089 = vld [vmem:[#allocation3 + $0xda] sm:$0xff]
      %v3090 = vld [vmem:[#allocation3 + $0xe2] sm:$0xff]
      %v3091 = vld [vmem:[#allocation3 + $0xf2] sm:$0xff]
      %v3092 = vld [vmem:[#allocation3 + $0xfa] sm:$0xff]
      %v3093 = vld [vmem:[#allocation3 + $0x10a] sm:$0xff]
      %v3094 = vld [vmem:[#allocation3 + $0x112] sm:$0xff]
      %v3095 = vld [vmem:[#allocation3 + $0x122] sm:$0xff]
      %v3096 = vld [vmem:[#allocation3 + $0x12a] sm:$0xff]
      %v3097 = vld [vmem:[#allocation3 + $0x13a] sm:$0xff]
      %v3098 = vld [vmem:[#allocation3 + $0x142] sm:$0xff]
      %v3099 = vld [vmem:[#allocation3 + $0x152] sm:$0xff]
      %v3100 = vld [vmem:[#allocation3 + $0x15a] sm:$0xff]
      %v3101 = vld [vmem:[#allocation3 + $0x16a] sm:$0xff]
      %v3102 = vld [vmem:[#allocation3 + $0x172] sm:$0xff]
      %v3103 = vld [vmem:[%s2813] sm:$0xff]
      %v3104 = vld [vmem:[%s2813 + $0x8] sm:$0xff]
      %v3105 = vld [vmem:[%s2813 + $0x18] sm:$0xff]
      %v3106 = vld [vmem:[%s2813 + $0x20] sm:$0xff]
      %v3107 = vld [vmem:[%s2813 + $0x30] sm:$0xff]
      %v3108 = vld [vmem:[%s2813 + $0x38] sm:$0xff]
      %v3109 = vld [vmem:[%s2813 + $0x48] sm:$0xff]
      %v3110 = vld [vmem:[%s2813 + $0x50] sm:$0xff]
      %v3111 = vld [vmem:[%s2813 + $0x60] sm:$0xff]
      %v3112 = vld [vmem:[%s2813 + $0x68] sm:$0xff]
      %v3113 = vld [vmem:[%s2813 + $0x78] sm:$0xff]
      %v3114 = vld [vmem:[%s2813 + $0x80] sm:$0xff]
      %v3115 = vld [vmem:[%s2813 + $0x90] sm:$0xff]
      %v3116 = vld [vmem:[%s2813 + $0x98] sm:$0xff]
      %v3117 = vld [vmem:[%s2813 + $0xa8] sm:$0xff]
      %v3118 = vld [vmem:[%s2813 + $0xb0] sm:$0xff]
      %v3119 = vld [vmem:[%s2813 + $0xc0] sm:$0xff]
      %v3120 = vld [vmem:[%s2813 + $0xc8] sm:$0xff]
      %v3121 = vld [vmem:[%s2813 + $0xd8] sm:$0xff]
      %v3122 = vld [vmem:[%s2813 + $0xe0] sm:$0xff]
      %v3123 = vld [vmem:[%s2813 + $0xf0] sm:$0xff]
      %v3124 = vld [vmem:[%s2813 + $0xf8] sm:$0xff]
      %v3125 = vld [vmem:[%s2813 + $0x108] sm:$0xff]
      %v3126 = vld [vmem:[%s2813 + $0x110] sm:$0xff]
      %v3127 = vld [vmem:[%s2813 + $0x120] sm:$0xff]
      %v3128 = vld [vmem:[%s2813 + $0x128] sm:$0xff]
      %v3129 = vld [vmem:[%s2813 + $0x138] sm:$0xff]
      %v3130 = vld [vmem:[%s2813 + $0x140] sm:$0xff]
      %v3131 = vld [vmem:[%s2813 + $0x150] sm:$0xff]
      %v3132 = vld [vmem:[%s2813 + $0x158] sm:$0xff]
      %v3133 = vld [vmem:[%s2813 + $0x168] sm:$0xff]
      %v3134 = vld [vmem:[%s2813 + $0x170] sm:$0xff]
      %v3135 = vld [vmem:[%s2813 + $0x1] sm:$0xff]
      %v3136 = vld [vmem:[%s2813 + $0x9] sm:$0xff]
      %v3137 = vld [vmem:[%s2813 + $0x19] sm:$0xff]
      %v3138 = vld [vmem:[%s2813 + $0x21] sm:$0xff]
      %v3139 = vld [vmem:[%s2813 + $0x31] sm:$0xff]
      %v3140 = vld [vmem:[%s2813 + $0x39] sm:$0xff]
      %v3141 = vld [vmem:[%s2813 + $0x49] sm:$0xff]
      %v3142 = vld [vmem:[%s2813 + $0x51] sm:$0xff]
      %v3143 = vld [vmem:[%s2813 + $0x61] sm:$0xff]
      %v3144 = vld [vmem:[%s2813 + $0x69] sm:$0xff]
      %v3145 = vld [vmem:[%s2813 + $0x79] sm:$0xff]
      %v3146 = vld [vmem:[%s2813 + $0x81] sm:$0xff]
      %v3147 = vld [vmem:[%s2813 + $0x91] sm:$0xff]
      %v3148 = vld [vmem:[%s2813 + $0x99] sm:$0xff]
      %v3149 = vld [vmem:[%s2813 + $0xa9] sm:$0xff]
      %v3150 = vld [vmem:[%s2813 + $0xb1] sm:$0xff]
      %v3151 = vld [vmem:[%s2813 + $0xc1] sm:$0xff]
      %v3152 = vld [vmem:[%s2813 + $0xc9] sm:$0xff]
      %v3153 = vld [vmem:[%s2813 + $0xd9] sm:$0xff]
      %v3154 = vld [vmem:[%s2813 + $0xe1] sm:$0xff]
      %v3155 = vld [vmem:[%s2813 + $0xf1] sm:$0xff]
      %v3156 = vld [vmem:[%s2813 + $0xf9] sm:$0xff]
      %v3157 = vld [vmem:[%s2813 + $0x109] sm:$0xff]
      %v3158 = vld [vmem:[%s2813 + $0x111] sm:$0xff]
      %v3159 = vld [vmem:[%s2813 + $0x121] sm:$0xff]
      %v3160 = vld [vmem:[%s2813 + $0x129] sm:$0xff]
      %v3161 = vld [vmem:[%s2813 + $0x139] sm:$0xff]
      %v3162 = vld [vmem:[%s2813 + $0x141] sm:$0xff]
      %v3163 = vld [vmem:[%s2813 + $0x151] sm:$0xff]
      %v3164 = vld [vmem:[%s2813 + $0x159] sm:$0xff]
      %v3165 = vld [vmem:[%s2813 + $0x169] sm:$0xff]
      %v3166 = vld [vmem:[%s2813 + $0x171] sm:$0xff]
      %v3167 = vld [vmem:[%s2813 + $0x2] sm:$0xff]
      %v3168 = vld [vmem:[%s2813 + $0xa] sm:$0xff]
      %v3169 = vld [vmem:[%s2813 + $0x1a] sm:$0xff]
      %v3170 = vld [vmem:[%s2813 + $0x22] sm:$0xff]
      %v3171 = vld [vmem:[%s2813 + $0x32] sm:$0xff]
      %v3172 = vld [vmem:[%s2813 + $0x3a] sm:$0xff]
      %v3173 = vld [vmem:[%s2813 + $0x4a] sm:$0xff]
      %v3174 = vld [vmem:[%s2813 + $0x52] sm:$0xff]
      %v3175 = vld [vmem:[%s2813 + $0x62] sm:$0xff]
      %v3176 = vld [vmem:[%s2813 + $0x6a] sm:$0xff]
      %v3177 = vld [vmem:[%s2813 + $0x7a] sm:$0xff]
      %v3178 = vld [vmem:[%s2813 + $0x82] sm:$0xff]
      %v3179 = vld [vmem:[%s2813 + $0x92] sm:$0xff]
      %v3180 = vld [vmem:[%s2813 + $0x9a] sm:$0xff]
      %v3181 = vld [vmem:[%s2813 + $0xaa] sm:$0xff]
      %v3182 = vld [vmem:[%s2813 + $0xb2] sm:$0xff]
      %v3183 = vld [vmem:[%s2813 + $0xc2] sm:$0xff]
      %v3184 = vld [vmem:[%s2813 + $0xca] sm:$0xff]
      %v3185 = vld [vmem:[%s2813 + $0xda] sm:$0xff]
      %v3186 = vld [vmem:[%s2813 + $0xe2] sm:$0xff]
      %v3187 = vld [vmem:[%s2813 + $0xf2] sm:$0xff]
      %v3188 = vld [vmem:[%s2813 + $0xfa] sm:$0xff]
      %v3189 = vld [vmem:[%s2813 + $0x10a] sm:$0xff]
      %v3190 = vld [vmem:[%s2813 + $0x112] sm:$0xff]
      %v3191 = vld [vmem:[%s2813 + $0x122] sm:$0xff]
      %v3192 = vld [vmem:[%s2813 + $0x12a] sm:$0xff]
      %v3193 = vld [vmem:[%s2813 + $0x13a] sm:$0xff]
      %v3194 = vld [vmem:[%s2813 + $0x142] sm:$0xff]
      %v3195 = vld [vmem:[%s2813 + $0x152] sm:$0xff]
      %v3196 = vld [vmem:[%s2813 + $0x15a] sm:$0xff]
      %v3197 = vld [vmem:[%s2813 + $0x16a] sm:$0xff]
      %v3198 = vld [vmem:[%s2813 + $0x172] sm:$0xff]
      %s3199 = scalar_lea.vmem [#allocation3], 48
      %v3200 = vld [vmem:[%s3199] sm:$0xff]
      %v3201 = vld [vmem:[%s3199 + $0x8] sm:$0xff]
      %v3202 = vld [vmem:[%s3199 + $0x18] sm:$0xff]
      %v3203 = vld [vmem:[%s3199 + $0x20] sm:$0xff]
      %v3204 = vld [vmem:[%s3199 + $0x30] sm:$0xff]
      %v3205 = vld [vmem:[%s3199 + $0x38] sm:$0xff]
      %v3206 = vld [vmem:[%s3199 + $0x48] sm:$0xff]
      %v3207 = vld [vmem:[%s3199 + $0x50] sm:$0xff]
      %v3208 = vld [vmem:[%s3199 + $0x60] sm:$0xff]
      %v3209 = vld [vmem:[%s3199 + $0x68] sm:$0xff]
      %v3210 = vld [vmem:[%s3199 + $0x78] sm:$0xff]
      %v3211 = vld [vmem:[%s3199 + $0x80] sm:$0xff]
      %v3212 = vld [vmem:[%s3199 + $0x90] sm:$0xff]
      %v3213 = vld [vmem:[%s3199 + $0x98] sm:$0xff]
      %v3214 = vld [vmem:[%s3199 + $0xa8] sm:$0xff]
      %v3215 = vld [vmem:[%s3199 + $0xb0] sm:$0xff]
      %v3216 = vld [vmem:[%s3199 + $0xc0] sm:$0xff]
      %v3217 = vld [vmem:[%s3199 + $0xc8] sm:$0xff]
      %v3218 = vld [vmem:[%s3199 + $0xd8] sm:$0xff]
      %v3219 = vld [vmem:[%s3199 + $0xe0] sm:$0xff]
      %v3220 = vld [vmem:[%s3199 + $0xf0] sm:$0xff]
      %v3221 = vld [vmem:[%s3199 + $0xf8] sm:$0xff]
      %v3222 = vld [vmem:[%s3199 + $0x108] sm:$0xff]
      %v3223 = vld [vmem:[%s3199 + $0x110] sm:$0xff]
      %v3224 = vld [vmem:[%s3199 + $0x120] sm:$0xff]
      %v3225 = vld [vmem:[%s3199 + $0x128] sm:$0xff]
      %v3226 = vld [vmem:[%s3199 + $0x138] sm:$0xff]
      %v3227 = vld [vmem:[%s3199 + $0x140] sm:$0xff]
      %v3228 = vld [vmem:[%s3199 + $0x150] sm:$0xff]
      %v3229 = vld [vmem:[%s3199 + $0x158] sm:$0xff]
      %v3230 = vld [vmem:[%s3199 + $0x168] sm:$0xff]
      %v3231 = vld [vmem:[%s3199 + $0x170] sm:$0xff]
      %v3232 = vld [vmem:[%s3199 + $0x1] sm:$0xff]
      %v3233 = vld [vmem:[%s3199 + $0x9] sm:$0xff]
      %v3234 = vld [vmem:[%s3199 + $0x19] sm:$0xff]
      %v3235 = vld [vmem:[%s3199 + $0x21] sm:$0xff]
      %v3236 = vld [vmem:[%s3199 + $0x31] sm:$0xff]
      %v3237 = vld [vmem:[%s3199 + $0x39] sm:$0xff]
      %v3238 = vld [vmem:[%s3199 + $0x49] sm:$0xff]
      %v3239 = vld [vmem:[%s3199 + $0x51] sm:$0xff]
      %v3240 = vld [vmem:[%s3199 + $0x61] sm:$0xff]
      %v3241 = vld [vmem:[%s3199 + $0x69] sm:$0xff]
      %v3242 = vld [vmem:[%s3199 + $0x79] sm:$0xff]
      %v3243 = vld [vmem:[%s3199 + $0x81] sm:$0xff]
      %v3244 = vld [vmem:[%s3199 + $0x91] sm:$0xff]
      %v3245 = vld [vmem:[%s3199 + $0x99] sm:$0xff]
      %v3246 = vld [vmem:[%s3199 + $0xa9] sm:$0xff]
      %v3247 = vld [vmem:[%s3199 + $0xb1] sm:$0xff]
      %v3248 = vld [vmem:[%s3199 + $0xc1] sm:$0xff]
      %v3249 = vld [vmem:[%s3199 + $0xc9] sm:$0xff]
      %v3250 = vld [vmem:[%s3199 + $0xd9] sm:$0xff]
      %v3251 = vld [vmem:[%s3199 + $0xe1] sm:$0xff]
      %v3252 = vld [vmem:[%s3199 + $0xf1] sm:$0xff]
      %v3253 = vld [vmem:[%s3199 + $0xf9] sm:$0xff]
      %v3254 = vld [vmem:[%s3199 + $0x109] sm:$0xff]
      %v3255 = vld [vmem:[%s3199 + $0x111] sm:$0xff]
      %v3256 = vld [vmem:[%s3199 + $0x121] sm:$0xff]
      %v3257 = vld [vmem:[%s3199 + $0x129] sm:$0xff]
      %v3258 = vld [vmem:[%s3199 + $0x139] sm:$0xff]
      %v3259 = vld [vmem:[%s3199 + $0x141] sm:$0xff]
      %v3260 = vld [vmem:[%s3199 + $0x151] sm:$0xff]
      %v3261 = vld [vmem:[%s3199 + $0x159] sm:$0xff]
      %v3262 = vld [vmem:[%s3199 + $0x169] sm:$0xff]
      %v3263 = vld [vmem:[%s3199 + $0x171] sm:$0xff]
      %v3264 = vld [vmem:[%s3199 + $0x2] sm:$0xff]
      %v3265 = vld [vmem:[%s3199 + $0xa] sm:$0xff]
      %v3266 = vld [vmem:[%s3199 + $0x1a] sm:$0xff]
      %v3267 = vld [vmem:[%s3199 + $0x22] sm:$0xff]
      %v3268 = vld [vmem:[%s3199 + $0x32] sm:$0xff]
      %v3269 = vld [vmem:[%s3199 + $0x3a] sm:$0xff]
      %v3270 = vld [vmem:[%s3199 + $0x4a] sm:$0xff]
      %v3271 = vld [vmem:[%s3199 + $0x52] sm:$0xff]
      %v3272 = vld [vmem:[%s3199 + $0x62] sm:$0xff]
      %v3273 = vld [vmem:[%s3199 + $0x6a] sm:$0xff]
      %v3274 = vld [vmem:[%s3199 + $0x7a] sm:$0xff]
      %v3275 = vld [vmem:[%s3199 + $0x82] sm:$0xff]
      %v3276 = vld [vmem:[%s3199 + $0x92] sm:$0xff]
      %v3277 = vld [vmem:[%s3199 + $0x9a] sm:$0xff]
      %v3278 = vld [vmem:[%s3199 + $0xaa] sm:$0xff]
      %v3279 = vld [vmem:[%s3199 + $0xb2] sm:$0xff]
      %v3280 = vld [vmem:[%s3199 + $0xc2] sm:$0xff]
      %v3281 = vld [vmem:[%s3199 + $0xca] sm:$0xff]
      %v3282 = vld [vmem:[%s3199 + $0xda] sm:$0xff]
      %v3283 = vld [vmem:[%s3199 + $0xe2] sm:$0xff]
      %v3284 = vld [vmem:[%s3199 + $0xf2] sm:$0xff]
      %v3285 = vld [vmem:[%s3199 + $0xfa] sm:$0xff]
      %v3286 = vld [vmem:[%s3199 + $0x10a] sm:$0xff]
      %v3287 = vld [vmem:[%s3199 + $0x112] sm:$0xff]
      %v3288 = vld [vmem:[%s3199 + $0x122] sm:$0xff]
      %v3289 = vld [vmem:[%s3199 + $0x12a] sm:$0xff]
      %v3290 = vld [vmem:[%s3199 + $0x13a] sm:$0xff]
      %v3291 = vld [vmem:[%s3199 + $0x142] sm:$0xff]
      %v3292 = vld [vmem:[%s3199 + $0x152] sm:$0xff]
      %v3293 = vld [vmem:[%s3199 + $0x15a] sm:$0xff]
      %v3294 = vld [vmem:[%s3199 + $0x16a] sm:$0xff]
      %v3295 = vld [vmem:[%s3199 + $0x172] sm:$0xff]
      %3328 = vrot.lane.b32.xlu0 %v3039, 32
      %v3329 = vpop.permute.xlu0 %3328
      %3330 = vrot.lane.b32.xlu0 %v3040, 32
      %v3331 = vpop.permute.xlu0 %3330
      %3332 = vrot.lane.b32.xlu0 %v3041, 32
      %v3333 = vpop.permute.xlu0 %3332
      %3334 = vrot.lane.b32.xlu0 %v3042, 32
      %v3335 = vpop.permute.xlu0 %3334
      %3336 = vrot.lane.b32.xlu0 %v3043, 32
      %v3337 = vpop.permute.xlu0 %3336
      %3338 = vrot.lane.b32.xlu0 %v3044, 32
      %v3339 = vpop.permute.xlu0 %3338
      %3340 = vrot.lane.b32.xlu0 %v3045, 32
      %v3341 = vpop.permute.xlu0 %3340
      %3342 = vrot.lane.b32.xlu0 %v3046, 32
      %v3343 = vpop.permute.xlu0 %3342
      %3344 = vrot.lane.b32.xlu0 %v3047, 32
      %v3345 = vpop.permute.xlu0 %3344
      %3346 = vrot.lane.b32.xlu0 %v3048, 32
      %v3347 = vpop.permute.xlu0 %3346
      %3348 = vrot.lane.b32.xlu0 %v3049, 32
      %v3349 = vpop.permute.xlu0 %3348
      %3350 = vrot.lane.b32.xlu0 %v3050, 32
      %v3351 = vpop.permute.xlu0 %3350
      %3352 = vrot.lane.b32.xlu0 %v3051, 32
      %v3353 = vpop.permute.xlu0 %3352
      %3354 = vrot.lane.b32.xlu0 %v3052, 32
      %v3355 = vpop.permute.xlu0 %3354
      %3356 = vrot.lane.b32.xlu0 %v3053, 32
      %v3357 = vpop.permute.xlu0 %3356
      %3358 = vrot.lane.b32.xlu0 %v3054, 32
      %v3359 = vpop.permute.xlu0 %3358
      %3360 = vrot.lane.b32.xlu0 %v3055, 32
      %v3361 = vpop.permute.xlu0 %3360
      %3362 = vrot.lane.b32.xlu0 %v3056, 32
      %v3363 = vpop.permute.xlu0 %3362
      %3364 = vrot.lane.b32.xlu0 %v3057, 32
      %v3365 = vpop.permute.xlu0 %3364
      %3366 = vrot.lane.b32.xlu0 %v3058, 32
      %v3367 = vpop.permute.xlu0 %3366
      %3368 = vrot.lane.b32.xlu0 %v3059, 32
      %v3369 = vpop.permute.xlu0 %3368
      %3370 = vrot.lane.b32.xlu0 %v3060, 32
      %v3371 = vpop.permute.xlu0 %3370
      %3372 = vrot.lane.b32.xlu0 %v3061, 32
      %v3373 = vpop.permute.xlu0 %3372
      %3374 = vrot.lane.b32.xlu0 %v3062, 32
      %v3375 = vpop.permute.xlu0 %3374
      %3376 = vrot.lane.b32.xlu0 %v3063, 32
      %v3377 = vpop.permute.xlu0 %3376
      %3378 = vrot.lane.b32.xlu0 %v3064, 32
      %v3379 = vpop.permute.xlu0 %3378
      %3380 = vrot.lane.b32.xlu0 %v3065, 32
      %v3381 = vpop.permute.xlu0 %3380
      %3382 = vrot.lane.b32.xlu0 %v3066, 32
      %v3383 = vpop.permute.xlu0 %3382
      %3384 = vrot.lane.b32.xlu0 %v3067, 32
      %v3385 = vpop.permute.xlu0 %3384
      %3386 = vrot.lane.b32.xlu0 %v3068, 32
      %v3387 = vpop.permute.xlu0 %3386
      %3388 = vrot.lane.b32.xlu0 %v3069, 32
      %v3389 = vpop.permute.xlu0 %3388
      %3390 = vrot.lane.b32.xlu0 %v3070, 32
      %v3391 = vpop.permute.xlu0 %3390
      %3456 = vrot.lane.b32.xlu0 %v3071, 64
      %v3457 = vpop.permute.xlu0 %3456
      %3458 = vrot.lane.b32.xlu0 %v3072, 64
      %v3459 = vpop.permute.xlu0 %3458
      %3460 = vrot.lane.b32.xlu0 %v3073, 64
      %v3461 = vpop.permute.xlu0 %3460
      %3462 = vrot.lane.b32.xlu0 %v3074, 64
      %v3463 = vpop.permute.xlu0 %3462
      %3464 = vrot.lane.b32.xlu0 %v3075, 64
      %v3465 = vpop.permute.xlu0 %3464
      %3466 = vrot.lane.b32.xlu0 %v3076, 64
      %v3467 = vpop.permute.xlu0 %3466
      %3468 = vrot.lane.b32.xlu0 %v3077, 64
      %v3469 = vpop.permute.xlu0 %3468
      %3470 = vrot.lane.b32.xlu0 %v3078, 64
      %v3471 = vpop.permute.xlu0 %3470
      %3472 = vrot.lane.b32.xlu0 %v3079, 64
      %v3473 = vpop.permute.xlu0 %3472
      %3474 = vrot.lane.b32.xlu0 %v3080, 64
      %v3475 = vpop.permute.xlu0 %3474
      %3476 = vrot.lane.b32.xlu0 %v3081, 64
      %v3477 = vpop.permute.xlu0 %3476
      %3478 = vrot.lane.b32.xlu0 %v3082, 64
      %v3479 = vpop.permute.xlu0 %3478
      %3480 = vrot.lane.b32.xlu0 %v3083, 64
      %v3481 = vpop.permute.xlu0 %3480
      %3482 = vrot.lane.b32.xlu0 %v3084, 64
      %v3483 = vpop.permute.xlu0 %3482
      %3484 = vrot.lane.b32.xlu0 %v3085, 64
      %v3485 = vpop.permute.xlu0 %3484
      %3486 = vrot.lane.b32.xlu0 %v3086, 64
      %v3487 = vpop.permute.xlu0 %3486
      %3488 = vrot.lane.b32.xlu0 %v3087, 64
      %v3489 = vpop.permute.xlu0 %3488
      %3490 = vrot.lane.b32.xlu0 %v3088, 64
      %v3491 = vpop.permute.xlu0 %3490
      %3492 = vrot.lane.b32.xlu0 %v3089, 64
      %v3493 = vpop.permute.xlu0 %3492
      %3494 = vrot.lane.b32.xlu0 %v3090, 64
      %v3495 = vpop.permute.xlu0 %3494
      %3496 = vrot.lane.b32.xlu0 %v3091, 64
      %v3497 = vpop.permute.xlu0 %3496
      %3498 = vrot.lane.b32.xlu0 %v3092, 64
      %v3499 = vpop.permute.xlu0 %3498
      %3500 = vrot.lane.b32.xlu0 %v3093, 64
      %v3501 = vpop.permute.xlu0 %3500
      %3502 = vrot.lane.b32.xlu0 %v3094, 64
      %v3503 = vpop.permute.xlu0 %3502
      %3504 = vrot.lane.b32.xlu0 %v3095, 64
      %v3505 = vpop.permute.xlu0 %3504
      %3506 = vrot.lane.b32.xlu0 %v3096, 64
      %v3507 = vpop.permute.xlu0 %3506
      %3508 = vrot.lane.b32.xlu0 %v3097, 64
      %v3509 = vpop.permute.xlu0 %3508
      %3510 = vrot.lane.b32.xlu0 %v3098, 64
      %v3511 = vpop.permute.xlu0 %3510
      %3512 = vrot.lane.b32.xlu0 %v3099, 64
      %v3513 = vpop.permute.xlu0 %3512
      %3514 = vrot.lane.b32.xlu0 %v3100, 64
      %v3515 = vpop.permute.xlu0 %3514
      %3516 = vrot.lane.b32.xlu0 %v3101, 64
      %v3517 = vpop.permute.xlu0 %3516
      %3518 = vrot.lane.b32.xlu0 %v3102, 64
      %v3519 = vpop.permute.xlu0 %3518
      %3584 = vrot.lane.b32.xlu0 %v3103, 96
      %v3585 = vpop.permute.xlu0 %3584
      %3586 = vrot.lane.b32.xlu0 %v3104, 96
      %v3587 = vpop.permute.xlu0 %3586
      %3588 = vrot.lane.b32.xlu0 %v3105, 96
      %v3589 = vpop.permute.xlu0 %3588
      %3590 = vrot.lane.b32.xlu0 %v3106, 96
      %v3591 = vpop.permute.xlu0 %3590
      %3592 = vrot.lane.b32.xlu0 %v3107, 96
      %v3593 = vpop.permute.xlu0 %3592
      %3594 = vrot.lane.b32.xlu0 %v3108, 96
      %v3595 = vpop.permute.xlu0 %3594
      %3596 = vrot.lane.b32.xlu0 %v3109, 96
      %v3597 = vpop.permute.xlu0 %3596
      %3598 = vrot.lane.b32.xlu0 %v3110, 96
      %v3599 = vpop.permute.xlu0 %3598
      %3600 = vrot.lane.b32.xlu0 %v3111, 96
      %v3601 = vpop.permute.xlu0 %3600
      %3602 = vrot.lane.b32.xlu0 %v3112, 96
      %v3603 = vpop.permute.xlu0 %3602
      %3604 = vrot.lane.b32.xlu0 %v3113, 96
      %v3605 = vpop.permute.xlu0 %3604
      %3606 = vrot.lane.b32.xlu0 %v3114, 96
      %v3607 = vpop.permute.xlu0 %3606
      %3608 = vrot.lane.b32.xlu0 %v3115, 96
      %v3609 = vpop.permute.xlu0 %3608
      %3610 = vrot.lane.b32.xlu0 %v3116, 96
      %v3611 = vpop.permute.xlu0 %3610
      %3612 = vrot.lane.b32.xlu0 %v3117, 96
      %v3613 = vpop.permute.xlu0 %3612
      %3614 = vrot.lane.b32.xlu0 %v3118, 96
      %v3615 = vpop.permute.xlu0 %3614
      %3616 = vrot.lane.b32.xlu0 %v3119, 96
      %v3617 = vpop.permute.xlu0 %3616
      %3618 = vrot.lane.b32.xlu0 %v3120, 96
      %v3619 = vpop.permute.xlu0 %3618
      %3620 = vrot.lane.b32.xlu0 %v3121, 96
      %v3621 = vpop.permute.xlu0 %3620
      %3622 = vrot.lane.b32.xlu0 %v3122, 96
      %v3623 = vpop.permute.xlu0 %3622
      %3624 = vrot.lane.b32.xlu0 %v3123, 96
      %v3625 = vpop.permute.xlu0 %3624
      %3626 = vrot.lane.b32.xlu0 %v3124, 96
      %v3627 = vpop.permute.xlu0 %3626
      %3628 = vrot.lane.b32.xlu0 %v3125, 96
      %v3629 = vpop.permute.xlu0 %3628
      %3630 = vrot.lane.b32.xlu0 %v3126, 96
      %v3631 = vpop.permute.xlu0 %3630
      %3632 = vrot.lane.b32.xlu0 %v3127, 96
      %v3633 = vpop.permute.xlu0 %3632
      %3634 = vrot.lane.b32.xlu0 %v3128, 96
      %v3635 = vpop.permute.xlu0 %3634
      %3636 = vrot.lane.b32.xlu0 %v3129, 96
      %v3637 = vpop.permute.xlu0 %3636
      %3638 = vrot.lane.b32.xlu0 %v3130, 96
      %v3639 = vpop.permute.xlu0 %3638
      %3640 = vrot.lane.b32.xlu0 %v3131, 96
      %v3641 = vpop.permute.xlu0 %3640
      %3642 = vrot.lane.b32.xlu0 %v3132, 96
      %v3643 = vpop.permute.xlu0 %3642
      %3644 = vrot.lane.b32.xlu0 %v3133, 96
      %v3645 = vpop.permute.xlu0 %3644
      %3646 = vrot.lane.b32.xlu0 %v3134, 96
      %v3647 = vpop.permute.xlu0 %3646
      %3712 = vrot.lane.b32.xlu0 %v3167, 32
      %v3713 = vpop.permute.xlu0 %3712
      %3714 = vrot.lane.b32.xlu0 %v3168, 32
      %v3715 = vpop.permute.xlu0 %3714
      %3716 = vrot.lane.b32.xlu0 %v3169, 32
      %v3717 = vpop.permute.xlu0 %3716
      %3718 = vrot.lane.b32.xlu0 %v3170, 32
      %v3719 = vpop.permute.xlu0 %3718
      %3720 = vrot.lane.b32.xlu0 %v3171, 32
      %v3721 = vpop.permute.xlu0 %3720
      %3722 = vrot.lane.b32.xlu0 %v3172, 32
      %v3723 = vpop.permute.xlu0 %3722
      %3724 = vrot.lane.b32.xlu0 %v3173, 32
      %v3725 = vpop.permute.xlu0 %3724
      %3726 = vrot.lane.b32.xlu0 %v3174, 32
      %v3727 = vpop.permute.xlu0 %3726
      %3728 = vrot.lane.b32.xlu0 %v3175, 32
      %v3729 = vpop.permute.xlu0 %3728
      %3730 = vrot.lane.b32.xlu0 %v3176, 32
      %v3731 = vpop.permute.xlu0 %3730
      %3732 = vrot.lane.b32.xlu0 %v3177, 32
      %v3733 = vpop.permute.xlu0 %3732
      %3734 = vrot.lane.b32.xlu0 %v3178, 32
      %v3735 = vpop.permute.xlu0 %3734
      %3736 = vrot.lane.b32.xlu0 %v3179, 32
      %v3737 = vpop.permute.xlu0 %3736
      %3738 = vrot.lane.b32.xlu0 %v3180, 32
      %v3739 = vpop.permute.xlu0 %3738
      %3740 = vrot.lane.b32.xlu0 %v3181, 32
      %v3741 = vpop.permute.xlu0 %3740
      %3742 = vrot.lane.b32.xlu0 %v3182, 32
      %v3743 = vpop.permute.xlu0 %3742
      %3744 = vrot.lane.b32.xlu0 %v3183, 32
      %v3745 = vpop.permute.xlu0 %3744
      %3746 = vrot.lane.b32.xlu0 %v3184, 32
      %v3747 = vpop.permute.xlu0 %3746
      %3748 = vrot.lane.b32.xlu0 %v3185, 32
      %v3749 = vpop.permute.xlu0 %3748
      %3750 = vrot.lane.b32.xlu0 %v3186, 32
      %v3751 = vpop.permute.xlu0 %3750
      %3752 = vrot.lane.b32.xlu0 %v3187, 32
      %v3753 = vpop.permute.xlu0 %3752
      %3754 = vrot.lane.b32.xlu0 %v3188, 32
      %v3755 = vpop.permute.xlu0 %3754
      %3756 = vrot.lane.b32.xlu0 %v3189, 32
      %v3757 = vpop.permute.xlu0 %3756
      %3758 = vrot.lane.b32.xlu0 %v3190, 32
      %v3759 = vpop.permute.xlu0 %3758
      %3760 = vrot.lane.b32.xlu0 %v3191, 32
      %v3761 = vpop.permute.xlu0 %3760
      %3762 = vrot.lane.b32.xlu0 %v3192, 32
      %v3763 = vpop.permute.xlu0 %3762
      %3764 = vrot.lane.b32.xlu0 %v3193, 32
      %v3765 = vpop.permute.xlu0 %3764
      %3766 = vrot.lane.b32.xlu0 %v3194, 32
      %v3767 = vpop.permute.xlu0 %3766
      %3768 = vrot.lane.b32.xlu0 %v3195, 32
      %v3769 = vpop.permute.xlu0 %3768
      %3770 = vrot.lane.b32.xlu0 %v3196, 32
      %v3771 = vpop.permute.xlu0 %3770
      %3772 = vrot.lane.b32.xlu0 %v3197, 32
      %v3773 = vpop.permute.xlu0 %3772
      %3774 = vrot.lane.b32.xlu0 %v3198, 32
      %v3775 = vpop.permute.xlu0 %3774
      %3840 = vrot.lane.b32.xlu0 %v3200, 64
      %v3841 = vpop.permute.xlu0 %3840
      %3842 = vrot.lane.b32.xlu0 %v3201, 64
      %v3843 = vpop.permute.xlu0 %3842
      %3844 = vrot.lane.b32.xlu0 %v3202, 64
      %v3845 = vpop.permute.xlu0 %3844
      %3846 = vrot.lane.b32.xlu0 %v3203, 64
      %v3847 = vpop.permute.xlu0 %3846
      %3848 = vrot.lane.b32.xlu0 %v3204, 64
      %v3849 = vpop.permute.xlu0 %3848
      %3850 = vrot.lane.b32.xlu0 %v3205, 64
      %v3851 = vpop.permute.xlu0 %3850
      %3852 = vrot.lane.b32.xlu0 %v3206, 64
      %v3853 = vpop.permute.xlu0 %3852
      %3854 = vrot.lane.b32.xlu0 %v3207, 64
      %v3855 = vpop.permute.xlu0 %3854
      %3856 = vrot.lane.b32.xlu0 %v3208, 64
      %v3857 = vpop.permute.xlu0 %3856
      %3858 = vrot.lane.b32.xlu0 %v3209, 64
      %v3859 = vpop.permute.xlu0 %3858
      %3860 = vrot.lane.b32.xlu0 %v3210, 64
      %v3861 = vpop.permute.xlu0 %3860
      %3862 = vrot.lane.b32.xlu0 %v3211, 64
      %v3863 = vpop.permute.xlu0 %3862
      %3864 = vrot.lane.b32.xlu0 %v3212, 64
      %v3865 = vpop.permute.xlu0 %3864
      %3866 = vrot.lane.b32.xlu0 %v3213, 64
      %v3867 = vpop.permute.xlu0 %3866
      %3868 = vrot.lane.b32.xlu0 %v3214, 64
      %v3869 = vpop.permute.xlu0 %3868
      %3870 = vrot.lane.b32.xlu0 %v3215, 64
      %v3871 = vpop.permute.xlu0 %3870
      %3872 = vrot.lane.b32.xlu0 %v3216, 64
      %v3873 = vpop.permute.xlu0 %3872
      %3874 = vrot.lane.b32.xlu0 %v3217, 64
      %v3875 = vpop.permute.xlu0 %3874
      %3876 = vrot.lane.b32.xlu0 %v3218, 64
      %v3877 = vpop.permute.xlu0 %3876
      %3878 = vrot.lane.b32.xlu0 %v3219, 64
      %v3879 = vpop.permute.xlu0 %3878
      %3880 = vrot.lane.b32.xlu0 %v3220, 64
      %v3881 = vpop.permute.xlu0 %3880
      %3882 = vrot.lane.b32.xlu0 %v3221, 64
      %v3883 = vpop.permute.xlu0 %3882
      %3884 = vrot.lane.b32.xlu0 %v3222, 64
      %v3885 = vpop.permute.xlu0 %3884
      %3886 = vrot.lane.b32.xlu0 %v3223, 64
      %v3887 = vpop.permute.xlu0 %3886
      %3888 = vrot.lane.b32.xlu0 %v3224, 64
      %v3889 = vpop.permute.xlu0 %3888
      %3890 = vrot.lane.b32.xlu0 %v3225, 64
      %v3891 = vpop.permute.xlu0 %3890
      %3892 = vrot.lane.b32.xlu0 %v3226, 64
      %v3893 = vpop.permute.xlu0 %3892
      %3894 = vrot.lane.b32.xlu0 %v3227, 64
      %v3895 = vpop.permute.xlu0 %3894
      %3896 = vrot.lane.b32.xlu0 %v3228, 64
      %v3897 = vpop.permute.xlu0 %3896
      %3898 = vrot.lane.b32.xlu0 %v3229, 64
      %v3899 = vpop.permute.xlu0 %3898
      %3900 = vrot.lane.b32.xlu0 %v3230, 64
      %v3901 = vpop.permute.xlu0 %3900
      %3902 = vrot.lane.b32.xlu0 %v3231, 64
      %v3903 = vpop.permute.xlu0 %3902
      %3968 = vrot.lane.b32.xlu0 %v3232, 96
      %v3969 = vpop.permute.xlu0 %3968
      %3970 = vrot.lane.b32.xlu0 %v3233, 96
      %v3971 = vpop.permute.xlu0 %3970
      %3972 = vrot.lane.b32.xlu0 %v3234, 96
      %v3973 = vpop.permute.xlu0 %3972
      %3974 = vrot.lane.b32.xlu0 %v3235, 96
      %v3975 = vpop.permute.xlu0 %3974
      %3976 = vrot.lane.b32.xlu0 %v3236, 96
      %v3977 = vpop.permute.xlu0 %3976
      %3978 = vrot.lane.b32.xlu0 %v3237, 96
      %v3979 = vpop.permute.xlu0 %3978
      %3980 = vrot.lane.b32.xlu0 %v3238, 96
      %v3981 = vpop.permute.xlu0 %3980
      %3982 = vrot.lane.b32.xlu0 %v3239, 96
      %v3983 = vpop.permute.xlu0 %3982
      %3984 = vrot.lane.b32.xlu0 %v3240, 96
      %v3985 = vpop.permute.xlu0 %3984
      %3986 = vrot.lane.b32.xlu0 %v3241, 96
      %v3987 = vpop.permute.xlu0 %3986
      %3988 = vrot.lane.b32.xlu0 %v3242, 96
      %v3989 = vpop.permute.xlu0 %3988
      %3990 = vrot.lane.b32.xlu0 %v3243, 96
      %v3991 = vpop.permute.xlu0 %3990
      %3992 = vrot.lane.b32.xlu0 %v3244, 96
      %v3993 = vpop.permute.xlu0 %3992
      %3994 = vrot.lane.b32.xlu0 %v3245, 96
      %v3995 = vpop.permute.xlu0 %3994
      %3996 = vrot.lane.b32.xlu0 %v3246, 96
      %v3997 = vpop.permute.xlu0 %3996
      %3998 = vrot.lane.b32.xlu0 %v3247, 96
      %v3999 = vpop.permute.xlu0 %3998
      %4000 = vrot.lane.b32.xlu0 %v3248, 96
      %v4001 = vpop.permute.xlu0 %4000
      %4002 = vrot.lane.b32.xlu0 %v3249, 96
      %v4003 = vpop.permute.xlu0 %4002
      %4004 = vrot.lane.b32.xlu0 %v3250, 96
      %v4005 = vpop.permute.xlu0 %4004
      %4006 = vrot.lane.b32.xlu0 %v3251, 96
      %v4007 = vpop.permute.xlu0 %4006
      %4008 = vrot.lane.b32.xlu0 %v3252, 96
      %v4009 = vpop.permute.xlu0 %4008
      %4010 = vrot.lane.b32.xlu0 %v3253, 96
      %v4011 = vpop.permute.xlu0 %4010
      %4012 = vrot.lane.b32.xlu0 %v3254, 96
      %v4013 = vpop.permute.xlu0 %4012
      %4014 = vrot.lane.b32.xlu0 %v3255, 96
      %v4015 = vpop.permute.xlu0 %4014
      %4016 = vrot.lane.b32.xlu0 %v3256, 96
      %v4017 = vpop.permute.xlu0 %4016
      %4018 = vrot.lane.b32.xlu0 %v3257, 96
      %v4019 = vpop.permute.xlu0 %4018
      %4020 = vrot.lane.b32.xlu0 %v3258, 96
      %v4021 = vpop.permute.xlu0 %4020
      %4022 = vrot.lane.b32.xlu0 %v3259, 96
      %v4023 = vpop.permute.xlu0 %4022
      %4024 = vrot.lane.b32.xlu0 %v3260, 96
      %v4025 = vpop.permute.xlu0 %4024
      %4026 = vrot.lane.b32.xlu0 %v3261, 96
      %v4027 = vpop.permute.xlu0 %4026
      %4028 = vrot.lane.b32.xlu0 %v3262, 96
      %v4029 = vpop.permute.xlu0 %4028
      %4030 = vrot.lane.b32.xlu0 %v3263, 96
      %v4031 = vpop.permute.xlu0 %4030
      %v4064 = vsel %vm459, %v3007, %v3329
      %v4065 = vsel %vm459, %v3008, %v3331
      %v4066 = vsel %vm459, %v3009, %v3333
      %v4067 = vsel %vm459, %v3010, %v3335
      %v4068 = vsel %vm459, %v3011, %v3337
      %v4069 = vsel %vm459, %v3012, %v3339
      %v4070 = vsel %vm459, %v3013, %v3341
      %v4071 = vsel %vm459, %v3014, %v3343
      %v4072 = vsel %vm459, %v3015, %v3345
      %v4073 = vsel %vm459, %v3016, %v3347
      %v4074 = vsel %vm459, %v3017, %v3349
      %v4075 = vsel %vm459, %v3018, %v3351
      %v4076 = vsel %vm459, %v3019, %v3353
      %v4077 = vsel %vm459, %v3020, %v3355
      %v4078 = vsel %vm459, %v3021, %v3357
      %v4079 = vsel %vm459, %v3022, %v3359
      %v4080 = vsel %vm459, %v3023, %v3361
      %v4081 = vsel %vm459, %v3024, %v3363
      %v4082 = vsel %vm459, %v3025, %v3365
      %v4083 = vsel %vm459, %v3026, %v3367
      %v4084 = vsel %vm459, %v3027, %v3369
      %v4085 = vsel %vm459, %v3028, %v3371
      %v4086 = vsel %vm459, %v3029, %v3373
      %v4087 = vsel %vm459, %v3030, %v3375
      %v4088 = vsel %vm459, %v3031, %v3377
      %v4089 = vsel %vm459, %v3032, %v3379
      %v4090 = vsel %vm459, %v3033, %v3381
      %v4091 = vsel %vm459, %v3034, %v3383
      %v4092 = vsel %vm459, %v3035, %v3385
      %v4093 = vsel %vm459, %v3036, %v3387
      %v4094 = vsel %vm459, %v3037, %v3389
      %v4095 = vsel %vm459, %v3038, %v3391
      %v4096 = vsel %vm1910, %v4064, %v3457
      %v4097 = vsel %vm1910, %v4065, %v3459
      %v4098 = vsel %vm1910, %v4066, %v3461
      %v4099 = vsel %vm1910, %v4067, %v3463
      %v4100 = vsel %vm1910, %v4068, %v3465
      %v4101 = vsel %vm1910, %v4069, %v3467
      %v4102 = vsel %vm1910, %v4070, %v3469
      %v4103 = vsel %vm1910, %v4071, %v3471
      %v4104 = vsel %vm1910, %v4072, %v3473
      %v4105 = vsel %vm1910, %v4073, %v3475
      %v4106 = vsel %vm1910, %v4074, %v3477
      %v4107 = vsel %vm1910, %v4075, %v3479
      %v4108 = vsel %vm1910, %v4076, %v3481
      %v4109 = vsel %vm1910, %v4077, %v3483
      %v4110 = vsel %vm1910, %v4078, %v3485
      %v4111 = vsel %vm1910, %v4079, %v3487
      %v4112 = vsel %vm1910, %v4080, %v3489
      %v4113 = vsel %vm1910, %v4081, %v3491
      %v4114 = vsel %vm1910, %v4082, %v3493
      %v4115 = vsel %vm1910, %v4083, %v3495
      %v4116 = vsel %vm1910, %v4084, %v3497
      %v4117 = vsel %vm1910, %v4085, %v3499
      %v4118 = vsel %vm1910, %v4086, %v3501
      %v4119 = vsel %vm1910, %v4087, %v3503
      %v4120 = vsel %vm1910, %v4088, %v3505
      %v4121 = vsel %vm1910, %v4089, %v3507
      %v4122 = vsel %vm1910, %v4090, %v3509
      %v4123 = vsel %vm1910, %v4091, %v3511
      %v4124 = vsel %vm1910, %v4092, %v3513
      %v4125 = vsel %vm1910, %v4093, %v3515
      %v4126 = vsel %vm1910, %v4094, %v3517
      %v4127 = vsel %vm1910, %v4095, %v3519
      %v4128 = vsel %vm1943, %v4096, %v3585
      %v4129 = vsel %vm1943, %v4097, %v3587
      %v4130 = vsel %vm1943, %v4098, %v3589
      %v4131 = vsel %vm1943, %v4099, %v3591
      %v4132 = vsel %vm1943, %v4100, %v3593
      %v4133 = vsel %vm1943, %v4101, %v3595
      %v4134 = vsel %vm1943, %v4102, %v3597
      %v4135 = vsel %vm1943, %v4103, %v3599
      %v4136 = vsel %vm1943, %v4104, %v3601
      %v4137 = vsel %vm1943, %v4105, %v3603
      %v4138 = vsel %vm1943, %v4106, %v3605
      %v4139 = vsel %vm1943, %v4107, %v3607
      %v4140 = vsel %vm1943, %v4108, %v3609
      %v4141 = vsel %vm1943, %v4109, %v3611
      %v4142 = vsel %vm1943, %v4110, %v3613
      %v4143 = vsel %vm1943, %v4111, %v3615
      %v4144 = vsel %vm1943, %v4112, %v3617
      %v4145 = vsel %vm1943, %v4113, %v3619
      %v4146 = vsel %vm1943, %v4114, %v3621
      %v4147 = vsel %vm1943, %v4115, %v3623
      %v4148 = vsel %vm1943, %v4116, %v3625
      %v4149 = vsel %vm1943, %v4117, %v3627
      %v4150 = vsel %vm1943, %v4118, %v3629
      %v4151 = vsel %vm1943, %v4119, %v3631
      %v4152 = vsel %vm1943, %v4120, %v3633
      %v4153 = vsel %vm1943, %v4121, %v3635
      %v4154 = vsel %vm1943, %v4122, %v3637
      %v4155 = vsel %vm1943, %v4123, %v3639
      %v4156 = vsel %vm1943, %v4124, %v3641
      %v4157 = vsel %vm1943, %v4125, %v3643
      %v4158 = vsel %vm1943, %v4126, %v3645
      %v4159 = vsel %vm1943, %v4127, %v3647
      %v4160 = vsel %vm459, %v3135, %v3713
      %v4161 = vsel %vm459, %v3136, %v3715
      %v4162 = vsel %vm459, %v3137, %v3717
      %v4163 = vsel %vm459, %v3138, %v3719
      %v4164 = vsel %vm459, %v3139, %v3721
      %v4165 = vsel %vm459, %v3140, %v3723
      %v4166 = vsel %vm459, %v3141, %v3725
      %v4167 = vsel %vm459, %v3142, %v3727
      %v4168 = vsel %vm459, %v3143, %v3729
      %v4169 = vsel %vm459, %v3144, %v3731
      %v4170 = vsel %vm459, %v3145, %v3733
      %v4171 = vsel %vm459, %v3146, %v3735
      %v4172 = vsel %vm459, %v3147, %v3737
      %v4173 = vsel %vm459, %v3148, %v3739
      %v4174 = vsel %vm459, %v3149, %v3741
      %v4175 = vsel %vm459, %v3150, %v3743
      %v4176 = vsel %vm459, %v3151, %v3745
      %v4177 = vsel %vm459, %v3152, %v3747
      %v4178 = vsel %vm459, %v3153, %v3749
      %v4179 = vsel %vm459, %v3154, %v3751
      %v4180 = vsel %vm459, %v3155, %v3753
      %v4181 = vsel %vm459, %v3156, %v3755
      %v4182 = vsel %vm459, %v3157, %v3757
      %v4183 = vsel %vm459, %v3158, %v3759
      %v4184 = vsel %vm459, %v3159, %v3761
      %v4185 = vsel %vm459, %v3160, %v3763
      %v4186 = vsel %vm459, %v3161, %v3765
      %v4187 = vsel %vm459, %v3162, %v3767
      %v4188 = vsel %vm459, %v3163, %v3769
      %v4189 = vsel %vm459, %v3164, %v3771
      %v4190 = vsel %vm459, %v3165, %v3773
      %v4191 = vsel %vm459, %v3166, %v3775
      %v4192 = vsel %vm1910, %v4160, %v3841
      %v4193 = vsel %vm1910, %v4161, %v3843
      %v4194 = vsel %vm1910, %v4162, %v3845
      %v4195 = vsel %vm1910, %v4163, %v3847
      %v4196 = vsel %vm1910, %v4164, %v3849
      %v4197 = vsel %vm1910, %v4165, %v3851
      %v4198 = vsel %vm1910, %v4166, %v3853
      %v4199 = vsel %vm1910, %v4167, %v3855
      %v4200 = vsel %vm1910, %v4168, %v3857
      %v4201 = vsel %vm1910, %v4169, %v3859
      %v4202 = vsel %vm1910, %v4170, %v3861
      %v4203 = vsel %vm1910, %v4171, %v3863
      %v4204 = vsel %vm1910, %v4172, %v3865
      %v4205 = vsel %vm1910, %v4173, %v3867
      %v4206 = vsel %vm1910, %v4174, %v3869
      %v4207 = vsel %vm1910, %v4175, %v3871
      %v4208 = vsel %vm1910, %v4176, %v3873
      %v4209 = vsel %vm1910, %v4177, %v3875
      %v4210 = vsel %vm1910, %v4178, %v3877
      %v4211 = vsel %vm1910, %v4179, %v3879
      %v4212 = vsel %vm1910, %v4180, %v3881
      %v4213 = vsel %vm1910, %v4181, %v3883
      %v4214 = vsel %vm1910, %v4182, %v3885
      %v4215 = vsel %vm1910, %v4183, %v3887
      %v4216 = vsel %vm1910, %v4184, %v3889
      %v4217 = vsel %vm1910, %v4185, %v3891
      %v4218 = vsel %vm1910, %v4186, %v3893
      %v4219 = vsel %vm1910, %v4187, %v3895
      %v4220 = vsel %vm1910, %v4188, %v3897
      %v4221 = vsel %vm1910, %v4189, %v3899
      %v4222 = vsel %vm1910, %v4190, %v3901
      %v4223 = vsel %vm1910, %v4191, %v3903
      %v4224 = vsel %vm1943, %v4192, %v3969
      %v4225 = vsel %vm1943, %v4193, %v3971
      %v4226 = vsel %vm1943, %v4194, %v3973
      %v4227 = vsel %vm1943, %v4195, %v3975
      %v4228 = vsel %vm1943, %v4196, %v3977
      %v4229 = vsel %vm1943, %v4197, %v3979
      %v4230 = vsel %vm1943, %v4198, %v3981
      %v4231 = vsel %vm1943, %v4199, %v3983
      %v4232 = vsel %vm1943, %v4200, %v3985
      %v4233 = vsel %vm1943, %v4201, %v3987
      %v4234 = vsel %vm1943, %v4202, %v3989
      %v4235 = vsel %vm1943, %v4203, %v3991
      %v4236 = vsel %vm1943, %v4204, %v3993
      %v4237 = vsel %vm1943, %v4205, %v3995
      %v4238 = vsel %vm1943, %v4206, %v3997
      %v4239 = vsel %vm1943, %v4207, %v3999
      %v4240 = vsel %vm1943, %v4208, %v4001
      %v4241 = vsel %vm1943, %v4209, %v4003
      %v4242 = vsel %vm1943, %v4210, %v4005
      %v4243 = vsel %vm1943, %v4211, %v4007
      %v4244 = vsel %vm1943, %v4212, %v4009
      %v4245 = vsel %vm1943, %v4213, %v4011
      %v4246 = vsel %vm1943, %v4214, %v4013
      %v4247 = vsel %vm1943, %v4215, %v4015
      %v4248 = vsel %vm1943, %v4216, %v4017
      %v4249 = vsel %vm1943, %v4217, %v4019
      %v4250 = vsel %vm1943, %v4218, %v4021
      %v4251 = vsel %vm1943, %v4219, %v4023
      %v4252 = vsel %vm1943, %v4220, %v4025
      %v4253 = vsel %vm1943, %v4221, %v4027
      %v4254 = vsel %vm1943, %v4222, %v4029
      %v4255 = vsel %vm1943, %v4223, %v4031
      %v4256 = vpack.c.bf16 %v4129, %v4128
      %v4257 = vpack.c.bf16 %v4225, %v4224
      %v4258 = vpack.c.bf16 %v3265, %v3264
      %v4259 = vpack.c.bf16 %v4131, %v4130
      %v4260 = vpack.c.bf16 %v4227, %v4226
      %v4261 = vpack.c.bf16 %v3267, %v3266
      %v4262 = vpack.c.bf16 %v4133, %v4132
      %v4263 = vpack.c.bf16 %v4229, %v4228
      %v4264 = vpack.c.bf16 %v3269, %v3268
      %v4265 = vpack.c.bf16 %v4135, %v4134
      %v4266 = vpack.c.bf16 %v4231, %v4230
      %v4267 = vpack.c.bf16 %v3271, %v3270
      %v4268 = vpack.c.bf16 %v4137, %v4136
      %v4269 = vpack.c.bf16 %v4233, %v4232
      %v4270 = vpack.c.bf16 %v3273, %v3272
      %v4271 = vpack.c.bf16 %v4139, %v4138
      %v4272 = vpack.c.bf16 %v4235, %v4234
      %v4273 = vpack.c.bf16 %v3275, %v3274
      %v4274 = vpack.c.bf16 %v4141, %v4140
      %v4275 = vpack.c.bf16 %v4237, %v4236
      %v4276 = vpack.c.bf16 %v3277, %v3276
      %v4277 = vpack.c.bf16 %v4143, %v4142
      %v4278 = vpack.c.bf16 %v4239, %v4238
      %v4279 = vpack.c.bf16 %v3279, %v3278
      %v4280 = vpack.c.bf16 %v4145, %v4144
      %v4281 = vpack.c.bf16 %v4241, %v4240
      %v4282 = vpack.c.bf16 %v3281, %v3280
      %v4283 = vpack.c.bf16 %v4147, %v4146
      %v4284 = vpack.c.bf16 %v4243, %v4242
      %v4285 = vpack.c.bf16 %v3283, %v3282
      %v4286 = vpack.c.bf16 %v4149, %v4148
      %v4287 = vpack.c.bf16 %v4245, %v4244
      %v4288 = vpack.c.bf16 %v3285, %v3284
      %v4289 = vpack.c.bf16 %v4151, %v4150
      %v4290 = vpack.c.bf16 %v4247, %v4246
      %v4291 = vpack.c.bf16 %v3287, %v3286
      %v4292 = vpack.c.bf16 %v4153, %v4152
      %v4293 = vpack.c.bf16 %v4249, %v4248
      %v4294 = vpack.c.bf16 %v3289, %v3288
      %v4295 = vpack.c.bf16 %v4155, %v4154
      %v4296 = vpack.c.bf16 %v4251, %v4250
      %v4297 = vpack.c.bf16 %v3291, %v3290
      %v4298 = vpack.c.bf16 %v4157, %v4156
      %v4299 = vpack.c.bf16 %v4253, %v4252
      %v4300 = vpack.c.bf16 %v3293, %v3292
      %v4301 = vpack.c.bf16 %v4159, %v4158
      %v4302 = vpack.c.bf16 %v4255, %v4254
      %v4303 = vpack.c.bf16 %v3295, %v3294
      %v4304 = vld [vmem:[%s5] sm:$0xf]
      %v4305 = vld [vmem:[%s5 + $0x4] sm:$0xf]
      %v4306 = vld [vmem:[%s5 + $0x8] sm:$0xf]
      %v4307 = vld [vmem:[%s5 + $0xc] sm:$0xf]
      %v4308 = vld [vmem:[%s5 + $0x10] sm:$0xf]
      %v4309 = vld [vmem:[%s5 + $0x14] sm:$0xf]
      %v4310 = vld [vmem:[%s5 + $0x18] sm:$0xf]
      %v4311 = vld [vmem:[%s5 + $0x1c] sm:$0xf]
      %v4312 = vld [vmem:[%s5 + $0x20] sm:$0xf]
      %v4313 = vld [vmem:[%s5 + $0x24] sm:$0xf]
      %v4314 = vld [vmem:[%s5 + $0x28] sm:$0xf]
      %v4315 = vld [vmem:[%s5 + $0x2c] sm:$0xf]
      %v4316 = vld [vmem:[%s5 + $0x30] sm:$0xf]
      %v4317 = vld [vmem:[%s5 + $0x34] sm:$0xf]
      %v4318 = vld [vmem:[%s5 + $0x38] sm:$0xf]
      %v4319 = vld [vmem:[%s5 + $0x3c] sm:$0xf]
      %v4320 = vld [vmem:[%s5 + $0x40] sm:$0xf]
      %v4321 = vld [vmem:[%s5 + $0x44] sm:$0xf]
      %v4322 = vld [vmem:[%s5 + $0x48] sm:$0xf]
      %v4323 = vld [vmem:[%s5 + $0x4c] sm:$0xf]
      %v4324 = vld [vmem:[%s5 + $0x50] sm:$0xf]
      %v4325 = vld [vmem:[%s5 + $0x54] sm:$0xf]
      %v4326 = vld [vmem:[%s5 + $0x58] sm:$0xf]
      %v4327 = vld [vmem:[%s5 + $0x5c] sm:$0xf]
      %v4328 = vld [vmem:[%s5 + $0x60] sm:$0xf]
      %v4329 = vld [vmem:[%s5 + $0x64] sm:$0xf]
      %v4330 = vld [vmem:[%s5 + $0x68] sm:$0xf]
      %v4331 = vld [vmem:[%s5 + $0x6c] sm:$0xf]
      %v4332 = vld [vmem:[%s5 + $0x70] sm:$0xf]
      %v4333 = vld [vmem:[%s5 + $0x74] sm:$0xf]
      %v4334 = vld [vmem:[%s5 + $0x78] sm:$0xf]
      %v4335 = vld [vmem:[%s5 + $0x7c] sm:$0xf]
      %v4336 = vld [vmem:[%s5 + $0x80] sm:$0xf]
      %v4337 = vld [vmem:[%s5 + $0x84] sm:$0xf]
      %v4338 = vld [vmem:[%s5 + $0x88] sm:$0xf]
      %v4339 = vld [vmem:[%s5 + $0x8c] sm:$0xf]
      %v4340 = vld [vmem:[%s6] sm:$0x1]
      %v4342 = vlaneseq
      %v4343 = vshrl.u32 %v4342, 7
      %v4344 = vsub.s32 0, %v4343
      %v4345 = vrot.slane %v4340, %v4344
      %v4383 = vunpack.c.l.b16 %v4304
      %v4384 = vunpack.c.l.b16 %v4305
      %v4385 = vunpack.c.l.b16 %v4306
      %v4386 = vunpack.c.l.b16 %v4307
      %v4387 = vunpack.c.l.b16 %v4308
      %v4388 = vunpack.c.l.b16 %v4309
      %v4389 = vunpack.c.l.b16 %v4310
      %v4390 = vunpack.c.l.b16 %v4311
      %v4391 = vunpack.c.l.b16 %v4312
      %v4392 = vunpack.c.l.b16 %v4313
      %v4393 = vunpack.c.l.b16 %v4314
      %v4394 = vunpack.c.l.b16 %v4315
      %v4395 = vunpack.c.l.b16 %v4316
      %v4396 = vunpack.c.l.b16 %v4317
      %v4397 = vunpack.c.l.b16 %v4318
      %v4398 = vunpack.c.l.b16 %v4319
      %v4399 = vunpack.c.l.b16 %v4320
      %v4400 = vunpack.c.l.b16 %v4321
      %v4401 = vunpack.c.l.b16 %v4322
      %v4402 = vunpack.c.l.b16 %v4323
      %v4403 = vunpack.c.l.b16 %v4324
      %v4404 = vunpack.c.l.b16 %v4325
      %v4405 = vunpack.c.l.b16 %v4326
      %v4406 = vunpack.c.l.b16 %v4327
      %v4407 = vunpack.c.l.b16 %v4328
      %v4408 = vunpack.c.l.b16 %v4329
      %v4409 = vunpack.c.l.b16 %v4330
      %v4410 = vunpack.c.l.b16 %v4331
      %v4411 = vunpack.c.l.b16 %v4332
      %v4412 = vunpack.c.l.b16 %v4333
      %v4413 = vunpack.c.l.b16 %v4334
      %v4414 = vunpack.c.l.b16 %v4335
      %v4415 = vunpack.c.l.b16 %v4336
      %v4416 = vunpack.c.l.b16 %v4337
      %v4417 = vunpack.c.l.b16 %v4338
      %v4418 = vunpack.c.l.b16 %v4339
      %v4419 = vpack.c.b16 %v4384, %v4383
      %v4420 = vpack.c.b16 %v4386, %v4385
      %v4421 = vpack.c.b16 %v4388, %v4387
      %v4422 = vpack.c.b16 %v4390, %v4389
      %v4423 = vpack.c.b16 %v4392, %v4391
      %v4424 = vpack.c.b16 %v4394, %v4393
      %v4425 = vpack.c.b16 %v4396, %v4395
      %v4426 = vpack.c.b16 %v4398, %v4397
      %v4427 = vpack.c.b16 %v4400, %v4399
      %v4428 = vpack.c.b16 %v4402, %v4401
      %v4429 = vpack.c.b16 %v4404, %v4403
      %v4430 = vpack.c.b16 %v4406, %v4405
      %v4431 = vpack.c.b16 %v4408, %v4407
      %v4432 = vpack.c.b16 %v4410, %v4409
      %v4433 = vpack.c.b16 %v4412, %v4411
      %v4434 = vpack.c.b16 %v4414, %v4413
      %v4435 = vpack.c.b16 %v4416, %v4415
      %v4436 = vpack.c.b16 %v4418, %v4417
      %v4456 = vsel %vm459, %v4258, 0
      %v4459 = vsel %vm459, %v4261, 0
      %v4462 = vsel %vm459, %v4264, 0
      %v4465 = vsel %vm459, %v4267, 0
      %v4468 = vsel %vm459, %v4270, 0
      %v4471 = vsel %vm459, %v4273, 0
      %v4474 = vsel %vm459, %v4276, 0
      %v4477 = vsel %vm459, %v4279, 0
      %v4480 = vsel %vm459, %v4282, 0
      %v4483 = vsel %vm459, %v4285, 0
      %v4486 = vsel %vm459, %v4288, 0
      %v4489 = vsel %vm459, %v4291, 0
      %v4492 = vsel %vm459, %v4294, 0
      %v4495 = vsel %vm459, %v4297, 0
      %v4498 = vsel %vm459, %v4300, 0
      %v4501 = vsel %vm459, %v4303, 0
      %4503 = vmatprep.subr.bf16.mxu0 0
      %4504 = vmatpush1.bf16.msra.mxu0 %v4426
      %4505 = vmatprep.subr.bf16.mxu0 0
      %4506 = vmatpush1.bf16.msra.mxu0 %v4425
      %4507 = vmatprep.subr.bf16.mxu0 0
      %4508 = vmatpush1.bf16.msra.mxu0 %v4424
      %4509 = vmatprep.subr.bf16.mxu0 0
      %4510 = vmatpush1.bf16.msra.mxu0 %v4423
      %4511 = vmatprep.subr.bf16.mxu0 0
      %4512 = vmatpush1.bf16.msra.mxu0 %v4422
      %4513 = vmatprep.subr.bf16.mxu0 0
      %4514 = vmatpush1.bf16.msra.mxu0 %v4421
      %4515 = vmatprep.subr.bf16.mxu0 0
      %4516 = vmatpush1.bf16.msra.mxu0 %v4420
      %4517 = vmatprep.subr.bf16.mxu0 0
      %4518 = vmatpush1.bf16.msra.mxu0 %v4419
      %4519 = vmatprep.subr.bf16.mxu0 0
      %4520 = vmatpush2.bf16.msra.mxu0 %v4434
      %4521 = vmatprep.subr.bf16.mxu0 0
      %4522 = vmatpush2.bf16.msra.mxu0 %v4433
      %4523 = vmatprep.subr.bf16.mxu0 0
      %4524 = vmatpush2.bf16.msra.mxu0 %v4432
      %4525 = vmatprep.subr.bf16.mxu0 0
      %4526 = vmatpush2.bf16.msra.mxu0 %v4431
      %4527 = vmatprep.subr.bf16.mxu0 0
      %4528 = vmatpush2.bf16.msra.mxu0 %v4430
      %4529 = vmatprep.subr.bf16.mxu0 0
      %4530 = vmatpush2.bf16.msra.mxu0 %v4429
      %4531 = vmatprep.subr.bf16.mxu0 0
      %4532 = vmatpush2.bf16.msra.mxu0 %v4428
      %4533 = vmatprep.subr.bf16.mxu0 0
      %4534 = vmatpush2.bf16.msra.mxu0 %v4427
      %4535 = vmatprep.mubr.bf16.mxu0 %v4257
      %4536 = vmatmul.mubr.bf16.gmra.mxu0 %v4256
      %v4537 = vpop.f32.mrf.mxu0
      %v4538 = vadd.f32 %v4345, %v4537
      %v4539 = vpop.f32.mrf.mxu0
      %v4540 = vpop.f32.mrf.mxu0
      %v4541 = vadd.f32 %v4345, %v4540
      %v4542 = vpop.f32.mrf.mxu0
      %4543 = vmatprep.mubr.bf16.mxu0 %v4260
      %4544 = vmatmul.mubr.bf16.gmra.mxu0 %v4259
      %v4545 = vpop.f32.mrf.mxu0
      %v4546 = vadd.f32 %v4345, %v4545
      %v4547 = vpop.f32.mrf.mxu0
      %v4548 = vpop.f32.mrf.mxu0
      %v4549 = vadd.f32 %v4345, %v4548
      %v4550 = vpop.f32.mrf.mxu0
      %4551 = vmatprep.mubr.bf16.mxu0 %v4263
      %4552 = vmatmul.mubr.bf16.gmra.mxu0 %v4262
      %v4553 = vpop.f32.mrf.mxu0
      %v4554 = vadd.f32 %v4345, %v4553
      %v4555 = vpop.f32.mrf.mxu0
      %v4556 = vpop.f32.mrf.mxu0
      %v4557 = vadd.f32 %v4345, %v4556
      %v4558 = vpop.f32.mrf.mxu0
      %4559 = vmatprep.mubr.bf16.mxu0 %v4266
      %4560 = vmatmul.mubr.bf16.gmra.mxu0 %v4265
      %v4561 = vpop.f32.mrf.mxu0
      %v4562 = vadd.f32 %v4345, %v4561
      %v4563 = vpop.f32.mrf.mxu0
      %v4564 = vpop.f32.mrf.mxu0
      %v4565 = vadd.f32 %v4345, %v4564
      %v4566 = vpop.f32.mrf.mxu0
      %4567 = vmatprep.mubr.bf16.mxu0 %v4269
      %4568 = vmatmul.mubr.bf16.gmra.mxu0 %v4268
      %v4569 = vpop.f32.mrf.mxu0
      %v4570 = vadd.f32 %v4345, %v4569
      %v4571 = vpop.f32.mrf.mxu0
      %v4572 = vpop.f32.mrf.mxu0
      %v4573 = vadd.f32 %v4345, %v4572
      %v4574 = vpop.f32.mrf.mxu0
      %4575 = vmatprep.mubr.bf16.mxu0 %v4272
      %4576 = vmatmul.mubr.bf16.gmra.mxu0 %v4271
      %v4577 = vpop.f32.mrf.mxu0
      %v4578 = vadd.f32 %v4345, %v4577
      %v4579 = vpop.f32.mrf.mxu0
      %v4580 = vpop.f32.mrf.mxu0
      %v4581 = vadd.f32 %v4345, %v4580
      %v4582 = vpop.f32.mrf.mxu0
      %4583 = vmatprep.mubr.bf16.mxu0 %v4275
      %4584 = vmatmul.mubr.bf16.gmra.mxu0 %v4274
      %v4585 = vpop.f32.mrf.mxu0
      %v4586 = vadd.f32 %v4345, %v4585
      %v4587 = vpop.f32.mrf.mxu0
      %v4588 = vpop.f32.mrf.mxu0
      %v4589 = vadd.f32 %v4345, %v4588
      %v4590 = vpop.f32.mrf.mxu0
      %4591 = vmatprep.mubr.bf16.mxu0 %v4278
      %4592 = vmatmul.mubr.bf16.gmra.mxu0 %v4277
      %v4593 = vpop.f32.mrf.mxu0
      %v4594 = vadd.f32 %v4345, %v4593
      %v4595 = vpop.f32.mrf.mxu0
      %v4596 = vpop.f32.mrf.mxu0
      %v4597 = vadd.f32 %v4345, %v4596
      %v4598 = vpop.f32.mrf.mxu0
      %4599 = vmatprep.mubr.bf16.mxu0 %v4281
      %4600 = vmatmul.mubr.bf16.gmra.mxu0 %v4280
      %v4601 = vpop.f32.mrf.mxu0
      %v4602 = vadd.f32 %v4345, %v4601
      %v4603 = vpop.f32.mrf.mxu0
      %v4604 = vpop.f32.mrf.mxu0
      %v4605 = vadd.f32 %v4345, %v4604
      %v4606 = vpop.f32.mrf.mxu0
      %4607 = vmatprep.mubr.bf16.mxu0 %v4284
      %4608 = vmatmul.mubr.bf16.gmra.mxu0 %v4283
      %v4609 = vpop.f32.mrf.mxu0
      %v4610 = vadd.f32 %v4345, %v4609
      %v4611 = vpop.f32.mrf.mxu0
      %v4612 = vpop.f32.mrf.mxu0
      %v4613 = vadd.f32 %v4345, %v4612
      %v4614 = vpop.f32.mrf.mxu0
      %4615 = vmatprep.mubr.bf16.mxu0 %v4287
      %4616 = vmatmul.mubr.bf16.gmra.mxu0 %v4286
      %v4617 = vpop.f32.mrf.mxu0
      %v4618 = vadd.f32 %v4345, %v4617
      %v4619 = vpop.f32.mrf.mxu0
      %v4620 = vpop.f32.mrf.mxu0
      %v4621 = vadd.f32 %v4345, %v4620
      %v4622 = vpop.f32.mrf.mxu0
      %4623 = vmatprep.mubr.bf16.mxu0 %v4290
      %4624 = vmatmul.mubr.bf16.gmra.mxu0 %v4289
      %v4625 = vpop.f32.mrf.mxu0
      %v4626 = vadd.f32 %v4345, %v4625
      %v4627 = vpop.f32.mrf.mxu0
      %v4628 = vpop.f32.mrf.mxu0
      %v4629 = vadd.f32 %v4345, %v4628
      %v4630 = vpop.f32.mrf.mxu0
      %4631 = vmatprep.mubr.bf16.mxu0 %v4293
      %4632 = vmatmul.mubr.bf16.gmra.mxu0 %v4292
      %v4633 = vpop.f32.mrf.mxu0
      %v4634 = vadd.f32 %v4345, %v4633
      %v4635 = vpop.f32.mrf.mxu0
      %v4636 = vpop.f32.mrf.mxu0
      %v4637 = vadd.f32 %v4345, %v4636
      %v4638 = vpop.f32.mrf.mxu0
      %4639 = vmatprep.mubr.bf16.mxu0 %v4296
      %4640 = vmatmul.mubr.bf16.gmra.mxu0 %v4295
      %v4641 = vpop.f32.mrf.mxu0
      %v4642 = vadd.f32 %v4345, %v4641
      %v4643 = vpop.f32.mrf.mxu0
      %v4644 = vpop.f32.mrf.mxu0
      %v4645 = vadd.f32 %v4345, %v4644
      %v4646 = vpop.f32.mrf.mxu0
      %4647 = vmatprep.mubr.bf16.mxu0 %v4299
      %4648 = vmatmul.mubr.bf16.gmra.mxu0 %v4298
      %v4649 = vpop.f32.mrf.mxu0
      %v4650 = vadd.f32 %v4345, %v4649
      %v4651 = vpop.f32.mrf.mxu0
      %v4652 = vpop.f32.mrf.mxu0
      %v4653 = vadd.f32 %v4345, %v4652
      %v4654 = vpop.f32.mrf.mxu0
      %4655 = vmatprep.mubr.bf16.mxu0 %v4302
      %4656 = vmatmul.mubr.bf16.gmra.mxu0 %v4301
      %v4657 = vpop.f32.mrf.mxu0
      %v4658 = vadd.f32 %v4345, %v4657
      %v4659 = vpop.f32.mrf.mxu0
      %v4660 = vpop.f32.mrf.mxu0
      %v4661 = vadd.f32 %v4345, %v4660
      %v4662 = vpop.f32.mrf.mxu0
      %4663 = vdwg.mxu0
      %4664 = vmatprep.subr.bf16.mxu0 0
      %4665 = vmatpush1.bf16.msra.mxu0 0
      %4666 = vmatprep.subr.bf16.mxu0 0
      %4667 = vmatpush1.bf16.msra.mxu0 0
      %4668 = vmatprep.subr.bf16.mxu0 0
      %4669 = vmatpush1.bf16.msra.mxu0 0
      %4670 = vmatprep.subr.bf16.mxu0 0
      %4671 = vmatpush1.bf16.msra.mxu0 0
      %4672 = vmatprep.subr.bf16.mxu0 0
      %4673 = vmatpush1.bf16.msra.mxu0 0
      %4674 = vmatprep.subr.bf16.mxu0 0
      %4675 = vmatpush1.bf16.msra.mxu0 0
      %4676 = vmatprep.subr.bf16.mxu0 0
      %4677 = vmatpush1.bf16.msra.mxu0 %v4436
      %4678 = vmatprep.subr.bf16.mxu0 0
      %4679 = vmatpush1.bf16.msra.mxu0 %v4435
      %4680 = vmatprep.subr.bf16.mxu0 0
      %4681 = vmatpush2.bf16.msra.mxu0 0
      %4682 = vmatprep.subr.bf16.mxu0 0
      %4683 = vmatpush2.bf16.msra.mxu0 0
      %4684 = vmatprep.subr.bf16.mxu0 0
      %4685 = vmatpush2.bf16.msra.mxu0 0
      %4686 = vmatprep.subr.bf16.mxu0 0
      %4687 = vmatpush2.bf16.msra.mxu0 0
      %4688 = vmatprep.subr.bf16.mxu0 0
      %4689 = vmatpush2.bf16.msra.mxu0 0
      %4690 = vmatprep.subr.bf16.mxu0 0
      %4691 = vmatpush2.bf16.msra.mxu0 0
      %4692 = vmatprep.subr.bf16.mxu0 0
      %4693 = vmatpush2.bf16.msra.mxu0 0
      %4694 = vmatprep.subr.bf16.mxu0 0
      %4695 = vmatpush2.bf16.msra.mxu0 0
      %4696 = vmatprep.mubr.bf16.mxu0 0
      %4697 = vmatmul.mubr.bf16.gmra.mxu0 %v4456
      %v4698 = vpop.f32.mrf.mxu0
      %v4699 = vadd.f32 %v4538, %v4698
      %v4700 = vpop.f32.mrf.mxu0
      %v4701 = vpop.f32.mrf.mxu0
      %v4702 = vadd.f32 %v4541, %v4701
      %v4703 = vpop.f32.mrf.mxu0
      %4704 = vmatprep.mubr.bf16.mxu0 0
      %4705 = vmatmul.mubr.bf16.gmra.mxu0 %v4459
      %v4706 = vpop.f32.mrf.mxu0
      %v4707 = vadd.f32 %v4546, %v4706
      %v4708 = vpop.f32.mrf.mxu0
      %v4709 = vpop.f32.mrf.mxu0
      %v4710 = vadd.f32 %v4549, %v4709
      %v4711 = vpop.f32.mrf.mxu0
      %4712 = vmatprep.mubr.bf16.mxu0 0
      %4713 = vmatmul.mubr.bf16.gmra.mxu0 %v4462
      %v4714 = vpop.f32.mrf.mxu0
      %v4715 = vadd.f32 %v4554, %v4714
      %v4716 = vpop.f32.mrf.mxu0
      %v4717 = vpop.f32.mrf.mxu0
      %v4718 = vadd.f32 %v4557, %v4717
      %v4719 = vpop.f32.mrf.mxu0
      %4720 = vmatprep.mubr.bf16.mxu0 0
      %4721 = vmatmul.mubr.bf16.gmra.mxu0 %v4465
      %v4722 = vpop.f32.mrf.mxu0
      %v4723 = vadd.f32 %v4562, %v4722
      %v4724 = vpop.f32.mrf.mxu0
      %v4725 = vpop.f32.mrf.mxu0
      %v4726 = vadd.f32 %v4565, %v4725
      %v4727 = vpop.f32.mrf.mxu0
      %4728 = vmatprep.mubr.bf16.mxu0 0
      %4729 = vmatmul.mubr.bf16.gmra.mxu0 %v4468
      %v4730 = vpop.f32.mrf.mxu0
      %v4731 = vadd.f32 %v4570, %v4730
      %v4732 = vpop.f32.mrf.mxu0
      %v4733 = vpop.f32.mrf.mxu0
      %v4734 = vadd.f32 %v4573, %v4733
      %v4735 = vpop.f32.mrf.mxu0
      %4736 = vmatprep.mubr.bf16.mxu0 0
      %4737 = vmatmul.mubr.bf16.gmra.mxu0 %v4471
      %v4738 = vpop.f32.mrf.mxu0
      %v4739 = vadd.f32 %v4578, %v4738
      %v4740 = vpop.f32.mrf.mxu0
      %v4741 = vpop.f32.mrf.mxu0
      %v4742 = vadd.f32 %v4581, %v4741
      %v4743 = vpop.f32.mrf.mxu0
      %4744 = vmatprep.mubr.bf16.mxu0 0
      %4745 = vmatmul.mubr.bf16.gmra.mxu0 %v4474
      %v4746 = vpop.f32.mrf.mxu0
      %v4747 = vadd.f32 %v4586, %v4746
      %v4748 = vpop.f32.mrf.mxu0
      %v4749 = vpop.f32.mrf.mxu0
      %v4750 = vadd.f32 %v4589, %v4749
      %v4751 = vpop.f32.mrf.mxu0
      %4752 = vmatprep.mubr.bf16.mxu0 0
      %4753 = vmatmul.mubr.bf16.gmra.mxu0 %v4477
      %v4754 = vpop.f32.mrf.mxu0
      %v4755 = vadd.f32 %v4594, %v4754
      %v4756 = vpop.f32.mrf.mxu0
      %v4757 = vpop.f32.mrf.mxu0
      %v4758 = vadd.f32 %v4597, %v4757
      %v4759 = vpop.f32.mrf.mxu0
      %4760 = vmatprep.mubr.bf16.mxu0 0
      %4761 = vmatmul.mubr.bf16.gmra.mxu0 %v4480
      %v4762 = vpop.f32.mrf.mxu0
      %v4763 = vadd.f32 %v4602, %v4762
      %v4764 = vpop.f32.mrf.mxu0
      %v4765 = vpop.f32.mrf.mxu0
      %v4766 = vadd.f32 %v4605, %v4765
      %v4767 = vpop.f32.mrf.mxu0
      %4768 = vmatprep.mubr.bf16.mxu0 0
      %4769 = vmatmul.mubr.bf16.gmra.mxu0 %v4483
      %v4770 = vpop.f32.mrf.mxu0
      %v4771 = vadd.f32 %v4610, %v4770
      %v4772 = vpop.f32.mrf.mxu0
      %v4773 = vpop.f32.mrf.mxu0
      %v4774 = vadd.f32 %v4613, %v4773
      %v4775 = vpop.f32.mrf.mxu0
      %4776 = vmatprep.mubr.bf16.mxu0 0
      %4777 = vmatmul.mubr.bf16.gmra.mxu0 %v4486
      %v4778 = vpop.f32.mrf.mxu0
      %v4779 = vadd.f32 %v4618, %v4778
      %v4780 = vpop.f32.mrf.mxu0
      %v4781 = vpop.f32.mrf.mxu0
      %v4782 = vadd.f32 %v4621, %v4781
      %v4783 = vpop.f32.mrf.mxu0
      %4784 = vmatprep.mubr.bf16.mxu0 0
      %4785 = vmatmul.mubr.bf16.gmra.mxu0 %v4489
      %v4786 = vpop.f32.mrf.mxu0
      %v4787 = vadd.f32 %v4626, %v4786
      %v4788 = vpop.f32.mrf.mxu0
      %v4789 = vpop.f32.mrf.mxu0
      %v4790 = vadd.f32 %v4629, %v4789
      %v4791 = vpop.f32.mrf.mxu0
      %4792 = vmatprep.mubr.bf16.mxu0 0
      %4793 = vmatmul.mubr.bf16.gmra.mxu0 %v4492
      %v4794 = vpop.f32.mrf.mxu0
      %v4795 = vadd.f32 %v4634, %v4794
      %v4796 = vpop.f32.mrf.mxu0
      %v4797 = vpop.f32.mrf.mxu0
      %v4798 = vadd.f32 %v4637, %v4797
      %v4799 = vpop.f32.mrf.mxu0
      %4800 = vmatprep.mubr.bf16.mxu0 0
      %4801 = vmatmul.mubr.bf16.gmra.mxu0 %v4495
      %v4802 = vpop.f32.mrf.mxu0
      %v4803 = vadd.f32 %v4642, %v4802
      %v4804 = vpop.f32.mrf.mxu0
      %v4805 = vpop.f32.mrf.mxu0
      %v4806 = vadd.f32 %v4645, %v4805
      %v4807 = vpop.f32.mrf.mxu0
      %4808 = vmatprep.mubr.bf16.mxu0 0
      %4809 = vmatmul.mubr.bf16.gmra.mxu0 %v4498
      %v4810 = vpop.f32.mrf.mxu0
      %v4811 = vadd.f32 %v4650, %v4810
      %v4812 = vpop.f32.mrf.mxu0
      %v4813 = vpop.f32.mrf.mxu0
      %v4814 = vadd.f32 %v4653, %v4813
      %v4815 = vpop.f32.mrf.mxu0
      %4816 = vmatprep.mubr.bf16.mxu0 0
      %4817 = vmatmul.mubr.bf16.gmra.mxu0 %v4501
      %v4818 = vpop.f32.mrf.mxu0
      %v4819 = vadd.f32 %v4658, %v4818
      %v4820 = vpop.f32.mrf.mxu0
      %v4821 = vpop.f32.mrf.mxu0
      %v4822 = vadd.f32 %v4661, %v4821
      %v4823 = vpop.f32.mrf.mxu0
      %4824 = vdwg.mxu0
      %v4825 = vmul.f32 %v4699, 0.1
      %v4826 = vmul.f32 %v4702, 0.1
      %v4827 = vmul.f32 %v4707, 0.1
      %v4828 = vmul.f32 %v4710, 0.1
      %v4829 = vmul.f32 %v4715, 0.1
      %v4830 = vmul.f32 %v4718, 0.1
      %v4831 = vmul.f32 %v4723, 0.1
      %v4832 = vmul.f32 %v4726, 0.1
      %v4833 = vmul.f32 %v4731, 0.1
      %v4834 = vmul.f32 %v4734, 0.1
      %v4835 = vmul.f32 %v4739, 0.1
      %v4836 = vmul.f32 %v4742, 0.1
      %v4837 = vmul.f32 %v4747, 0.1
      %v4838 = vmul.f32 %v4750, 0.1
      %v4839 = vmul.f32 %v4755, 0.1
      %v4840 = vmul.f32 %v4758, 0.1
      %v4841 = vmul.f32 %v4763, 0.1
      %v4842 = vmul.f32 %v4766, 0.1
      %v4843 = vmul.f32 %v4771, 0.1
      %v4844 = vmul.f32 %v4774, 0.1
      %v4845 = vmul.f32 %v4779, 0.1
      %v4846 = vmul.f32 %v4782, 0.1
      %v4847 = vmul.f32 %v4787, 0.1
      %v4848 = vmul.f32 %v4790, 0.1
      %v4849 = vmul.f32 %v4795, 0.1
      %v4850 = vmul.f32 %v4798, 0.1
      %v4851 = vmul.f32 %v4803, 0.1
      %v4852 = vmul.f32 %v4806, 0.1
      %v4853 = vmul.f32 %v4811, 0.1
      %v4854 = vmul.f32 %v4814, 0.1
      %v4855 = vmul.f32 %v4819, 0.1
      %v4856 = vmul.f32 %v4822, 0.1
      %v4857 = vmax.f32 %v4699, %v4825
      %v4858 = vmax.f32 %v4702, %v4826
      %v4859 = vmax.f32 %v4707, %v4827
      %v4860 = vmax.f32 %v4710, %v4828
      %v4861 = vmax.f32 %v4715, %v4829
      %v4862 = vmax.f32 %v4718, %v4830
      %v4863 = vmax.f32 %v4723, %v4831
      %v4864 = vmax.f32 %v4726, %v4832
      %v4865 = vmax.f32 %v4731, %v4833
      %v4866 = vmax.f32 %v4734, %v4834
      %v4867 = vmax.f32 %v4739, %v4835
      %v4868 = vmax.f32 %v4742, %v4836
      %v4869 = vmax.f32 %v4747, %v4837
      %v4870 = vmax.f32 %v4750, %v4838
      %v4871 = vmax.f32 %v4755, %v4839
      %v4872 = vmax.f32 %v4758, %v4840
      %v4873 = vmax.f32 %v4763, %v4841
      %v4874 = vmax.f32 %v4766, %v4842
      %v4875 = vmax.f32 %v4771, %v4843
      %v4876 = vmax.f32 %v4774, %v4844
      %v4877 = vmax.f32 %v4779, %v4845
      %v4878 = vmax.f32 %v4782, %v4846
      %v4879 = vmax.f32 %v4787, %v4847
      %v4880 = vmax.f32 %v4790, %v4848
      %v4881 = vmax.f32 %v4795, %v4849
      %v4882 = vmax.f32 %v4798, %v4850
      %v4883 = vmax.f32 %v4803, %v4851
      %v4884 = vmax.f32 %v4806, %v4852
      %v4885 = vmax.f32 %v4811, %v4853
      %v4886 = vmax.f32 %v4814, %v4854
      %v4887 = vmax.f32 %v4819, %v4855
      %v4888 = vmax.f32 %v4822, %v4856
      %v4889 = vld [vmem:[#allocation4] sm:$0xff]
      %v4890 = vld [vmem:[#allocation4 + $0x8] sm:$0xff]
      %v4891 = vld [vmem:[#allocation4 + $0x18] sm:$0xff]
      %v4892 = vld [vmem:[#allocation4 + $0x20] sm:$0xff]
      %v4893 = vld [vmem:[#allocation4 + $0x30] sm:$0xff]
      %v4894 = vld [vmem:[#allocation4 + $0x38] sm:$0xff]
      %v4895 = vld [vmem:[#allocation4 + $0x48] sm:$0xff]
      %v4896 = vld [vmem:[#allocation4 + $0x50] sm:$0xff]
      %v4897 = vld [vmem:[#allocation4 + $0x60] sm:$0xff]
      %v4898 = vld [vmem:[#allocation4 + $0x68] sm:$0xff]
      %v4899 = vld [vmem:[#allocation4 + $0x78] sm:$0xff]
      %v4900 = vld [vmem:[#allocation4 + $0x80] sm:$0xff]
      %v4901 = vld [vmem:[#allocation4 + $0x90] sm:$0xff]
      %v4902 = vld [vmem:[#allocation4 + $0x98] sm:$0xff]
      %v4903 = vld [vmem:[#allocation4 + $0xa8] sm:$0xff]
      %v4904 = vld [vmem:[#allocation4 + $0xb0] sm:$0xff]
      %v4905 = vld [vmem:[#allocation4 + $0xc0] sm:$0xff]
      %v4906 = vld [vmem:[#allocation4 + $0xc8] sm:$0xff]
      %v4907 = vld [vmem:[#allocation4 + $0xd8] sm:$0xff]
      %v4908 = vld [vmem:[#allocation4 + $0xe0] sm:$0xff]
      %v4909 = vld [vmem:[#allocation4 + $0xf0] sm:$0xff]
      %v4910 = vld [vmem:[#allocation4 + $0xf8] sm:$0xff]
      %v4911 = vld [vmem:[#allocation4 + $0x108] sm:$0xff]
      %v4912 = vld [vmem:[#allocation4 + $0x110] sm:$0xff]
      %v4913 = vld [vmem:[#allocation4 + $0x120] sm:$0xff]
      %v4914 = vld [vmem:[#allocation4 + $0x128] sm:$0xff]
      %v4915 = vld [vmem:[#allocation4 + $0x138] sm:$0xff]
      %v4916 = vld [vmem:[#allocation4 + $0x140] sm:$0xff]
      %v4917 = vld [vmem:[#allocation4 + $0x150] sm:$0xff]
      %v4918 = vld [vmem:[#allocation4 + $0x158] sm:$0xff]
      %v4919 = vld [vmem:[#allocation4 + $0x168] sm:$0xff]
      %v4920 = vld [vmem:[#allocation4 + $0x170] sm:$0xff]
      %v4921 = vld [vmem:[#allocation4 + $0x1] sm:$0xff]
      %v4922 = vld [vmem:[#allocation4 + $0x9] sm:$0xff]
      %v4923 = vld [vmem:[#allocation4 + $0x19] sm:$0xff]
      %v4924 = vld [vmem:[#allocation4 + $0x21] sm:$0xff]
      %v4925 = vld [vmem:[#allocation4 + $0x31] sm:$0xff]
      %v4926 = vld [vmem:[#allocation4 + $0x39] sm:$0xff]
      %v4927 = vld [vmem:[#allocation4 + $0x49] sm:$0xff]
      %v4928 = vld [vmem:[#allocation4 + $0x51] sm:$0xff]
      %v4929 = vld [vmem:[#allocation4 + $0x61] sm:$0xff]
      %v4930 = vld [vmem:[#allocation4 + $0x69] sm:$0xff]
      %v4931 = vld [vmem:[#allocation4 + $0x79] sm:$0xff]
      %v4932 = vld [vmem:[#allocation4 + $0x81] sm:$0xff]
      %v4933 = vld [vmem:[#allocation4 + $0x91] sm:$0xff]
      %v4934 = vld [vmem:[#allocation4 + $0x99] sm:$0xff]
      %v4935 = vld [vmem:[#allocation4 + $0xa9] sm:$0xff]
      %v4936 = vld [vmem:[#allocation4 + $0xb1] sm:$0xff]
      %v4937 = vld [vmem:[#allocation4 + $0xc1] sm:$0xff]
      %v4938 = vld [vmem:[#allocation4 + $0xc9] sm:$0xff]
      %v4939 = vld [vmem:[#allocation4 + $0xd9] sm:$0xff]
      %v4940 = vld [vmem:[#allocation4 + $0xe1] sm:$0xff]
      %v4941 = vld [vmem:[#allocation4 + $0xf1] sm:$0xff]
      %v4942 = vld [vmem:[#allocation4 + $0xf9] sm:$0xff]
      %v4943 = vld [vmem:[#allocation4 + $0x109] sm:$0xff]
      %v4944 = vld [vmem:[#allocation4 + $0x111] sm:$0xff]
      %v4945 = vld [vmem:[#allocation4 + $0x121] sm:$0xff]
      %v4946 = vld [vmem:[#allocation4 + $0x129] sm:$0xff]
      %v4947 = vld [vmem:[#allocation4 + $0x139] sm:$0xff]
      %v4948 = vld [vmem:[#allocation4 + $0x141] sm:$0xff]
      %v4949 = vld [vmem:[#allocation4 + $0x151] sm:$0xff]
      %v4950 = vld [vmem:[#allocation4 + $0x159] sm:$0xff]
      %v4951 = vld [vmem:[#allocation4 + $0x169] sm:$0xff]
      %v4952 = vld [vmem:[#allocation4 + $0x171] sm:$0xff]
      %v4953 = vld [vmem:[#allocation4 + $0x2] sm:$0xff]
      %v4954 = vld [vmem:[#allocation4 + $0xa] sm:$0xff]
      %v4955 = vld [vmem:[#allocation4 + $0x1a] sm:$0xff]
      %v4956 = vld [vmem:[#allocation4 + $0x22] sm:$0xff]
      %v4957 = vld [vmem:[#allocation4 + $0x32] sm:$0xff]
      %v4958 = vld [vmem:[#allocation4 + $0x3a] sm:$0xff]
      %v4959 = vld [vmem:[#allocation4 + $0x4a] sm:$0xff]
      %v4960 = vld [vmem:[#allocation4 + $0x52] sm:$0xff]
      %v4961 = vld [vmem:[#allocation4 + $0x62] sm:$0xff]
      %v4962 = vld [vmem:[#allocation4 + $0x6a] sm:$0xff]
      %v4963 = vld [vmem:[#allocation4 + $0x7a] sm:$0xff]
      %v4964 = vld [vmem:[#allocation4 + $0x82] sm:$0xff]
      %v4965 = vld [vmem:[#allocation4 + $0x92] sm:$0xff]
      %v4966 = vld [vmem:[#allocation4 + $0x9a] sm:$0xff]
      %v4967 = vld [vmem:[#allocation4 + $0xaa] sm:$0xff]
      %v4968 = vld [vmem:[#allocation4 + $0xb2] sm:$0xff]
      %v4969 = vld [vmem:[#allocation4 + $0xc2] sm:$0xff]
      %v4970 = vld [vmem:[#allocation4 + $0xca] sm:$0xff]
      %v4971 = vld [vmem:[#allocation4 + $0xda] sm:$0xff]
      %v4972 = vld [vmem:[#allocation4 + $0xe2] sm:$0xff]
      %v4973 = vld [vmem:[#allocation4 + $0xf2] sm:$0xff]
      %v4974 = vld [vmem:[#allocation4 + $0xfa] sm:$0xff]
      %v4975 = vld [vmem:[#allocation4 + $0x10a] sm:$0xff]
      %v4976 = vld [vmem:[#allocation4 + $0x112] sm:$0xff]
      %v4977 = vld [vmem:[#allocation4 + $0x122] sm:$0xff]
      %v4978 = vld [vmem:[#allocation4 + $0x12a] sm:$0xff]
      %v4979 = vld [vmem:[#allocation4 + $0x13a] sm:$0xff]
      %v4980 = vld [vmem:[#allocation4 + $0x142] sm:$0xff]
      %v4981 = vld [vmem:[#allocation4 + $0x152] sm:$0xff]
      %v4982 = vld [vmem:[#allocation4 + $0x15a] sm:$0xff]
      %v4983 = vld [vmem:[#allocation4 + $0x16a] sm:$0xff]
      %v4984 = vld [vmem:[#allocation4 + $0x172] sm:$0xff]
      %v4985 = vld [vmem:[%s2974] sm:$0xff]
      %v4986 = vld [vmem:[%s2974 + $0x8] sm:$0xff]
      %v4987 = vld [vmem:[%s2974 + $0x18] sm:$0xff]
      %v4988 = vld [vmem:[%s2974 + $0x20] sm:$0xff]
      %v4989 = vld [vmem:[%s2974 + $0x30] sm:$0xff]
      %v4990 = vld [vmem:[%s2974 + $0x38] sm:$0xff]
      %v4991 = vld [vmem:[%s2974 + $0x48] sm:$0xff]
      %v4992 = vld [vmem:[%s2974 + $0x50] sm:$0xff]
      %v4993 = vld [vmem:[%s2974 + $0x60] sm:$0xff]
      %v4994 = vld [vmem:[%s2974 + $0x68] sm:$0xff]
      %v4995 = vld [vmem:[%s2974 + $0x78] sm:$0xff]
      %v4996 = vld [vmem:[%s2974 + $0x80] sm:$0xff]
      %v4997 = vld [vmem:[%s2974 + $0x90] sm:$0xff]
      %v4998 = vld [vmem:[%s2974 + $0x98] sm:$0xff]
      %v4999 = vld [vmem:[%s2974 + $0xa8] sm:$0xff]
      %v5000 = vld [vmem:[%s2974 + $0xb0] sm:$0xff]
      %v5001 = vld [vmem:[%s2974 + $0xc0] sm:$0xff]
      %v5002 = vld [vmem:[%s2974 + $0xc8] sm:$0xff]
      %v5003 = vld [vmem:[%s2974 + $0xd8] sm:$0xff]
      %v5004 = vld [vmem:[%s2974 + $0xe0] sm:$0xff]
      %v5005 = vld [vmem:[%s2974 + $0xf0] sm:$0xff]
      %v5006 = vld [vmem:[%s2974 + $0xf8] sm:$0xff]
      %v5007 = vld [vmem:[%s2974 + $0x108] sm:$0xff]
      %v5008 = vld [vmem:[%s2974 + $0x110] sm:$0xff]
      %v5009 = vld [vmem:[%s2974 + $0x120] sm:$0xff]
      %v5010 = vld [vmem:[%s2974 + $0x128] sm:$0xff]
      %v5011 = vld [vmem:[%s2974 + $0x138] sm:$0xff]
      %v5012 = vld [vmem:[%s2974 + $0x140] sm:$0xff]
      %v5013 = vld [vmem:[%s2974 + $0x150] sm:$0xff]
      %v5014 = vld [vmem:[%s2974 + $0x158] sm:$0xff]
      %v5015 = vld [vmem:[%s2974 + $0x168] sm:$0xff]
      %v5016 = vld [vmem:[%s2974 + $0x170] sm:$0xff]
      %v5017 = vld [vmem:[%s2974 + $0x1] sm:$0xff]
      %v5018 = vld [vmem:[%s2974 + $0x9] sm:$0xff]
      %v5019 = vld [vmem:[%s2974 + $0x19] sm:$0xff]
      %v5020 = vld [vmem:[%s2974 + $0x21] sm:$0xff]
      %v5021 = vld [vmem:[%s2974 + $0x31] sm:$0xff]
      %v5022 = vld [vmem:[%s2974 + $0x39] sm:$0xff]
      %v5023 = vld [vmem:[%s2974 + $0x49] sm:$0xff]
      %v5024 = vld [vmem:[%s2974 + $0x51] sm:$0xff]
      %v5025 = vld [vmem:[%s2974 + $0x61] sm:$0xff]
      %v5026 = vld [vmem:[%s2974 + $0x69] sm:$0xff]
      %v5027 = vld [vmem:[%s2974 + $0x79] sm:$0xff]
      %v5028 = vld [vmem:[%s2974 + $0x81] sm:$0xff]
      %v5029 = vld [vmem:[%s2974 + $0x91] sm:$0xff]
      %v5030 = vld [vmem:[%s2974 + $0x99] sm:$0xff]
      %v5031 = vld [vmem:[%s2974 + $0xa9] sm:$0xff]
      %v5032 = vld [vmem:[%s2974 + $0xb1] sm:$0xff]
      %v5033 = vld [vmem:[%s2974 + $0xc1] sm:$0xff]
      %v5034 = vld [vmem:[%s2974 + $0xc9] sm:$0xff]
      %v5035 = vld [vmem:[%s2974 + $0xd9] sm:$0xff]
      %v5036 = vld [vmem:[%s2974 + $0xe1] sm:$0xff]
      %v5037 = vld [vmem:[%s2974 + $0xf1] sm:$0xff]
      %v5038 = vld [vmem:[%s2974 + $0xf9] sm:$0xff]
      %v5039 = vld [vmem:[%s2974 + $0x109] sm:$0xff]
      %v5040 = vld [vmem:[%s2974 + $0x111] sm:$0xff]
      %v5041 = vld [vmem:[%s2974 + $0x121] sm:$0xff]
      %v5042 = vld [vmem:[%s2974 + $0x129] sm:$0xff]
      %v5043 = vld [vmem:[%s2974 + $0x139] sm:$0xff]
      %v5044 = vld [vmem:[%s2974 + $0x141] sm:$0xff]
      %v5045 = vld [vmem:[%s2974 + $0x151] sm:$0xff]
      %v5046 = vld [vmem:[%s2974 + $0x159] sm:$0xff]
      %v5047 = vld [vmem:[%s2974 + $0x169] sm:$0xff]
      %v5048 = vld [vmem:[%s2974 + $0x171] sm:$0xff]
      %v5049 = vld [vmem:[%s2974 + $0x2] sm:$0xff]
      %v5050 = vld [vmem:[%s2974 + $0xa] sm:$0xff]
      %v5051 = vld [vmem:[%s2974 + $0x1a] sm:$0xff]
      %v5052 = vld [vmem:[%s2974 + $0x22] sm:$0xff]
      %v5053 = vld [vmem:[%s2974 + $0x32] sm:$0xff]
      %v5054 = vld [vmem:[%s2974 + $0x3a] sm:$0xff]
      %v5055 = vld [vmem:[%s2974 + $0x4a] sm:$0xff]
      %v5056 = vld [vmem:[%s2974 + $0x52] sm:$0xff]
      %v5057 = vld [vmem:[%s2974 + $0x62] sm:$0xff]
      %v5058 = vld [vmem:[%s2974 + $0x6a] sm:$0xff]
      %v5059 = vld [vmem:[%s2974 + $0x7a] sm:$0xff]
      %v5060 = vld [vmem:[%s2974 + $0x82] sm:$0xff]
      %v5061 = vld [vmem:[%s2974 + $0x92] sm:$0xff]
      %v5062 = vld [vmem:[%s2974 + $0x9a] sm:$0xff]
      %v5063 = vld [vmem:[%s2974 + $0xaa] sm:$0xff]
      %v5064 = vld [vmem:[%s2974 + $0xb2] sm:$0xff]
      %v5065 = vld [vmem:[%s2974 + $0xc2] sm:$0xff]
      %v5066 = vld [vmem:[%s2974 + $0xca] sm:$0xff]
      %v5067 = vld [vmem:[%s2974 + $0xda] sm:$0xff]
      %v5068 = vld [vmem:[%s2974 + $0xe2] sm:$0xff]
      %v5069 = vld [vmem:[%s2974 + $0xf2] sm:$0xff]
      %v5070 = vld [vmem:[%s2974 + $0xfa] sm:$0xff]
      %v5071 = vld [vmem:[%s2974 + $0x10a] sm:$0xff]
      %v5072 = vld [vmem:[%s2974 + $0x112] sm:$0xff]
      %v5073 = vld [vmem:[%s2974 + $0x122] sm:$0xff]
      %v5074 = vld [vmem:[%s2974 + $0x12a] sm:$0xff]
      %v5075 = vld [vmem:[%s2974 + $0x13a] sm:$0xff]
      %v5076 = vld [vmem:[%s2974 + $0x142] sm:$0xff]
      %v5077 = vld [vmem:[%s2974 + $0x152] sm:$0xff]
      %v5078 = vld [vmem:[%s2974 + $0x15a] sm:$0xff]
      %v5079 = vld [vmem:[%s2974 + $0x16a] sm:$0xff]
      %v5080 = vld [vmem:[%s2974 + $0x172] sm:$0xff]
      %s5081 = scalar_lea.vmem [#allocation4], 48
      %v5082 = vld [vmem:[%s5081] sm:$0xff]
      %v5083 = vld [vmem:[%s5081 + $0x8] sm:$0xff]
      %v5084 = vld [vmem:[%s5081 + $0x18] sm:$0xff]
      %v5085 = vld [vmem:[%s5081 + $0x20] sm:$0xff]
      %v5086 = vld [vmem:[%s5081 + $0x30] sm:$0xff]
      %v5087 = vld [vmem:[%s5081 + $0x38] sm:$0xff]
      %v5088 = vld [vmem:[%s5081 + $0x48] sm:$0xff]
      %v5089 = vld [vmem:[%s5081 + $0x50] sm:$0xff]
      %v5090 = vld [vmem:[%s5081 + $0x60] sm:$0xff]
      %v5091 = vld [vmem:[%s5081 + $0x68] sm:$0xff]
      %v5092 = vld [vmem:[%s5081 + $0x78] sm:$0xff]
      %v5093 = vld [vmem:[%s5081 + $0x80] sm:$0xff]
      %v5094 = vld [vmem:[%s5081 + $0x90] sm:$0xff]
      %v5095 = vld [vmem:[%s5081 + $0x98] sm:$0xff]
      %v5096 = vld [vmem:[%s5081 + $0xa8] sm:$0xff]
      %v5097 = vld [vmem:[%s5081 + $0xb0] sm:$0xff]
      %v5098 = vld [vmem:[%s5081 + $0xc0] sm:$0xff]
      %v5099 = vld [vmem:[%s5081 + $0xc8] sm:$0xff]
      %v5100 = vld [vmem:[%s5081 + $0xd8] sm:$0xff]
      %v5101 = vld [vmem:[%s5081 + $0xe0] sm:$0xff]
      %v5102 = vld [vmem:[%s5081 + $0xf0] sm:$0xff]
      %v5103 = vld [vmem:[%s5081 + $0xf8] sm:$0xff]
      %v5104 = vld [vmem:[%s5081 + $0x108] sm:$0xff]
      %v5105 = vld [vmem:[%s5081 + $0x110] sm:$0xff]
      %v5106 = vld [vmem:[%s5081 + $0x120] sm:$0xff]
      %v5107 = vld [vmem:[%s5081 + $0x128] sm:$0xff]
      %v5108 = vld [vmem:[%s5081 + $0x138] sm:$0xff]
      %v5109 = vld [vmem:[%s5081 + $0x140] sm:$0xff]
      %v5110 = vld [vmem:[%s5081 + $0x150] sm:$0xff]
      %v5111 = vld [vmem:[%s5081 + $0x158] sm:$0xff]
      %v5112 = vld [vmem:[%s5081 + $0x168] sm:$0xff]
      %v5113 = vld [vmem:[%s5081 + $0x170] sm:$0xff]
      %v5114 = vld [vmem:[%s5081 + $0x1] sm:$0xff]
      %v5115 = vld [vmem:[%s5081 + $0x9] sm:$0xff]
      %v5116 = vld [vmem:[%s5081 + $0x19] sm:$0xff]
      %v5117 = vld [vmem:[%s5081 + $0x21] sm:$0xff]
      %v5118 = vld [vmem:[%s5081 + $0x31] sm:$0xff]
      %v5119 = vld [vmem:[%s5081 + $0x39] sm:$0xff]
      %v5120 = vld [vmem:[%s5081 + $0x49] sm:$0xff]
      %v5121 = vld [vmem:[%s5081 + $0x51] sm:$0xff]
      %v5122 = vld [vmem:[%s5081 + $0x61] sm:$0xff]
      %v5123 = vld [vmem:[%s5081 + $0x69] sm:$0xff]
      %v5124 = vld [vmem:[%s5081 + $0x79] sm:$0xff]
      %v5125 = vld [vmem:[%s5081 + $0x81] sm:$0xff]
      %v5126 = vld [vmem:[%s5081 + $0x91] sm:$0xff]
      %v5127 = vld [vmem:[%s5081 + $0x99] sm:$0xff]
      %v5128 = vld [vmem:[%s5081 + $0xa9] sm:$0xff]
      %v5129 = vld [vmem:[%s5081 + $0xb1] sm:$0xff]
      %v5130 = vld [vmem:[%s5081 + $0xc1] sm:$0xff]
      %v5131 = vld [vmem:[%s5081 + $0xc9] sm:$0xff]
      %v5132 = vld [vmem:[%s5081 + $0xd9] sm:$0xff]
      %v5133 = vld [vmem:[%s5081 + $0xe1] sm:$0xff]
      %v5134 = vld [vmem:[%s5081 + $0xf1] sm:$0xff]
      %v5135 = vld [vmem:[%s5081 + $0xf9] sm:$0xff]
      %v5136 = vld [vmem:[%s5081 + $0x109] sm:$0xff]
      %v5137 = vld [vmem:[%s5081 + $0x111] sm:$0xff]
      %v5138 = vld [vmem:[%s5081 + $0x121] sm:$0xff]
      %v5139 = vld [vmem:[%s5081 + $0x129] sm:$0xff]
      %v5140 = vld [vmem:[%s5081 + $0x139] sm:$0xff]
      %v5141 = vld [vmem:[%s5081 + $0x141] sm:$0xff]
      %v5142 = vld [vmem:[%s5081 + $0x151] sm:$0xff]
      %v5143 = vld [vmem:[%s5081 + $0x159] sm:$0xff]
      %v5144 = vld [vmem:[%s5081 + $0x169] sm:$0xff]
      %v5145 = vld [vmem:[%s5081 + $0x171] sm:$0xff]
      %v5146 = vld [vmem:[%s5081 + $0x2] sm:$0xff]
      %v5147 = vld [vmem:[%s5081 + $0xa] sm:$0xff]
      %v5148 = vld [vmem:[%s5081 + $0x1a] sm:$0xff]
      %v5149 = vld [vmem:[%s5081 + $0x22] sm:$0xff]
      %v5150 = vld [vmem:[%s5081 + $0x32] sm:$0xff]
      %v5151 = vld [vmem:[%s5081 + $0x3a] sm:$0xff]
      %v5152 = vld [vmem:[%s5081 + $0x4a] sm:$0xff]
      %v5153 = vld [vmem:[%s5081 + $0x52] sm:$0xff]
      %v5154 = vld [vmem:[%s5081 + $0x62] sm:$0xff]
      %v5155 = vld [vmem:[%s5081 + $0x6a] sm:$0xff]
      %v5156 = vld [vmem:[%s5081 + $0x7a] sm:$0xff]
      %v5157 = vld [vmem:[%s5081 + $0x82] sm:$0xff]
      %v5158 = vld [vmem:[%s5081 + $0x92] sm:$0xff]
      %v5159 = vld [vmem:[%s5081 + $0x9a] sm:$0xff]
      %v5160 = vld [vmem:[%s5081 + $0xaa] sm:$0xff]
      %v5161 = vld [vmem:[%s5081 + $0xb2] sm:$0xff]
      %v5162 = vld [vmem:[%s5081 + $0xc2] sm:$0xff]
      %v5163 = vld [vmem:[%s5081 + $0xca] sm:$0xff]
      %v5164 = vld [vmem:[%s5081 + $0xda] sm:$0xff]
      %v5165 = vld [vmem:[%s5081 + $0xe2] sm:$0xff]
      %v5166 = vld [vmem:[%s5081 + $0xf2] sm:$0xff]
      %v5167 = vld [vmem:[%s5081 + $0xfa] sm:$0xff]
      %v5168 = vld [vmem:[%s5081 + $0x10a] sm:$0xff]
      %v5169 = vld [vmem:[%s5081 + $0x112] sm:$0xff]
      %v5170 = vld [vmem:[%s5081 + $0x122] sm:$0xff]
      %v5171 = vld [vmem:[%s5081 + $0x12a] sm:$0xff]
      %v5172 = vld [vmem:[%s5081 + $0x13a] sm:$0xff]
      %v5173 = vld [vmem:[%s5081 + $0x142] sm:$0xff]
      %v5174 = vld [vmem:[%s5081 + $0x152] sm:$0xff]
      %v5175 = vld [vmem:[%s5081 + $0x15a] sm:$0xff]
      %v5176 = vld [vmem:[%s5081 + $0x16a] sm:$0xff]
      %v5177 = vld [vmem:[%s5081 + $0x172] sm:$0xff]
      %5210 = vrot.lane.b32.xlu0 %v4921, 32
      %v5211 = vpop.permute.xlu0 %5210
      %5212 = vrot.lane.b32.xlu0 %v4922, 32
      %v5213 = vpop.permute.xlu0 %5212
      %5214 = vrot.lane.b32.xlu0 %v4923, 32
      %v5215 = vpop.permute.xlu0 %5214
      %5216 = vrot.lane.b32.xlu0 %v4924, 32
      %v5217 = vpop.permute.xlu0 %5216
      %5218 = vrot.lane.b32.xlu0 %v4925, 32
      %v5219 = vpop.permute.xlu0 %5218
      %5220 = vrot.lane.b32.xlu0 %v4926, 32
      %v5221 = vpop.permute.xlu0 %5220
      %5222 = vrot.lane.b32.xlu0 %v4927, 32
      %v5223 = vpop.permute.xlu0 %5222
      %5224 = vrot.lane.b32.xlu0 %v4928, 32
      %v5225 = vpop.permute.xlu0 %5224
      %5226 = vrot.lane.b32.xlu0 %v4929, 32
      %v5227 = vpop.permute.xlu0 %5226
      %5228 = vrot.lane.b32.xlu0 %v4930, 32
      %v5229 = vpop.permute.xlu0 %5228
      %5230 = vrot.lane.b32.xlu0 %v4931, 32
      %v5231 = vpop.permute.xlu0 %5230
      %5232 = vrot.lane.b32.xlu0 %v4932, 32
      %v5233 = vpop.permute.xlu0 %5232
      %5234 = vrot.lane.b32.xlu0 %v4933, 32
      %v5235 = vpop.permute.xlu0 %5234
      %5236 = vrot.lane.b32.xlu0 %v4934, 32
      %v5237 = vpop.permute.xlu0 %5236
      %5238 = vrot.lane.b32.xlu0 %v4935, 32
      %v5239 = vpop.permute.xlu0 %5238
      %5240 = vrot.lane.b32.xlu0 %v4936, 32
      %v5241 = vpop.permute.xlu0 %5240
      %5242 = vrot.lane.b32.xlu0 %v4937, 32
      %v5243 = vpop.permute.xlu0 %5242
      %5244 = vrot.lane.b32.xlu0 %v4938, 32
      %v5245 = vpop.permute.xlu0 %5244
      %5246 = vrot.lane.b32.xlu0 %v4939, 32
      %v5247 = vpop.permute.xlu0 %5246
      %5248 = vrot.lane.b32.xlu0 %v4940, 32
      %v5249 = vpop.permute.xlu0 %5248
      %5250 = vrot.lane.b32.xlu0 %v4941, 32
      %v5251 = vpop.permute.xlu0 %5250
      %5252 = vrot.lane.b32.xlu0 %v4942, 32
      %v5253 = vpop.permute.xlu0 %5252
      %5254 = vrot.lane.b32.xlu0 %v4943, 32
      %v5255 = vpop.permute.xlu0 %5254
      %5256 = vrot.lane.b32.xlu0 %v4944, 32
      %v5257 = vpop.permute.xlu0 %5256
      %5258 = vrot.lane.b32.xlu0 %v4945, 32
      %v5259 = vpop.permute.xlu0 %5258
      %5260 = vrot.lane.b32.xlu0 %v4946, 32
      %v5261 = vpop.permute.xlu0 %5260
      %5262 = vrot.lane.b32.xlu0 %v4947, 32
      %v5263 = vpop.permute.xlu0 %5262
      %5264 = vrot.lane.b32.xlu0 %v4948, 32
      %v5265 = vpop.permute.xlu0 %5264
      %5266 = vrot.lane.b32.xlu0 %v4949, 32
      %v5267 = vpop.permute.xlu0 %5266
      %5268 = vrot.lane.b32.xlu0 %v4950, 32
      %v5269 = vpop.permute.xlu0 %5268
      %5270 = vrot.lane.b32.xlu0 %v4951, 32
      %v5271 = vpop.permute.xlu0 %5270
      %5272 = vrot.lane.b32.xlu0 %v4952, 32
      %v5273 = vpop.permute.xlu0 %5272
      %5338 = vrot.lane.b32.xlu0 %v4953, 64
      %v5339 = vpop.permute.xlu0 %5338
      %5340 = vrot.lane.b32.xlu0 %v4954, 64
      %v5341 = vpop.permute.xlu0 %5340
      %5342 = vrot.lane.b32.xlu0 %v4955, 64
      %v5343 = vpop.permute.xlu0 %5342
      %5344 = vrot.lane.b32.xlu0 %v4956, 64
      %v5345 = vpop.permute.xlu0 %5344
      %5346 = vrot.lane.b32.xlu0 %v4957, 64
      %v5347 = vpop.permute.xlu0 %5346
      %5348 = vrot.lane.b32.xlu0 %v4958, 64
      %v5349 = vpop.permute.xlu0 %5348
      %5350 = vrot.lane.b32.xlu0 %v4959, 64
      %v5351 = vpop.permute.xlu0 %5350
      %5352 = vrot.lane.b32.xlu0 %v4960, 64
      %v5353 = vpop.permute.xlu0 %5352
      %5354 = vrot.lane.b32.xlu0 %v4961, 64
      %v5355 = vpop.permute.xlu0 %5354
      %5356 = vrot.lane.b32.xlu0 %v4962, 64
      %v5357 = vpop.permute.xlu0 %5356
      %5358 = vrot.lane.b32.xlu0 %v4963, 64
      %v5359 = vpop.permute.xlu0 %5358
      %5360 = vrot.lane.b32.xlu0 %v4964, 64
      %v5361 = vpop.permute.xlu0 %5360
      %5362 = vrot.lane.b32.xlu0 %v4965, 64
      %v5363 = vpop.permute.xlu0 %5362
      %5364 = vrot.lane.b32.xlu0 %v4966, 64
      %v5365 = vpop.permute.xlu0 %5364
      %5366 = vrot.lane.b32.xlu0 %v4967, 64
      %v5367 = vpop.permute.xlu0 %5366
      %5368 = vrot.lane.b32.xlu0 %v4968, 64
      %v5369 = vpop.permute.xlu0 %5368
      %5370 = vrot.lane.b32.xlu0 %v4969, 64
      %v5371 = vpop.permute.xlu0 %5370
      %5372 = vrot.lane.b32.xlu0 %v4970, 64
      %v5373 = vpop.permute.xlu0 %5372
      %5374 = vrot.lane.b32.xlu0 %v4971, 64
      %v5375 = vpop.permute.xlu0 %5374
      %5376 = vrot.lane.b32.xlu0 %v4972, 64
      %v5377 = vpop.permute.xlu0 %5376
      %5378 = vrot.lane.b32.xlu0 %v4973, 64
      %v5379 = vpop.permute.xlu0 %5378
      %5380 = vrot.lane.b32.xlu0 %v4974, 64
      %v5381 = vpop.permute.xlu0 %5380
      %5382 = vrot.lane.b32.xlu0 %v4975, 64
      %v5383 = vpop.permute.xlu0 %5382
      %5384 = vrot.lane.b32.xlu0 %v4976, 64
      %v5385 = vpop.permute.xlu0 %5384
      %5386 = vrot.lane.b32.xlu0 %v4977, 64
      %v5387 = vpop.permute.xlu0 %5386
      %5388 = vrot.lane.b32.xlu0 %v4978, 64
      %v5389 = vpop.permute.xlu0 %5388
      %5390 = vrot.lane.b32.xlu0 %v4979, 64
      %v5391 = vpop.permute.xlu0 %5390
      %5392 = vrot.lane.b32.xlu0 %v4980, 64
      %v5393 = vpop.permute.xlu0 %5392
      %5394 = vrot.lane.b32.xlu0 %v4981, 64
      %v5395 = vpop.permute.xlu0 %5394
      %5396 = vrot.lane.b32.xlu0 %v4982, 64
      %v5397 = vpop.permute.xlu0 %5396
      %5398 = vrot.lane.b32.xlu0 %v4983, 64
      %v5399 = vpop.permute.xlu0 %5398
      %5400 = vrot.lane.b32.xlu0 %v4984, 64
      %v5401 = vpop.permute.xlu0 %5400
      %5466 = vrot.lane.b32.xlu0 %v4985, 96
      %v5467 = vpop.permute.xlu0 %5466
      %5468 = vrot.lane.b32.xlu0 %v4986, 96
      %v5469 = vpop.permute.xlu0 %5468
      %5470 = vrot.lane.b32.xlu0 %v4987, 96
      %v5471 = vpop.permute.xlu0 %5470
      %5472 = vrot.lane.b32.xlu0 %v4988, 96
      %v5473 = vpop.permute.xlu0 %5472
      %5474 = vrot.lane.b32.xlu0 %v4989, 96
      %v5475 = vpop.permute.xlu0 %5474
      %5476 = vrot.lane.b32.xlu0 %v4990, 96
      %v5477 = vpop.permute.xlu0 %5476
      %5478 = vrot.lane.b32.xlu0 %v4991, 96
      %v5479 = vpop.permute.xlu0 %5478
      %5480 = vrot.lane.b32.xlu0 %v4992, 96
      %v5481 = vpop.permute.xlu0 %5480
      %5482 = vrot.lane.b32.xlu0 %v4993, 96
      %v5483 = vpop.permute.xlu0 %5482
      %5484 = vrot.lane.b32.xlu0 %v4994, 96
      %v5485 = vpop.permute.xlu0 %5484
      %5486 = vrot.lane.b32.xlu0 %v4995, 96
      %v5487 = vpop.permute.xlu0 %5486
      %5488 = vrot.lane.b32.xlu0 %v4996, 96
      %v5489 = vpop.permute.xlu0 %5488
      %5490 = vrot.lane.b32.xlu0 %v4997, 96
      %v5491 = vpop.permute.xlu0 %5490
      %5492 = vrot.lane.b32.xlu0 %v4998, 96
      %v5493 = vpop.permute.xlu0 %5492
      %5494 = vrot.lane.b32.xlu0 %v4999, 96
      %v5495 = vpop.permute.xlu0 %5494
      %5496 = vrot.lane.b32.xlu0 %v5000, 96
      %v5497 = vpop.permute.xlu0 %5496
      %5498 = vrot.lane.b32.xlu0 %v5001, 96
      %v5499 = vpop.permute.xlu0 %5498
      %5500 = vrot.lane.b32.xlu0 %v5002, 96
      %v5501 = vpop.permute.xlu0 %5500
      %5502 = vrot.lane.b32.xlu0 %v5003, 96
      %v5503 = vpop.permute.xlu0 %5502
      %5504 = vrot.lane.b32.xlu0 %v5004, 96
      %v5505 = vpop.permute.xlu0 %5504
      %5506 = vrot.lane.b32.xlu0 %v5005, 96
      %v5507 = vpop.permute.xlu0 %5506
      %5508 = vrot.lane.b32.xlu0 %v5006, 96
      %v5509 = vpop.permute.xlu0 %5508
      %5510 = vrot.lane.b32.xlu0 %v5007, 96
      %v5511 = vpop.permute.xlu0 %5510
      %5512 = vrot.lane.b32.xlu0 %v5008, 96
      %v5513 = vpop.permute.xlu0 %5512
      %5514 = vrot.lane.b32.xlu0 %v5009, 96
      %v5515 = vpop.permute.xlu0 %5514
      %5516 = vrot.lane.b32.xlu0 %v5010, 96
      %v5517 = vpop.permute.xlu0 %5516
      %5518 = vrot.lane.b32.xlu0 %v5011, 96
      %v5519 = vpop.permute.xlu0 %5518
      %5520 = vrot.lane.b32.xlu0 %v5012, 96
      %v5521 = vpop.permute.xlu0 %5520
      %5522 = vrot.lane.b32.xlu0 %v5013, 96
      %v5523 = vpop.permute.xlu0 %5522
      %5524 = vrot.lane.b32.xlu0 %v5014, 96
      %v5525 = vpop.permute.xlu0 %5524
      %5526 = vrot.lane.b32.xlu0 %v5015, 96
      %v5527 = vpop.permute.xlu0 %5526
      %5528 = vrot.lane.b32.xlu0 %v5016, 96
      %v5529 = vpop.permute.xlu0 %5528
      %5594 = vrot.lane.b32.xlu0 %v5049, 32
      %v5595 = vpop.permute.xlu0 %5594
      %5596 = vrot.lane.b32.xlu0 %v5050, 32
      %v5597 = vpop.permute.xlu0 %5596
      %5598 = vrot.lane.b32.xlu0 %v5051, 32
      %v5599 = vpop.permute.xlu0 %5598
      %5600 = vrot.lane.b32.xlu0 %v5052, 32
      %v5601 = vpop.permute.xlu0 %5600
      %5602 = vrot.lane.b32.xlu0 %v5053, 32
      %v5603 = vpop.permute.xlu0 %5602
      %5604 = vrot.lane.b32.xlu0 %v5054, 32
      %v5605 = vpop.permute.xlu0 %5604
      %5606 = vrot.lane.b32.xlu0 %v5055, 32
      %v5607 = vpop.permute.xlu0 %5606
      %5608 = vrot.lane.b32.xlu0 %v5056, 32
      %v5609 = vpop.permute.xlu0 %5608
      %5610 = vrot.lane.b32.xlu0 %v5057, 32
      %v5611 = vpop.permute.xlu0 %5610
      %5612 = vrot.lane.b32.xlu0 %v5058, 32
      %v5613 = vpop.permute.xlu0 %5612
      %5614 = vrot.lane.b32.xlu0 %v5059, 32
      %v5615 = vpop.permute.xlu0 %5614
      %5616 = vrot.lane.b32.xlu0 %v5060, 32
      %v5617 = vpop.permute.xlu0 %5616
      %5618 = vrot.lane.b32.xlu0 %v5061, 32
      %v5619 = vpop.permute.xlu0 %5618
      %5620 = vrot.lane.b32.xlu0 %v5062, 32
      %v5621 = vpop.permute.xlu0 %5620
      %5622 = vrot.lane.b32.xlu0 %v5063, 32
      %v5623 = vpop.permute.xlu0 %5622
      %5624 = vrot.lane.b32.xlu0 %v5064, 32
      %v5625 = vpop.permute.xlu0 %5624
      %5626 = vrot.lane.b32.xlu0 %v5065, 32
      %v5627 = vpop.permute.xlu0 %5626
      %5628 = vrot.lane.b32.xlu0 %v5066, 32
      %v5629 = vpop.permute.xlu0 %5628
      %5630 = vrot.lane.b32.xlu0 %v5067, 32
      %v5631 = vpop.permute.xlu0 %5630
      %5632 = vrot.lane.b32.xlu0 %v5068, 32
      %v5633 = vpop.permute.xlu0 %5632
      %5634 = vrot.lane.b32.xlu0 %v5069, 32
      %v5635 = vpop.permute.xlu0 %5634
      %5636 = vrot.lane.b32.xlu0 %v5070, 32
      %v5637 = vpop.permute.xlu0 %5636
      %5638 = vrot.lane.b32.xlu0 %v5071, 32
      %v5639 = vpop.permute.xlu0 %5638
      %5640 = vrot.lane.b32.xlu0 %v5072, 32
      %v5641 = vpop.permute.xlu0 %5640
      %5642 = vrot.lane.b32.xlu0 %v5073, 32
      %v5643 = vpop.permute.xlu0 %5642
      %5644 = vrot.lane.b32.xlu0 %v5074, 32
      %v5645 = vpop.permute.xlu0 %5644
      %5646 = vrot.lane.b32.xlu0 %v5075, 32
      %v5647 = vpop.permute.xlu0 %5646
      %5648 = vrot.lane.b32.xlu0 %v5076, 32
      %v5649 = vpop.permute.xlu0 %5648
      %5650 = vrot.lane.b32.xlu0 %v5077, 32
      %v5651 = vpop.permute.xlu0 %5650
      %5652 = vrot.lane.b32.xlu0 %v5078, 32
      %v5653 = vpop.permute.xlu0 %5652
      %5654 = vrot.lane.b32.xlu0 %v5079, 32
      %v5655 = vpop.permute.xlu0 %5654
      %5656 = vrot.lane.b32.xlu0 %v5080, 32
      %v5657 = vpop.permute.xlu0 %5656
      %5722 = vrot.lane.b32.xlu0 %v5082, 64
      %v5723 = vpop.permute.xlu0 %5722
      %5724 = vrot.lane.b32.xlu0 %v5083, 64
      %v5725 = vpop.permute.xlu0 %5724
      %5726 = vrot.lane.b32.xlu0 %v5084, 64
      %v5727 = vpop.permute.xlu0 %5726
      %5728 = vrot.lane.b32.xlu0 %v5085, 64
      %v5729 = vpop.permute.xlu0 %5728
      %5730 = vrot.lane.b32.xlu0 %v5086, 64
      %v5731 = vpop.permute.xlu0 %5730
      %5732 = vrot.lane.b32.xlu0 %v5087, 64
      %v5733 = vpop.permute.xlu0 %5732
      %5734 = vrot.lane.b32.xlu0 %v5088, 64
      %v5735 = vpop.permute.xlu0 %5734
      %5736 = vrot.lane.b32.xlu0 %v5089, 64
      %v5737 = vpop.permute.xlu0 %5736
      %5738 = vrot.lane.b32.xlu0 %v5090, 64
      %v5739 = vpop.permute.xlu0 %5738
      %5740 = vrot.lane.b32.xlu0 %v5091, 64
      %v5741 = vpop.permute.xlu0 %5740
      %5742 = vrot.lane.b32.xlu0 %v5092, 64
      %v5743 = vpop.permute.xlu0 %5742
      %5744 = vrot.lane.b32.xlu0 %v5093, 64
      %v5745 = vpop.permute.xlu0 %5744
      %5746 = vrot.lane.b32.xlu0 %v5094, 64
      %v5747 = vpop.permute.xlu0 %5746
      %5748 = vrot.lane.b32.xlu0 %v5095, 64
      %v5749 = vpop.permute.xlu0 %5748
      %5750 = vrot.lane.b32.xlu0 %v5096, 64
      %v5751 = vpop.permute.xlu0 %5750
      %5752 = vrot.lane.b32.xlu0 %v5097, 64
      %v5753 = vpop.permute.xlu0 %5752
      %5754 = vrot.lane.b32.xlu0 %v5098, 64
      %v5755 = vpop.permute.xlu0 %5754
      %5756 = vrot.lane.b32.xlu0 %v5099, 64
      %v5757 = vpop.permute.xlu0 %5756
      %5758 = vrot.lane.b32.xlu0 %v5100, 64
      %v5759 = vpop.permute.xlu0 %5758
      %5760 = vrot.lane.b32.xlu0 %v5101, 64
      %v5761 = vpop.permute.xlu0 %5760
      %5762 = vrot.lane.b32.xlu0 %v5102, 64
      %v5763 = vpop.permute.xlu0 %5762
      %5764 = vrot.lane.b32.xlu0 %v5103, 64
      %v5765 = vpop.permute.xlu0 %5764
      %5766 = vrot.lane.b32.xlu0 %v5104, 64
      %v5767 = vpop.permute.xlu0 %5766
      %5768 = vrot.lane.b32.xlu0 %v5105, 64
      %v5769 = vpop.permute.xlu0 %5768
      %5770 = vrot.lane.b32.xlu0 %v5106, 64
      %v5771 = vpop.permute.xlu0 %5770
      %5772 = vrot.lane.b32.xlu0 %v5107, 64
      %v5773 = vpop.permute.xlu0 %5772
      %5774 = vrot.lane.b32.xlu0 %v5108, 64
      %v5775 = vpop.permute.xlu0 %5774
      %5776 = vrot.lane.b32.xlu0 %v5109, 64
      %v5777 = vpop.permute.xlu0 %5776
      %5778 = vrot.lane.b32.xlu0 %v5110, 64
      %v5779 = vpop.permute.xlu0 %5778
      %5780 = vrot.lane.b32.xlu0 %v5111, 64
      %v5781 = vpop.permute.xlu0 %5780
      %5782 = vrot.lane.b32.xlu0 %v5112, 64
      %v5783 = vpop.permute.xlu0 %5782
      %5784 = vrot.lane.b32.xlu0 %v5113, 64
      %v5785 = vpop.permute.xlu0 %5784
      %5850 = vrot.lane.b32.xlu0 %v5114, 96
      %v5851 = vpop.permute.xlu0 %5850
      %5852 = vrot.lane.b32.xlu0 %v5115, 96
      %v5853 = vpop.permute.xlu0 %5852
      %5854 = vrot.lane.b32.xlu0 %v5116, 96
      %v5855 = vpop.permute.xlu0 %5854
      %5856 = vrot.lane.b32.xlu0 %v5117, 96
      %v5857 = vpop.permute.xlu0 %5856
      %5858 = vrot.lane.b32.xlu0 %v5118, 96
      %v5859 = vpop.permute.xlu0 %5858
      %5860 = vrot.lane.b32.xlu0 %v5119, 96
      %v5861 = vpop.permute.xlu0 %5860
      %5862 = vrot.lane.b32.xlu0 %v5120, 96
      %v5863 = vpop.permute.xlu0 %5862
      %5864 = vrot.lane.b32.xlu0 %v5121, 96
      %v5865 = vpop.permute.xlu0 %5864
      %5866 = vrot.lane.b32.xlu0 %v5122, 96
      %v5867 = vpop.permute.xlu0 %5866
      %5868 = vrot.lane.b32.xlu0 %v5123, 96
      %v5869 = vpop.permute.xlu0 %5868
      %5870 = vrot.lane.b32.xlu0 %v5124, 96
      %v5871 = vpop.permute.xlu0 %5870
      %5872 = vrot.lane.b32.xlu0 %v5125, 96
      %v5873 = vpop.permute.xlu0 %5872
      %5874 = vrot.lane.b32.xlu0 %v5126, 96
      %v5875 = vpop.permute.xlu0 %5874
      %5876 = vrot.lane.b32.xlu0 %v5127, 96
      %v5877 = vpop.permute.xlu0 %5876
      %5878 = vrot.lane.b32.xlu0 %v5128, 96
      %v5879 = vpop.permute.xlu0 %5878
      %5880 = vrot.lane.b32.xlu0 %v5129, 96
      %v5881 = vpop.permute.xlu0 %5880
      %5882 = vrot.lane.b32.xlu0 %v5130, 96
      %v5883 = vpop.permute.xlu0 %5882
      %5884 = vrot.lane.b32.xlu0 %v5131, 96
      %v5885 = vpop.permute.xlu0 %5884
      %5886 = vrot.lane.b32.xlu0 %v5132, 96
      %v5887 = vpop.permute.xlu0 %5886
      %5888 = vrot.lane.b32.xlu0 %v5133, 96
      %v5889 = vpop.permute.xlu0 %5888
      %5890 = vrot.lane.b32.xlu0 %v5134, 96
      %v5891 = vpop.permute.xlu0 %5890
      %5892 = vrot.lane.b32.xlu0 %v5135, 96
      %v5893 = vpop.permute.xlu0 %5892
      %5894 = vrot.lane.b32.xlu0 %v5136, 96
      %v5895 = vpop.permute.xlu0 %5894
      %5896 = vrot.lane.b32.xlu0 %v5137, 96
      %v5897 = vpop.permute.xlu0 %5896
      %5898 = vrot.lane.b32.xlu0 %v5138, 96
      %v5899 = vpop.permute.xlu0 %5898
      %5900 = vrot.lane.b32.xlu0 %v5139, 96
      %v5901 = vpop.permute.xlu0 %5900
      %5902 = vrot.lane.b32.xlu0 %v5140, 96
      %v5903 = vpop.permute.xlu0 %5902
      %5904 = vrot.lane.b32.xlu0 %v5141, 96
      %v5905 = vpop.permute.xlu0 %5904
      %5906 = vrot.lane.b32.xlu0 %v5142, 96
      %v5907 = vpop.permute.xlu0 %5906
      %5908 = vrot.lane.b32.xlu0 %v5143, 96
      %v5909 = vpop.permute.xlu0 %5908
      %5910 = vrot.lane.b32.xlu0 %v5144, 96
      %v5911 = vpop.permute.xlu0 %5910
      %5912 = vrot.lane.b32.xlu0 %v5145, 96
      %v5913 = vpop.permute.xlu0 %5912
      %v5946 = vsel %vm459, %v4889, %v5211
      %v5947 = vsel %vm459, %v4890, %v5213
      %v5948 = vsel %vm459, %v4891, %v5215
      %v5949 = vsel %vm459, %v4892, %v5217
      %v5950 = vsel %vm459, %v4893, %v5219
      %v5951 = vsel %vm459, %v4894, %v5221
      %v5952 = vsel %vm459, %v4895, %v5223
      %v5953 = vsel %vm459, %v4896, %v5225
      %v5954 = vsel %vm459, %v4897, %v5227
      %v5955 = vsel %vm459, %v4898, %v5229
      %v5956 = vsel %vm459, %v4899, %v5231
      %v5957 = vsel %vm459, %v4900, %v5233
      %v5958 = vsel %vm459, %v4901, %v5235
      %v5959 = vsel %vm459, %v4902, %v5237
      %v5960 = vsel %vm459, %v4903, %v5239
      %v5961 = vsel %vm459, %v4904, %v5241
      %v5962 = vsel %vm459, %v4905, %v5243
      %v5963 = vsel %vm459, %v4906, %v5245
      %v5964 = vsel %vm459, %v4907, %v5247
      %v5965 = vsel %vm459, %v4908, %v5249
      %v5966 = vsel %vm459, %v4909, %v5251
      %v5967 = vsel %vm459, %v4910, %v5253
      %v5968 = vsel %vm459, %v4911, %v5255
      %v5969 = vsel %vm459, %v4912, %v5257
      %v5970 = vsel %vm459, %v4913, %v5259
      %v5971 = vsel %vm459, %v4914, %v5261
      %v5972 = vsel %vm459, %v4915, %v5263
      %v5973 = vsel %vm459, %v4916, %v5265
      %v5974 = vsel %vm459, %v4917, %v5267
      %v5975 = vsel %vm459, %v4918, %v5269
      %v5976 = vsel %vm459, %v4919, %v5271
      %v5977 = vsel %vm459, %v4920, %v5273
      %v5978 = vsel %vm1910, %v5946, %v5339
      %v5979 = vsel %vm1910, %v5947, %v5341
      %v5980 = vsel %vm1910, %v5948, %v5343
      %v5981 = vsel %vm1910, %v5949, %v5345
      %v5982 = vsel %vm1910, %v5950, %v5347
      %v5983 = vsel %vm1910, %v5951, %v5349
      %v5984 = vsel %vm1910, %v5952, %v5351
      %v5985 = vsel %vm1910, %v5953, %v5353
      %v5986 = vsel %vm1910, %v5954, %v5355
      %v5987 = vsel %vm1910, %v5955, %v5357
      %v5988 = vsel %vm1910, %v5956, %v5359
      %v5989 = vsel %vm1910, %v5957, %v5361
      %v5990 = vsel %vm1910, %v5958, %v5363
      %v5991 = vsel %vm1910, %v5959, %v5365
      %v5992 = vsel %vm1910, %v5960, %v5367
      %v5993 = vsel %vm1910, %v5961, %v5369
      %v5994 = vsel %vm1910, %v5962, %v5371
      %v5995 = vsel %vm1910, %v5963, %v5373
      %v5996 = vsel %vm1910, %v5964, %v5375
      %v5997 = vsel %vm1910, %v5965, %v5377
      %v5998 = vsel %vm1910, %v5966, %v5379
      %v5999 = vsel %vm1910, %v5967, %v5381
      %v6000 = vsel %vm1910, %v5968, %v5383
      %v6001 = vsel %vm1910, %v5969, %v5385
      %v6002 = vsel %vm1910, %v5970, %v5387
      %v6003 = vsel %vm1910, %v5971, %v5389
      %v6004 = vsel %vm1910, %v5972, %v5391
      %v6005 = vsel %vm1910, %v5973, %v5393
      %v6006 = vsel %vm1910, %v5974, %v5395
      %v6007 = vsel %vm1910, %v5975, %v5397
      %v6008 = vsel %vm1910, %v5976, %v5399
      %v6009 = vsel %vm1910, %v5977, %v5401
      %v6010 = vsel %vm1943, %v5978, %v5467
      %v6011 = vsel %vm1943, %v5979, %v5469
      %v6012 = vsel %vm1943, %v5980, %v5471
      %v6013 = vsel %vm1943, %v5981, %v5473
      %v6014 = vsel %vm1943, %v5982, %v5475
      %v6015 = vsel %vm1943, %v5983, %v5477
      %v6016 = vsel %vm1943, %v5984, %v5479
      %v6017 = vsel %vm1943, %v5985, %v5481
      %v6018 = vsel %vm1943, %v5986, %v5483
      %v6019 = vsel %vm1943, %v5987, %v5485
      %v6020 = vsel %vm1943, %v5988, %v5487
      %v6021 = vsel %vm1943, %v5989, %v5489
      %v6022 = vsel %vm1943, %v5990, %v5491
      %v6023 = vsel %vm1943, %v5991, %v5493
      %v6024 = vsel %vm1943, %v5992, %v5495
      %v6025 = vsel %vm1943, %v5993, %v5497
      %v6026 = vsel %vm1943, %v5994, %v5499
      %v6027 = vsel %vm1943, %v5995, %v5501
      %v6028 = vsel %vm1943, %v5996, %v5503
      %v6029 = vsel %vm1943, %v5997, %v5505
      %v6030 = vsel %vm1943, %v5998, %v5507
      %v6031 = vsel %vm1943, %v5999, %v5509
      %v6032 = vsel %vm1943, %v6000, %v5511
      %v6033 = vsel %vm1943, %v6001, %v5513
      %v6034 = vsel %vm1943, %v6002, %v5515
      %v6035 = vsel %vm1943, %v6003, %v5517
      %v6036 = vsel %vm1943, %v6004, %v5519
      %v6037 = vsel %vm1943, %v6005, %v5521
      %v6038 = vsel %vm1943, %v6006, %v5523
      %v6039 = vsel %vm1943, %v6007, %v5525
      %v6040 = vsel %vm1943, %v6008, %v5527
      %v6041 = vsel %vm1943, %v6009, %v5529
      %v6042 = vsel %vm459, %v5017, %v5595
      %v6043 = vsel %vm459, %v5018, %v5597
      %v6044 = vsel %vm459, %v5019, %v5599
      %v6045 = vsel %vm459, %v5020, %v5601
      %v6046 = vsel %vm459, %v5021, %v5603
      %v6047 = vsel %vm459, %v5022, %v5605
      %v6048 = vsel %vm459, %v5023, %v5607
      %v6049 = vsel %vm459, %v5024, %v5609
      %v6050 = vsel %vm459, %v5025, %v5611
      %v6051 = vsel %vm459, %v5026, %v5613
      %v6052 = vsel %vm459, %v5027, %v5615
      %v6053 = vsel %vm459, %v5028, %v5617
      %v6054 = vsel %vm459, %v5029, %v5619
      %v6055 = vsel %vm459, %v5030, %v5621
      %v6056 = vsel %vm459, %v5031, %v5623
      %v6057 = vsel %vm459, %v5032, %v5625
      %v6058 = vsel %vm459, %v5033, %v5627
      %v6059 = vsel %vm459, %v5034, %v5629
      %v6060 = vsel %vm459, %v5035, %v5631
      %v6061 = vsel %vm459, %v5036, %v5633
      %v6062 = vsel %vm459, %v5037, %v5635
      %v6063 = vsel %vm459, %v5038, %v5637
      %v6064 = vsel %vm459, %v5039, %v5639
      %v6065 = vsel %vm459, %v5040, %v5641
      %v6066 = vsel %vm459, %v5041, %v5643
      %v6067 = vsel %vm459, %v5042, %v5645
      %v6068 = vsel %vm459, %v5043, %v5647
      %v6069 = vsel %vm459, %v5044, %v5649
      %v6070 = vsel %vm459, %v5045, %v5651
      %v6071 = vsel %vm459, %v5046, %v5653
      %v6072 = vsel %vm459, %v5047, %v5655
      %v6073 = vsel %vm459, %v5048, %v5657
      %v6074 = vsel %vm1910, %v6042, %v5723
      %v6075 = vsel %vm1910, %v6043, %v5725
      %v6076 = vsel %vm1910, %v6044, %v5727
      %v6077 = vsel %vm1910, %v6045, %v5729
      %v6078 = vsel %vm1910, %v6046, %v5731
      %v6079 = vsel %vm1910, %v6047, %v5733
      %v6080 = vsel %vm1910, %v6048, %v5735
      %v6081 = vsel %vm1910, %v6049, %v5737
      %v6082 = vsel %vm1910, %v6050, %v5739
      %v6083 = vsel %vm1910, %v6051, %v5741
      %v6084 = vsel %vm1910, %v6052, %v5743
      %v6085 = vsel %vm1910, %v6053, %v5745
      %v6086 = vsel %vm1910, %v6054, %v5747
      %v6087 = vsel %vm1910, %v6055, %v5749
      %v6088 = vsel %vm1910, %v6056, %v5751
      %v6089 = vsel %vm1910, %v6057, %v5753
      %v6090 = vsel %vm1910, %v6058, %v5755
      %v6091 = vsel %vm1910, %v6059, %v5757
      %v6092 = vsel %vm1910, %v6060, %v5759
      %v6093 = vsel %vm1910, %v6061, %v5761
      %v6094 = vsel %vm1910, %v6062, %v5763
      %v6095 = vsel %vm1910, %v6063, %v5765
      %v6096 = vsel %vm1910, %v6064, %v5767
      %v6097 = vsel %vm1910, %v6065, %v5769
      %v6098 = vsel %vm1910, %v6066, %v5771
      %v6099 = vsel %vm1910, %v6067, %v5773
      %v6100 = vsel %vm1910, %v6068, %v5775
      %v6101 = vsel %vm1910, %v6069, %v5777
      %v6102 = vsel %vm1910, %v6070, %v5779
      %v6103 = vsel %vm1910, %v6071, %v5781
      %v6104 = vsel %vm1910, %v6072, %v5783
      %v6105 = vsel %vm1910, %v6073, %v5785
      %v6106 = vsel %vm1943, %v6074, %v5851
      %v6107 = vsel %vm1943, %v6075, %v5853
      %v6108 = vsel %vm1943, %v6076, %v5855
      %v6109 = vsel %vm1943, %v6077, %v5857
      %v6110 = vsel %vm1943, %v6078, %v5859
      %v6111 = vsel %vm1943, %v6079, %v5861
      %v6112 = vsel %vm1943, %v6080, %v5863
      %v6113 = vsel %vm1943, %v6081, %v5865
      %v6114 = vsel %vm1943, %v6082, %v5867
      %v6115 = vsel %vm1943, %v6083, %v5869
      %v6116 = vsel %vm1943, %v6084, %v5871
      %v6117 = vsel %vm1943, %v6085, %v5873
      %v6118 = vsel %vm1943, %v6086, %v5875
      %v6119 = vsel %vm1943, %v6087, %v5877
      %v6120 = vsel %vm1943, %v6088, %v5879
      %v6121 = vsel %vm1943, %v6089, %v5881
      %v6122 = vsel %vm1943, %v6090, %v5883
      %v6123 = vsel %vm1943, %v6091, %v5885
      %v6124 = vsel %vm1943, %v6092, %v5887
      %v6125 = vsel %vm1943, %v6093, %v5889
      %v6126 = vsel %vm1943, %v6094, %v5891
      %v6127 = vsel %vm1943, %v6095, %v5893
      %v6128 = vsel %vm1943, %v6096, %v5895
      %v6129 = vsel %vm1943, %v6097, %v5897
      %v6130 = vsel %vm1943, %v6098, %v5899
      %v6131 = vsel %vm1943, %v6099, %v5901
      %v6132 = vsel %vm1943, %v6100, %v5903
      %v6133 = vsel %vm1943, %v6101, %v5905
      %v6134 = vsel %vm1943, %v6102, %v5907
      %v6135 = vsel %vm1943, %v6103, %v5909
      %v6136 = vsel %vm1943, %v6104, %v5911
      %v6137 = vsel %vm1943, %v6105, %v5913
      %v6138 = vpack.c.bf16 %v6011, %v6010
      %v6139 = vpack.c.bf16 %v6107, %v6106
      %v6140 = vpack.c.bf16 %v5147, %v5146
      %v6141 = vpack.c.bf16 %v6013, %v6012
      %v6142 = vpack.c.bf16 %v6109, %v6108
      %v6143 = vpack.c.bf16 %v5149, %v5148
      %v6144 = vpack.c.bf16 %v6015, %v6014
      %v6145 = vpack.c.bf16 %v6111, %v6110
      %v6146 = vpack.c.bf16 %v5151, %v5150
      %v6147 = vpack.c.bf16 %v6017, %v6016
      %v6148 = vpack.c.bf16 %v6113, %v6112
      %v6149 = vpack.c.bf16 %v5153, %v5152
      %v6150 = vpack.c.bf16 %v6019, %v6018
      %v6151 = vpack.c.bf16 %v6115, %v6114
      %v6152 = vpack.c.bf16 %v5155, %v5154
      %v6153 = vpack.c.bf16 %v6021, %v6020
      %v6154 = vpack.c.bf16 %v6117, %v6116
      %v6155 = vpack.c.bf16 %v5157, %v5156
      %v6156 = vpack.c.bf16 %v6023, %v6022
      %v6157 = vpack.c.bf16 %v6119, %v6118
      %v6158 = vpack.c.bf16 %v5159, %v5158
      %v6159 = vpack.c.bf16 %v6025, %v6024
      %v6160 = vpack.c.bf16 %v6121, %v6120
      %v6161 = vpack.c.bf16 %v5161, %v5160
      %v6162 = vpack.c.bf16 %v6027, %v6026
      %v6163 = vpack.c.bf16 %v6123, %v6122
      %v6164 = vpack.c.bf16 %v5163, %v5162
      %v6165 = vpack.c.bf16 %v6029, %v6028
      %v6166 = vpack.c.bf16 %v6125, %v6124
      %v6167 = vpack.c.bf16 %v5165, %v5164
      %v6168 = vpack.c.bf16 %v6031, %v6030
      %v6169 = vpack.c.bf16 %v6127, %v6126
      %v6170 = vpack.c.bf16 %v5167, %v5166
      %v6171 = vpack.c.bf16 %v6033, %v6032
      %v6172 = vpack.c.bf16 %v6129, %v6128
      %v6173 = vpack.c.bf16 %v5169, %v5168
      %v6174 = vpack.c.bf16 %v6035, %v6034
      %v6175 = vpack.c.bf16 %v6131, %v6130
      %v6176 = vpack.c.bf16 %v5171, %v5170
      %v6177 = vpack.c.bf16 %v6037, %v6036
      %v6178 = vpack.c.bf16 %v6133, %v6132
      %v6179 = vpack.c.bf16 %v5173, %v5172
      %v6180 = vpack.c.bf16 %v6039, %v6038
      %v6181 = vpack.c.bf16 %v6135, %v6134
      %v6182 = vpack.c.bf16 %v5175, %v5174
      %v6183 = vpack.c.bf16 %v6041, %v6040
      %v6184 = vpack.c.bf16 %v6137, %v6136
      %v6185 = vpack.c.bf16 %v5177, %v5176
      %v6186 = vld [vmem:[%s7] sm:$0xf]
      %v6187 = vld [vmem:[%s7 + $0x4] sm:$0xf]
      %v6188 = vld [vmem:[%s7 + $0x8] sm:$0xf]
      %v6189 = vld [vmem:[%s7 + $0xc] sm:$0xf]
      %v6190 = vld [vmem:[%s7 + $0x10] sm:$0xf]
      %v6191 = vld [vmem:[%s7 + $0x14] sm:$0xf]
      %v6192 = vld [vmem:[%s7 + $0x18] sm:$0xf]
      %v6193 = vld [vmem:[%s7 + $0x1c] sm:$0xf]
      %v6194 = vld [vmem:[%s7 + $0x20] sm:$0xf]
      %v6195 = vld [vmem:[%s7 + $0x24] sm:$0xf]
      %v6196 = vld [vmem:[%s7 + $0x28] sm:$0xf]
      %v6197 = vld [vmem:[%s7 + $0x2c] sm:$0xf]
      %v6198 = vld [vmem:[%s7 + $0x30] sm:$0xf]
      %v6199 = vld [vmem:[%s7 + $0x34] sm:$0xf]
      %v6200 = vld [vmem:[%s7 + $0x38] sm:$0xf]
      %v6201 = vld [vmem:[%s7 + $0x3c] sm:$0xf]
      %v6202 = vld [vmem:[%s7 + $0x40] sm:$0xf]
      %v6203 = vld [vmem:[%s7 + $0x44] sm:$0xf]
      %v6204 = vld [vmem:[%s7 + $0x48] sm:$0xf]
      %v6205 = vld [vmem:[%s7 + $0x4c] sm:$0xf]
      %v6206 = vld [vmem:[%s7 + $0x50] sm:$0xf]
      %v6207 = vld [vmem:[%s7 + $0x54] sm:$0xf]
      %v6208 = vld [vmem:[%s7 + $0x58] sm:$0xf]
      %v6209 = vld [vmem:[%s7 + $0x5c] sm:$0xf]
      %v6210 = vld [vmem:[%s7 + $0x60] sm:$0xf]
      %v6211 = vld [vmem:[%s7 + $0x64] sm:$0xf]
      %v6212 = vld [vmem:[%s7 + $0x68] sm:$0xf]
      %v6213 = vld [vmem:[%s7 + $0x6c] sm:$0xf]
      %v6214 = vld [vmem:[%s7 + $0x70] sm:$0xf]
      %v6215 = vld [vmem:[%s7 + $0x74] sm:$0xf]
      %v6216 = vld [vmem:[%s7 + $0x78] sm:$0xf]
      %v6217 = vld [vmem:[%s7 + $0x7c] sm:$0xf]
      %v6218 = vld [vmem:[%s7 + $0x80] sm:$0xf]
      %v6219 = vld [vmem:[%s7 + $0x84] sm:$0xf]
      %v6220 = vld [vmem:[%s7 + $0x88] sm:$0xf]
      %v6221 = vld [vmem:[%s7 + $0x8c] sm:$0xf]
      %v6222 = vld [vmem:[%s8] sm:$0x1]
      %v6224 = vlaneseq
      %v6225 = vshrl.u32 %v6224, 7
      %v6226 = vsub.s32 0, %v6225
      %v6227 = vrot.slane %v6222, %v6226
      %v6265 = vunpack.c.l.b16 %v6186
      %v6266 = vunpack.c.l.b16 %v6187
      %v6267 = vunpack.c.l.b16 %v6188
      %v6268 = vunpack.c.l.b16 %v6189
      %v6269 = vunpack.c.l.b16 %v6190
      %v6270 = vunpack.c.l.b16 %v6191
      %v6271 = vunpack.c.l.b16 %v6192
      %v6272 = vunpack.c.l.b16 %v6193
      %v6273 = vunpack.c.l.b16 %v6194
      %v6274 = vunpack.c.l.b16 %v6195
      %v6275 = vunpack.c.l.b16 %v6196
      %v6276 = vunpack.c.l.b16 %v6197
      %v6277 = vunpack.c.l.b16 %v6198
      %v6278 = vunpack.c.l.b16 %v6199
      %v6279 = vunpack.c.l.b16 %v6200
      %v6280 = vunpack.c.l.b16 %v6201
      %v6281 = vunpack.c.l.b16 %v6202
      %v6282 = vunpack.c.l.b16 %v6203
      %v6283 = vunpack.c.l.b16 %v6204
      %v6284 = vunpack.c.l.b16 %v6205
      %v6285 = vunpack.c.l.b16 %v6206
      %v6286 = vunpack.c.l.b16 %v6207
      %v6287 = vunpack.c.l.b16 %v6208
      %v6288 = vunpack.c.l.b16 %v6209
      %v6289 = vunpack.c.l.b16 %v6210
      %v6290 = vunpack.c.l.b16 %v6211
      %v6291 = vunpack.c.l.b16 %v6212
      %v6292 = vunpack.c.l.b16 %v6213
      %v6293 = vunpack.c.l.b16 %v6214
      %v6294 = vunpack.c.l.b16 %v6215
      %v6295 = vunpack.c.l.b16 %v6216
      %v6296 = vunpack.c.l.b16 %v6217
      %v6297 = vunpack.c.l.b16 %v6218
      %v6298 = vunpack.c.l.b16 %v6219
      %v6299 = vunpack.c.l.b16 %v6220
      %v6300 = vunpack.c.l.b16 %v6221
      %v6301 = vpack.c.b16 %v6266, %v6265
      %v6302 = vpack.c.b16 %v6268, %v6267
      %v6303 = vpack.c.b16 %v6270, %v6269
      %v6304 = vpack.c.b16 %v6272, %v6271
      %v6305 = vpack.c.b16 %v6274, %v6273
      %v6306 = vpack.c.b16 %v6276, %v6275
      %v6307 = vpack.c.b16 %v6278, %v6277
      %v6308 = vpack.c.b16 %v6280, %v6279
      %v6309 = vpack.c.b16 %v6282, %v6281
      %v6310 = vpack.c.b16 %v6284, %v6283
      %v6311 = vpack.c.b16 %v6286, %v6285
      %v6312 = vpack.c.b16 %v6288, %v6287
      %v6313 = vpack.c.b16 %v6290, %v6289
      %v6314 = vpack.c.b16 %v6292, %v6291
      %v6315 = vpack.c.b16 %v6294, %v6293
      %v6316 = vpack.c.b16 %v6296, %v6295
      %v6317 = vpack.c.b16 %v6298, %v6297
      %v6318 = vpack.c.b16 %v6300, %v6299
      %v6338 = vsel %vm459, %v6140, 0
      %v6341 = vsel %vm459, %v6143, 0
      %v6344 = vsel %vm459, %v6146, 0
      %v6347 = vsel %vm459, %v6149, 0
      %v6350 = vsel %vm459, %v6152, 0
      %v6353 = vsel %vm459, %v6155, 0
      %v6356 = vsel %vm459, %v6158, 0
      %v6359 = vsel %vm459, %v6161, 0
      %v6362 = vsel %vm459, %v6164, 0
      %v6365 = vsel %vm459, %v6167, 0
      %v6368 = vsel %vm459, %v6170, 0
      %v6371 = vsel %vm459, %v6173, 0
      %v6374 = vsel %vm459, %v6176, 0
      %v6377 = vsel %vm459, %v6179, 0
      %v6380 = vsel %vm459, %v6182, 0
      %v6383 = vsel %vm459, %v6185, 0
      %6385 = vmatprep.subr.bf16.mxu0 0
      %6386 = vmatpush1.bf16.msra.mxu0 %v6308
      %6387 = vmatprep.subr.bf16.mxu0 0
      %6388 = vmatpush1.bf16.msra.mxu0 %v6307
      %6389 = vmatprep.subr.bf16.mxu0 0
      %6390 = vmatpush1.bf16.msra.mxu0 %v6306
      %6391 = vmatprep.subr.bf16.mxu0 0
      %6392 = vmatpush1.bf16.msra.mxu0 %v6305
      %6393 = vmatprep.subr.bf16.mxu0 0
      %6394 = vmatpush1.bf16.msra.mxu0 %v6304
      %6395 = vmatprep.subr.bf16.mxu0 0
      %6396 = vmatpush1.bf16.msra.mxu0 %v6303
      %6397 = vmatprep.subr.bf16.mxu0 0
      %6398 = vmatpush1.bf16.msra.mxu0 %v6302
      %6399 = vmatprep.subr.bf16.mxu0 0
      %6400 = vmatpush1.bf16.msra.mxu0 %v6301
      %6401 = vmatprep.subr.bf16.mxu0 0
      %6402 = vmatpush2.bf16.msra.mxu0 %v6316
      %6403 = vmatprep.subr.bf16.mxu0 0
      %6404 = vmatpush2.bf16.msra.mxu0 %v6315
      %6405 = vmatprep.subr.bf16.mxu0 0
      %6406 = vmatpush2.bf16.msra.mxu0 %v6314
      %6407 = vmatprep.subr.bf16.mxu0 0
      %6408 = vmatpush2.bf16.msra.mxu0 %v6313
      %6409 = vmatprep.subr.bf16.mxu0 0
      %6410 = vmatpush2.bf16.msra.mxu0 %v6312
      %6411 = vmatprep.subr.bf16.mxu0 0
      %6412 = vmatpush2.bf16.msra.mxu0 %v6311
      %6413 = vmatprep.subr.bf16.mxu0 0
      %6414 = vmatpush2.bf16.msra.mxu0 %v6310
      %6415 = vmatprep.subr.bf16.mxu0 0
      %6416 = vmatpush2.bf16.msra.mxu0 %v6309
      %6417 = vmatprep.mubr.bf16.mxu0 %v6139
      %6418 = vmatmul.mubr.bf16.gmra.mxu0 %v6138
      %v6419 = vpop.f32.mrf.mxu0
      %v6420 = vadd.f32 %v6227, %v6419
      %v6421 = vpop.f32.mrf.mxu0
      %v6422 = vpop.f32.mrf.mxu0
      %v6423 = vadd.f32 %v6227, %v6422
      %v6424 = vpop.f32.mrf.mxu0
      %6425 = vmatprep.mubr.bf16.mxu0 %v6142
      %6426 = vmatmul.mubr.bf16.gmra.mxu0 %v6141
      %v6427 = vpop.f32.mrf.mxu0
      %v6428 = vadd.f32 %v6227, %v6427
      %v6429 = vpop.f32.mrf.mxu0
      %v6430 = vpop.f32.mrf.mxu0
      %v6431 = vadd.f32 %v6227, %v6430
      %v6432 = vpop.f32.mrf.mxu0
      %6433 = vmatprep.mubr.bf16.mxu0 %v6145
      %6434 = vmatmul.mubr.bf16.gmra.mxu0 %v6144
      %v6435 = vpop.f32.mrf.mxu0
      %v6436 = vadd.f32 %v6227, %v6435
      %v6437 = vpop.f32.mrf.mxu0
      %v6438 = vpop.f32.mrf.mxu0
      %v6439 = vadd.f32 %v6227, %v6438
      %v6440 = vpop.f32.mrf.mxu0
      %6441 = vmatprep.mubr.bf16.mxu0 %v6148
      %6442 = vmatmul.mubr.bf16.gmra.mxu0 %v6147
      %v6443 = vpop.f32.mrf.mxu0
      %v6444 = vadd.f32 %v6227, %v6443
      %v6445 = vpop.f32.mrf.mxu0
      %v6446 = vpop.f32.mrf.mxu0
      %v6447 = vadd.f32 %v6227, %v6446
      %v6448 = vpop.f32.mrf.mxu0
      %6449 = vmatprep.mubr.bf16.mxu0 %v6151
      %6450 = vmatmul.mubr.bf16.gmra.mxu0 %v6150
      %v6451 = vpop.f32.mrf.mxu0
      %v6452 = vadd.f32 %v6227, %v6451
      %v6453 = vpop.f32.mrf.mxu0
      %v6454 = vpop.f32.mrf.mxu0
      %v6455 = vadd.f32 %v6227, %v6454
      %v6456 = vpop.f32.mrf.mxu0
      %6457 = vmatprep.mubr.bf16.mxu0 %v6154
      %6458 = vmatmul.mubr.bf16.gmra.mxu0 %v6153
      %v6459 = vpop.f32.mrf.mxu0
      %v6460 = vadd.f32 %v6227, %v6459
      %v6461 = vpop.f32.mrf.mxu0
      %v6462 = vpop.f32.mrf.mxu0
      %v6463 = vadd.f32 %v6227, %v6462
      %v6464 = vpop.f32.mrf.mxu0
      %6465 = vmatprep.mubr.bf16.mxu0 %v6157
      %6466 = vmatmul.mubr.bf16.gmra.mxu0 %v6156
      %v6467 = vpop.f32.mrf.mxu0
      %v6468 = vadd.f32 %v6227, %v6467
      %v6469 = vpop.f32.mrf.mxu0
      %v6470 = vpop.f32.mrf.mxu0
      %v6471 = vadd.f32 %v6227, %v6470
      %v6472 = vpop.f32.mrf.mxu0
      %6473 = vmatprep.mubr.bf16.mxu0 %v6160
      %6474 = vmatmul.mubr.bf16.gmra.mxu0 %v6159
      %v6475 = vpop.f32.mrf.mxu0
      %v6476 = vadd.f32 %v6227, %v6475
      %v6477 = vpop.f32.mrf.mxu0
      %v6478 = vpop.f32.mrf.mxu0
      %v6479 = vadd.f32 %v6227, %v6478
      %v6480 = vpop.f32.mrf.mxu0
      %6481 = vmatprep.mubr.bf16.mxu0 %v6163
      %6482 = vmatmul.mubr.bf16.gmra.mxu0 %v6162
      %v6483 = vpop.f32.mrf.mxu0
      %v6484 = vadd.f32 %v6227, %v6483
      %v6485 = vpop.f32.mrf.mxu0
      %v6486 = vpop.f32.mrf.mxu0
      %v6487 = vadd.f32 %v6227, %v6486
      %v6488 = vpop.f32.mrf.mxu0
      %6489 = vmatprep.mubr.bf16.mxu0 %v6166
      %6490 = vmatmul.mubr.bf16.gmra.mxu0 %v6165
      %v6491 = vpop.f32.mrf.mxu0
      %v6492 = vadd.f32 %v6227, %v6491
      %v6493 = vpop.f32.mrf.mxu0
      %v6494 = vpop.f32.mrf.mxu0
      %v6495 = vadd.f32 %v6227, %v6494
      %v6496 = vpop.f32.mrf.mxu0
      %6497 = vmatprep.mubr.bf16.mxu0 %v6169
      %6498 = vmatmul.mubr.bf16.gmra.mxu0 %v6168
      %v6499 = vpop.f32.mrf.mxu0
      %v6500 = vadd.f32 %v6227, %v6499
      %v6501 = vpop.f32.mrf.mxu0
      %v6502 = vpop.f32.mrf.mxu0
      %v6503 = vadd.f32 %v6227, %v6502
      %v6504 = vpop.f32.mrf.mxu0
      %6505 = vmatprep.mubr.bf16.mxu0 %v6172
      %6506 = vmatmul.mubr.bf16.gmra.mxu0 %v6171
      %v6507 = vpop.f32.mrf.mxu0
      %v6508 = vadd.f32 %v6227, %v6507
      %v6509 = vpop.f32.mrf.mxu0
      %v6510 = vpop.f32.mrf.mxu0
      %v6511 = vadd.f32 %v6227, %v6510
      %v6512 = vpop.f32.mrf.mxu0
      %6513 = vmatprep.mubr.bf16.mxu0 %v6175
      %6514 = vmatmul.mubr.bf16.gmra.mxu0 %v6174
      %v6515 = vpop.f32.mrf.mxu0
      %v6516 = vadd.f32 %v6227, %v6515
      %v6517 = vpop.f32.mrf.mxu0
      %v6518 = vpop.f32.mrf.mxu0
      %v6519 = vadd.f32 %v6227, %v6518
      %v6520 = vpop.f32.mrf.mxu0
      %6521 = vmatprep.mubr.bf16.mxu0 %v6178
      %6522 = vmatmul.mubr.bf16.gmra.mxu0 %v6177
      %v6523 = vpop.f32.mrf.mxu0
      %v6524 = vadd.f32 %v6227, %v6523
      %v6525 = vpop.f32.mrf.mxu0
      %v6526 = vpop.f32.mrf.mxu0
      %v6527 = vadd.f32 %v6227, %v6526
      %v6528 = vpop.f32.mrf.mxu0
      %6529 = vmatprep.mubr.bf16.mxu0 %v6181
      %6530 = vmatmul.mubr.bf16.gmra.mxu0 %v6180
      %v6531 = vpop.f32.mrf.mxu0
      %v6532 = vadd.f32 %v6227, %v6531
      %v6533 = vpop.f32.mrf.mxu0
      %v6534 = vpop.f32.mrf.mxu0
      %v6535 = vadd.f32 %v6227, %v6534
      %v6536 = vpop.f32.mrf.mxu0
      %6537 = vmatprep.mubr.bf16.mxu0 %v6184
      %6538 = vmatmul.mubr.bf16.gmra.mxu0 %v6183
      %v6539 = vpop.f32.mrf.mxu0
      %v6540 = vadd.f32 %v6227, %v6539
      %v6541 = vpop.f32.mrf.mxu0
      %v6542 = vpop.f32.mrf.mxu0
      %v6543 = vadd.f32 %v6227, %v6542
      %v6544 = vpop.f32.mrf.mxu0
      %6545 = vdwg.mxu0
      %6546 = vmatprep.subr.bf16.mxu0 0
      %6547 = vmatpush1.bf16.msra.mxu0 0
      %6548 = vmatprep.subr.bf16.mxu0 0
      %6549 = vmatpush1.bf16.msra.mxu0 0
      %6550 = vmatprep.subr.bf16.mxu0 0
      %6551 = vmatpush1.bf16.msra.mxu0 0
      %6552 = vmatprep.subr.bf16.mxu0 0
      %6553 = vmatpush1.bf16.msra.mxu0 0
      %6554 = vmatprep.subr.bf16.mxu0 0
      %6555 = vmatpush1.bf16.msra.mxu0 0
      %6556 = vmatprep.subr.bf16.mxu0 0
      %6557 = vmatpush1.bf16.msra.mxu0 0
      %6558 = vmatprep.subr.bf16.mxu0 0
      %6559 = vmatpush1.bf16.msra.mxu0 %v6318
      %6560 = vmatprep.subr.bf16.mxu0 0
      %6561 = vmatpush1.bf16.msra.mxu0 %v6317
      %6562 = vmatprep.subr.bf16.mxu0 0
      %6563 = vmatpush2.bf16.msra.mxu0 0
      %6564 = vmatprep.subr.bf16.mxu0 0
      %6565 = vmatpush2.bf16.msra.mxu0 0
      %6566 = vmatprep.subr.bf16.mxu0 0
      %6567 = vmatpush2.bf16.msra.mxu0 0
      %6568 = vmatprep.subr.bf16.mxu0 0
      %6569 = vmatpush2.bf16.msra.mxu0 0
      %6570 = vmatprep.subr.bf16.mxu0 0
      %6571 = vmatpush2.bf16.msra.mxu0 0
      %6572 = vmatprep.subr.bf16.mxu0 0
      %6573 = vmatpush2.bf16.msra.mxu0 0
      %6574 = vmatprep.subr.bf16.mxu0 0
      %6575 = vmatpush2.bf16.msra.mxu0 0
      %6576 = vmatprep.subr.bf16.mxu0 0
      %6577 = vmatpush2.bf16.msra.mxu0 0
      %6578 = vmatprep.mubr.bf16.mxu0 0
      %6579 = vmatmul.mubr.bf16.gmra.mxu0 %v6338
      %v6580 = vpop.f32.mrf.mxu0
      %v6581 = vadd.f32 %v6420, %v6580
      %v6582 = vpop.f32.mrf.mxu0
      %v6583 = vpop.f32.mrf.mxu0
      %v6584 = vadd.f32 %v6423, %v6583
      %v6585 = vpop.f32.mrf.mxu0
      %6586 = vmatprep.mubr.bf16.mxu0 0
      %6587 = vmatmul.mubr.bf16.gmra.mxu0 %v6341
      %v6588 = vpop.f32.mrf.mxu0
      %v6589 = vadd.f32 %v6428, %v6588
      %v6590 = vpop.f32.mrf.mxu0
      %v6591 = vpop.f32.mrf.mxu0
      %v6592 = vadd.f32 %v6431, %v6591
      %v6593 = vpop.f32.mrf.mxu0
      %6594 = vmatprep.mubr.bf16.mxu0 0
      %6595 = vmatmul.mubr.bf16.gmra.mxu0 %v6344
      %v6596 = vpop.f32.mrf.mxu0
      %v6597 = vadd.f32 %v6436, %v6596
      %v6598 = vpop.f32.mrf.mxu0
      %v6599 = vpop.f32.mrf.mxu0
      %v6600 = vadd.f32 %v6439, %v6599
      %v6601 = vpop.f32.mrf.mxu0
      %6602 = vmatprep.mubr.bf16.mxu0 0
      %6603 = vmatmul.mubr.bf16.gmra.mxu0 %v6347
      %v6604 = vpop.f32.mrf.mxu0
      %v6605 = vadd.f32 %v6444, %v6604
      %v6606 = vpop.f32.mrf.mxu0
      %v6607 = vpop.f32.mrf.mxu0
      %v6608 = vadd.f32 %v6447, %v6607
      %v6609 = vpop.f32.mrf.mxu0
      %6610 = vmatprep.mubr.bf16.mxu0 0
      %6611 = vmatmul.mubr.bf16.gmra.mxu0 %v6350
      %v6612 = vpop.f32.mrf.mxu0
      %v6613 = vadd.f32 %v6452, %v6612
      %v6614 = vpop.f32.mrf.mxu0
      %v6615 = vpop.f32.mrf.mxu0
      %v6616 = vadd.f32 %v6455, %v6615
      %v6617 = vpop.f32.mrf.mxu0
      %6618 = vmatprep.mubr.bf16.mxu0 0
      %6619 = vmatmul.mubr.bf16.gmra.mxu0 %v6353
      %v6620 = vpop.f32.mrf.mxu0
      %v6621 = vadd.f32 %v6460, %v6620
      %v6622 = vpop.f32.mrf.mxu0
      %v6623 = vpop.f32.mrf.mxu0
      %v6624 = vadd.f32 %v6463, %v6623
      %v6625 = vpop.f32.mrf.mxu0
      %6626 = vmatprep.mubr.bf16.mxu0 0
      %6627 = vmatmul.mubr.bf16.gmra.mxu0 %v6356
      %v6628 = vpop.f32.mrf.mxu0
      %v6629 = vadd.f32 %v6468, %v6628
      %v6630 = vpop.f32.mrf.mxu0
      %v6631 = vpop.f32.mrf.mxu0
      %v6632 = vadd.f32 %v6471, %v6631
      %v6633 = vpop.f32.mrf.mxu0
      %6634 = vmatprep.mubr.bf16.mxu0 0
      %6635 = vmatmul.mubr.bf16.gmra.mxu0 %v6359
      %v6636 = vpop.f32.mrf.mxu0
      %v6637 = vadd.f32 %v6476, %v6636
      %v6638 = vpop.f32.mrf.mxu0
      %v6639 = vpop.f32.mrf.mxu0
      %v6640 = vadd.f32 %v6479, %v6639
      %v6641 = vpop.f32.mrf.mxu0
      %6642 = vmatprep.mubr.bf16.mxu0 0
      %6643 = vmatmul.mubr.bf16.gmra.mxu0 %v6362
      %v6644 = vpop.f32.mrf.mxu0
      %v6645 = vadd.f32 %v6484, %v6644
      %v6646 = vpop.f32.mrf.mxu0
      %v6647 = vpop.f32.mrf.mxu0
      %v6648 = vadd.f32 %v6487, %v6647
      %v6649 = vpop.f32.mrf.mxu0
      %6650 = vmatprep.mubr.bf16.mxu0 0
      %6651 = vmatmul.mubr.bf16.gmra.mxu0 %v6365
      %v6652 = vpop.f32.mrf.mxu0
      %v6653 = vadd.f32 %v6492, %v6652
      %v6654 = vpop.f32.mrf.mxu0
      %v6655 = vpop.f32.mrf.mxu0
      %v6656 = vadd.f32 %v6495, %v6655
      %v6657 = vpop.f32.mrf.mxu0
      %6658 = vmatprep.mubr.bf16.mxu0 0
      %6659 = vmatmul.mubr.bf16.gmra.mxu0 %v6368
      %v6660 = vpop.f32.mrf.mxu0
      %v6661 = vadd.f32 %v6500, %v6660
      %v6662 = vpop.f32.mrf.mxu0
      %v6663 = vpop.f32.mrf.mxu0
      %v6664 = vadd.f32 %v6503, %v6663
      %v6665 = vpop.f32.mrf.mxu0
      %6666 = vmatprep.mubr.bf16.mxu0 0
      %6667 = vmatmul.mubr.bf16.gmra.mxu0 %v6371
      %v6668 = vpop.f32.mrf.mxu0
      %v6669 = vadd.f32 %v6508, %v6668
      %v6670 = vpop.f32.mrf.mxu0
      %v6671 = vpop.f32.mrf.mxu0
      %v6672 = vadd.f32 %v6511, %v6671
      %v6673 = vpop.f32.mrf.mxu0
      %6674 = vmatprep.mubr.bf16.mxu0 0
      %6675 = vmatmul.mubr.bf16.gmra.mxu0 %v6374
      %v6676 = vpop.f32.mrf.mxu0
      %v6677 = vadd.f32 %v6516, %v6676
      %v6678 = vpop.f32.mrf.mxu0
      %v6679 = vpop.f32.mrf.mxu0
      %v6680 = vadd.f32 %v6519, %v6679
      %v6681 = vpop.f32.mrf.mxu0
      %6682 = vmatprep.mubr.bf16.mxu0 0
      %6683 = vmatmul.mubr.bf16.gmra.mxu0 %v6377
      %v6684 = vpop.f32.mrf.mxu0
      %v6685 = vadd.f32 %v6524, %v6684
      %v6686 = vpop.f32.mrf.mxu0
      %v6687 = vpop.f32.mrf.mxu0
      %v6688 = vadd.f32 %v6527, %v6687
      %v6689 = vpop.f32.mrf.mxu0
      %6690 = vmatprep.mubr.bf16.mxu0 0
      %6691 = vmatmul.mubr.bf16.gmra.mxu0 %v6380
      %v6692 = vpop.f32.mrf.mxu0
      %v6693 = vadd.f32 %v6532, %v6692
      %v6694 = vpop.f32.mrf.mxu0
      %v6695 = vpop.f32.mrf.mxu0
      %v6696 = vadd.f32 %v6535, %v6695
      %v6697 = vpop.f32.mrf.mxu0
      %6698 = vmatprep.mubr.bf16.mxu0 0
      %6699 = vmatmul.mubr.bf16.gmra.mxu0 %v6383
      %v6700 = vpop.f32.mrf.mxu0
      %v6701 = vadd.f32 %v6540, %v6700
      %v6702 = vpop.f32.mrf.mxu0
      %v6703 = vpop.f32.mrf.mxu0
      %v6704 = vadd.f32 %v6543, %v6703
      %v6705 = vpop.f32.mrf.mxu0
      %6706 = vdwg.mxu0
      %v6707 = vmul.f32 %v6581, 0.1
      %v6708 = vmul.f32 %v6584, 0.1
      %v6709 = vmul.f32 %v6589, 0.1
      %v6710 = vmul.f32 %v6592, 0.1
      %v6711 = vmul.f32 %v6597, 0.1
      %v6712 = vmul.f32 %v6600, 0.1
      %v6713 = vmul.f32 %v6605, 0.1
      %v6714 = vmul.f32 %v6608, 0.1
      %v6715 = vmul.f32 %v6613, 0.1
      %v6716 = vmul.f32 %v6616, 0.1
      %v6717 = vmul.f32 %v6621, 0.1
      %v6718 = vmul.f32 %v6624, 0.1
      %v6719 = vmul.f32 %v6629, 0.1
      %v6720 = vmul.f32 %v6632, 0.1
      %v6721 = vmul.f32 %v6637, 0.1
      %v6722 = vmul.f32 %v6640, 0.1
      %v6723 = vmul.f32 %v6645, 0.1
      %v6724 = vmul.f32 %v6648, 0.1
      %v6725 = vmul.f32 %v6653, 0.1
      %v6726 = vmul.f32 %v6656, 0.1
      %v6727 = vmul.f32 %v6661, 0.1
      %v6728 = vmul.f32 %v6664, 0.1
      %v6729 = vmul.f32 %v6669, 0.1
      %v6730 = vmul.f32 %v6672, 0.1
      %v6731 = vmul.f32 %v6677, 0.1
      %v6732 = vmul.f32 %v6680, 0.1
      %v6733 = vmul.f32 %v6685, 0.1
      %v6734 = vmul.f32 %v6688, 0.1
      %v6735 = vmul.f32 %v6693, 0.1
      %v6736 = vmul.f32 %v6696, 0.1
      %v6737 = vmul.f32 %v6701, 0.1
      %v6738 = vmul.f32 %v6704, 0.1
      %v6739 = vmax.f32 %v6581, %v6707
      %v6740 = vmax.f32 %v6584, %v6708
      %v6741 = vmax.f32 %v6589, %v6709
      %v6742 = vmax.f32 %v6592, %v6710
      %v6743 = vmax.f32 %v6597, %v6711
      %v6744 = vmax.f32 %v6600, %v6712
      %v6745 = vmax.f32 %v6605, %v6713
      %v6746 = vmax.f32 %v6608, %v6714
      %v6747 = vmax.f32 %v6613, %v6715
      %v6748 = vmax.f32 %v6616, %v6716
      %v6749 = vmax.f32 %v6621, %v6717
      %v6750 = vmax.f32 %v6624, %v6718
      %v6751 = vmax.f32 %v6629, %v6719
      %v6752 = vmax.f32 %v6632, %v6720
      %v6753 = vmax.f32 %v6637, %v6721
      %v6754 = vmax.f32 %v6640, %v6722
      %v6755 = vmax.f32 %v6645, %v6723
      %v6756 = vmax.f32 %v6648, %v6724
      %v6757 = vmax.f32 %v6653, %v6725
      %v6758 = vmax.f32 %v6656, %v6726
      %v6759 = vmax.f32 %v6661, %v6727
      %v6760 = vmax.f32 %v6664, %v6728
      %v6761 = vmax.f32 %v6669, %v6729
      %v6762 = vmax.f32 %v6672, %v6730
      %v6763 = vmax.f32 %v6677, %v6731
      %v6764 = vmax.f32 %v6680, %v6732
      %v6765 = vmax.f32 %v6685, %v6733
      %v6766 = vmax.f32 %v6688, %v6734
      %v6767 = vmax.f32 %v6693, %v6735
      %v6768 = vmax.f32 %v6696, %v6736
      %v6769 = vmax.f32 %v6701, %v6737
      %v6770 = vmax.f32 %v6704, %v6738
      %6803 = vrot.lane.b32.xlu0 %v4857, 32
      %v6804 = vpop.permute.xlu0 %6803
      %6805 = vrot.lane.b32.xlu0 %v4858, 32
      %v6806 = vpop.permute.xlu0 %6805
      %6807 = vrot.lane.b32.xlu0 %v4859, 32
      %v6808 = vpop.permute.xlu0 %6807
      %6809 = vrot.lane.b32.xlu0 %v4860, 32
      %v6810 = vpop.permute.xlu0 %6809
      %6811 = vrot.lane.b32.xlu0 %v4861, 32
      %v6812 = vpop.permute.xlu0 %6811
      %6813 = vrot.lane.b32.xlu0 %v4862, 32
      %v6814 = vpop.permute.xlu0 %6813
      %6815 = vrot.lane.b32.xlu0 %v4863, 32
      %v6816 = vpop.permute.xlu0 %6815
      %6817 = vrot.lane.b32.xlu0 %v4864, 32
      %v6818 = vpop.permute.xlu0 %6817
      %6819 = vrot.lane.b32.xlu0 %v4865, 32
      %v6820 = vpop.permute.xlu0 %6819
      %6821 = vrot.lane.b32.xlu0 %v4866, 32
      %v6822 = vpop.permute.xlu0 %6821
      %6823 = vrot.lane.b32.xlu0 %v4867, 32
      %v6824 = vpop.permute.xlu0 %6823
      %6825 = vrot.lane.b32.xlu0 %v4868, 32
      %v6826 = vpop.permute.xlu0 %6825
      %6827 = vrot.lane.b32.xlu0 %v4869, 32
      %v6828 = vpop.permute.xlu0 %6827
      %6829 = vrot.lane.b32.xlu0 %v4870, 32
      %v6830 = vpop.permute.xlu0 %6829
      %6831 = vrot.lane.b32.xlu0 %v4871, 32
      %v6832 = vpop.permute.xlu0 %6831
      %6833 = vrot.lane.b32.xlu0 %v4872, 32
      %v6834 = vpop.permute.xlu0 %6833
      %6835 = vrot.lane.b32.xlu0 %v4873, 32
      %v6836 = vpop.permute.xlu0 %6835
      %6837 = vrot.lane.b32.xlu0 %v4874, 32
      %v6838 = vpop.permute.xlu0 %6837
      %6839 = vrot.lane.b32.xlu0 %v4875, 32
      %v6840 = vpop.permute.xlu0 %6839
      %6841 = vrot.lane.b32.xlu0 %v4876, 32
      %v6842 = vpop.permute.xlu0 %6841
      %6843 = vrot.lane.b32.xlu0 %v4877, 32
      %v6844 = vpop.permute.xlu0 %6843
      %6845 = vrot.lane.b32.xlu0 %v4878, 32
      %v6846 = vpop.permute.xlu0 %6845
      %6847 = vrot.lane.b32.xlu0 %v4879, 32
      %v6848 = vpop.permute.xlu0 %6847
      %6849 = vrot.lane.b32.xlu0 %v4880, 32
      %v6850 = vpop.permute.xlu0 %6849
      %6851 = vrot.lane.b32.xlu0 %v4881, 32
      %v6852 = vpop.permute.xlu0 %6851
      %6853 = vrot.lane.b32.xlu0 %v4882, 32
      %v6854 = vpop.permute.xlu0 %6853
      %6855 = vrot.lane.b32.xlu0 %v4883, 32
      %v6856 = vpop.permute.xlu0 %6855
      %6857 = vrot.lane.b32.xlu0 %v4884, 32
      %v6858 = vpop.permute.xlu0 %6857
      %6859 = vrot.lane.b32.xlu0 %v4885, 32
      %v6860 = vpop.permute.xlu0 %6859
      %6861 = vrot.lane.b32.xlu0 %v4886, 32
      %v6862 = vpop.permute.xlu0 %6861
      %6863 = vrot.lane.b32.xlu0 %v4887, 32
      %v6864 = vpop.permute.xlu0 %6863
      %6865 = vrot.lane.b32.xlu0 %v4888, 32
      %v6866 = vpop.permute.xlu0 %6865
      %v6899 = vsel %vm459, %v6739, %v6804
      %v6900 = vsel %vm459, %v6740, %v6806
      %v6901 = vsel %vm459, %v6741, %v6808
      %v6902 = vsel %vm459, %v6742, %v6810
      %v6903 = vsel %vm459, %v6743, %v6812
      %v6904 = vsel %vm459, %v6744, %v6814
      %v6905 = vsel %vm459, %v6745, %v6816
      %v6906 = vsel %vm459, %v6746, %v6818
      %v6907 = vsel %vm459, %v6747, %v6820
      %v6908 = vsel %vm459, %v6748, %v6822
      %v6909 = vsel %vm459, %v6749, %v6824
      %v6910 = vsel %vm459, %v6750, %v6826
      %v6911 = vsel %vm459, %v6751, %v6828
      %v6912 = vsel %vm459, %v6752, %v6830
      %v6913 = vsel %vm459, %v6753, %v6832
      %v6914 = vsel %vm459, %v6754, %v6834
      %v6915 = vsel %vm459, %v6755, %v6836
      %v6916 = vsel %vm459, %v6756, %v6838
      %v6917 = vsel %vm459, %v6757, %v6840
      %v6918 = vsel %vm459, %v6758, %v6842
      %v6919 = vsel %vm459, %v6759, %v6844
      %v6920 = vsel %vm459, %v6760, %v6846
      %v6921 = vsel %vm459, %v6761, %v6848
      %v6922 = vsel %vm459, %v6762, %v6850
      %v6923 = vsel %vm459, %v6763, %v6852
      %v6924 = vsel %vm459, %v6764, %v6854
      %v6925 = vsel %vm459, %v6765, %v6856
      %v6926 = vsel %vm459, %v6766, %v6858
      %v6927 = vsel %vm459, %v6767, %v6860
      %v6928 = vsel %vm459, %v6768, %v6862
      %v6929 = vsel %vm459, %v6769, %v6864
      %v6930 = vsel %vm459, %v6770, %v6866
      %v6931 = vpack.c.bf16 %v6900, %v6899
      %v6932 = vpack.c.bf16 %v6902, %v6901
      %v6933 = vpack.c.bf16 %v6904, %v6903
      %v6934 = vpack.c.bf16 %v6906, %v6905
      %v6935 = vpack.c.bf16 %v6908, %v6907
      %v6936 = vpack.c.bf16 %v6910, %v6909
      %v6937 = vpack.c.bf16 %v6912, %v6911
      %v6938 = vpack.c.bf16 %v6914, %v6913
      %v6939 = vpack.c.bf16 %v6916, %v6915
      %v6940 = vpack.c.bf16 %v6918, %v6917
      %v6941 = vpack.c.bf16 %v6920, %v6919
      %v6942 = vpack.c.bf16 %v6922, %v6921
      %v6943 = vpack.c.bf16 %v6924, %v6923
      %v6944 = vpack.c.bf16 %v6926, %v6925
      %v6945 = vpack.c.bf16 %v6928, %v6927
      %v6946 = vpack.c.bf16 %v6930, %v6929
      %v6947 = vld [vmem:[%s9] sm:$0xf]
      %v6948 = vld [vmem:[%s9 + $0x4] sm:$0xf]
      %v6949 = vld [vmem:[%s9 + $0x8] sm:$0xf]
      %v6950 = vld [vmem:[%s9 + $0xc] sm:$0xf]
      %v6951 = vld [vmem:[%s9 + $0x10] sm:$0xf]
      %v6952 = vld [vmem:[%s9 + $0x14] sm:$0xf]
      %v6953 = vld [vmem:[%s9 + $0x18] sm:$0xf]
      %v6954 = vld [vmem:[%s9 + $0x1c] sm:$0xf]
      %v6955 = vld [vmem:[%s10] sm:$0x1]
      %v6957 = vlaneseq
      %v6958 = vshrl.u32 %v6957, 7
      %v6959 = vsub.s32 0, %v6958
      %v6960 = vrot.slane %v6955, %v6959
      %v6970 = vunpack.c.l.b16 %v6947
      %v6971 = vunpack.c.l.b16 %v6948
      %v6972 = vunpack.c.l.b16 %v6949
      %v6973 = vunpack.c.l.b16 %v6950
      %v6974 = vunpack.c.l.b16 %v6951
      %v6975 = vunpack.c.l.b16 %v6952
      %v6976 = vunpack.c.l.b16 %v6953
      %v6977 = vunpack.c.l.b16 %v6954
      %v6978 = vpack.c.b16 %v6971, %v6970
      %v6979 = vpack.c.b16 %v6973, %v6972
      %v6980 = vpack.c.b16 %v6975, %v6974
      %v6981 = vpack.c.b16 %v6977, %v6976
      %v6987 = vsel %vm1910, %v6931, 0
      %v6990 = vsel %vm1910, %v6932, 0
      %v6993 = vsel %vm1910, %v6933, 0
      %v6996 = vsel %vm1910, %v6934, 0
      %v6999 = vsel %vm1910, %v6935, 0
      %v7002 = vsel %vm1910, %v6936, 0
      %v7005 = vsel %vm1910, %v6937, 0
      %v7008 = vsel %vm1910, %v6938, 0
      %v7011 = vsel %vm1910, %v6939, 0
      %v7014 = vsel %vm1910, %v6940, 0
      %v7017 = vsel %vm1910, %v6941, 0
      %v7020 = vsel %vm1910, %v6942, 0
      %v7023 = vsel %vm1910, %v6943, 0
      %v7026 = vsel %vm1910, %v6944, 0
      %v7029 = vsel %vm1910, %v6945, 0
      %v7032 = vsel %vm1910, %v6946, 0
      %7034 = vmatprep.subr.bf16.mxu0 0
      %7035 = vmatpush1.bf16.msra.mxu0 0
      %7036 = vmatprep.subr.bf16.mxu0 0
      %7037 = vmatpush1.bf16.msra.mxu0 0
      %7038 = vmatprep.subr.bf16.mxu0 0
      %7039 = vmatpush1.bf16.msra.mxu0 0
      %7040 = vmatprep.subr.bf16.mxu0 0
      %7041 = vmatpush1.bf16.msra.mxu0 0
      %7042 = vmatprep.subr.bf16.mxu0 0
      %7043 = vmatpush1.bf16.msra.mxu0 %v6981
      %7044 = vmatprep.subr.bf16.mxu0 0
      %7045 = vmatpush1.bf16.msra.mxu0 %v6980
      %7046 = vmatprep.subr.bf16.mxu0 0
      %7047 = vmatpush1.bf16.msra.mxu0 %v6979
      %7048 = vmatprep.subr.bf16.mxu0 0
      %7049 = vmatpush1.bf16.msra.mxu0 %v6978
      %7050 = vmatprep.subr.bf16.mxu0 0
      %7051 = vmatpush2.bf16.msra.mxu0 0
      %7052 = vmatprep.subr.bf16.mxu0 0
      %7053 = vmatpush2.bf16.msra.mxu0 0
      %7054 = vmatprep.subr.bf16.mxu0 0
      %7055 = vmatpush2.bf16.msra.mxu0 0
      %7056 = vmatprep.subr.bf16.mxu0 0
      %7057 = vmatpush2.bf16.msra.mxu0 0
      %7058 = vmatprep.subr.bf16.mxu0 0
      %7059 = vmatpush2.bf16.msra.mxu0 0
      %7060 = vmatprep.subr.bf16.mxu0 0
      %7061 = vmatpush2.bf16.msra.mxu0 0
      %7062 = vmatprep.subr.bf16.mxu0 0
      %7063 = vmatpush2.bf16.msra.mxu0 0
      %7064 = vmatprep.subr.bf16.mxu0 0
      %7065 = vmatpush2.bf16.msra.mxu0 0
      %7066 = vmatprep.mubr.bf16.mxu0 0
      %7067 = vmatmul.mubr.bf16.gmra.mxu0 %v6987
      %v7068 = vpop.f32.mrf.mxu0
      %v7069 = vadd.f32 %v6960, %v7068
      %v7070 = vpop.f32.mrf.mxu0
      %v7071 = vpop.f32.mrf.mxu0
      %v7072 = vadd.f32 %v6960, %v7071
      %v7073 = vpop.f32.mrf.mxu0
      %7074 = vmatprep.mubr.bf16.mxu0 0
      %7075 = vmatmul.mubr.bf16.gmra.mxu0 %v6990
      %v7076 = vpop.f32.mrf.mxu0
      %v7077 = vadd.f32 %v6960, %v7076
      %v7078 = vpop.f32.mrf.mxu0
      %v7079 = vpop.f32.mrf.mxu0
      %v7080 = vadd.f32 %v6960, %v7079
      %v7081 = vpop.f32.mrf.mxu0
      %7082 = vmatprep.mubr.bf16.mxu0 0
      %7083 = vmatmul.mubr.bf16.gmra.mxu0 %v6993
      %v7084 = vpop.f32.mrf.mxu0
      %v7085 = vadd.f32 %v6960, %v7084
      %v7086 = vpop.f32.mrf.mxu0
      %v7087 = vpop.f32.mrf.mxu0
      %v7088 = vadd.f32 %v6960, %v7087
      %v7089 = vpop.f32.mrf.mxu0
      %7090 = vmatprep.mubr.bf16.mxu0 0
      %7091 = vmatmul.mubr.bf16.gmra.mxu0 %v6996
      %v7092 = vpop.f32.mrf.mxu0
      %v7093 = vadd.f32 %v6960, %v7092
      %v7094 = vpop.f32.mrf.mxu0
      %v7095 = vpop.f32.mrf.mxu0
      %v7096 = vadd.f32 %v6960, %v7095
      %v7097 = vpop.f32.mrf.mxu0
      %7098 = vmatprep.mubr.bf16.mxu0 0
      %7099 = vmatmul.mubr.bf16.gmra.mxu0 %v6999
      %v7100 = vpop.f32.mrf.mxu0
      %v7101 = vadd.f32 %v6960, %v7100
      %v7102 = vpop.f32.mrf.mxu0
      %v7103 = vpop.f32.mrf.mxu0
      %v7104 = vadd.f32 %v6960, %v7103
      %v7105 = vpop.f32.mrf.mxu0
      %7106 = vmatprep.mubr.bf16.mxu0 0
      %7107 = vmatmul.mubr.bf16.gmra.mxu0 %v7002
      %v7108 = vpop.f32.mrf.mxu0
      %v7109 = vadd.f32 %v6960, %v7108
      %v7110 = vpop.f32.mrf.mxu0
      %v7111 = vpop.f32.mrf.mxu0
      %v7112 = vadd.f32 %v6960, %v7111
      %v7113 = vpop.f32.mrf.mxu0
      %7114 = vmatprep.mubr.bf16.mxu0 0
      %7115 = vmatmul.mubr.bf16.gmra.mxu0 %v7005
      %v7116 = vpop.f32.mrf.mxu0
      %v7117 = vadd.f32 %v6960, %v7116
      %v7118 = vpop.f32.mrf.mxu0
      %v7119 = vpop.f32.mrf.mxu0
      %v7120 = vadd.f32 %v6960, %v7119
      %v7121 = vpop.f32.mrf.mxu0
      %7122 = vmatprep.mubr.bf16.mxu0 0
      %7123 = vmatmul.mubr.bf16.gmra.mxu0 %v7008
      %v7124 = vpop.f32.mrf.mxu0
      %v7125 = vadd.f32 %v6960, %v7124
      %v7126 = vpop.f32.mrf.mxu0
      %v7127 = vpop.f32.mrf.mxu0
      %v7128 = vadd.f32 %v6960, %v7127
      %v7129 = vpop.f32.mrf.mxu0
      %7130 = vmatprep.mubr.bf16.mxu0 0
      %7131 = vmatmul.mubr.bf16.gmra.mxu0 %v7011
      %v7132 = vpop.f32.mrf.mxu0
      %v7133 = vadd.f32 %v6960, %v7132
      %v7134 = vpop.f32.mrf.mxu0
      %v7135 = vpop.f32.mrf.mxu0
      %v7136 = vadd.f32 %v6960, %v7135
      %v7137 = vpop.f32.mrf.mxu0
      %7138 = vmatprep.mubr.bf16.mxu0 0
      %7139 = vmatmul.mubr.bf16.gmra.mxu0 %v7014
      %v7140 = vpop.f32.mrf.mxu0
      %v7141 = vadd.f32 %v6960, %v7140
      %v7142 = vpop.f32.mrf.mxu0
      %v7143 = vpop.f32.mrf.mxu0
      %v7144 = vadd.f32 %v6960, %v7143
      %v7145 = vpop.f32.mrf.mxu0
      %7146 = vmatprep.mubr.bf16.mxu0 0
      %7147 = vmatmul.mubr.bf16.gmra.mxu0 %v7017
      %v7148 = vpop.f32.mrf.mxu0
      %v7149 = vadd.f32 %v6960, %v7148
      %v7150 = vpop.f32.mrf.mxu0
      %v7151 = vpop.f32.mrf.mxu0
      %v7152 = vadd.f32 %v6960, %v7151
      %v7153 = vpop.f32.mrf.mxu0
      %7154 = vmatprep.mubr.bf16.mxu0 0
      %7155 = vmatmul.mubr.bf16.gmra.mxu0 %v7020
      %v7156 = vpop.f32.mrf.mxu0
      %v7157 = vadd.f32 %v6960, %v7156
      %v7158 = vpop.f32.mrf.mxu0
      %v7159 = vpop.f32.mrf.mxu0
      %v7160 = vadd.f32 %v6960, %v7159
      %v7161 = vpop.f32.mrf.mxu0
      %7162 = vmatprep.mubr.bf16.mxu0 0
      %7163 = vmatmul.mubr.bf16.gmra.mxu0 %v7023
      %v7164 = vpop.f32.mrf.mxu0
      %v7165 = vadd.f32 %v6960, %v7164
      %v7166 = vpop.f32.mrf.mxu0
      %v7167 = vpop.f32.mrf.mxu0
      %v7168 = vadd.f32 %v6960, %v7167
      %v7169 = vpop.f32.mrf.mxu0
      %7170 = vmatprep.mubr.bf16.mxu0 0
      %7171 = vmatmul.mubr.bf16.gmra.mxu0 %v7026
      %v7172 = vpop.f32.mrf.mxu0
      %v7173 = vadd.f32 %v6960, %v7172
      %v7174 = vpop.f32.mrf.mxu0
      %v7175 = vpop.f32.mrf.mxu0
      %v7176 = vadd.f32 %v6960, %v7175
      %v7177 = vpop.f32.mrf.mxu0
      %7178 = vmatprep.mubr.bf16.mxu0 0
      %7179 = vmatmul.mubr.bf16.gmra.mxu0 %v7029
      %v7180 = vpop.f32.mrf.mxu0
      %v7181 = vadd.f32 %v6960, %v7180
      %v7182 = vpop.f32.mrf.mxu0
      %v7183 = vpop.f32.mrf.mxu0
      %v7184 = vadd.f32 %v6960, %v7183
      %v7185 = vpop.f32.mrf.mxu0
      %7186 = vmatprep.mubr.bf16.mxu0 0
      %7187 = vmatmul.mubr.bf16.gmra.mxu0 %v7032
      %v7188 = vpop.f32.mrf.mxu0
      %v7189 = vadd.f32 %v6960, %v7188
      %v7190 = vpop.f32.mrf.mxu0
      %v7191 = vpop.f32.mrf.mxu0
      %v7192 = vadd.f32 %v6960, %v7191
      %v7193 = vpop.f32.mrf.mxu0
      %7194 = vdwg.mxu0
      %vm7195 = vcmask 64512
      %7196 = vst.msk [vmem:[%s386] sm:$0xff] %vm7195, %v7069
      %7197 = vst.msk [vmem:[%s386 + $0x8] sm:$0xff] %vm7195, %v7072
      %7198 = vst.msk [vmem:[%s386 + $0x10] sm:$0xff] %vm7195, %v7077
      %7199 = vst.msk [vmem:[%s386 + $0x18] sm:$0xff] %vm7195, %v7080
      %7200 = vst.msk [vmem:[%s386 + $0x20] sm:$0xff] %vm7195, %v7085
      %7201 = vst.msk [vmem:[%s386 + $0x28] sm:$0xff] %vm7195, %v7088
      %7202 = vst.msk [vmem:[%s386 + $0x30] sm:$0xff] %vm7195, %v7093
      %7203 = vst.msk [vmem:[%s386 + $0x38] sm:$0xff] %vm7195, %v7096
      %7204 = vst.msk [vmem:[%s386 + $0x40] sm:$0xff] %vm7195, %v7101
      %7205 = vst.msk [vmem:[%s386 + $0x48] sm:$0xff] %vm7195, %v7104
      %7206 = vst.msk [vmem:[%s386 + $0x50] sm:$0xff] %vm7195, %v7109
      %7207 = vst.msk [vmem:[%s386 + $0x58] sm:$0xff] %vm7195, %v7112
      %7208 = vst.msk [vmem:[%s386 + $0x60] sm:$0xff] %vm7195, %v7117
      %7209 = vst.msk [vmem:[%s386 + $0x68] sm:$0xff] %vm7195, %v7120
      %7210 = vst.msk [vmem:[%s386 + $0x70] sm:$0xff] %vm7195, %v7125
      %7211 = vst.msk [vmem:[%s386 + $0x78] sm:$0xff] %vm7195, %v7128
      %7212 = vst.msk [vmem:[%s386 + $0x80] sm:$0xff] %vm7195, %v7133
      %7213 = vst.msk [vmem:[%s386 + $0x88] sm:$0xff] %vm7195, %v7136
      %7214 = vst.msk [vmem:[%s386 + $0x90] sm:$0xff] %vm7195, %v7141
      %7215 = vst.msk [vmem:[%s386 + $0x98] sm:$0xff] %vm7195, %v7144
      %7216 = vst.msk [vmem:[%s386 + $0xa0] sm:$0xff] %vm7195, %v7149
      %7217 = vst.msk [vmem:[%s386 + $0xa8] sm:$0xff] %vm7195, %v7152
      %7218 = vst.msk [vmem:[%s386 + $0xb0] sm:$0xff] %vm7195, %v7157
      %7219 = vst.msk [vmem:[%s386 + $0xb8] sm:$0xff] %vm7195, %v7160
      %7220 = vst.msk [vmem:[%s386 + $0xc0] sm:$0xff] %vm7195, %v7165
      %7221 = vst.msk [vmem:[%s386 + $0xc8] sm:$0xff] %vm7195, %v7168
      %7222 = vst.msk [vmem:[%s386 + $0xd0] sm:$0xff] %vm7195, %v7173
      %7223 = vst.msk [vmem:[%s386 + $0xd8] sm:$0xff] %vm7195, %v7176
      %7224 = vst.msk [vmem:[%s386 + $0xe0] sm:$0xff] %vm7195, %v7181
      %7225 = vst.msk [vmem:[%s386 + $0xe8] sm:$0xff] %vm7195, %v7184
      %7226 = vst.msk [vmem:[%s386 + $0xf0] sm:$0xff] %vm7195, %v7189
      %7227 = vst.msk [vmem:[%s386 + $0xf8] sm:$0xff] %vm7195, %v7192
      %p7228 = scmp.lt.s32.totalorder %s22, 1
      %s7229 = scalar_select %p7228, %s22, 1
      %s7230 = smul.addr %s7229, 32
      %s7231 = smul.addr %s7230, 8
      %s7232 = scalar_lea.vmem %s11, %s7231
      // Predicated region
      $region65: #{_run_level.1} parent=63 // pred_check
        %p7233 = pneg %p276
      $region66: #{_run_level.1} parent=63 // pred_check_branch
        %7235 = sbr.rel (%p7233) target = $region68
      $region67: #{_run_level.1} parent=63 // pred_region
        _
      $region68: #{_run_level.1} parent=63 // pred_fallthru
        _
    $region64: #{_run_level.1} parent=5 // pred_fallthru
      _
    %p7236 = scmp.le.s32.totalorder 2, %s17
    // Predicated region
    $region69: #{_run_level.1} parent=5 // pred_check
      %p7237 = pneg %p7236
    $region70: #{_run_level.1} parent=5 // pred_check_branch
      %7239 = sbr.rel (%p7237) target = $region72
    $region71: #{_run_level.1} parent=5 // pred_region
      %s7240 = ssub.s32 %s17, 2
      // Predicated region
      $region73: #{_run_level.1} parent=71 // pred_check
        %p7241 = pneg %p282
      $region74: #{_run_level.1} parent=71 // pred_check_branch
        %7243 = sbr.rel (%p7241) target = $region76
      $region75: #{_run_level.1} parent=71 // pred_region
        %p7244 = scmp.lt.s32.totalorder %s23, 1
        %s7245 = scalar_select %p7244, %s23, 1
        %s7246 = smul.addr %s7245, 32
        %s7247 = smul.addr %s7246, 8
        %s7248 = scalar_lea.vmem %s11, %s7247
      $region76: #{_run_level.1} parent=71 // pred_fallthru
        _
    $region72: #{_run_level.1} parent=5 // pred_fallthru
      _
  $region6: #{_run_level.1} parent=0 // loop_footer
    %s21 = sadd.s32 1, %s17
  $region7: #{_run_level.1} parent=0 // loop_footer_branch
    %16 = sbr.rel target = $region3
  $region8: #{_run_level.1} parent=0 // loop_exit
    _

</llo_original>
